<compile_context>
chip_gen: v5e
topology: v5e:2x2
jax: 0.10.0
libtpu: 0.0.40
codegen_flags: <defaults>
</compile_context>

<pallas_src>
import jax
import jax.numpy as jnp
from jax import lax
from jax.experimental import pallas as pl
from jax.experimental.pallas import tpu as pltpu

K = 7        # depthwise kernel size
PAD = 3      # conv padding
CW = 8       # scratch column where the image interior starts (sublane-aligned)
LANE = 128   # TPU lane width


def _round_up(v, m):
    return (v + m - 1) // m * m


def _gelu_tanh(x):
    """tanh-approximation GELU (tanh runs on the EUP; ~half the VALU ops of the
    erf polynomial).  |gelu_tanh - gelu_erf| <~ 1e-3, inside this kernel's
    bf16-MXU tolerance."""
    c = 0.7978845608028654   # sqrt(2/pi)
    return 0.5 * x * (1.0 + jnp.tanh(c * (x + 0.044715 * (x * x * x))))


def _default_elementwise_bf16():
    """bf16 elementwise math only on bf16-native VPUs (v6e/v7x); f32 elsewhere."""
    try:
        kind = jax.devices()[0].device_kind.lower()
    except Exception:
        return False
    return any(tag in kind for tag in ("v6", "v7", "7x"))


def _vmem_limit_bytes(est_bytes):
    """Per-generation scoped-VMEM limit: physical capacity minus headroom."""
    try:
        cap = int(pltpu.get_tpu_info().vmem_capacity_bytes)
    except Exception:
        cap = 64 * 2 ** 20                       # conservative (v7x physical)
    gen_cap = max(32 * 2 ** 20, cap - 12 * 2 ** 20)   # leave compiler headroom
    return int(min(gen_cap, max(32 * 2 ** 20, 2 * est_bytes)))


def convnext_block(x_nchw, params, *, mlp_chunk_rows=512, elementwise_bf16=None):
    """x_nchw: (N, C, H, W) float32, PyTorch convention. Returns (N, C, H, W)."""
    N, C, H, W = x_nchw.shape
    C4 = 4 * C
    Cp = _round_up(C, LANE)
    C4p = _round_up(C4, LANE)
    HW = H * W
    Hp = H + 2 * PAD
    Wtot = _round_up(CW + W + PAD, 8)            # sublane-aligned scratch width

    # Image rows per MLP chunk: largest divisor of H with rows*W <= mlp_chunk_rows.
    rows_h = 1
    for cand in range(1, H + 1):
        if H % cand == 0 and cand * W <= max(W, mlp_chunk_rows):
            rows_h = cand
    RC = rows_h * W                              # flattened rows per chunk
    n_chunks = H // rows_h

    if elementwise_bf16 is None:
        elementwise_bf16 = _default_elementwise_bf16()
    ew = jnp.bfloat16 if elementwise_bf16 else jnp.float32

    dww, dwb, lnw, lnb, w1, b1, gg, gb, w2, b2, ls = params

    def padto(a, axis, target):
        a = a.astype(jnp.float32)
        if a.shape[axis] == target:
            return a
        cfg = [(0, 0)] * a.ndim
        cfg[axis] = (0, target - a.shape[axis])
        return jnp.pad(a, cfg)

    # Lane-dense, zero-padded parameters (zero padding keeps the math exact).
    dww_p = padto(dww, 2, Cp)
    dwb_p = padto(dwb, 1, Cp)
    lnw_p = padto(lnw, 1, Cp)
    lnb_p = padto(lnb, 1, Cp)
    w1_p = padto(padto(w1, 0, Cp), 1, C4p).astype(jnp.bfloat16)
    b1_p = padto(b1, 1, C4p)
    gg_p = padto(gg, 1, C4p)
    gb_p = padto(gb, 1, C4p)
    w2_p = padto(padto(w2, 0, C4p), 1, Cp).astype(jnp.bfloat16)
    b2_p = padto(b2, 1, Cp)
    ls_p = padto(ls, 1, Cp)

    x = jnp.transpose(x_nchw, (0, 2, 3, 1)).astype(jnp.float32)      # NHWC, true C

    def kernel(x_ref, dww_ref, dwb_ref, lnw_ref, lnb_ref, w1_ref, b1_ref,
               gg_ref, gb_ref, w2_ref, b2_ref, ls_ref, out_ref,
               xpad_scr, xn_scr, h_scr):
        # ---- one-time zero of the padded-image scratch -----------------------
        # Grid axis is "arbitrary" (sequential on one TensorCore), so the halo
        # rows/cols and the channel-pad lanes stay zero for every later step;
        # each step only rewrites the interior :C lanes.
        @pl.when(pl.program_id(0) == 0)
        def _():
            xpad_scr[...] = jnp.zeros_like(xpad_scr)

        # Interior write: sublane-aligned (column CW=8), lane-masked to :C.
        xpad_scr[PAD:PAD + H, CW:CW + W, :C] = x_ref[0]

        # ---- depthwise 7x7 conv (padding=3, groups=C), f32 --------------------
        # One sublane-shifted slab per kx, reused across the 7 ky taps (ky slices
        # are major-dim and free).  The shift is done with an XLU roll (aligned
        # slice when the offset is already a multiple of 8), so the misaligned
        # sublane slices never hit the load/store slots.
        xpad = xpad_scr[...]                           # (Hp, Wtot, Cp)
        wdw = dww_ref[...]                             # (K, K, Cp)
        acc0 = None
        acc1 = None
        t = 0
        for kx in range(K):
            off = CW - PAD + kx                        # 5..11
            if off % 8 == 0:
                slab = xpad[:, off:off + W, :]
            else:
                slab = pltpu.roll(xpad, shift=Wtot - off, axis=1)[:, :W, :]
            for ky in range(K):
                term = slab[ky:ky + H] * wdw[ky, kx]
                if t == 0:
                    acc0 = term
                elif t == 1:
                    acc1 = term + dwb_ref[0]           # conv bias folded here
                elif t % 2 == 0:
                    acc0 = acc0 + term
                else:
                    acc1 = acc1 + term
                t += 1
        acc = acc0 + acc1                              # (H, W, Cp), padded lanes = 0

        # ---- LayerNorm over channels (channels_last, eps=1e-6, biased var) ----
        # Padded channels of `acc` are exactly zero (zero-padded weights/bias),
        # so true-C statistics are recovered with exact corrections.
        inv_c = 1.0 / C
        u = jnp.sum(acc, axis=-1, keepdims=True) * inv_c
        dev = acc - u
        var = (jnp.sum(dev * dev, axis=-1, keepdims=True) - (Cp - C) * (u * u)) * inv_c
        xn = (dev * lax.rsqrt(var + 1e-6)) * lnw_ref[0] + lnb_ref[0]
        xn_scr[...] = xn.reshape(HW, Cp).astype(jnp.bfloat16)   # MXU lhs staging

        # ---- pass 1: row-chunked pwconv1 -> GELU -> GRN sum-of-squares --------
        w1v = w1_ref[...]
        b1v = b1_ref[0]

        def pass1(i, ssq):
            r0 = pl.multiple_of(i * RC, RC)
            xc = xn_scr[pl.ds(r0, RC), :]                          # bf16 (RC, Cp)
            hc = jnp.dot(xc, w1v, preferred_element_type=jnp.float32) + b1v
            hc = _gelu_tanh(hc.astype(ew))
            h_scr[pl.ds(r0, RC), :] = hc.astype(jnp.bfloat16)
            hf = hc.astype(jnp.float32)
            return ssq + jnp.sum(hf * hf, axis=0, keepdims=True)   # f32 accum

        ssq = lax.fori_loop(0, n_chunks, pass1,
                            jnp.zeros((1, C4p), jnp.float32))

        # ---- GRN statistics (per batch element, over H*W) ---------------------
        gx = jnp.sqrt(ssq)                                 # (1, C4p); padded lanes 0
        mean_gx = jnp.sum(gx, axis=-1, keepdims=True) * (1.0 / C4)   # true-4C mean
        nx = (gx / (mean_gx + 1e-6)).astype(ew)

        # ---- pass 2: row-chunked GRN-apply -> pwconv2 -> residual -------------
        w2v = w2_ref[...]
        b2v = b2_ref[0]
        lsv = ls_ref[0]
        ggv = gg_ref[0].astype(ew)
        gbv = gb_ref[0].astype(ew)

        def pass2(i, carry):
            r0 = pl.multiple_of(i * RC, RC)
            hc = h_scr[pl.ds(r0, RC), :].astype(ew)                # (RC, C4p)
            hg = ggv * (hc * nx) + gbv + hc
            yc = jnp.dot(hg.astype(jnp.bfloat16), w2v,
                         preferred_element_type=jnp.float32) + b2v  # (RC, Cp) f32
            # residual re-read from the padded-image scratch (not kept live).
            res = xpad_scr[pl.ds(PAD + i * rows_h, rows_h), CW:CW + W, :]
            outc = res.reshape(RC, Cp) + yc * lsv
            out_ref[:, pl.ds(r0, RC), :] = outc[None]
            return carry

        lax.fori_loop(0, n_chunks, pass2, 0)

    def const_spec(shape):
        n = len(shape)
        return pl.BlockSpec(shape, lambda b, _n=n: (0,) * _n)

    # VMEM budget: blocks (double-buffered) + scratches + live values.
    est = (2 * H * W * C * 4                               # input block
           + 2 * HW * Cp * 4                               # output block
           + 2 * (K * K * Cp + 8 * Cp + 3 * C4p) * 4       # small f32 params
           + 2 * (Cp * C4p + C4p * Cp) * 2                 # bf16 weights
           + Hp * Wtot * Cp * 4                            # padded-image scratch
           + HW * Cp * 2 + HW * C4p * 2                    # xn / h bf16 scratches
           + 4 * Hp * Wtot * Cp * 4                        # conv live values
           + 3 * HW * Cp * 4                               # LayerNorm temporaries
           + 4 * RC * C4p * 4)                             # per-chunk temporaries
    vmem_limit = _vmem_limit_bytes(est)

    out = pl.pallas_call(
        kernel,
        out_shape=jax.ShapeDtypeStruct((N, HW, Cp), jnp.float32),
        grid=(N,),
        in_specs=[
            pl.BlockSpec((1, H, W, C), lambda b: (b, 0, 0, 0)),   # x (unpadded)
            const_spec((K, K, Cp)),     # dw weight
            const_spec((1, Cp)),        # dw bias
            const_spec((1, Cp)),        # ln weight
            const_spec((1, Cp)),        # ln bias
            const_spec((Cp, C4p)),      # pwconv1 weight (bf16)
            const_spec((1, C4p)),       # pwconv1 bias
            const_spec((1, C4p)),       # grn gamma
            const_spec((1, C4p)),       # grn beta
            const_spec((C4p, Cp)),      # pwconv2 weight (bf16)
            const_spec((1, Cp)),        # pwconv2 bias
            const_spec((1, Cp)),        # layer-scale gamma
        ],
        out_specs=pl.BlockSpec((1, HW, Cp), lambda b: (b, 0, 0)),
        scratch_shapes=[
            pltpu.VMEM((Hp, Wtot, Cp), jnp.float32),       # padded image
            pltpu.VMEM((HW, Cp), jnp.bfloat16),            # LayerNorm output
            pltpu.VMEM((HW, C4p), jnp.bfloat16),           # hidden activations
        ],
        compiler_params=pltpu.CompilerParams(
            dimension_semantics=("arbitrary",),            # sequential: scratch init persists
            vmem_limit_bytes=vmem_limit),
    )(x, dww_p, dwb_p, lnw_p, lnb_p, w1_p, b1_p, gg_p, gb_p, w2_p, b2_p, ls_p)

    out = out.reshape(N, H, W, Cp)[:, :, :, :C]
    return jnp.transpose(out, (0, 3, 1, 2))


def init_params(key, dim):
    """Deterministic parameter init.  GRN gamma/beta and layer-scale gamma get
    non-trivial values so those paths are actually exercised by the check."""
    C4 = 4 * dim
    ks = jax.random.split(key, 8)
    dww = 0.1 * jax.random.normal(ks[0], (K, K, dim), jnp.float32)
    dwb = 0.1 * jax.random.normal(ks[1], (1, dim), jnp.float32)
    lnw = jnp.ones((1, dim), jnp.float32)
    lnb = jnp.zeros((1, dim), jnp.float32)
    w1 = 0.1 * jax.random.normal(ks[2], (dim, C4), jnp.float32)
    b1 = 0.1 * jax.random.normal(ks[3], (1, C4), jnp.float32)
    gg = 0.1 * jax.random.normal(ks[4], (1, C4), jnp.float32)
    gb = 0.1 * jax.random.normal(ks[5], (1, C4), jnp.float32)
    w2 = 0.1 * jax.random.normal(ks[6], (C4, dim), jnp.float32)
    b2 = 0.1 * jax.random.normal(ks[7], (1, dim), jnp.float32)
    ls = jnp.full((1, dim), 0.1, jnp.float32)
    return (dww, dwb, lnw, lnb, w1, b1, gg, gb, w2, b2, ls)


def reference(x_nchw, params):
    """Pure-JAX float32 reference of the PyTorch ConvNeXtBlock forward."""
    dww, dwb, lnw, lnb, w1, b1, gg, gb, w2, b2, ls = params
    N, C, H, W = x_nchw.shape
    x = jnp.transpose(x_nchw, (0, 2, 3, 1)).astype(jnp.float32)
    xp = jnp.pad(x, ((0, 0), (PAD, PAD), (PAD, PAD), (0, 0)))
    acc = jnp.zeros((N, H, W, C), jnp.float32) + dwb[0]
    for ky in range(K):
        for kx in range(K):
            acc = acc + xp[:, ky:ky + H, kx:kx + W, :] * dww[ky, kx]
    u = jnp.mean(acc, axis=-1, keepdims=True)
    s = jnp.mean((acc - u) ** 2, axis=-1, keepdims=True)
    xn = (acc - u) / jnp.sqrt(s + 1e-6) * lnw[0] + lnb[0]
    h = xn @ w1 + b1[0]
    h = jax.nn.gelu(h, approximate=False)
    gx = jnp.sqrt(jnp.sum(h * h, axis=(1, 2), keepdims=True))
    nx = gx / (jnp.mean(gx, axis=-1, keepdims=True) + 1e-6)
    h = gg[0] * (h * nx) + gb[0] + h
    y = h @ w2 + b2[0]
    out = x + y * ls[0]
    return jnp.transpose(out, (0, 3, 1, 2))


if __name__ == "__main__":
    N, dim, H, W = 2, 8, 16, 16
    key = jax.random.PRNGKey(0)
    k1, k2 = jax.random.split(key)
    x = jax.random.normal(k1, (N, dim, H, W), jnp.float32)   # NCHW, like PyTorch
    params = init_params(k2, dim)

    # mlp_chunk_rows=128 -> 2 MLP chunks at this shape (exercises the chunked path).
    y = convnext_block(x, params, mlp_chunk_rows=128)
    y = jax.block_until_ready(y)
    assert y.shape == (N, dim, H, W) and y.dtype == jnp.float32

    ref = reference(x, params)
    err = float(jnp.max(jnp.abs(y - ref)))
    # bf16 MXU operands + tanh-approx GELU (+ optional bf16 elementwise) -> loose tolerance.
    assert err < 2e-2, f"max abs error vs reference: {err}"
    print("KERNEL_OK")
</pallas_src>

<mosaic_0001>
module attributes {stable_mosaic.version = 11 : i64} {
  func.func @kernel(%arg0: i32, %arg1: memref<1x16x16x8xf32, #tpu.memory_space<vmem>>, %arg2: memref<7x7x128xf32, #tpu.memory_space<vmem>>, %arg3: memref<1x128xf32, #tpu.memory_space<vmem>>, %arg4: memref<1x128xf32, #tpu.memory_space<vmem>>, %arg5: memref<1x128xf32, #tpu.memory_space<vmem>>, %arg6: memref<128x128xbf16, #tpu.memory_space<vmem>>, %arg7: memref<1x128xf32, #tpu.memory_space<vmem>>, %arg8: memref<1x128xf32, #tpu.memory_space<vmem>>, %arg9: memref<1x128xf32, #tpu.memory_space<vmem>>, %arg10: memref<128x128xbf16, #tpu.memory_space<vmem>>, %arg11: memref<1x128xf32, #tpu.memory_space<vmem>>, %arg12: memref<1x128xf32, #tpu.memory_space<vmem>>, %arg13: memref<1x256x128xf32, #tpu.memory_space<vmem>>, %arg14: memref<22x32x128xf32, #tpu.memory_space<vmem>>, %arg15: memref<256x128xbf16, #tpu.memory_space<vmem>>, %arg16: memref<256x128xbf16, #tpu.memory_space<vmem>>) attributes {dimension_semantics = [#tpu.dimension_semantics<arbitrary>], iteration_bounds = array<i64: 2>, scalar_prefetch = 0 : i64, scratch_operands = 3 : i64, tpu.core_type = #tpu.core_type<tc>, window_params = [{transform_indices = @transform_0, window_bounds = array<i64: 1, 16, 16, 8>}, {pipeline_mode = #tpu.pipeline_mode<synchronous>, transform_indices = @transform_1, window_bounds = array<i64: 7, 7, 128>}, {pipeline_mode = #tpu.pipeline_mode<synchronous>, transform_indices = @transform_2, window_bounds = array<i64: 1, 128>}, {pipeline_mode = #tpu.pipeline_mode<synchronous>, transform_indices = @transform_3, window_bounds = array<i64: 1, 128>}, {pipeline_mode = #tpu.pipeline_mode<synchronous>, transform_indices = @transform_4, window_bounds = array<i64: 1, 128>}, {pipeline_mode = #tpu.pipeline_mode<synchronous>, transform_indices = @transform_5, window_bounds = array<i64: 128, 128>}, {pipeline_mode = #tpu.pipeline_mode<synchronous>, transform_indices = @transform_6, window_bounds = array<i64: 1, 128>}, {pipeline_mode = #tpu.pipeline_mode<synchronous>, transform_indices = @transform_7, window_bounds = array<i64: 1, 128>}, {pipeline_mode = #tpu.pipeline_mode<synchronous>, transform_indices = @transform_8, window_bounds = array<i64: 1, 128>}, {pipeline_mode = #tpu.pipeline_mode<synchronous>, transform_indices = @transform_9, window_bounds = array<i64: 128, 128>}, {pipeline_mode = #tpu.pipeline_mode<synchronous>, transform_indices = @transform_10, window_bounds = array<i64: 1, 128>}, {pipeline_mode = #tpu.pipeline_mode<synchronous>, transform_indices = @transform_11, window_bounds = array<i64: 1, 128>}, {transform_indices = @transform_12, window_bounds = array<i64: 1, 256, 128>}]} {
    %c0_i32 = arith.constant 0 : i32
    %0 = arith.cmpi eq, %arg0, %c0_i32 : i32
    %1 = arith.extui %0 : i1 to i32
    %c0_i32_0 = arith.constant 0 : i32
    %2 = arith.cmpi ne, %1, %c0_i32_0 : i32
    scf.if %2 {
      %cst_48 = arith.constant 0.000000e+00 : f32
      %426 = vector.broadcast %cst_48 : f32 to vector<22x32x128xf32>
      %c0_49 = arith.constant 0 : index
      %c0_50 = arith.constant 0 : index
      %c0_51 = arith.constant 0 : index
      %427 = vector.load %arg14[%c0_49, %c0_50, %c0_51] : memref<22x32x128xf32, #tpu.memory_space<vmem>>, vector<22x32x128xf32>
      tpu.vector_store %arg14[%c0_49, %c0_50, %c0_51], %426 {strides = array<i32>} : memref<22x32x128xf32, #tpu.memory_space<vmem>>, vector<22x32x128xf32>,
    } else {
    }
    %c0 = arith.constant 0 : index
    %c0_1 = arith.constant 0 : index
    %c0_2 = arith.constant 0 : index
    %c0_3 = arith.constant 0 : index
    %3 = vector.load %arg1[%c0, %c0_1, %c0_2, %c0_3] : memref<1x16x16x8xf32, #tpu.memory_space<vmem>>, vector<1x16x16x8xf32>
    %4 = vector.shape_cast %3 : vector<1x16x16x8xf32> to vector<16x16x8xf32>
    %c3 = arith.constant 3 : index
    %c8 = arith.constant 8 : index
    %c0_4 = arith.constant 0 : index
    %5 = vector.load %arg14[%c3, %c8, %c0_4] : memref<22x32x128xf32, #tpu.memory_space<vmem>>, vector<16x16x8xf32>
    tpu.vector_store %arg14[%c3, %c8, %c0_4], %4 {strides = array<i32>} : memref<22x32x128xf32, #tpu.memory_space<vmem>>, vector<16x16x8xf32>,
    %c0_5 = arith.constant 0 : index
    %c0_6 = arith.constant 0 : index
    %c0_7 = arith.constant 0 : index
    %6 = vector.load %arg14[%c0_5, %c0_6, %c0_7] : memref<22x32x128xf32, #tpu.memory_space<vmem>>, vector<22x32x128xf32>
    %c0_8 = arith.constant 0 : index
    %c0_9 = arith.constant 0 : index
    %c0_10 = arith.constant 0 : index
    %7 = vector.load %arg2[%c0_8, %c0_9, %c0_10] : memref<7x7x128xf32, #tpu.memory_space<vmem>>, vector<7x7x128xf32>
    %c27_i32 = arith.constant 27 : i32
    %8 = tpu.dynamic_rotate %6 by %c27_i32 dim 1 : vector<22x32x128xf32>, i32 -> vector<22x32x128xf32>
    %9 = vector.extract_strided_slice %8 {offsets = [0, 0, 0], sizes = [22, 16, 128], strides = [1, 1, 1]} : vector<22x32x128xf32> to vector<22x16x128xf32>
    %10 = vector.extract_strided_slice %9 {offsets = [0, 0, 0], sizes = [16, 16, 128], strides = [1, 1, 1]} : vector<22x16x128xf32> to vector<16x16x128xf32>
    %11 = vector.extract_strided_slice %7 {offsets = [0, 0, 0], sizes = [1, 1, 128], strides = [1, 1, 1]} : vector<7x7x128xf32> to vector<1x1x128xf32>
    %12 = vector.shape_cast %11 : vector<1x1x128xf32> to vector<128xf32>
    %13 = vector.shape_cast %12 : vector<128xf32> to vector<1x1x128xf32>
    %14 = vector.broadcast %13 : vector<1x1x128xf32> to vector<16x16x128xf32>
    %15 = arith.mulf %10, %14 : vector<16x16x128xf32>
    %16 = vector.extract_strided_slice %9 {offsets = [1, 0, 0], sizes = [16, 16, 128], strides = [1, 1, 1]} : vector<22x16x128xf32> to vector<16x16x128xf32>
    %17 = vector.extract_strided_slice %7 {offsets = [1, 0, 0], sizes = [1, 1, 128], strides = [1, 1, 1]} : vector<7x7x128xf32> to vector<1x1x128xf32>
    %18 = vector.shape_cast %17 : vector<1x1x128xf32> to vector<128xf32>
    %19 = vector.shape_cast %18 : vector<128xf32> to vector<1x1x128xf32>
    %20 = vector.broadcast %19 : vector<1x1x128xf32> to vector<16x16x128xf32>
    %21 = arith.mulf %16, %20 : vector<16x16x128xf32>
    %c0_11 = arith.constant 0 : index
    %c0_12 = arith.constant 0 : index
    %22 = vector.load %arg3[%c0_11, %c0_12] : memref<1x128xf32, #tpu.memory_space<vmem>>, vector<1x128xf32>
    %23 = vector.shape_cast %22 : vector<1x128xf32> to vector<128xf32>
    %24 = vector.shape_cast %23 : vector<128xf32> to vector<1x1x128xf32>
    %25 = vector.broadcast %24 : vector<1x1x128xf32> to vector<16x16x128xf32>
    %26 = arith.addf %21, %25 : vector<16x16x128xf32>
    %27 = vector.extract_strided_slice %9 {offsets = [2, 0, 0], sizes = [16, 16, 128], strides = [1, 1, 1]} : vector<22x16x128xf32> to vector<16x16x128xf32>
    %28 = vector.extract_strided_slice %7 {offsets = [2, 0, 0], sizes = [1, 1, 128], strides = [1, 1, 1]} : vector<7x7x128xf32> to vector<1x1x128xf32>
    %29 = vector.shape_cast %28 : vector<1x1x128xf32> to vector<128xf32>
    %30 = vector.shape_cast %29 : vector<128xf32> to vector<1x1x128xf32>
    %31 = vector.broadcast %30 : vector<1x1x128xf32> to vector<16x16x128xf32>
    %32 = arith.mulf %27, %31 : vector<16x16x128xf32>
    %33 = arith.addf %15, %32 : vector<16x16x128xf32>
    %34 = vector.extract_strided_slice %9 {offsets = [3, 0, 0], sizes = [16, 16, 128], strides = [1, 1, 1]} : vector<22x16x128xf32> to vector<16x16x128xf32>
    %35 = vector.extract_strided_slice %7 {offsets = [3, 0, 0], sizes = [1, 1, 128], strides = [1, 1, 1]} : vector<7x7x128xf32> to vector<1x1x128xf32>
    %36 = vector.shape_cast %35 : vector<1x1x128xf32> to vector<128xf32>
    %37 = vector.shape_cast %36 : vector<128xf32> to vector<1x1x128xf32>
    %38 = vector.broadcast %37 : vector<1x1x128xf32> to vector<16x16x128xf32>
    %39 = arith.mulf %34, %38 : vector<16x16x128xf32>
    %40 = arith.addf %26, %39 : vector<16x16x128xf32>
    %41 = vector.extract_strided_slice %9 {offsets = [4, 0, 0], sizes = [16, 16, 128], strides = [1, 1, 1]} : vector<22x16x128xf32> to vector<16x16x128xf32>
    %42 = vector.extract_strided_slice %7 {offsets = [4, 0, 0], sizes = [1, 1, 128], strides = [1, 1, 1]} : vector<7x7x128xf32> to vector<1x1x128xf32>
    %43 = vector.shape_cast %42 : vector<1x1x128xf32> to vector<128xf32>
    %44 = vector.shape_cast %43 : vector<128xf32> to vector<1x1x128xf32>
    %45 = vector.broadcast %44 : vector<1x1x128xf32> to vector<16x16x128xf32>
    %46 = arith.mulf %41, %45 : vector<16x16x128xf32>
    %47 = arith.addf %33, %46 : vector<16x16x128xf32>
    %48 = vector.extract_strided_slice %9 {offsets = [5, 0, 0], sizes = [16, 16, 128], strides = [1, 1, 1]} : vector<22x16x128xf32> to vector<16x16x128xf32>
    %49 = vector.extract_strided_slice %7 {offsets = [5, 0, 0], sizes = [1, 1, 128], strides = [1, 1, 1]} : vector<7x7x128xf32> to vector<1x1x128xf32>
    %50 = vector.shape_cast %49 : vector<1x1x128xf32> to vector<128xf32>
    %51 = vector.shape_cast %50 : vector<128xf32> to vector<1x1x128xf32>
    %52 = vector.broadcast %51 : vector<1x1x128xf32> to vector<16x16x128xf32>
    %53 = arith.mulf %48, %52 : vector<16x16x128xf32>
    %54 = arith.addf %40, %53 : vector<16x16x128xf32>
    %55 = vector.extract_strided_slice %9 {offsets = [6, 0, 0], sizes = [16, 16, 128], strides = [1, 1, 1]} : vector<22x16x128xf32> to vector<16x16x128xf32>
    %56 = vector.extract_strided_slice %7 {offsets = [6, 0, 0], sizes = [1, 1, 128], strides = [1, 1, 1]} : vector<7x7x128xf32> to vector<1x1x128xf32>
    %57 = vector.shape_cast %56 : vector<1x1x128xf32> to vector<128xf32>
    %58 = vector.shape_cast %57 : vector<128xf32> to vector<1x1x128xf32>
    %59 = vector.broadcast %58 : vector<1x1x128xf32> to vector<16x16x128xf32>
    %60 = arith.mulf %55, %59 : vector<16x16x128xf32>
    %61 = arith.addf %47, %60 : vector<16x16x128xf32>
    %c26_i32 = arith.constant 26 : i32
    %62 = tpu.dynamic_rotate %6 by %c26_i32 dim 1 : vector<22x32x128xf32>, i32 -> vector<22x32x128xf32>
    %63 = vector.extract_strided_slice %62 {offsets = [0, 0, 0], sizes = [22, 16, 128], strides = [1, 1, 1]} : vector<22x32x128xf32> to vector<22x16x128xf32>
    %64 = vector.extract_strided_slice %63 {offsets = [0, 0, 0], sizes = [16, 16, 128], strides = [1, 1, 1]} : vector<22x16x128xf32> to vector<16x16x128xf32>
    %65 = vector.extract_strided_slice %7 {offsets = [0, 1, 0], sizes = [1, 1, 128], strides = [1, 1, 1]} : vector<7x7x128xf32> to vector<1x1x128xf32>
    %66 = vector.shape_cast %65 : vector<1x1x128xf32> to vector<128xf32>
    %67 = vector.shape_cast %66 : vector<128xf32> to vector<1x1x128xf32>
    %68 = vector.broadcast %67 : vector<1x1x128xf32> to vector<16x16x128xf32>
    %69 = arith.mulf %64, %68 : vector<16x16x128xf32>
    %70 = arith.addf %54, %69 : vector<16x16x128xf32>
    %71 = vector.extract_strided_slice %63 {offsets = [1, 0, 0], sizes = [16, 16, 128], strides = [1, 1, 1]} : vector<22x16x128xf32> to vector<16x16x128xf32>
    %72 = vector.extract_strided_slice %7 {offsets = [1, 1, 0], sizes = [1, 1, 128], strides = [1, 1, 1]} : vector<7x7x128xf32> to vector<1x1x128xf32>
    %73 = vector.shape_cast %72 : vector<1x1x128xf32> to vector<128xf32>
    %74 = vector.shape_cast %73 : vector<128xf32> to vector<1x1x128xf32>
    %75 = vector.broadcast %74 : vector<1x1x128xf32> to vector<16x16x128xf32>
    %76 = arith.mulf %71, %75 : vector<16x16x128xf32>
    %77 = arith.addf %61, %76 : vector<16x16x128xf32>
    %78 = vector.extract_strided_slice %63 {offsets = [2, 0, 0], sizes = [16, 16, 128], strides = [1, 1, 1]} : vector<22x16x128xf32> to vector<16x16x128xf32>
    %79 = vector.extract_strided_slice %7 {offsets = [2, 1, 0], sizes = [1, 1, 128], strides = [1, 1, 1]} : vector<7x7x128xf32> to vector<1x1x128xf32>
    %80 = vector.shape_cast %79 : vector<1x1x128xf32> to vector<128xf32>
    %81 = vector.shape_cast %80 : vector<128xf32> to vector<1x1x128xf32>
    %82 = vector.broadcast %81 : vector<1x1x128xf32> to vector<16x16x128xf32>
    %83 = arith.mulf %78, %82 : vector<16x16x128xf32>
    %84 = arith.addf %70, %83 : vector<16x16x128xf32>
    %85 = vector.extract_strided_slice %63 {offsets = [3, 0, 0], sizes = [16, 16, 128], strides = [1, 1, 1]} : vector<22x16x128xf32> to vector<16x16x128xf32>
    %86 = vector.extract_strided_slice %7 {offsets = [3, 1, 0], sizes = [1, 1, 128], strides = [1, 1, 1]} : vector<7x7x128xf32> to vector<1x1x128xf32>
    %87 = vector.shape_cast %86 : vector<1x1x128xf32> to vector<128xf32>
    %88 = vector.shape_cast %87 : vector<128xf32> to vector<1x1x128xf32>
    %89 = vector.broadcast %88 : vector<1x1x128xf32> to vector<16x16x128xf32>
    %90 = arith.mulf %85, %89 : vector<16x16x128xf32>
    %91 = arith.addf %77, %90 : vector<16x16x128xf32>
    %92 = vector.extract_strided_slice %63 {offsets = [4, 0, 0], sizes = [16, 16, 128], strides = [1, 1, 1]} : vector<22x16x128xf32> to vector<16x16x128xf32>
    %93 = vector.extract_strided_slice %7 {offsets = [4, 1, 0], sizes = [1, 1, 128], strides = [1, 1, 1]} : vector<7x7x128xf32> to vector<1x1x128xf32>
    %94 = vector.shape_cast %93 : vector<1x1x128xf32> to vector<128xf32>
    %95 = vector.shape_cast %94 : vector<128xf32> to vector<1x1x128xf32>
    %96 = vector.broadcast %95 : vector<1x1x128xf32> to vector<16x16x128xf32>
    %97 = arith.mulf %92, %96 : vector<16x16x128xf32>
    %98 = arith.addf %84, %97 : vector<16x16x128xf32>
    %99 = vector.extract_strided_slice %63 {offsets = [5, 0, 0], sizes = [16, 16, 128], strides = [1, 1, 1]} : vector<22x16x128xf32> to vector<16x16x128xf32>
    %100 = vector.extract_strided_slice %7 {offsets = [5, 1, 0], sizes = [1, 1, 128], strides = [1, 1, 1]} : vector<7x7x128xf32> to vector<1x1x128xf32>
    %101 = vector.shape_cast %100 : vector<1x1x128xf32> to vector<128xf32>
    %102 = vector.shape_cast %101 : vector<128xf32> to vector<1x1x128xf32>
    %103 = vector.broadcast %102 : vector<1x1x128xf32> to vector<16x16x128xf32>
    %104 = arith.mulf %99, %103 : vector<16x16x128xf32>
    %105 = arith.addf %91, %104 : vector<16x16x128xf32>
    %106 = vector.extract_strided_slice %63 {offsets = [6, 0, 0], sizes = [16, 16, 128], strides = [1, 1, 1]} : vector<22x16x128xf32> to vector<16x16x128xf32>
    %107 = vector.extract_strided_slice %7 {offsets = [6, 1, 0], sizes = [1, 1, 128], strides = [1, 1, 1]} : vector<7x7x128xf32> to vector<1x1x128xf32>
    %108 = vector.shape_cast %107 : vector<1x1x128xf32> to vector<128xf32>
    %109 = vector.shape_cast %108 : vector<128xf32> to vector<1x1x128xf32>
    %110 = vector.broadcast %109 : vector<1x1x128xf32> to vector<16x16x128xf32>
    %111 = arith.mulf %106, %110 : vector<16x16x128xf32>
    %112 = arith.addf %98, %111 : vector<16x16x128xf32>
    %c25_i32 = arith.constant 25 : i32
    %113 = tpu.dynamic_rotate %6 by %c25_i32 dim 1 : vector<22x32x128xf32>, i32 -> vector<22x32x128xf32>
    %114 = vector.extract_strided_slice %113 {offsets = [0, 0, 0], sizes = [22, 16, 128], strides = [1, 1, 1]} : vector<22x32x128xf32> to vector<22x16x128xf32>
    %115 = vector.extract_strided_slice %114 {offsets = [0, 0, 0], sizes = [16, 16, 128], strides = [1, 1, 1]} : vector<22x16x128xf32> to vector<16x16x128xf32>
    %116 = vector.extract_strided_slice %7 {offsets = [0, 2, 0], sizes = [1, 1, 128], strides = [1, 1, 1]} : vector<7x7x128xf32> to vector<1x1x128xf32>
    %117 = vector.shape_cast %116 : vector<1x1x128xf32> to vector<128xf32>
    %118 = vector.shape_cast %117 : vector<128xf32> to vector<1x1x128xf32>
    %119 = vector.broadcast %118 : vector<1x1x128xf32> to vector<16x16x128xf32>
    %120 = arith.mulf %115, %119 : vector<16x16x128xf32>
    %121 = arith.addf %105, %120 : vector<16x16x128xf32>
    %122 = vector.extract_strided_slice %114 {offsets = [1, 0, 0], sizes = [16, 16, 128], strides = [1, 1, 1]} : vector<22x16x128xf32> to vector<16x16x128xf32>
    %123 = vector.extract_strided_slice %7 {offsets = [1, 2, 0], sizes = [1, 1, 128], strides = [1, 1, 1]} : vector<7x7x128xf32> to vector<1x1x128xf32>
    %124 = vector.shape_cast %123 : vector<1x1x128xf32> to vector<128xf32>
    %125 = vector.shape_cast %124 : vector<128xf32> to vector<1x1x128xf32>
    %126 = vector.broadcast %125 : vector<1x1x128xf32> to vector<16x16x128xf32>
    %127 = arith.mulf %122, %126 : vector<16x16x128xf32>
    %128 = arith.addf %112, %127 : vector<16x16x128xf32>
    %129 = vector.extract_strided_slice %114 {offsets = [2, 0, 0], sizes = [16, 16, 128], strides = [1, 1, 1]} : vector<22x16x128xf32> to vector<16x16x128xf32>
    %130 = vector.extract_strided_slice %7 {offsets = [2, 2, 0], sizes = [1, 1, 128], strides = [1, 1, 1]} : vector<7x7x128xf32> to vector<1x1x128xf32>
    %131 = vector.shape_cast %130 : vector<1x1x128xf32> to vector<128xf32>
    %132 = vector.shape_cast %131 : vector<128xf32> to vector<1x1x128xf32>
    %133 = vector.broadcast %132 : vector<1x1x128xf32> to vector<16x16x128xf32>
    %134 = arith.mulf %129, %133 : vector<16x16x128xf32>
    %135 = arith.addf %121, %134 : vector<16x16x128xf32>
    %136 = vector.extract_strided_slice %114 {offsets = [3, 0, 0], sizes = [16, 16, 128], strides = [1, 1, 1]} : vector<22x16x128xf32> to vector<16x16x128xf32>
    %137 = vector.extract_strided_slice %7 {offsets = [3, 2, 0], sizes = [1, 1, 128], strides = [1, 1, 1]} : vector<7x7x128xf32> to vector<1x1x128xf32>
    %138 = vector.shape_cast %137 : vector<1x1x128xf32> to vector<128xf32>
    %139 = vector.shape_cast %138 : vector<128xf32> to vector<1x1x128xf32>
    %140 = vector.broadcast %139 : vector<1x1x128xf32> to vector<16x16x128xf32>
    %141 = arith.mulf %136, %140 : vector<16x16x128xf32>
    %142 = arith.addf %128, %141 : vector<16x16x128xf32>
    %143 = vector.extract_strided_slice %114 {offsets = [4, 0, 0], sizes = [16, 16, 128], strides = [1, 1, 1]} : vector<22x16x128xf32> to vector<16x16x128xf32>
    %144 = vector.extract_strided_slice %7 {offsets = [4, 2, 0], sizes = [1, 1, 128], strides = [1, 1, 1]} : vector<7x7x128xf32> to vector<1x1x128xf32>
    %145 = vector.shape_cast %144 : vector<1x1x128xf32> to vector<128xf32>
    %146 = vector.shape_cast %145 : vector<128xf32> to vector<1x1x128xf32>
    %147 = vector.broadcast %146 : vector<1x1x128xf32> to vector<16x16x128xf32>
    %148 = arith.mulf %143, %147 : vector<16x16x128xf32>
    %149 = arith.addf %135, %148 : vector<16x16x128xf32>
    %150 = vector.extract_strided_slice %114 {offsets = [5, 0, 0], sizes = [16, 16, 128], strides = [1, 1, 1]} : vector<22x16x128xf32> to vector<16x16x128xf32>
    %151 = vector.extract_strided_slice %7 {offsets = [5, 2, 0], sizes = [1, 1, 128], strides = [1, 1, 1]} : vector<7x7x128xf32> to vector<1x1x128xf32>
    %152 = vector.shape_cast %151 : vector<1x1x128xf32> to vector<128xf32>
    %153 = vector.shape_cast %152 : vector<128xf32> to vector<1x1x128xf32>
    %154 = vector.broadcast %153 : vector<1x1x128xf32> to vector<16x16x128xf32>
    %155 = arith.mulf %150, %154 : vector<16x16x128xf32>
    %156 = arith.addf %142, %155 : vector<16x16x128xf32>
    %157 = vector.extract_strided_slice %114 {offsets = [6, 0, 0], sizes = [16, 16, 128], strides = [1, 1, 1]} : vector<22x16x128xf32> to vector<16x16x128xf32>
    %158 = vector.extract_strided_slice %7 {offsets = [6, 2, 0], sizes = [1, 1, 128], strides = [1, 1, 1]} : vector<7x7x128xf32> to vector<1x1x128xf32>
    %159 = vector.shape_cast %158 : vector<1x1x128xf32> to vector<128xf32>
    %160 = vector.shape_cast %159 : vector<128xf32> to vector<1x1x128xf32>
    %161 = vector.broadcast %160 : vector<1x1x128xf32> to vector<16x16x128xf32>
    %162 = arith.mulf %157, %161 : vector<16x16x128xf32>
    %163 = arith.addf %149, %162 : vector<16x16x128xf32>
    %164 = vector.extract_strided_slice %6 {offsets = [0, 8, 0], sizes = [22, 16, 128], strides = [1, 1, 1]} : vector<22x32x128xf32> to vector<22x16x128xf32>
    %165 = vector.extract_strided_slice %164 {offsets = [0, 0, 0], sizes = [16, 16, 128], strides = [1, 1, 1]} : vector<22x16x128xf32> to vector<16x16x128xf32>
    %166 = vector.extract_strided_slice %7 {offsets = [0, 3, 0], sizes = [1, 1, 128], strides = [1, 1, 1]} : vector<7x7x128xf32> to vector<1x1x128xf32>
    %167 = vector.shape_cast %166 : vector<1x1x128xf32> to vector<128xf32>
    %168 = vector.shape_cast %167 : vector<128xf32> to vector<1x1x128xf32>
    %169 = vector.broadcast %168 : vector<1x1x128xf32> to vector<16x16x128xf32>
    %170 = arith.mulf %165, %169 : vector<16x16x128xf32>
    %171 = arith.addf %156, %170 : vector<16x16x128xf32>
    %172 = vector.extract_strided_slice %164 {offsets = [1, 0, 0], sizes = [16, 16, 128], strides = [1, 1, 1]} : vector<22x16x128xf32> to vector<16x16x128xf32>
    %173 = vector.extract_strided_slice %7 {offsets = [1, 3, 0], sizes = [1, 1, 128], strides = [1, 1, 1]} : vector<7x7x128xf32> to vector<1x1x128xf32>
    %174 = vector.shape_cast %173 : vector<1x1x128xf32> to vector<128xf32>
    %175 = vector.shape_cast %174 : vector<128xf32> to vector<1x1x128xf32>
    %176 = vector.broadcast %175 : vector<1x1x128xf32> to vector<16x16x128xf32>
    %177 = arith.mulf %172, %176 : vector<16x16x128xf32>
    %178 = arith.addf %163, %177 : vector<16x16x128xf32>
    %179 = vector.extract_strided_slice %164 {offsets = [2, 0, 0], sizes = [16, 16, 128], strides = [1, 1, 1]} : vector<22x16x128xf32> to vector<16x16x128xf32>
    %180 = vector.extract_strided_slice %7 {offsets = [2, 3, 0], sizes = [1, 1, 128], strides = [1, 1, 1]} : vector<7x7x128xf32> to vector<1x1x128xf32>
    %181 = vector.shape_cast %180 : vector<1x1x128xf32> to vector<128xf32>
    %182 = vector.shape_cast %181 : vector<128xf32> to vector<1x1x128xf32>
    %183 = vector.broadcast %182 : vector<1x1x128xf32> to vector<16x16x128xf32>
    %184 = arith.mulf %179, %183 : vector<16x16x128xf32>
    %185 = arith.addf %171, %184 : vector<16x16x128xf32>
    %186 = vector.extract_strided_slice %164 {offsets = [3, 0, 0], sizes = [16, 16, 128], strides = [1, 1, 1]} : vector<22x16x128xf32> to vector<16x16x128xf32>
    %187 = vector.extract_strided_slice %7 {offsets = [3, 3, 0], sizes = [1, 1, 128], strides = [1, 1, 1]} : vector<7x7x128xf32> to vector<1x1x128xf32>
    %188 = vector.shape_cast %187 : vector<1x1x128xf32> to vector<128xf32>
    %189 = vector.shape_cast %188 : vector<128xf32> to vector<1x1x128xf32>
    %190 = vector.broadcast %189 : vector<1x1x128xf32> to vector<16x16x128xf32>
    %191 = arith.mulf %186, %190 : vector<16x16x128xf32>
    %192 = arith.addf %178, %191 : vector<16x16x128xf32>
    %193 = vector.extract_strided_slice %164 {offsets = [4, 0, 0], sizes = [16, 16, 128], strides = [1, 1, 1]} : vector<22x16x128xf32> to vector<16x16x128xf32>
    %194 = vector.extract_strided_slice %7 {offsets = [4, 3, 0], sizes = [1, 1, 128], strides = [1, 1, 1]} : vector<7x7x128xf32> to vector<1x1x128xf32>
    %195 = vector.shape_cast %194 : vector<1x1x128xf32> to vector<128xf32>
    %196 = vector.shape_cast %195 : vector<128xf32> to vector<1x1x128xf32>
    %197 = vector.broadcast %196 : vector<1x1x128xf32> to vector<16x16x128xf32>
    %198 = arith.mulf %193, %197 : vector<16x16x128xf32>
    %199 = arith.addf %185, %198 : vector<16x16x128xf32>
    %200 = vector.extract_strided_slice %164 {offsets = [5, 0, 0], sizes = [16, 16, 128], strides = [1, 1, 1]} : vector<22x16x128xf32> to vector<16x16x128xf32>
    %201 = vector.extract_strided_slice %7 {offsets = [5, 3, 0], sizes = [1, 1, 128], strides = [1, 1, 1]} : vector<7x7x128xf32> to vector<1x1x128xf32>
    %202 = vector.shape_cast %201 : vector<1x1x128xf32> to vector<128xf32>
    %203 = vector.shape_cast %202 : vector<128xf32> to vector<1x1x128xf32>
    %204 = vector.broadcast %203 : vector<1x1x128xf32> to vector<16x16x128xf32>
    %205 = arith.mulf %200, %204 : vector<16x16x128xf32>
    %206 = arith.addf %192, %205 : vector<16x16x128xf32>
    %207 = vector.extract_strided_slice %164 {offsets = [6, 0, 0], sizes = [16, 16, 128], strides = [1, 1, 1]} : vector<22x16x128xf32> to vector<16x16x128xf32>
    %208 = vector.extract_strided_slice %7 {offsets = [6, 3, 0], sizes = [1, 1, 128], strides = [1, 1, 1]} : vector<7x7x128xf32> to vector<1x1x128xf32>
    %209 = vector.shape_cast %208 : vector<1x1x128xf32> to vector<128xf32>
    %210 = vector.shape_cast %209 : vector<128xf32> to vector<1x1x128xf32>
    %211 = vector.broadcast %210 : vector<1x1x128xf32> to vector<16x16x128xf32>
    %212 = arith.mulf %207, %211 : vector<16x16x128xf32>
    %213 = arith.addf %199, %212 : vector<16x16x128xf32>
    %c23_i32 = arith.constant 23 : i32
    %214 = tpu.dynamic_rotate %6 by %c23_i32 dim 1 : vector<22x32x128xf32>, i32 -> vector<22x32x128xf32>
    %215 = vector.extract_strided_slice %214 {offsets = [0, 0, 0], sizes = [22, 16, 128], strides = [1, 1, 1]} : vector<22x32x128xf32> to vector<22x16x128xf32>
    %216 = vector.extract_strided_slice %215 {offsets = [0, 0, 0], sizes = [16, 16, 128], strides = [1, 1, 1]} : vector<22x16x128xf32> to vector<16x16x128xf32>
    %217 = vector.extract_strided_slice %7 {offsets = [0, 4, 0], sizes = [1, 1, 128], strides = [1, 1, 1]} : vector<7x7x128xf32> to vector<1x1x128xf32>
    %218 = vector.shape_cast %217 : vector<1x1x128xf32> to vector<128xf32>
    %219 = vector.shape_cast %218 : vector<128xf32> to vector<1x1x128xf32>
    %220 = vector.broadcast %219 : vector<1x1x128xf32> to vector<16x16x128xf32>
    %221 = arith.mulf %216, %220 : vector<16x16x128xf32>
    %222 = arith.addf %206, %221 : vector<16x16x128xf32>
    %223 = vector.extract_strided_slice %215 {offsets = [1, 0, 0], sizes = [16, 16, 128], strides = [1, 1, 1]} : vector<22x16x128xf32> to vector<16x16x128xf32>
    %224 = vector.extract_strided_slice %7 {offsets = [1, 4, 0], sizes = [1, 1, 128], strides = [1, 1, 1]} : vector<7x7x128xf32> to vector<1x1x128xf32>
    %225 = vector.shape_cast %224 : vector<1x1x128xf32> to vector<128xf32>
    %226 = vector.shape_cast %225 : vector<128xf32> to vector<1x1x128xf32>
    %227 = vector.broadcast %226 : vector<1x1x128xf32> to vector<16x16x128xf32>
    %228 = arith.mulf %223, %227 : vector<16x16x128xf32>
    %229 = arith.addf %213, %228 : vector<16x16x128xf32>
    %230 = vector.extract_strided_slice %215 {offsets = [2, 0, 0], sizes = [16, 16, 128], strides = [1, 1, 1]} : vector<22x16x128xf32> to vector<16x16x128xf32>
    %231 = vector.extract_strided_slice %7 {offsets = [2, 4, 0], sizes = [1, 1, 128], strides = [1, 1, 1]} : vector<7x7x128xf32> to vector<1x1x128xf32>
    %232 = vector.shape_cast %231 : vector<1x1x128xf32> to vector<128xf32>
    %233 = vector.shape_cast %232 : vector<128xf32> to vector<1x1x128xf32>
    %234 = vector.broadcast %233 : vector<1x1x128xf32> to vector<16x16x128xf32>
    %235 = arith.mulf %230, %234 : vector<16x16x128xf32>
    %236 = arith.addf %222, %235 : vector<16x16x128xf32>
    %237 = vector.extract_strided_slice %215 {offsets = [3, 0, 0], sizes = [16, 16, 128], strides = [1, 1, 1]} : vector<22x16x128xf32> to vector<16x16x128xf32>
    %238 = vector.extract_strided_slice %7 {offsets = [3, 4, 0], sizes = [1, 1, 128], strides = [1, 1, 1]} : vector<7x7x128xf32> to vector<1x1x128xf32>
    %239 = vector.shape_cast %238 : vector<1x1x128xf32> to vector<128xf32>
    %240 = vector.shape_cast %239 : vector<128xf32> to vector<1x1x128xf32>
    %241 = vector.broadcast %240 : vector<1x1x128xf32> to vector<16x16x128xf32>
    %242 = arith.mulf %237, %241 : vector<16x16x128xf32>
    %243 = arith.addf %229, %242 : vector<16x16x128xf32>
    %244 = vector.extract_strided_slice %215 {offsets = [4, 0, 0], sizes = [16, 16, 128], strides = [1, 1, 1]} : vector<22x16x128xf32> to vector<16x16x128xf32>
    %245 = vector.extract_strided_slice %7 {offsets = [4, 4, 0], sizes = [1, 1, 128], strides = [1, 1, 1]} : vector<7x7x128xf32> to vector<1x1x128xf32>
    %246 = vector.shape_cast %245 : vector<1x1x128xf32> to vector<128xf32>
    %247 = vector.shape_cast %246 : vector<128xf32> to vector<1x1x128xf32>
    %248 = vector.broadcast %247 : vector<1x1x128xf32> to vector<16x16x128xf32>
    %249 = arith.mulf %244, %248 : vector<16x16x128xf32>
    %250 = arith.addf %236, %249 : vector<16x16x128xf32>
    %251 = vector.extract_strided_slice %215 {offsets = [5, 0, 0], sizes = [16, 16, 128], strides = [1, 1, 1]} : vector<22x16x128xf32> to vector<16x16x128xf32>
    %252 = vector.extract_strided_slice %7 {offsets = [5, 4, 0], sizes = [1, 1, 128], strides = [1, 1, 1]} : vector<7x7x128xf32> to vector<1x1x128xf32>
    %253 = vector.shape_cast %252 : vector<1x1x128xf32> to vector<128xf32>
    %254 = vector.shape_cast %253 : vector<128xf32> to vector<1x1x128xf32>
    %255 = vector.broadcast %254 : vector<1x1x128xf32> to vector<16x16x128xf32>
    %256 = arith.mulf %251, %255 : vector<16x16x128xf32>
    %257 = arith.addf %243, %256 : vector<16x16x128xf32>
    %258 = vector.extract_strided_slice %215 {offsets = [6, 0, 0], sizes = [16, 16, 128], strides = [1, 1, 1]} : vector<22x16x128xf32> to vector<16x16x128xf32>
    %259 = vector.extract_strided_slice %7 {offsets = [6, 4, 0], sizes = [1, 1, 128], strides = [1, 1, 1]} : vector<7x7x128xf32> to vector<1x1x128xf32>
    %260 = vector.shape_cast %259 : vector<1x1x128xf32> to vector<128xf32>
    %261 = vector.shape_cast %260 : vector<128xf32> to vector<1x1x128xf32>
    %262 = vector.broadcast %261 : vector<1x1x128xf32> to vector<16x16x128xf32>
    %263 = arith.mulf %258, %262 : vector<16x16x128xf32>
    %264 = arith.addf %250, %263 : vector<16x16x128xf32>
    %c22_i32 = arith.constant 22 : i32
    %265 = tpu.dynamic_rotate %6 by %c22_i32 dim 1 : vector<22x32x128xf32>, i32 -> vector<22x32x128xf32>
    %266 = vector.extract_strided_slice %265 {offsets = [0, 0, 0], sizes = [22, 16, 128], strides = [1, 1, 1]} : vector<22x32x128xf32> to vector<22x16x128xf32>
    %267 = vector.extract_strided_slice %266 {offsets = [0, 0, 0], sizes = [16, 16, 128], strides = [1, 1, 1]} : vector<22x16x128xf32> to vector<16x16x128xf32>
    %268 = vector.extract_strided_slice %7 {offsets = [0, 5, 0], sizes = [1, 1, 128], strides = [1, 1, 1]} : vector<7x7x128xf32> to vector<1x1x128xf32>
    %269 = vector.shape_cast %268 : vector<1x1x128xf32> to vector<128xf32>
    %270 = vector.shape_cast %269 : vector<128xf32> to vector<1x1x128xf32>
    %271 = vector.broadcast %270 : vector<1x1x128xf32> to vector<16x16x128xf32>
    %272 = arith.mulf %267, %271 : vector<16x16x128xf32>
    %273 = arith.addf %257, %272 : vector<16x16x128xf32>
    %274 = vector.extract_strided_slice %266 {offsets = [1, 0, 0], sizes = [16, 16, 128], strides = [1, 1, 1]} : vector<22x16x128xf32> to vector<16x16x128xf32>
    %275 = vector.extract_strided_slice %7 {offsets = [1, 5, 0], sizes = [1, 1, 128], strides = [1, 1, 1]} : vector<7x7x128xf32> to vector<1x1x128xf32>
    %276 = vector.shape_cast %275 : vector<1x1x128xf32> to vector<128xf32>
    %277 = vector.shape_cast %276 : vector<128xf32> to vector<1x1x128xf32>
    %278 = vector.broadcast %277 : vector<1x1x128xf32> to vector<16x16x128xf32>
    %279 = arith.mulf %274, %278 : vector<16x16x128xf32>
    %280 = arith.addf %264, %279 : vector<16x16x128xf32>
    %281 = vector.extract_strided_slice %266 {offsets = [2, 0, 0], sizes = [16, 16, 128], strides = [1, 1, 1]} : vector<22x16x128xf32> to vector<16x16x128xf32>
    %282 = vector.extract_strided_slice %7 {offsets = [2, 5, 0], sizes = [1, 1, 128], strides = [1, 1, 1]} : vector<7x7x128xf32> to vector<1x1x128xf32>
    %283 = vector.shape_cast %282 : vector<1x1x128xf32> to vector<128xf32>
    %284 = vector.shape_cast %283 : vector<128xf32> to vector<1x1x128xf32>
    %285 = vector.broadcast %284 : vector<1x1x128xf32> to vector<16x16x128xf32>
    %286 = arith.mulf %281, %285 : vector<16x16x128xf32>
    %287 = arith.addf %273, %286 : vector<16x16x128xf32>
    %288 = vector.extract_strided_slice %266 {offsets = [3, 0, 0], sizes = [16, 16, 128], strides = [1, 1, 1]} : vector<22x16x128xf32> to vector<16x16x128xf32>
    %289 = vector.extract_strided_slice %7 {offsets = [3, 5, 0], sizes = [1, 1, 128], strides = [1, 1, 1]} : vector<7x7x128xf32> to vector<1x1x128xf32>
    %290 = vector.shape_cast %289 : vector<1x1x128xf32> to vector<128xf32>
    %291 = vector.shape_cast %290 : vector<128xf32> to vector<1x1x128xf32>
    %292 = vector.broadcast %291 : vector<1x1x128xf32> to vector<16x16x128xf32>
    %293 = arith.mulf %288, %292 : vector<16x16x128xf32>
    %294 = arith.addf %280, %293 : vector<16x16x128xf32>
    %295 = vector.extract_strided_slice %266 {offsets = [4, 0, 0], sizes = [16, 16, 128], strides = [1, 1, 1]} : vector<22x16x128xf32> to vector<16x16x128xf32>
    %296 = vector.extract_strided_slice %7 {offsets = [4, 5, 0], sizes = [1, 1, 128], strides = [1, 1, 1]} : vector<7x7x128xf32> to vector<1x1x128xf32>
    %297 = vector.shape_cast %296 : vector<1x1x128xf32> to vector<128xf32>
    %298 = vector.shape_cast %297 : vector<128xf32> to vector<1x1x128xf32>
    %299 = vector.broadcast %298 : vector<1x1x128xf32> to vector<16x16x128xf32>
    %300 = arith.mulf %295, %299 : vector<16x16x128xf32>
    %301 = arith.addf %287, %300 : vector<16x16x128xf32>
    %302 = vector.extract_strided_slice %266 {offsets = [5, 0, 0], sizes = [16, 16, 128], strides = [1, 1, 1]} : vector<22x16x128xf32> to vector<16x16x128xf32>
    %303 = vector.extract_strided_slice %7 {offsets = [5, 5, 0], sizes = [1, 1, 128], strides = [1, 1, 1]} : vector<7x7x128xf32> to vector<1x1x128xf32>
    %304 = vector.shape_cast %303 : vector<1x1x128xf32> to vector<128xf32>
    %305 = vector.shape_cast %304 : vector<128xf32> to vector<1x1x128xf32>
    %306 = vector.broadcast %305 : vector<1x1x128xf32> to vector<16x16x128xf32>
    %307 = arith.mulf %302, %306 : vector<16x16x128xf32>
    %308 = arith.addf %294, %307 : vector<16x16x128xf32>
    %309 = vector.extract_strided_slice %266 {offsets = [6, 0, 0], sizes = [16, 16, 128], strides = [1, 1, 1]} : vector<22x16x128xf32> to vector<16x16x128xf32>
    %310 = vector.extract_strided_slice %7 {offsets = [6, 5, 0], sizes = [1, 1, 128], strides = [1, 1, 1]} : vector<7x7x128xf32> to vector<1x1x128xf32>
    %311 = vector.shape_cast %310 : vector<1x1x128xf32> to vector<128xf32>
    %312 = vector.shape_cast %311 : vector<128xf32> to vector<1x1x128xf32>
    %313 = vector.broadcast %312 : vector<1x1x128xf32> to vector<16x16x128xf32>
    %314 = arith.mulf %309, %313 : vector<16x16x128xf32>
    %315 = arith.addf %301, %314 : vector<16x16x128xf32>
    %c21_i32 = arith.constant 21 : i32
    %316 = tpu.dynamic_rotate %6 by %c21_i32 dim 1 : vector<22x32x128xf32>, i32 -> vector<22x32x128xf32>
    %317 = vector.extract_strided_slice %316 {offsets = [0, 0, 0], sizes = [22, 16, 128], strides = [1, 1, 1]} : vector<22x32x128xf32> to vector<22x16x128xf32>
    %318 = vector.extract_strided_slice %317 {offsets = [0, 0, 0], sizes = [16, 16, 128], strides = [1, 1, 1]} : vector<22x16x128xf32> to vector<16x16x128xf32>
    %319 = vector.extract_strided_slice %7 {offsets = [0, 6, 0], sizes = [1, 1, 128], strides = [1, 1, 1]} : vector<7x7x128xf32> to vector<1x1x128xf32>
    %320 = vector.shape_cast %319 : vector<1x1x128xf32> to vector<128xf32>
    %321 = vector.shape_cast %320 : vector<128xf32> to vector<1x1x128xf32>
    %322 = vector.broadcast %321 : vector<1x1x128xf32> to vector<16x16x128xf32>
    %323 = arith.mulf %318, %322 : vector<16x16x128xf32>
    %324 = arith.addf %308, %323 : vector<16x16x128xf32>
    %325 = vector.extract_strided_slice %317 {offsets = [1, 0, 0], sizes = [16, 16, 128], strides = [1, 1, 1]} : vector<22x16x128xf32> to vector<16x16x128xf32>
    %326 = vector.extract_strided_slice %7 {offsets = [1, 6, 0], sizes = [1, 1, 128], strides = [1, 1, 1]} : vector<7x7x128xf32> to vector<1x1x128xf32>
    %327 = vector.shape_cast %326 : vector<1x1x128xf32> to vector<128xf32>
    %328 = vector.shape_cast %327 : vector<128xf32> to vector<1x1x128xf32>
    %329 = vector.broadcast %328 : vector<1x1x128xf32> to vector<16x16x128xf32>
    %330 = arith.mulf %325, %329 : vector<16x16x128xf32>
    %331 = arith.addf %315, %330 : vector<16x16x128xf32>
    %332 = vector.extract_strided_slice %317 {offsets = [2, 0, 0], sizes = [16, 16, 128], strides = [1, 1, 1]} : vector<22x16x128xf32> to vector<16x16x128xf32>
    %333 = vector.extract_strided_slice %7 {offsets = [2, 6, 0], sizes = [1, 1, 128], strides = [1, 1, 1]} : vector<7x7x128xf32> to vector<1x1x128xf32>
    %334 = vector.shape_cast %333 : vector<1x1x128xf32> to vector<128xf32>
    %335 = vector.shape_cast %334 : vector<128xf32> to vector<1x1x128xf32>
    %336 = vector.broadcast %335 : vector<1x1x128xf32> to vector<16x16x128xf32>
    %337 = arith.mulf %332, %336 : vector<16x16x128xf32>
    %338 = arith.addf %324, %337 : vector<16x16x128xf32>
    %339 = vector.extract_strided_slice %317 {offsets = [3, 0, 0], sizes = [16, 16, 128], strides = [1, 1, 1]} : vector<22x16x128xf32> to vector<16x16x128xf32>
    %340 = vector.extract_strided_slice %7 {offsets = [3, 6, 0], sizes = [1, 1, 128], strides = [1, 1, 1]} : vector<7x7x128xf32> to vector<1x1x128xf32>
    %341 = vector.shape_cast %340 : vector<1x1x128xf32> to vector<128xf32>
    %342 = vector.shape_cast %341 : vector<128xf32> to vector<1x1x128xf32>
    %343 = vector.broadcast %342 : vector<1x1x128xf32> to vector<16x16x128xf32>
    %344 = arith.mulf %339, %343 : vector<16x16x128xf32>
    %345 = arith.addf %331, %344 : vector<16x16x128xf32>
    %346 = vector.extract_strided_slice %317 {offsets = [4, 0, 0], sizes = [16, 16, 128], strides = [1, 1, 1]} : vector<22x16x128xf32> to vector<16x16x128xf32>
    %347 = vector.extract_strided_slice %7 {offsets = [4, 6, 0], sizes = [1, 1, 128], strides = [1, 1, 1]} : vector<7x7x128xf32> to vector<1x1x128xf32>
    %348 = vector.shape_cast %347 : vector<1x1x128xf32> to vector<128xf32>
    %349 = vector.shape_cast %348 : vector<128xf32> to vector<1x1x128xf32>
    %350 = vector.broadcast %349 : vector<1x1x128xf32> to vector<16x16x128xf32>
    %351 = arith.mulf %346, %350 : vector<16x16x128xf32>
    %352 = arith.addf %338, %351 : vector<16x16x128xf32>
    %353 = vector.extract_strided_slice %317 {offsets = [5, 0, 0], sizes = [16, 16, 128], strides = [1, 1, 1]} : vector<22x16x128xf32> to vector<16x16x128xf32>
    %354 = vector.extract_strided_slice %7 {offsets = [5, 6, 0], sizes = [1, 1, 128], strides = [1, 1, 1]} : vector<7x7x128xf32> to vector<1x1x128xf32>
    %355 = vector.shape_cast %354 : vector<1x1x128xf32> to vector<128xf32>
    %356 = vector.shape_cast %355 : vector<128xf32> to vector<1x1x128xf32>
    %357 = vector.broadcast %356 : vector<1x1x128xf32> to vector<16x16x128xf32>
    %358 = arith.mulf %353, %357 : vector<16x16x128xf32>
    %359 = arith.addf %345, %358 : vector<16x16x128xf32>
    %360 = vector.extract_strided_slice %317 {offsets = [6, 0, 0], sizes = [16, 16, 128], strides = [1, 1, 1]} : vector<22x16x128xf32> to vector<16x16x128xf32>
    %361 = vector.extract_strided_slice %7 {offsets = [6, 6, 0], sizes = [1, 1, 128], strides = [1, 1, 1]} : vector<7x7x128xf32> to vector<1x1x128xf32>
    %362 = vector.shape_cast %361 : vector<1x1x128xf32> to vector<128xf32>
    %363 = vector.shape_cast %362 : vector<128xf32> to vector<1x1x128xf32>
    %364 = vector.broadcast %363 : vector<1x1x128xf32> to vector<16x16x128xf32>
    %365 = arith.mulf %360, %364 : vector<16x16x128xf32>
    %366 = arith.addf %352, %365 : vector<16x16x128xf32>
    %367 = arith.addf %366, %359 : vector<16x16x128xf32>
    %cst = arith.constant dense<0.000000e+00> : vector<16x16xf32>
    %368 = vector.multi_reduction <add>, %367, %cst [2] : vector<16x16x128xf32> to vector<16x16xf32>
    %369 = vector.shape_cast %368 : vector<16x16xf32> to vector<16x16x1xf32>
    %cst_13 = arith.constant 1.250000e-01 : f32
    %370 = vector.broadcast %cst_13 : f32 to vector<16x16x1xf32>
    %371 = arith.mulf %369, %370 : vector<16x16x1xf32>
    %372 = vector.broadcast %371 : vector<16x16x1xf32> to vector<16x16x128xf32>
    %373 = arith.subf %367, %372 : vector<16x16x128xf32>
    %374 = arith.mulf %373, %373 : vector<16x16x128xf32>
    %cst_14 = arith.constant dense<0.000000e+00> : vector<16x16xf32>
    %375 = vector.multi_reduction <add>, %374, %cst_14 [2] : vector<16x16x128xf32> to vector<16x16xf32>
    %376 = vector.shape_cast %375 : vector<16x16xf32> to vector<16x16x1xf32>
    %377 = arith.mulf %371, %371 : vector<16x16x1xf32>
    %cst_15 = arith.constant 1.200000e+02 : f32
    %378 = vector.broadcast %cst_15 : f32 to vector<16x16x1xf32>
    %379 = arith.mulf %378, %377 : vector<16x16x1xf32>
    %380 = arith.subf %376, %379 : vector<16x16x1xf32>
    %cst_16 = arith.constant 1.250000e-01 : f32
    %381 = vector.broadcast %cst_16 : f32 to vector<16x16x1xf32>
    %382 = arith.mulf %380, %381 : vector<16x16x1xf32>
    %cst_17 = arith.constant 9.99999997E-7 : f32
    %383 = vector.broadcast %cst_17 : f32 to vector<16x16x1xf32>
    %384 = arith.addf %382, %383 : vector<16x16x1xf32>
    %385 = math.rsqrt %384 : vector<16x16x1xf32>
    %386 = vector.broadcast %385 : vector<16x16x1xf32> to vector<16x16x128xf32>
    %387 = arith.mulf %373, %386 : vector<16x16x128xf32>
    %c0_18 = arith.constant 0 : index
    %c0_19 = arith.constant 0 : index
    %388 = vector.load %arg4[%c0_18, %c0_19] : memref<1x128xf32, #tpu.memory_space<vmem>>, vector<1x128xf32>
    %389 = vector.shape_cast %388 : vector<1x128xf32> to vector<128xf32>
    %390 = vector.shape_cast %389 : vector<128xf32> to vector<1x1x128xf32>
    %391 = vector.broadcast %390 : vector<1x1x128xf32> to vector<16x16x128xf32>
    %392 = arith.mulf %387, %391 : vector<16x16x128xf32>
    %c0_20 = arith.constant 0 : index
    %c0_21 = arith.constant 0 : index
    %393 = vector.load %arg5[%c0_20, %c0_21] : memref<1x128xf32, #tpu.memory_space<vmem>>, vector<1x128xf32>
    %394 = vector.shape_cast %393 : vector<1x128xf32> to vector<128xf32>
    %395 = vector.shape_cast %394 : vector<128xf32> to vector<1x1x128xf32>
    %396 = vector.broadcast %395 : vector<1x1x128xf32> to vector<16x16x128xf32>
    %397 = arith.addf %392, %396 : vector<16x16x128xf32>
    %398 = vector.shape_cast %397 : vector<16x16x128xf32> to vector<256x128xf32>
    %399 = arith.truncf %398 : vector<256x128xf32> to vector<256x128xbf16>
    %c0_22 = arith.constant 0 : index
    %c0_23 = arith.constant 0 : index
    %400 = vector.load %arg15[%c0_22, %c0_23] : memref<256x128xbf16, #tpu.memory_space<vmem>>, vector<256x128xbf16>
    tpu.vector_store %arg15[%c0_22, %c0_23], %399 {strides = array<i32>} : memref<256x128xbf16, #tpu.memory_space<vmem>>, vector<256x128xbf16>,
    %c0_24 = arith.constant 0 : index
    %c0_25 = arith.constant 0 : index
    %401 = vector.load %arg6[%c0_24, %c0_25] : memref<128x128xbf16, #tpu.memory_space<vmem>>, vector<128x128xbf16>
    %c0_26 = arith.constant 0 : index
    %c0_27 = arith.constant 0 : index
    %402 = vector.load %arg7[%c0_26, %c0_27] : memref<1x128xf32, #tpu.memory_space<vmem>>, vector<1x128xf32>
    %403 = vector.shape_cast %402 : vector<1x128xf32> to vector<128xf32>
    %cst_28 = arith.constant 0.000000e+00 : f32
    %404 = vector.broadcast %cst_28 : f32 to vector<1x128xf32>
    %c0_i32_29 = arith.constant 0 : i32
    %c2_i32 = arith.constant 2 : i32
    %405 = arith.addi %c0_i32_29, %c2_i32 : i32
    %c1_i32 = arith.constant 1 : i32
    %406 = scf.for %arg17 = %c0_i32_29 to %405 step %c1_i32 iter_args(%arg18 = %404) -> (vector<1x128xf32>)  : i32 {
      %c128_i32 = arith.constant 128 : i32
      %426 = arith.muli %arg17, %c128_i32 : i32
      %427 = tpu.assume_multiple %426, 128 : i32
      %428 = arith.index_cast %427 : i32 to index
      %c0_48 = arith.constant 0 : index
      %429 = vector.load %arg15[%428, %c0_48] : memref<256x128xbf16, #tpu.memory_space<vmem>>, vector<128x128xbf16>
      %cst_49 = arith.constant dense<0.000000e+00> : vector<128x128xf32>
      %430 = tpu.matmul %429, %401, %cst_49 {dimension_numbers = #tpu.dot_dimension_numbers<[1], [0], [0], [1], [0, 0, 1, 1], [], []>} : vector<128x128xbf16>, vector<128x128xbf16>, vector<128x128xf32> -> vector<128x128xf32>
      %431 = vector.shape_cast %403 : vector<128xf32> to vector<1x128xf32>
      %432 = vector.broadcast %431 : vector<1x128xf32> to vector<128x128xf32>
      %433 = arith.addf %430, %432 : vector<128x128xf32>
      %cst_50 = arith.constant 5.000000e-01 : f32
      %434 = vector.broadcast %cst_50 : f32 to vector<128x128xf32>
      %435 = arith.mulf %434, %433 : vector<128x128xf32>
      %436 = arith.mulf %433, %433 : vector<128x128xf32>
      %437 = arith.mulf %436, %433 : vector<128x128xf32>
      %cst_51 = arith.constant 4.471500e-02 : f32
      %438 = vector.broadcast %cst_51 : f32 to vector<128x128xf32>
      %439 = arith.mulf %438, %437 : vector<128x128xf32>
      %440 = arith.addf %433, %439 : vector<128x128xf32>
      %cst_52 = arith.constant 0.797884583 : f32
      %441 = vector.broadcast %cst_52 : f32 to vector<128x128xf32>
      %442 = arith.mulf %441, %440 : vector<128x128xf32>
      %443 = math.tanh %442 : vector<128x128xf32>
      %cst_53 = arith.constant 1.000000e+00 : f32
      %444 = vector.broadcast %cst_53 : f32 to vector<128x128xf32>
      %445 = arith.addf %444, %443 : vector<128x128xf32>
      %446 = arith.mulf %435, %445 : vector<128x128xf32>
      %447 = arith.truncf %446 : vector<128x128xf32> to vector<128x128xbf16>
      %448 = arith.index_cast %427 : i32 to index
      %c0_54 = arith.constant 0 : index
      %449 = vector.load %arg16[%448, %c0_54] : memref<256x128xbf16, #tpu.memory_space<vmem>>, vector<128x128xbf16>
      tpu.vector_store %arg16[%448, %c0_54], %447 {strides = array<i32>} : memref<256x128xbf16, #tpu.memory_space<vmem>>, vector<128x128xbf16>,
      %450 = arith.mulf %446, %446 : vector<128x128xf32>
      %cst_55 = arith.constant dense<0.000000e+00> : vector<128xf32>
      %451 = vector.multi_reduction <add>, %450, %cst_55 [0] : vector<128x128xf32> to vector<128xf32>
      %452 = vector.shape_cast %451 : vector<128xf32> to vector<1x128xf32>
      %453 = arith.addf %arg18, %452 : vector<1x128xf32>
      scf.yield %453 : vector<1x128xf32>
    }
    %c2_i32_30 = arith.constant 2 : i32
    %407 = math.sqrt %406 : vector<1x128xf32>
    %cst_31 = arith.constant dense<0.000000e+00> : vector<1xf32>
    %408 = vector.multi_reduction <add>, %407, %cst_31 [1] : vector<1x128xf32> to vector<1xf32>
    %409 = vector.shape_cast %408 : vector<1xf32> to vector<1x1xf32>
    %cst_32 = arith.constant 3.125000e-02 : f32
    %410 = vector.broadcast %cst_32 : f32 to vector<1x1xf32>
    %411 = arith.mulf %409, %410 : vector<1x1xf32>
    %cst_33 = arith.constant 9.99999997E-7 : f32
    %412 = vector.broadcast %cst_33 : f32 to vector<1x1xf32>
    %413 = arith.addf %411, %412 : vector<1x1xf32>
    %414 = vector.broadcast %413 : vector<1x1xf32> to vector<1x128xf32>
    %415 = arith.divf %407, %414 : vector<1x128xf32>
    %c0_34 = arith.constant 0 : index
    %c0_35 = arith.constant 0 : index
    %416 = vector.load %arg10[%c0_34, %c0_35] : memref<128x128xbf16, #tpu.memory_space<vmem>>, vector<128x128xbf16>
    %c0_36 = arith.constant 0 : index
    %c0_37 = arith.constant 0 : index
    %417 = vector.load %arg11[%c0_36, %c0_37] : memref<1x128xf32, #tpu.memory_space<vmem>>, vector<1x128xf32>
    %418 = vector.shape_cast %417 : vector<1x128xf32> to vector<128xf32>
    %c0_38 = arith.constant 0 : index
    %c0_39 = arith.constant 0 : index
    %419 = vector.load %arg12[%c0_38, %c0_39] : memref<1x128xf32, #tpu.memory_space<vmem>>, vector<1x128xf32>
    %420 = vector.shape_cast %419 : vector<1x128xf32> to vector<128xf32>
    %c0_40 = arith.constant 0 : index
    %c0_41 = arith.constant 0 : index
    %421 = vector.load %arg8[%c0_40, %c0_41] : memref<1x128xf32, #tpu.memory_space<vmem>>, vector<1x128xf32>
    %422 = vector.shape_cast %421 : vector<1x128xf32> to vector<128xf32>
    %c0_42 = arith.constant 0 : index
    %c0_43 = arith.constant 0 : index
    %423 = vector.load %arg9[%c0_42, %c0_43] : memref<1x128xf32, #tpu.memory_space<vmem>>, vector<1x128xf32>
    %424 = vector.shape_cast %423 : vector<1x128xf32> to vector<128xf32>
    %c0_i32_44 = arith.constant 0 : i32
    %c2_i32_45 = arith.constant 2 : i32
    %425 = arith.addi %c0_i32_44, %c2_i32_45 : i32
    %c1_i32_46 = arith.constant 1 : i32
    scf.for %arg17 = %c0_i32_44 to %425 step %c1_i32_46  : i32 {
      %c128_i32 = arith.constant 128 : i32
      %426 = arith.muli %arg17, %c128_i32 : i32
      %427 = tpu.assume_multiple %426, 128 : i32
      %428 = arith.index_cast %427 : i32 to index
      %c0_48 = arith.constant 0 : index
      %429 = vector.load %arg16[%428, %c0_48] : memref<256x128xbf16, #tpu.memory_space<vmem>>, vector<128x128xbf16>
      %430 = arith.extf %429 : vector<128x128xbf16> to vector<128x128xf32>
      %431 = vector.broadcast %415 : vector<1x128xf32> to vector<128x128xf32>
      %432 = arith.mulf %430, %431 : vector<128x128xf32>
      %433 = vector.shape_cast %422 : vector<128xf32> to vector<1x128xf32>
      %434 = vector.broadcast %433 : vector<1x128xf32> to vector<128x128xf32>
      %435 = arith.mulf %434, %432 : vector<128x128xf32>
      %436 = vector.shape_cast %424 : vector<128xf32> to vector<1x128xf32>
      %437 = vector.broadcast %436 : vector<1x128xf32> to vector<128x128xf32>
      %438 = arith.addf %435, %437 : vector<128x128xf32>
      %439 = arith.addf %438, %430 : vector<128x128xf32>
      %440 = arith.truncf %439 : vector<128x128xf32> to vector<128x128xbf16>
      %cst_49 = arith.constant dense<0.000000e+00> : vector<128x128xf32>
      %441 = tpu.matmul %440, %416, %cst_49 {dimension_numbers = #tpu.dot_dimension_numbers<[1], [0], [0], [1], [0, 0, 1, 1], [], []>} : vector<128x128xbf16>, vector<128x128xbf16>, vector<128x128xf32> -> vector<128x128xf32>
      %442 = vector.shape_cast %418 : vector<128xf32> to vector<1x128xf32>
      %443 = vector.broadcast %442 : vector<1x128xf32> to vector<128x128xf32>
      %444 = arith.addf %441, %443 : vector<128x128xf32>
      %c8_i32 = arith.constant 8 : i32
      %445 = arith.muli %arg17, %c8_i32 : i32
      %c3_i32 = arith.constant 3 : i32
      %446 = arith.addi %c3_i32, %445 : i32
      %447 = arith.index_cast %446 : i32 to index
      %c8_50 = arith.constant 8 : index
      %c0_51 = arith.constant 0 : index
      %448 = vector.load %arg14[%447, %c8_50, %c0_51] : memref<22x32x128xf32, #tpu.memory_space<vmem>>, vector<8x16x128xf32>
      %449 = vector.shape_cast %448 : vector<8x16x128xf32> to vector<128x128xf32>
      %450 = vector.shape_cast %420 : vector<128xf32> to vector<1x128xf32>
      %451 = vector.broadcast %450 : vector<1x128xf32> to vector<128x128xf32>
      %452 = arith.mulf %444, %451 : vector<128x128xf32>
      %453 = arith.addf %449, %452 : vector<128x128xf32>
      %454 = vector.shape_cast %453 : vector<128x128xf32> to vector<1x128x128xf32>
      %c0_52 = arith.constant 0 : index
      %455 = arith.index_cast %427 : i32 to index
      %c0_53 = arith.constant 0 : index
      %456 = vector.load %arg13[%c0_52, %455, %c0_53] : memref<1x256x128xf32, #tpu.memory_space<vmem>>, vector<1x128x128xf32>
      tpu.vector_store %arg13[%c0_52, %455, %c0_53], %454 {strides = array<i32>} : memref<1x256x128xf32, #tpu.memory_space<vmem>>, vector<1x128x128xf32>,
    }
    %c2_i32_47 = arith.constant 2 : i32
    return
  }
  func.func @transform_0(%arg0: i32) -> (i32, i32, i32, i32) {
    %c0_i32 = arith.constant 0 : i32
    %c0_i32_0 = arith.constant 0 : i32
    %c0_i32_1 = arith.constant 0 : i32
    %c0_i32_2 = arith.constant 0 : i32
    return %arg0, %c0_i32, %c0_i32_0, %c0_i32_1 : i32, i32, i32, i32
  }
  func.func @transform_1(%arg0: i32) -> (i32, i32, i32) {
    %c0_i32 = arith.constant 0 : i32
    %c0_i32_0 = arith.constant 0 : i32
    %c0_i32_1 = arith.constant 0 : i32
    %c0_i32_2 = arith.constant 0 : i32
    return %c0_i32, %c0_i32_0, %c0_i32_1 : i32, i32, i32
  }
  func.func @transform_2(%arg0: i32) -> (i32, i32) {
    %c0_i32 = arith.constant 0 : i32
    %c0_i32_0 = arith.constant 0 : i32
    %c0_i32_1 = arith.constant 0 : i32
    return %c0_i32, %c0_i32_0 : i32, i32
  }
  func.func @transform_3(%arg0: i32) -> (i32, i32) {
    %c0_i32 = arith.constant 0 : i32
    %c0_i32_0 = arith.constant 0 : i32
    %c0_i32_1 = arith.constant 0 : i32
    return %c0_i32, %c0_i32_0 : i32, i32
  }
  func.func @transform_4(%arg0: i32) -> (i32, i32) {
    %c0_i32 = arith.constant 0 : i32
    %c0_i32_0 = arith.constant 0 : i32
    %c0_i32_1 = arith.constant 0 : i32
    return %c0_i32, %c0_i32_0 : i32, i32
  }
  func.func @transform_5(%arg0: i32) -> (i32, i32) {
    %c0_i32 = arith.constant 0 : i32
    %c0_i32_0 = arith.constant 0 : i32
    %c0_i32_1 = arith.constant 0 : i32
    return %c0_i32, %c0_i32_0 : i32, i32
  }
  func.func @transform_6(%arg0: i32) -> (i32, i32) {
    %c0_i32 = arith.constant 0 : i32
    %c0_i32_0 = arith.constant 0 : i32
    %c0_i32_1 = arith.constant 0 : i32
    return %c0_i32, %c0_i32_0 : i32, i32
  }
  func.func @transform_7(%arg0: i32) -> (i32, i32) {
    %c0_i32 = arith.constant 0 : i32
    %c0_i32_0 = arith.constant 0 : i32
    %c0_i32_1 = arith.constant 0 : i32
    return %c0_i32, %c0_i32_0 : i32, i32
  }
  func.func @transform_8(%arg0: i32) -> (i32, i32) {
    %c0_i32 = arith.constant 0 : i32
    %c0_i32_0 = arith.constant 0 : i32
    %c0_i32_1 = arith.constant 0 : i32
    return %c0_i32, %c0_i32_0 : i32, i32
  }
  func.func @transform_9(%arg0: i32) -> (i32, i32) {
    %c0_i32 = arith.constant 0 : i32
    %c0_i32_0 = arith.constant 0 : i32
    %c0_i32_1 = arith.constant 0 : i32
    return %c0_i32, %c0_i32_0 : i32, i32
  }
  func.func @transform_10(%arg0: i32) -> (i32, i32) {
    %c0_i32 = arith.constant 0 : i32
    %c0_i32_0 = arith.constant 0 : i32
    %c0_i32_1 = arith.constant 0 : i32
    return %c0_i32, %c0_i32_0 : i32, i32
  }
  func.func @transform_11(%arg0: i32) -> (i32, i32) {
    %c0_i32 = arith.constant 0 : i32
    %c0_i32_0 = arith.constant 0 : i32
    %c0_i32_1 = arith.constant 0 : i32
    return %c0_i32, %c0_i32_0 : i32, i32
  }
  func.func @transform_12(%arg0: i32) -> (i32, i32, i32) {
    %c0_i32 = arith.constant 0 : i32
    %c0_i32_0 = arith.constant 0 : i32
    %c0_i32_1 = arith.constant 0 : i32
    return %arg0, %c0_i32, %c0_i32_0 : i32, i32, i32
  }
}

</mosaic_0001>

<llo_original>
// kernel: tpu_custom_call.1
$region0: #{tpu_custom_call.1}
  #allocation0 [shape = 'u32[]', space=smem, size = 0x4, offset = 0x4, fixed_abs, tag = 'smem constant byte address 0x4 - core index']
  #allocation1 [shape = 'u32[72,128]{1,0:T(1,128)}', space=vmem, size = 0x9000, scoped, tag = 'internal scratch']
  #allocation2 [shape = 'f32[22,32,128]{2,1,0:T(8,128)}', space=vmem, size = 0x58000, scoped, tag = 'scratch operand']
  #allocation3 [shape = 'bf16[256,128]{1,0:T(8,128)(2,1)}', space=vmem, size = 0x10000, scoped, tag = 'scratch operand']
  #allocation4 [shape = 'bf16[256,128]{1,0:T(8,128)(2,1)}', space=vmem, size = 0x10000, scoped, tag = 'scratch operand']
  %s0 = inlined_call_operand.vmem [shape: f32[2,16,16,8], index: 0, kind: input, shape index: {}]
  %s1 = inlined_call_operand.vmem [shape: f32[7,7,128], index: 1, kind: input, shape index: {}]
  %s2 = inlined_call_operand.vmem [shape: f32[1,128], index: 2, kind: input, shape index: {}]
  %s3 = inlined_call_operand.vmem [shape: f32[1,128], index: 3, kind: input, shape index: {}]
  %s4 = inlined_call_operand.vmem [shape: f32[1,128], index: 4, kind: input, shape index: {}]
  %s5 = inlined_call_operand.vmem [shape: bf16[128,128], index: 5, kind: input, shape index: {}]
  %s6 = inlined_call_operand.vmem [shape: f32[1,128], index: 6, kind: input, shape index: {}]
  %s7 = inlined_call_operand.vmem [shape: f32[1,128], index: 7, kind: input, shape index: {}]
  %s8 = inlined_call_operand.vmem [shape: f32[1,128], index: 8, kind: input, shape index: {}]
  %s9 = inlined_call_operand.vmem [shape: bf16[128,128], index: 9, kind: input, shape index: {}]
  %s10 = inlined_call_operand.vmem [shape: f32[1,128], index: 10, kind: input, shape index: {}]
  %s11 = inlined_call_operand.vmem [shape: f32[1,128], index: 11, kind: input, shape index: {}]
  %s12 = inlined_call_operand.hbm [shape: f32[2,256,128], index: 12, kind: output, shape index: {}]
  %s13 = sld [smem:[#allocation0]]
  $region99: #{tpu_custom_call.1} parent=0
    _
  %s15 = ssub.s32 1, %s13
  %s16 = scalar_select 0, %s15, %s13
  $region1: #{tpu_custom_call.1} parent=0
    #allocation5 [shape = 'u8[262144]{0}', space=vmem, size = 0x40000, scoped, tag = 'output window, operand 0']
    #allocation6 [shape = 's32[2]{0}', space=sflag, size = 0x8, scoped, tag = 'scoped memory for tpu_custom_call.1']
    %17 = vsyncpa [#allocation6], 0
    %s18 = scalar_lea.sflag [#allocation6], 1
    %19 = vsyncpa %s18, 0
    loop: start=0, step=1, limit=4
    $region2: #{tpu_custom_call.1} parent=1 // loop_pre_header
      _
    $region3: #{tpu_custom_call.1} parent=1 // loop_header
      %s21 = sphi 0, %s25
      %p22 = scmp.ge.s32.totalorder %s21, 4
      %s31 = sphi 0, %s33
      %s34 = sphi 0, %s31
      %s35 = sphi 0, %s34
      %s51 = sphi 0, %s35
      %s55 = sphi 0, %s55
      %s57 = sphi 0, %s55
      %s58 = sphi 0, %s57
      %s72 = sphi 0, %s58
      %s76 = sphi 0, %s76
      %s78 = sphi 0, %s76
      %s79 = sphi 0, %s78
      %s93 = sphi 0, %s79
      %s97 = sphi 0, %s97
      %s99 = sphi 0, %s97
      %s100 = sphi 0, %s99
      %s114 = sphi 0, %s100
      %s118 = sphi 0, %s118
      %s120 = sphi 0, %s118
      %s121 = sphi 0, %s120
      %s135 = sphi 0, %s121
      %s139 = sphi 0, %s139
      %s141 = sphi 0, %s139
      %s142 = sphi 0, %s141
      %s156 = sphi 0, %s142
      %s160 = sphi 0, %s160
      %s162 = sphi 0, %s160
      %s163 = sphi 0, %s162
      %s177 = sphi 0, %s163
      %s181 = sphi 0, %s181
      %s183 = sphi 0, %s181
      %s184 = sphi 0, %s183
      %s198 = sphi 0, %s184
      %s202 = sphi 0, %s202
      %s204 = sphi 0, %s202
      %s205 = sphi 0, %s204
      %s219 = sphi 0, %s205
      %s223 = sphi 0, %s223
      %s225 = sphi 0, %s223
      %s226 = sphi 0, %s225
      %s240 = sphi 0, %s226
      %s244 = sphi 0, %s244
      %s246 = sphi 0, %s244
      %s247 = sphi 0, %s246
      %s261 = sphi 0, %s247
      %s265 = sphi 0, %s265
      %s267 = sphi 0, %s265
      %s268 = sphi 0, %s267
      %s282 = sphi 0, %s268
      %s288 = sphi 0, %s290
      %s291 = sphi 0, %s288
      %s292 = sphi 0, %s291
      %s308 = sphi 0, %s292
    $region4: #{tpu_custom_call.1} parent=1 // loop_header_branch
      %24 = sbr.rel (%p22) target = $region8
    $region5: #{tpu_custom_call.1} parent=1 // loop_body
      %s26 = ssub.s32 %s21, 1
      %s27 = ssub.s32 %s21, 2
      %s28 = sadd.s32 %s21, 1
      %s29 = ssub.s32 %s21, %s28
      %p30 = scmp.eq.s32.totalorder %s29, 0
      %s32 = sadd.s32 %s31, 1
      %s33 = scalar_select %p30, %s31, %s32
      %p36 = pneg %p30
      %p37 = scmp.eq.s32.totalorder %s21, 1
      %p38 = por %p36, %p37
      %p39 = scmp.ne.s32.totalorder %s31, %s34
      %p40 = scmp.eq.s32.totalorder %s21, 0
      %p41 = por %p39, %p40
      %p42 = scmp.ne.s32.totalorder %s31, %s34
      %p43 = scmp.eq.s32.totalorder %s26, 1
      %p44 = por %p42, %p43
      %p45 = scmp.ne.s32.totalorder %s34, %s35
      %p46 = scmp.eq.s32.totalorder %s26, 0
      %p47 = por %p45, %p46
      %p48 = scmp.ne.s32.totalorder %s34, %s35
      %p49 = scmp.eq.s32.totalorder %s27, 1
      %p50 = por %p48, %p49
      %p52 = scmp.ne.s32.totalorder %s35, %s51
      %p53 = scmp.eq.s32.totalorder %s27, 0
      %p54 = por %p52, %p53
      %s56 = sadd.s32 %s55, 1
      %p59 = scmp.eq.s32.totalorder %s21, 1
      %p60 = scmp.ne.s32.totalorder %s55, %s57
      %p61 = scmp.eq.s32.totalorder %s21, 0
      %p62 = por %p60, %p61
      %p63 = scmp.ne.s32.totalorder %s55, %s57
      %p64 = scmp.eq.s32.totalorder %s26, 1
      %p65 = por %p63, %p64
      %p66 = scmp.ne.s32.totalorder %s57, %s58
      %p67 = scmp.eq.s32.totalorder %s26, 0
      %p68 = por %p66, %p67
      %p69 = scmp.ne.s32.totalorder %s57, %s58
      %p70 = scmp.eq.s32.totalorder %s27, 1
      %p71 = por %p69, %p70
      %p73 = scmp.ne.s32.totalorder %s58, %s72
      %p74 = scmp.eq.s32.totalorder %s27, 0
      %p75 = por %p73, %p74
      %s77 = sadd.s32 %s76, 1
      %p80 = scmp.eq.s32.totalorder %s21, 1
      %p81 = scmp.ne.s32.totalorder %s76, %s78
      %p82 = scmp.eq.s32.totalorder %s21, 0
      %p83 = por %p81, %p82
      %p84 = scmp.ne.s32.totalorder %s76, %s78
      %p85 = scmp.eq.s32.totalorder %s26, 1
      %p86 = por %p84, %p85
      %p87 = scmp.ne.s32.totalorder %s78, %s79
      %p88 = scmp.eq.s32.totalorder %s26, 0
      %p89 = por %p87, %p88
      %p90 = scmp.ne.s32.totalorder %s78, %s79
      %p91 = scmp.eq.s32.totalorder %s27, 1
      %p92 = por %p90, %p91
      %p94 = scmp.ne.s32.totalorder %s79, %s93
      %p95 = scmp.eq.s32.totalorder %s27, 0
      %p96 = por %p94, %p95
      %s98 = sadd.s32 %s97, 1
      %p101 = scmp.eq.s32.totalorder %s21, 1
      %p102 = scmp.ne.s32.totalorder %s97, %s99
      %p103 = scmp.eq.s32.totalorder %s21, 0
      %p104 = por %p102, %p103
      %p105 = scmp.ne.s32.totalorder %s97, %s99
      %p106 = scmp.eq.s32.totalorder %s26, 1
      %p107 = por %p105, %p106
      %p108 = scmp.ne.s32.totalorder %s99, %s100
      %p109 = scmp.eq.s32.totalorder %s26, 0
      %p110 = por %p108, %p109
      %p111 = scmp.ne.s32.totalorder %s99, %s100
      %p112 = scmp.eq.s32.totalorder %s27, 1
      %p113 = por %p111, %p112
      %p115 = scmp.ne.s32.totalorder %s100, %s114
      %p116 = scmp.eq.s32.totalorder %s27, 0
      %p117 = por %p115, %p116
      %s119 = sadd.s32 %s118, 1
      %p122 = scmp.eq.s32.totalorder %s21, 1
      %p123 = scmp.ne.s32.totalorder %s118, %s120
      %p124 = scmp.eq.s32.totalorder %s21, 0
      %p125 = por %p123, %p124
      %p126 = scmp.ne.s32.totalorder %s118, %s120
      %p127 = scmp.eq.s32.totalorder %s26, 1
      %p128 = por %p126, %p127
      %p129 = scmp.ne.s32.totalorder %s120, %s121
      %p130 = scmp.eq.s32.totalorder %s26, 0
      %p131 = por %p129, %p130
      %p132 = scmp.ne.s32.totalorder %s120, %s121
      %p133 = scmp.eq.s32.totalorder %s27, 1
      %p134 = por %p132, %p133
      %p136 = scmp.ne.s32.totalorder %s121, %s135
      %p137 = scmp.eq.s32.totalorder %s27, 0
      %p138 = por %p136, %p137
      %s140 = sadd.s32 %s139, 1
      %p143 = scmp.eq.s32.totalorder %s21, 1
      %p144 = scmp.ne.s32.totalorder %s139, %s141
      %p145 = scmp.eq.s32.totalorder %s21, 0
      %p146 = por %p144, %p145
      %p147 = scmp.ne.s32.totalorder %s139, %s141
      %p148 = scmp.eq.s32.totalorder %s26, 1
      %p149 = por %p147, %p148
      %p150 = scmp.ne.s32.totalorder %s141, %s142
      %p151 = scmp.eq.s32.totalorder %s26, 0
      %p152 = por %p150, %p151
      %p153 = scmp.ne.s32.totalorder %s141, %s142
      %p154 = scmp.eq.s32.totalorder %s27, 1
      %p155 = por %p153, %p154
      %p157 = scmp.ne.s32.totalorder %s142, %s156
      %p158 = scmp.eq.s32.totalorder %s27, 0
      %p159 = por %p157, %p158
      %s161 = sadd.s32 %s160, 1
      %p164 = scmp.eq.s32.totalorder %s21, 1
      %p165 = scmp.ne.s32.totalorder %s160, %s162
      %p166 = scmp.eq.s32.totalorder %s21, 0
      %p167 = por %p165, %p166
      %p168 = scmp.ne.s32.totalorder %s160, %s162
      %p169 = scmp.eq.s32.totalorder %s26, 1
      %p170 = por %p168, %p169
      %p171 = scmp.ne.s32.totalorder %s162, %s163
      %p172 = scmp.eq.s32.totalorder %s26, 0
      %p173 = por %p171, %p172
      %p174 = scmp.ne.s32.totalorder %s162, %s163
      %p175 = scmp.eq.s32.totalorder %s27, 1
      %p176 = por %p174, %p175
      %p178 = scmp.ne.s32.totalorder %s163, %s177
      %p179 = scmp.eq.s32.totalorder %s27, 0
      %p180 = por %p178, %p179
      %s182 = sadd.s32 %s181, 1
      %p185 = scmp.eq.s32.totalorder %s21, 1
      %p186 = scmp.ne.s32.totalorder %s181, %s183
      %p187 = scmp.eq.s32.totalorder %s21, 0
      %p188 = por %p186, %p187
      %p189 = scmp.ne.s32.totalorder %s181, %s183
      %p190 = scmp.eq.s32.totalorder %s26, 1
      %p191 = por %p189, %p190
      %p192 = scmp.ne.s32.totalorder %s183, %s184
      %p193 = scmp.eq.s32.totalorder %s26, 0
      %p194 = por %p192, %p193
      %p195 = scmp.ne.s32.totalorder %s183, %s184
      %p196 = scmp.eq.s32.totalorder %s27, 1
      %p197 = por %p195, %p196
      %p199 = scmp.ne.s32.totalorder %s184, %s198
      %p200 = scmp.eq.s32.totalorder %s27, 0
      %p201 = por %p199, %p200
      %s203 = sadd.s32 %s202, 1
      %p206 = scmp.eq.s32.totalorder %s21, 1
      %p207 = scmp.ne.s32.totalorder %s202, %s204
      %p208 = scmp.eq.s32.totalorder %s21, 0
      %p209 = por %p207, %p208
      %p210 = scmp.ne.s32.totalorder %s202, %s204
      %p211 = scmp.eq.s32.totalorder %s26, 1
      %p212 = por %p210, %p211
      %p213 = scmp.ne.s32.totalorder %s204, %s205
      %p214 = scmp.eq.s32.totalorder %s26, 0
      %p215 = por %p213, %p214
      %p216 = scmp.ne.s32.totalorder %s204, %s205
      %p217 = scmp.eq.s32.totalorder %s27, 1
      %p218 = por %p216, %p217
      %p220 = scmp.ne.s32.totalorder %s205, %s219
      %p221 = scmp.eq.s32.totalorder %s27, 0
      %p222 = por %p220, %p221
      %s224 = sadd.s32 %s223, 1
      %p227 = scmp.eq.s32.totalorder %s21, 1
      %p228 = scmp.ne.s32.totalorder %s223, %s225
      %p229 = scmp.eq.s32.totalorder %s21, 0
      %p230 = por %p228, %p229
      %p231 = scmp.ne.s32.totalorder %s223, %s225
      %p232 = scmp.eq.s32.totalorder %s26, 1
      %p233 = por %p231, %p232
      %p234 = scmp.ne.s32.totalorder %s225, %s226
      %p235 = scmp.eq.s32.totalorder %s26, 0
      %p236 = por %p234, %p235
      %p237 = scmp.ne.s32.totalorder %s225, %s226
      %p238 = scmp.eq.s32.totalorder %s27, 1
      %p239 = por %p237, %p238
      %p241 = scmp.ne.s32.totalorder %s226, %s240
      %p242 = scmp.eq.s32.totalorder %s27, 0
      %p243 = por %p241, %p242
      %s245 = sadd.s32 %s244, 1
      %p248 = scmp.eq.s32.totalorder %s21, 1
      %p249 = scmp.ne.s32.totalorder %s244, %s246
      %p250 = scmp.eq.s32.totalorder %s21, 0
      %p251 = por %p249, %p250
      %p252 = scmp.ne.s32.totalorder %s244, %s246
      %p253 = scmp.eq.s32.totalorder %s26, 1
      %p254 = por %p252, %p253
      %p255 = scmp.ne.s32.totalorder %s246, %s247
      %p256 = scmp.eq.s32.totalorder %s26, 0
      %p257 = por %p255, %p256
      %p258 = scmp.ne.s32.totalorder %s246, %s247
      %p259 = scmp.eq.s32.totalorder %s27, 1
      %p260 = por %p258, %p259
      %p262 = scmp.ne.s32.totalorder %s247, %s261
      %p263 = scmp.eq.s32.totalorder %s27, 0
      %p264 = por %p262, %p263
      %s266 = sadd.s32 %s265, 1
      %p269 = scmp.eq.s32.totalorder %s21, 1
      %p270 = scmp.ne.s32.totalorder %s265, %s267
      %p271 = scmp.eq.s32.totalorder %s21, 0
      %p272 = por %p270, %p271
      %p273 = scmp.ne.s32.totalorder %s265, %s267
      %p274 = scmp.eq.s32.totalorder %s26, 1
      %p275 = por %p273, %p274
      %p276 = scmp.ne.s32.totalorder %s267, %s268
      %p277 = scmp.eq.s32.totalorder %s26, 0
      %p278 = por %p276, %p277
      %p279 = scmp.ne.s32.totalorder %s267, %s268
      %p280 = scmp.eq.s32.totalorder %s27, 1
      %p281 = por %p279, %p280
      %p283 = scmp.ne.s32.totalorder %s268, %s282
      %p284 = scmp.eq.s32.totalorder %s27, 0
      %p285 = por %p283, %p284
      %s286 = ssub.s32 %s21, %s28
      %p287 = scmp.eq.s32.totalorder %s286, 0
      %s289 = sadd.s32 %s288, 1
      %s290 = scalar_select %p287, %s288, %s289
      %p293 = pneg %p287
      %p294 = scmp.eq.s32.totalorder %s21, 1
      %p295 = por %p293, %p294
      %p296 = scmp.ne.s32.totalorder %s288, %s291
      %p297 = scmp.eq.s32.totalorder %s21, 0
      %p298 = por %p296, %p297
      %p299 = scmp.ne.s32.totalorder %s288, %s291
      %p300 = scmp.eq.s32.totalorder %s26, 1
      %p301 = por %p299, %p300
      %p302 = scmp.ne.s32.totalorder %s291, %s292
      %p303 = scmp.eq.s32.totalorder %s26, 0
      %p304 = por %p302, %p303
      %p305 = scmp.ne.s32.totalorder %s291, %s292
      %p306 = scmp.eq.s32.totalorder %s27, 1
      %p307 = por %p305, %p306
      %p309 = scmp.ne.s32.totalorder %s292, %s308
      %p310 = scmp.eq.s32.totalorder %s27, 0
      %p311 = por %p309, %p310
      %p312 = scmp.le.s32.totalorder 1, %s21
      %p313 = scmp.lt.s32.totalorder %s21, 3
      %p314 = pnand %p312, %p313
      %p315 = pneg %p314
      // Predicated region
      $region9: #{tpu_custom_call.1} parent=5 // pred_check
        _
      $region10: #{tpu_custom_call.1} parent=5 // pred_check_branch
        %317 = sbr.rel (%p314) target = $region12
      $region11: #{tpu_custom_call.1} parent=5 // pred_region
        %s318 = ssub.s32 %s21, 1
        // Predicated region
        $region13: #{tpu_custom_call.1} parent=11 // pred_check
          %p319 = pneg %p68
        $region14: #{tpu_custom_call.1} parent=11 // pred_check_branch
          %321 = sbr.rel (%p319) target = $region16
        $region15: #{tpu_custom_call.1} parent=11 // pred_region
          _
        $region16: #{tpu_custom_call.1} parent=11 // pred_fallthru
          _
        // Predicated region
        $region17: #{tpu_custom_call.1} parent=11 // pred_check
          %p322 = pneg %p89
        $region18: #{tpu_custom_call.1} parent=11 // pred_check_branch
          %324 = sbr.rel (%p322) target = $region20
        $region19: #{tpu_custom_call.1} parent=11 // pred_region
          _
        $region20: #{tpu_custom_call.1} parent=11 // pred_fallthru
          _
        // Predicated region
        $region21: #{tpu_custom_call.1} parent=11 // pred_check
          %p325 = pneg %p110
        $region22: #{tpu_custom_call.1} parent=11 // pred_check_branch
          %327 = sbr.rel (%p325) target = $region24
        $region23: #{tpu_custom_call.1} parent=11 // pred_region
          _
        $region24: #{tpu_custom_call.1} parent=11 // pred_fallthru
          _
        // Predicated region
        $region25: #{tpu_custom_call.1} parent=11 // pred_check
          %p328 = pneg %p131
        $region26: #{tpu_custom_call.1} parent=11 // pred_check_branch
          %330 = sbr.rel (%p328) target = $region28
        $region27: #{tpu_custom_call.1} parent=11 // pred_region
          _
        $region28: #{tpu_custom_call.1} parent=11 // pred_fallthru
          _
        // Predicated region
        $region29: #{tpu_custom_call.1} parent=11 // pred_check
          %p331 = pneg %p152
        $region30: #{tpu_custom_call.1} parent=11 // pred_check_branch
          %333 = sbr.rel (%p331) target = $region32
        $region31: #{tpu_custom_call.1} parent=11 // pred_region
          _
        $region32: #{tpu_custom_call.1} parent=11 // pred_fallthru
          _
        // Predicated region
        $region33: #{tpu_custom_call.1} parent=11 // pred_check
          %p334 = pneg %p173
        $region34: #{tpu_custom_call.1} parent=11 // pred_check_branch
          %336 = sbr.rel (%p334) target = $region36
        $region35: #{tpu_custom_call.1} parent=11 // pred_region
          _
        $region36: #{tpu_custom_call.1} parent=11 // pred_fallthru
          _
        // Predicated region
        $region37: #{tpu_custom_call.1} parent=11 // pred_check
          %p337 = pneg %p194
        $region38: #{tpu_custom_call.1} parent=11 // pred_check_branch
          %339 = sbr.rel (%p337) target = $region40
        $region39: #{tpu_custom_call.1} parent=11 // pred_region
          _
        $region40: #{tpu_custom_call.1} parent=11 // pred_fallthru
          _
        // Predicated region
        $region41: #{tpu_custom_call.1} parent=11 // pred_check
          %p340 = pneg %p215
        $region42: #{tpu_custom_call.1} parent=11 // pred_check_branch
          %342 = sbr.rel (%p340) target = $region44
        $region43: #{tpu_custom_call.1} parent=11 // pred_region
          _
        $region44: #{tpu_custom_call.1} parent=11 // pred_fallthru
          _
        // Predicated region
        $region45: #{tpu_custom_call.1} parent=11 // pred_check
          %p343 = pneg %p236
        $region46: #{tpu_custom_call.1} parent=11 // pred_check_branch
          %345 = sbr.rel (%p343) target = $region48
        $region47: #{tpu_custom_call.1} parent=11 // pred_region
          _
        $region48: #{tpu_custom_call.1} parent=11 // pred_fallthru
          _
        // Predicated region
        $region49: #{tpu_custom_call.1} parent=11 // pred_check
          %p346 = pneg %p257
        $region50: #{tpu_custom_call.1} parent=11 // pred_check_branch
          %348 = sbr.rel (%p346) target = $region52
        $region51: #{tpu_custom_call.1} parent=11 // pred_region
          _
        $region52: #{tpu_custom_call.1} parent=11 // pred_fallthru
          _
        // Predicated region
        $region53: #{tpu_custom_call.1} parent=11 // pred_check
          %p349 = pneg %p278
        $region54: #{tpu_custom_call.1} parent=11 // pred_check_branch
          %351 = sbr.rel (%p349) target = $region56
        $region55: #{tpu_custom_call.1} parent=11 // pred_region
          _
        $region56: #{tpu_custom_call.1} parent=11 // pred_fallthru
          _
      $region12: #{tpu_custom_call.1} parent=5 // pred_fallthru
        _
      %p352 = scmp.lt.s32.totalorder %s21, 2
      // Predicated region
      $region57: #{tpu_custom_call.1} parent=5 // pred_check
        %p353 = pneg %p352
      $region58: #{tpu_custom_call.1} parent=5 // pred_check_branch
        %355 = sbr.rel (%p353) target = $region60
      $region59: #{tpu_custom_call.1} parent=5 // pred_region
        // Predicated region
        $region61: #{tpu_custom_call.1} parent=59 // pred_check
          %p356 = pneg %p41
        $region62: #{tpu_custom_call.1} parent=59 // pred_check_branch
          %358 = sbr.rel (%p356) target = $region64
        $region63: #{tpu_custom_call.1} parent=59 // pred_region
          %p359 = scmp.lt.s32.totalorder %s21, 1
          %s360 = scalar_select %p359, %s21, 1
          %s361 = smul.addr %s360, 32
          %s362 = smul.addr %s361, 8
          %s363 = scalar_lea.vmem %s0, %s362
        $region64: #{tpu_custom_call.1} parent=59 // pred_fallthru
          _
      $region60: #{tpu_custom_call.1} parent=5 // pred_fallthru
        _
      %p364 = scmp.le.s32.totalorder 1, %s21
      %p365 = scmp.lt.s32.totalorder %s21, 3
      %p366 = pnand %p364, %p365
      %p367 = pneg %p366
      // Predicated region
      $region65: #{tpu_custom_call.1} parent=5 // pred_check
        _
      $region66: #{tpu_custom_call.1} parent=5 // pred_check_branch
        %369 = sbr.rel (%p366) target = $region68
      $region67: #{tpu_custom_call.1} parent=5 // pred_region
        %s370 = ssub.s32 %s21, 1
        %p371 = scmp.lt.s32.totalorder %s26, 1
        %s372 = scalar_select %p371, %s26, 1
        %s373 = smul.addr %s372, 32
        %s374 = smul.addr %s373, 8
        %s375 = scalar_lea.vmem %s0, %s374
        %p376 = pneg %p47
        %p377 = pneg %p44
        %p378 = pneg %p68
        %p379 = pneg %p65
        %p380 = pneg %p89
        %p381 = pneg %p86
        %p382 = pneg %p110
        %p383 = pneg %p107
        %p384 = pneg %p131
        %p385 = pneg %p128
        %p386 = pneg %p152
        %p387 = pneg %p149
        %p388 = pneg %p173
        %p389 = pneg %p170
        %p390 = pneg %p194
        %p391 = pneg %p191
        %p392 = pneg %p215
        %p393 = pneg %p212
        %p394 = pneg %p236
        %p395 = pneg %p233
        %p396 = pneg %p257
        %p397 = pneg %p254
        %p398 = pneg %p278
        %p399 = pneg %p275
        %p400 = pneg %p304
        %p401 = pneg %p301
        %s402 = sand.u32 %s291, 1
        %s403 = scalar_lea.sflag [#allocation6], %s402
        %s404 = sand.u32 %s291, 1
        %s405 = smul.addr %s404, 256
        %s406 = scalar_lea.vmem [#allocation5], %s405
        %p407 = scmp.lt.s32.totalorder %s26, 1
        %s408 = scalar_select %p407, %s26, 1
        %s409 = smul.addr %s408, 32
        %s410 = smul.addr %s409, 8
        %s411 = scalar_lea.vmem %s0, %s410
        %p412 = scmp.eq.s32.totalorder %s26, 0
        // Predicated region
        $region69: #{tpu_custom_call.1} parent=67 // pred_check
          %p413 = pneg %p412
        $region70: #{tpu_custom_call.1} parent=67 // pred_check_branch
          %415 = sbr.rel (%p413) target = $region72
        $region71: #{tpu_custom_call.1} parent=67 // pred_region
          %416 = vst [vmem:[#allocation2] sm:$0xff] 0.0
          %417 = vst [vmem:[#allocation2 + $0x8] sm:$0xff] 0.0
          %418 = vst [vmem:[#allocation2 + $0x10] sm:$0xff] 0.0
          %419 = vst [vmem:[#allocation2 + $0x18] sm:$0xff] 0.0
          %420 = vst [vmem:[#allocation2 + $0x20] sm:$0xff] 0.0
          %421 = vst [vmem:[#allocation2 + $0x28] sm:$0xff] 0.0
          %422 = vst [vmem:[#allocation2 + $0x30] sm:$0xff] 0.0
          %423 = vst [vmem:[#allocation2 + $0x38] sm:$0xff] 0.0
          %424 = vst [vmem:[#allocation2 + $0x40] sm:$0xff] 0.0
          %425 = vst [vmem:[#allocation2 + $0x48] sm:$0xff] 0.0
          %426 = vst [vmem:[#allocation2 + $0x50] sm:$0xff] 0.0
          %427 = vst [vmem:[#allocation2 + $0x58] sm:$0xff] 0.0
          %428 = vst [vmem:[#allocation2 + $0x60] sm:$0xff] 0.0
          %429 = vst [vmem:[#allocation2 + $0x68] sm:$0xff] 0.0
          %430 = vst [vmem:[#allocation2 + $0x70] sm:$0xff] 0.0
          %431 = vst [vmem:[#allocation2 + $0x78] sm:$0xff] 0.0
          %432 = vst [vmem:[#allocation2 + $0x80] sm:$0xff] 0.0
          %433 = vst [vmem:[#allocation2 + $0x88] sm:$0xff] 0.0
          %434 = vst [vmem:[#allocation2 + $0x90] sm:$0xff] 0.0
          %435 = vst [vmem:[#allocation2 + $0x98] sm:$0xff] 0.0
          %436 = vst [vmem:[#allocation2 + $0xa0] sm:$0xff] 0.0
          %437 = vst [vmem:[#allocation2 + $0xa8] sm:$0xff] 0.0
          %438 = vst [vmem:[#allocation2 + $0xb0] sm:$0xff] 0.0
          %439 = vst [vmem:[#allocation2 + $0xb8] sm:$0xff] 0.0
          %440 = vst [vmem:[#allocation2 + $0xc0] sm:$0xff] 0.0
          %441 = vst [vmem:[#allocation2 + $0xc8] sm:$0xff] 0.0
          %442 = vst [vmem:[#allocation2 + $0xd0] sm:$0xff] 0.0
          %443 = vst [vmem:[#allocation2 + $0xd8] sm:$0xff] 0.0
          %444 = vst [vmem:[#allocation2 + $0xe0] sm:$0xff] 0.0
          %445 = vst [vmem:[#allocation2 + $0xe8] sm:$0xff] 0.0
          %446 = vst [vmem:[#allocation2 + $0xf0] sm:$0xff] 0.0
          %447 = vst [vmem:[#allocation2 + $0xf8] sm:$0xff] 0.0
          %448 = vst [vmem:[#allocation2 + $0x100] sm:$0xff] 0.0
          %449 = vst [vmem:[#allocation2 + $0x108] sm:$0xff] 0.0
          %450 = vst [vmem:[#allocation2 + $0x110] sm:$0xff] 0.0
          %451 = vst [vmem:[#allocation2 + $0x118] sm:$0xff] 0.0
          %452 = vst [vmem:[#allocation2 + $0x120] sm:$0xff] 0.0
          %453 = vst [vmem:[#allocation2 + $0x128] sm:$0xff] 0.0
          %454 = vst [vmem:[#allocation2 + $0x130] sm:$0xff] 0.0
          %455 = vst [vmem:[#allocation2 + $0x138] sm:$0xff] 0.0
          %456 = vst [vmem:[#allocation2 + $0x140] sm:$0xff] 0.0
          %457 = vst [vmem:[#allocation2 + $0x148] sm:$0xff] 0.0
          %458 = vst [vmem:[#allocation2 + $0x150] sm:$0xff] 0.0
          %459 = vst [vmem:[#allocation2 + $0x158] sm:$0xff] 0.0
          %460 = vst [vmem:[#allocation2 + $0x160] sm:$0xff] 0.0
          %461 = vst [vmem:[#allocation2 + $0x168] sm:$0xff] 0.0
          %462 = vst [vmem:[#allocation2 + $0x170] sm:$0xff] 0.0
          %463 = vst [vmem:[#allocation2 + $0x178] sm:$0xff] 0.0
          %464 = vst [vmem:[#allocation2 + $0x180] sm:$0xff] 0.0
          %465 = vst [vmem:[#allocation2 + $0x188] sm:$0xff] 0.0
          %466 = vst [vmem:[#allocation2 + $0x190] sm:$0xff] 0.0
          %467 = vst [vmem:[#allocation2 + $0x198] sm:$0xff] 0.0
          %468 = vst [vmem:[#allocation2 + $0x1a0] sm:$0xff] 0.0
          %469 = vst [vmem:[#allocation2 + $0x1a8] sm:$0xff] 0.0
          %470 = vst [vmem:[#allocation2 + $0x1b0] sm:$0xff] 0.0
          %471 = vst [vmem:[#allocation2 + $0x1b8] sm:$0xff] 0.0
          %472 = vst [vmem:[#allocation2 + $0x1c0] sm:$0xff] 0.0
          %473 = vst [vmem:[#allocation2 + $0x1c8] sm:$0xff] 0.0
          %474 = vst [vmem:[#allocation2 + $0x1d0] sm:$0xff] 0.0
          %475 = vst [vmem:[#allocation2 + $0x1d8] sm:$0xff] 0.0
          %476 = vst [vmem:[#allocation2 + $0x1e0] sm:$0xff] 0.0
          %477 = vst [vmem:[#allocation2 + $0x1e8] sm:$0xff] 0.0
          %478 = vst [vmem:[#allocation2 + $0x1f0] sm:$0xff] 0.0
          %479 = vst [vmem:[#allocation2 + $0x1f8] sm:$0xff] 0.0
          %480 = vst [vmem:[#allocation2 + $0x200] sm:$0xff] 0.0
          %481 = vst [vmem:[#allocation2 + $0x208] sm:$0xff] 0.0
          %482 = vst [vmem:[#allocation2 + $0x210] sm:$0xff] 0.0
          %483 = vst [vmem:[#allocation2 + $0x218] sm:$0xff] 0.0
          %484 = vst [vmem:[#allocation2 + $0x220] sm:$0xff] 0.0
          %485 = vst [vmem:[#allocation2 + $0x228] sm:$0xff] 0.0
          %486 = vst [vmem:[#allocation2 + $0x230] sm:$0xff] 0.0
          %487 = vst [vmem:[#allocation2 + $0x238] sm:$0xff] 0.0
          %488 = vst [vmem:[#allocation2 + $0x240] sm:$0xff] 0.0
          %489 = vst [vmem:[#allocation2 + $0x248] sm:$0xff] 0.0
          %490 = vst [vmem:[#allocation2 + $0x250] sm:$0xff] 0.0
          %491 = vst [vmem:[#allocation2 + $0x258] sm:$0xff] 0.0
          %492 = vst [vmem:[#allocation2 + $0x260] sm:$0xff] 0.0
          %493 = vst [vmem:[#allocation2 + $0x268] sm:$0xff] 0.0
          %494 = vst [vmem:[#allocation2 + $0x270] sm:$0xff] 0.0
          %495 = vst [vmem:[#allocation2 + $0x278] sm:$0xff] 0.0
          %496 = vst [vmem:[#allocation2 + $0x280] sm:$0xff] 0.0
          %497 = vst [vmem:[#allocation2 + $0x288] sm:$0xff] 0.0
          %498 = vst [vmem:[#allocation2 + $0x290] sm:$0xff] 0.0
          %499 = vst [vmem:[#allocation2 + $0x298] sm:$0xff] 0.0
          %500 = vst [vmem:[#allocation2 + $0x2a0] sm:$0xff] 0.0
          %501 = vst [vmem:[#allocation2 + $0x2a8] sm:$0xff] 0.0
          %502 = vst [vmem:[#allocation2 + $0x2b0] sm:$0xff] 0.0
          %503 = vst [vmem:[#allocation2 + $0x2b8] sm:$0xff] 0.0
        $region72: #{tpu_custom_call.1} parent=67 // pred_fallthru
          _
        %v504 = vld [vmem:[%s411] sm:$0xff]
        %v505 = vld [vmem:[%s411 + $0x8] sm:$0xff]
        %v506 = vld [vmem:[%s411 + $0x10] sm:$0xff]
        %v507 = vld [vmem:[%s411 + $0x18] sm:$0xff]
        %v508 = vld [vmem:[%s411 + $0x20] sm:$0xff]
        %v509 = vld [vmem:[%s411 + $0x28] sm:$0xff]
        %v510 = vld [vmem:[%s411 + $0x30] sm:$0xff]
        %v511 = vld [vmem:[%s411 + $0x38] sm:$0xff]
        %v512 = vld [vmem:[%s411 + $0x40] sm:$0xff]
        %v513 = vld [vmem:[%s411 + $0x48] sm:$0xff]
        %v514 = vld [vmem:[%s411 + $0x50] sm:$0xff]
        %v515 = vld [vmem:[%s411 + $0x58] sm:$0xff]
        %v516 = vld [vmem:[%s411 + $0x60] sm:$0xff]
        %v517 = vld [vmem:[%s411 + $0x68] sm:$0xff]
        %v518 = vld [vmem:[%s411 + $0x70] sm:$0xff]
        %v519 = vld [vmem:[%s411 + $0x78] sm:$0xff]
        %v520 = vld [vmem:[%s411 + $0x80] sm:$0xff]
        %v521 = vld [vmem:[%s411 + $0x88] sm:$0xff]
        %v522 = vld [vmem:[%s411 + $0x90] sm:$0xff]
        %v523 = vld [vmem:[%s411 + $0x98] sm:$0xff]
        %v524 = vld [vmem:[%s411 + $0xa0] sm:$0xff]
        %v525 = vld [vmem:[%s411 + $0xa8] sm:$0xff]
        %v526 = vld [vmem:[%s411 + $0xb0] sm:$0xff]
        %v527 = vld [vmem:[%s411 + $0xb8] sm:$0xff]
        %v528 = vld [vmem:[%s411 + $0xc0] sm:$0xff]
        %v529 = vld [vmem:[%s411 + $0xc8] sm:$0xff]
        %v530 = vld [vmem:[%s411 + $0xd0] sm:$0xff]
        %v531 = vld [vmem:[%s411 + $0xd8] sm:$0xff]
        %v532 = vld [vmem:[%s411 + $0xe0] sm:$0xff]
        %v533 = vld [vmem:[%s411 + $0xe8] sm:$0xff]
        %v534 = vld [vmem:[%s411 + $0xf0] sm:$0xff]
        %v535 = vld [vmem:[%s411 + $0xf8] sm:$0xff]
        %s536 = scalar_lea.vmem [#allocation2], 96
        %vm537 = vcmask 64512
        %538 = vst.msk [vmem:[%s536 + $0x8] sm:$0xff] %vm537, %v504
        %539 = vst.msk [vmem:[%s536 + $0x10] sm:$0xff] %vm537, %v505
        %540 = vst.msk [vmem:[%s536 + $0x28] sm:$0xff] %vm537, %v506
        %541 = vst.msk [vmem:[%s536 + $0x30] sm:$0xff] %vm537, %v507
        %542 = vst.msk [vmem:[%s536 + $0x48] sm:$0xff] %vm537, %v508
        %543 = vst.msk [vmem:[%s536 + $0x50] sm:$0xff] %vm537, %v509
        %544 = vst.msk [vmem:[%s536 + $0x68] sm:$0xff] %vm537, %v510
        %545 = vst.msk [vmem:[%s536 + $0x70] sm:$0xff] %vm537, %v511
        %546 = vst.msk [vmem:[%s536 + $0x88] sm:$0xff] %vm537, %v512
        %547 = vst.msk [vmem:[%s536 + $0x90] sm:$0xff] %vm537, %v513
        %548 = vst.msk [vmem:[%s536 + $0xa8] sm:$0xff] %vm537, %v514
        %549 = vst.msk [vmem:[%s536 + $0xb0] sm:$0xff] %vm537, %v515
        %550 = vst.msk [vmem:[%s536 + $0xc8] sm:$0xff] %vm537, %v516
        %551 = vst.msk [vmem:[%s536 + $0xd0] sm:$0xff] %vm537, %v517
        %552 = vst.msk [vmem:[%s536 + $0xe8] sm:$0xff] %vm537, %v518
        %553 = vst.msk [vmem:[%s536 + $0xf0] sm:$0xff] %vm537, %v519
        %554 = vst.msk [vmem:[%s536 + $0x108] sm:$0xff] %vm537, %v520
        %555 = vst.msk [vmem:[%s536 + $0x110] sm:$0xff] %vm537, %v521
        %556 = vst.msk [vmem:[%s536 + $0x128] sm:$0xff] %vm537, %v522
        %557 = vst.msk [vmem:[%s536 + $0x130] sm:$0xff] %vm537, %v523
        %558 = vst.msk [vmem:[%s536 + $0x148] sm:$0xff] %vm537, %v524
        %559 = vst.msk [vmem:[%s536 + $0x150] sm:$0xff] %vm537, %v525
        %560 = vst.msk [vmem:[%s536 + $0x168] sm:$0xff] %vm537, %v526
        %561 = vst.msk [vmem:[%s536 + $0x170] sm:$0xff] %vm537, %v527
        %562 = vst.msk [vmem:[%s536 + $0x188] sm:$0xff] %vm537, %v528
        %563 = vst.msk [vmem:[%s536 + $0x190] sm:$0xff] %vm537, %v529
        %564 = vst.msk [vmem:[%s536 + $0x1a8] sm:$0xff] %vm537, %v530
        %565 = vst.msk [vmem:[%s536 + $0x1b0] sm:$0xff] %vm537, %v531
        %566 = vst.msk [vmem:[%s536 + $0x1c8] sm:$0xff] %vm537, %v532
        %567 = vst.msk [vmem:[%s536 + $0x1d0] sm:$0xff] %vm537, %v533
        %568 = vst.msk [vmem:[%s536 + $0x1e8] sm:$0xff] %vm537, %v534
        %569 = vst.msk [vmem:[%s536 + $0x1f0] sm:$0xff] %vm537, %v535
        %v570 = vld [vmem:[#allocation2] sm:$0xff]
        %v571 = vld [vmem:[#allocation2 + $0x8] sm:$0xff]
        %v572 = vld [vmem:[#allocation2 + $0x10] sm:$0xff]
        %v573 = vld [vmem:[#allocation2 + $0x18] sm:$0xff]
        %v574 = vld [vmem:[#allocation2 + $0x20] sm:$0xff]
        %v575 = vld [vmem:[#allocation2 + $0x28] sm:$0xff]
        %v576 = vld [vmem:[#allocation2 + $0x30] sm:$0xff]
        %v577 = vld [vmem:[#allocation2 + $0x38] sm:$0xff]
        %v578 = vld [vmem:[#allocation2 + $0x40] sm:$0xff]
        %v579 = vld [vmem:[#allocation2 + $0x48] sm:$0xff]
        %v580 = vld [vmem:[#allocation2 + $0x50] sm:$0xff]
        %v581 = vld [vmem:[#allocation2 + $0x58] sm:$0xff]
        %v582 = vld [vmem:[#allocation2 + $0x60] sm:$0xff]
        %v583 = vld [vmem:[#allocation2 + $0x68] sm:$0xff]
        %v584 = vld [vmem:[#allocation2 + $0x70] sm:$0xff]
        %v585 = vld [vmem:[#allocation2 + $0x78] sm:$0xff]
        %v586 = vld [vmem:[#allocation2 + $0x80] sm:$0xff]
        %v587 = vld [vmem:[#allocation2 + $0x88] sm:$0xff]
        %v588 = vld [vmem:[#allocation2 + $0x90] sm:$0xff]
        %v589 = vld [vmem:[#allocation2 + $0x98] sm:$0xff]
        %v590 = vld [vmem:[#allocation2 + $0xa0] sm:$0xff]
        %v591 = vld [vmem:[#allocation2 + $0xa8] sm:$0xff]
        %v592 = vld [vmem:[#allocation2 + $0xb0] sm:$0xff]
        %v593 = vld [vmem:[#allocation2 + $0xb8] sm:$0xff]
        %v594 = vld [vmem:[#allocation2 + $0xc0] sm:$0xff]
        %v595 = vld [vmem:[#allocation2 + $0xc8] sm:$0xff]
        %v596 = vld [vmem:[#allocation2 + $0xd0] sm:$0xff]
        %v597 = vld [vmem:[#allocation2 + $0xd8] sm:$0xff]
        %v598 = vld [vmem:[#allocation2 + $0xe0] sm:$0xff]
        %v599 = vld [vmem:[#allocation2 + $0xe8] sm:$0xff]
        %v600 = vld [vmem:[#allocation2 + $0xf0] sm:$0xff]
        %v601 = vld [vmem:[#allocation2 + $0xf8] sm:$0xff]
        %v602 = vld [vmem:[#allocation2 + $0x100] sm:$0xff]
        %v603 = vld [vmem:[#allocation2 + $0x108] sm:$0xff]
        %v604 = vld [vmem:[#allocation2 + $0x110] sm:$0xff]
        %v605 = vld [vmem:[#allocation2 + $0x118] sm:$0xff]
        %v606 = vld [vmem:[#allocation2 + $0x120] sm:$0xff]
        %v607 = vld [vmem:[#allocation2 + $0x128] sm:$0xff]
        %v608 = vld [vmem:[#allocation2 + $0x130] sm:$0xff]
        %v609 = vld [vmem:[#allocation2 + $0x138] sm:$0xff]
        %v610 = vld [vmem:[#allocation2 + $0x140] sm:$0xff]
        %v611 = vld [vmem:[#allocation2 + $0x148] sm:$0xff]
        %v612 = vld [vmem:[#allocation2 + $0x150] sm:$0xff]
        %v613 = vld [vmem:[#allocation2 + $0x158] sm:$0xff]
        %v614 = vld [vmem:[#allocation2 + $0x160] sm:$0xff]
        %v615 = vld [vmem:[#allocation2 + $0x168] sm:$0xff]
        %v616 = vld [vmem:[#allocation2 + $0x170] sm:$0xff]
        %v617 = vld [vmem:[#allocation2 + $0x178] sm:$0xff]
        %v618 = vld [vmem:[#allocation2 + $0x180] sm:$0xff]
        %v619 = vld [vmem:[#allocation2 + $0x188] sm:$0xff]
        %v620 = vld [vmem:[#allocation2 + $0x190] sm:$0xff]
        %v621 = vld [vmem:[#allocation2 + $0x198] sm:$0xff]
        %v622 = vld [vmem:[#allocation2 + $0x1a0] sm:$0xff]
        %v623 = vld [vmem:[#allocation2 + $0x1a8] sm:$0xff]
        %v624 = vld [vmem:[#allocation2 + $0x1b0] sm:$0xff]
        %v625 = vld [vmem:[#allocation2 + $0x1b8] sm:$0xff]
        %v626 = vld [vmem:[#allocation2 + $0x1c0] sm:$0xff]
        %v627 = vld [vmem:[#allocation2 + $0x1c8] sm:$0xff]
        %v628 = vld [vmem:[#allocation2 + $0x1d0] sm:$0xff]
        %v629 = vld [vmem:[#allocation2 + $0x1d8] sm:$0xff]
        %v630 = vld [vmem:[#allocation2 + $0x1e0] sm:$0xff]
        %v631 = vld [vmem:[#allocation2 + $0x1e8] sm:$0xff]
        %v632 = vld [vmem:[#allocation2 + $0x1f0] sm:$0xff]
        %v633 = vld [vmem:[#allocation2 + $0x1f8] sm:$0xff]
        %v634 = vld [vmem:[#allocation2 + $0x200] sm:$0xff]
        %v635 = vld [vmem:[#allocation2 + $0x208] sm:$0xff]
        %v636 = vld [vmem:[#allocation2 + $0x210] sm:$0xff]
        %v637 = vld [vmem:[#allocation2 + $0x218] sm:$0xff]
        %v638 = vld [vmem:[#allocation2 + $0x220] sm:$0xff]
        %v639 = vld [vmem:[#allocation2 + $0x228] sm:$0xff]
        %v640 = vld [vmem:[#allocation2 + $0x230] sm:$0xff]
        %v641 = vld [vmem:[#allocation2 + $0x238] sm:$0xff]
        %v642 = vld [vmem:[#allocation2 + $0x240] sm:$0xff]
        %v643 = vld [vmem:[#allocation2 + $0x248] sm:$0xff]
        %v644 = vld [vmem:[#allocation2 + $0x250] sm:$0xff]
        %v645 = vld [vmem:[#allocation2 + $0x258] sm:$0xff]
        %v646 = vld [vmem:[#allocation2 + $0x260] sm:$0xff]
        %v647 = vld [vmem:[#allocation2 + $0x268] sm:$0xff]
        %v648 = vld [vmem:[#allocation2 + $0x270] sm:$0xff]
        %v649 = vld [vmem:[#allocation2 + $0x278] sm:$0xff]
        %v650 = vld [vmem:[#allocation2 + $0x280] sm:$0xff]
        %v651 = vld [vmem:[#allocation2 + $0x288] sm:$0xff]
        %v652 = vld [vmem:[#allocation2 + $0x290] sm:$0xff]
        %v653 = vld [vmem:[#allocation2 + $0x298] sm:$0xff]
        %v654 = vld [vmem:[#allocation2 + $0x2a0] sm:$0xff]
        %v655 = vld [vmem:[#allocation2 + $0x2a8] sm:$0xff]
        %v656 = vld [vmem:[#allocation2 + $0x2b0] sm:$0xff]
        %v657 = vld [vmem:[#allocation2 + $0x2b8] sm:$0xff]
        %v658 = vld [vmem:[%s1] sm:$0x7f]
        %v659 = vld [vmem:[%s1 + $0x8] sm:$0x7f]
        %v660 = vld [vmem:[%s1 + $0x10] sm:$0x7f]
        %v661 = vld [vmem:[%s1 + $0x18] sm:$0x7f]
        %v662 = vld [vmem:[%s1 + $0x20] sm:$0x7f]
        %v663 = vld [vmem:[%s1 + $0x28] sm:$0x7f]
        %v664 = vld [vmem:[%s1 + $0x30] sm:$0x7f]
        %v665 = vrot.slane %v570, 5
        %v666 = vrot.slane %v574, 5
        %v667 = vrot.slane %v578, 5
        %v668 = vrot.slane %v582, 5
        %v669 = vrot.slane %v586, 5
        %v670 = vrot.slane %v590, 5
        %v671 = vrot.slane %v594, 5
        %v672 = vrot.slane %v598, 5
        %v673 = vrot.slane %v602, 5
        %v674 = vrot.slane %v606, 5
        %v675 = vrot.slane %v610, 5
        %v676 = vrot.slane %v614, 5
        %v677 = vrot.slane %v618, 5
        %v678 = vrot.slane %v622, 5
        %v679 = vrot.slane %v626, 5
        %v680 = vrot.slane %v630, 5
        %v681 = vrot.slane %v634, 5
        %v682 = vrot.slane %v638, 5
        %v683 = vrot.slane %v642, 5
        %v684 = vrot.slane %v646, 5
        %v685 = vrot.slane %v650, 5
        %v686 = vrot.slane %v654, 5
        %v687 = vrot.slane %v571, 5
        %v688 = vrot.slane %v575, 5
        %v689 = vrot.slane %v579, 5
        %v690 = vrot.slane %v583, 5
        %v691 = vrot.slane %v587, 5
        %v692 = vrot.slane %v591, 5
        %v693 = vrot.slane %v595, 5
        %v694 = vrot.slane %v599, 5
        %v695 = vrot.slane %v603, 5
        %v696 = vrot.slane %v607, 5
        %v697 = vrot.slane %v611, 5
        %v698 = vrot.slane %v615, 5
        %v699 = vrot.slane %v619, 5
        %v700 = vrot.slane %v623, 5
        %v701 = vrot.slane %v627, 5
        %v702 = vrot.slane %v631, 5
        %v703 = vrot.slane %v635, 5
        %v704 = vrot.slane %v639, 5
        %v705 = vrot.slane %v643, 5
        %v706 = vrot.slane %v647, 5
        %v707 = vrot.slane %v651, 5
        %v708 = vrot.slane %v655, 5
        %v709 = vrot.slane %v572, 5
        %v710 = vrot.slane %v576, 5
        %v711 = vrot.slane %v580, 5
        %v712 = vrot.slane %v584, 5
        %v713 = vrot.slane %v588, 5
        %v714 = vrot.slane %v592, 5
        %v715 = vrot.slane %v596, 5
        %v716 = vrot.slane %v600, 5
        %v717 = vrot.slane %v604, 5
        %v718 = vrot.slane %v608, 5
        %v719 = vrot.slane %v612, 5
        %v720 = vrot.slane %v616, 5
        %v721 = vrot.slane %v620, 5
        %v722 = vrot.slane %v624, 5
        %v723 = vrot.slane %v628, 5
        %v724 = vrot.slane %v632, 5
        %v725 = vrot.slane %v636, 5
        %v726 = vrot.slane %v640, 5
        %v727 = vrot.slane %v644, 5
        %v728 = vrot.slane %v648, 5
        %v729 = vrot.slane %v652, 5
        %v730 = vrot.slane %v656, 5
        %v731 = vlaneseq
        %v732 = vshrl.u32 %v731, 7
        %vm733 = vcmp.lt.s32.totalorder %v732, 3
        %v734 = vsel %vm733, %v687, %v709
        %v735 = vsel %vm733, %v688, %v710
        %v736 = vsel %vm733, %v689, %v711
        %v737 = vsel %vm733, %v690, %v712
        %v738 = vsel %vm733, %v691, %v713
        %v739 = vsel %vm733, %v692, %v714
        %v740 = vsel %vm733, %v693, %v715
        %v741 = vsel %vm733, %v694, %v716
        %v742 = vsel %vm733, %v695, %v717
        %v743 = vsel %vm733, %v696, %v718
        %v744 = vsel %vm733, %v697, %v719
        %v745 = vsel %vm733, %v698, %v720
        %v746 = vsel %vm733, %v699, %v721
        %v747 = vsel %vm733, %v700, %v722
        %v748 = vsel %vm733, %v701, %v723
        %v749 = vsel %vm733, %v702, %v724
        %v750 = vsel %vm733, %v703, %v725
        %v751 = vsel %vm733, %v704, %v726
        %v752 = vsel %vm733, %v705, %v727
        %v753 = vsel %vm733, %v706, %v728
        %v754 = vsel %vm733, %v707, %v729
        %v755 = vsel %vm733, %v708, %v730
        %v756 = vsel %vm733, %v665, %v687
        %v757 = vsel %vm733, %v666, %v688
        %v758 = vsel %vm733, %v667, %v689
        %v759 = vsel %vm733, %v668, %v690
        %v760 = vsel %vm733, %v669, %v691
        %v761 = vsel %vm733, %v670, %v692
        %v762 = vsel %vm733, %v671, %v693
        %v763 = vsel %vm733, %v672, %v694
        %v764 = vsel %vm733, %v673, %v695
        %v765 = vsel %vm733, %v674, %v696
        %v766 = vsel %vm733, %v675, %v697
        %v767 = vsel %vm733, %v676, %v698
        %v768 = vsel %vm733, %v677, %v699
        %v769 = vsel %vm733, %v678, %v700
        %v770 = vsel %vm733, %v679, %v701
        %v771 = vsel %vm733, %v680, %v702
        %v772 = vsel %vm733, %v681, %v703
        %v773 = vsel %vm733, %v682, %v704
        %v774 = vsel %vm733, %v683, %v705
        %v775 = vsel %vm733, %v684, %v706
        %v776 = vsel %vm733, %v685, %v707
        %v777 = vsel %vm733, %v686, %v708
        %v778 = vperm.slane %v658, 0
        %v779 = vmul.f32 %v756, %v778
        %v780 = vmul.f32 %v734, %v778
        %v781 = vmul.f32 %v757, %v778
        %v782 = vmul.f32 %v735, %v778
        %v783 = vmul.f32 %v758, %v778
        %v784 = vmul.f32 %v736, %v778
        %v785 = vmul.f32 %v759, %v778
        %v786 = vmul.f32 %v737, %v778
        %v787 = vmul.f32 %v760, %v778
        %v788 = vmul.f32 %v738, %v778
        %v789 = vmul.f32 %v761, %v778
        %v790 = vmul.f32 %v739, %v778
        %v791 = vmul.f32 %v762, %v778
        %v792 = vmul.f32 %v740, %v778
        %v793 = vmul.f32 %v763, %v778
        %v794 = vmul.f32 %v741, %v778
        %v795 = vmul.f32 %v764, %v778
        %v796 = vmul.f32 %v742, %v778
        %v797 = vmul.f32 %v765, %v778
        %v798 = vmul.f32 %v743, %v778
        %v799 = vmul.f32 %v766, %v778
        %v800 = vmul.f32 %v744, %v778
        %v801 = vmul.f32 %v767, %v778
        %v802 = vmul.f32 %v745, %v778
        %v803 = vmul.f32 %v768, %v778
        %v804 = vmul.f32 %v746, %v778
        %v805 = vmul.f32 %v769, %v778
        %v806 = vmul.f32 %v747, %v778
        %v807 = vmul.f32 %v770, %v778
        %v808 = vmul.f32 %v748, %v778
        %v809 = vmul.f32 %v771, %v778
        %v810 = vmul.f32 %v749, %v778
        %v811 = vperm.slane %v659, 0
        %v812 = vmul.f32 %v757, %v811
        %v813 = vmul.f32 %v735, %v811
        %v814 = vmul.f32 %v758, %v811
        %v815 = vmul.f32 %v736, %v811
        %v816 = vmul.f32 %v759, %v811
        %v817 = vmul.f32 %v737, %v811
        %v818 = vmul.f32 %v760, %v811
        %v819 = vmul.f32 %v738, %v811
        %v820 = vmul.f32 %v761, %v811
        %v821 = vmul.f32 %v739, %v811
        %v822 = vmul.f32 %v762, %v811
        %v823 = vmul.f32 %v740, %v811
        %v824 = vmul.f32 %v763, %v811
        %v825 = vmul.f32 %v741, %v811
        %v826 = vmul.f32 %v764, %v811
        %v827 = vmul.f32 %v742, %v811
        %v828 = vmul.f32 %v765, %v811
        %v829 = vmul.f32 %v743, %v811
        %v830 = vmul.f32 %v766, %v811
        %v831 = vmul.f32 %v744, %v811
        %v832 = vmul.f32 %v767, %v811
        %v833 = vmul.f32 %v745, %v811
        %v834 = vmul.f32 %v768, %v811
        %v835 = vmul.f32 %v746, %v811
        %v836 = vmul.f32 %v769, %v811
        %v837 = vmul.f32 %v747, %v811
        %v838 = vmul.f32 %v770, %v811
        %v839 = vmul.f32 %v748, %v811
        %v840 = vmul.f32 %v771, %v811
        %v841 = vmul.f32 %v749, %v811
        %v842 = vmul.f32 %v772, %v811
        %v843 = vmul.f32 %v750, %v811
        %v844 = vld [vmem:[%s2] sm:$0x1]
        %v846 = vperm.slane %v844, 0
        %v848 = vadd.f32 %v812, %v846
        %v849 = vadd.f32 %v813, %v846
        %v850 = vadd.f32 %v814, %v846
        %v851 = vadd.f32 %v815, %v846
        %v852 = vadd.f32 %v816, %v846
        %v853 = vadd.f32 %v817, %v846
        %v854 = vadd.f32 %v818, %v846
        %v855 = vadd.f32 %v819, %v846
        %v856 = vadd.f32 %v820, %v846
        %v857 = vadd.f32 %v821, %v846
        %v858 = vadd.f32 %v822, %v846
        %v859 = vadd.f32 %v823, %v846
        %v860 = vadd.f32 %v824, %v846
        %v861 = vadd.f32 %v825, %v846
        %v862 = vadd.f32 %v826, %v846
        %v863 = vadd.f32 %v827, %v846
        %v864 = vadd.f32 %v828, %v846
        %v865 = vadd.f32 %v829, %v846
        %v866 = vadd.f32 %v830, %v846
        %v867 = vadd.f32 %v831, %v846
        %v868 = vadd.f32 %v832, %v846
        %v869 = vadd.f32 %v833, %v846
        %v870 = vadd.f32 %v834, %v846
        %v871 = vadd.f32 %v835, %v846
        %v872 = vadd.f32 %v836, %v846
        %v873 = vadd.f32 %v837, %v846
        %v874 = vadd.f32 %v838, %v846
        %v875 = vadd.f32 %v839, %v846
        %v876 = vadd.f32 %v840, %v846
        %v877 = vadd.f32 %v841, %v846
        %v878 = vadd.f32 %v842, %v846
        %v879 = vadd.f32 %v843, %v846
        %v880 = vperm.slane %v660, 0
        %v881 = vmul.f32 %v758, %v880
        %v882 = vmul.f32 %v736, %v880
        %v883 = vmul.f32 %v759, %v880
        %v884 = vmul.f32 %v737, %v880
        %v885 = vmul.f32 %v760, %v880
        %v886 = vmul.f32 %v738, %v880
        %v887 = vmul.f32 %v761, %v880
        %v888 = vmul.f32 %v739, %v880
        %v889 = vmul.f32 %v762, %v880
        %v890 = vmul.f32 %v740, %v880
        %v891 = vmul.f32 %v763, %v880
        %v892 = vmul.f32 %v741, %v880
        %v893 = vmul.f32 %v764, %v880
        %v894 = vmul.f32 %v742, %v880
        %v895 = vmul.f32 %v765, %v880
        %v896 = vmul.f32 %v743, %v880
        %v897 = vmul.f32 %v766, %v880
        %v898 = vmul.f32 %v744, %v880
        %v899 = vmul.f32 %v767, %v880
        %v900 = vmul.f32 %v745, %v880
        %v901 = vmul.f32 %v768, %v880
        %v902 = vmul.f32 %v746, %v880
        %v903 = vmul.f32 %v769, %v880
        %v904 = vmul.f32 %v747, %v880
        %v905 = vmul.f32 %v770, %v880
        %v906 = vmul.f32 %v748, %v880
        %v907 = vmul.f32 %v771, %v880
        %v908 = vmul.f32 %v749, %v880
        %v909 = vmul.f32 %v772, %v880
        %v910 = vmul.f32 %v750, %v880
        %v911 = vmul.f32 %v773, %v880
        %v912 = vmul.f32 %v751, %v880
        %v913 = vadd.f32 %v779, %v881
        %v914 = vadd.f32 %v780, %v882
        %v915 = vadd.f32 %v781, %v883
        %v916 = vadd.f32 %v782, %v884
        %v917 = vadd.f32 %v783, %v885
        %v918 = vadd.f32 %v784, %v886
        %v919 = vadd.f32 %v785, %v887
        %v920 = vadd.f32 %v786, %v888
        %v921 = vadd.f32 %v787, %v889
        %v922 = vadd.f32 %v788, %v890
        %v923 = vadd.f32 %v789, %v891
        %v924 = vadd.f32 %v790, %v892
        %v925 = vadd.f32 %v791, %v893
        %v926 = vadd.f32 %v792, %v894
        %v927 = vadd.f32 %v793, %v895
        %v928 = vadd.f32 %v794, %v896
        %v929 = vadd.f32 %v795, %v897
        %v930 = vadd.f32 %v796, %v898
        %v931 = vadd.f32 %v797, %v899
        %v932 = vadd.f32 %v798, %v900
        %v933 = vadd.f32 %v799, %v901
        %v934 = vadd.f32 %v800, %v902
        %v935 = vadd.f32 %v801, %v903
        %v936 = vadd.f32 %v802, %v904
        %v937 = vadd.f32 %v803, %v905
        %v938 = vadd.f32 %v804, %v906
        %v939 = vadd.f32 %v805, %v907
        %v940 = vadd.f32 %v806, %v908
        %v941 = vadd.f32 %v807, %v909
        %v942 = vadd.f32 %v808, %v910
        %v943 = vadd.f32 %v809, %v911
        %v944 = vadd.f32 %v810, %v912
        %v945 = vperm.slane %v661, 0
        %v946 = vmul.f32 %v759, %v945
        %v947 = vmul.f32 %v737, %v945
        %v948 = vmul.f32 %v760, %v945
        %v949 = vmul.f32 %v738, %v945
        %v950 = vmul.f32 %v761, %v945
        %v951 = vmul.f32 %v739, %v945
        %v952 = vmul.f32 %v762, %v945
        %v953 = vmul.f32 %v740, %v945
        %v954 = vmul.f32 %v763, %v945
        %v955 = vmul.f32 %v741, %v945
        %v956 = vmul.f32 %v764, %v945
        %v957 = vmul.f32 %v742, %v945
        %v958 = vmul.f32 %v765, %v945
        %v959 = vmul.f32 %v743, %v945
        %v960 = vmul.f32 %v766, %v945
        %v961 = vmul.f32 %v744, %v945
        %v962 = vmul.f32 %v767, %v945
        %v963 = vmul.f32 %v745, %v945
        %v964 = vmul.f32 %v768, %v945
        %v965 = vmul.f32 %v746, %v945
        %v966 = vmul.f32 %v769, %v945
        %v967 = vmul.f32 %v747, %v945
        %v968 = vmul.f32 %v770, %v945
        %v969 = vmul.f32 %v748, %v945
        %v970 = vmul.f32 %v771, %v945
        %v971 = vmul.f32 %v749, %v945
        %v972 = vmul.f32 %v772, %v945
        %v973 = vmul.f32 %v750, %v945
        %v974 = vmul.f32 %v773, %v945
        %v975 = vmul.f32 %v751, %v945
        %v976 = vmul.f32 %v774, %v945
        %v977 = vmul.f32 %v752, %v945
        %v978 = vadd.f32 %v848, %v946
        %v979 = vadd.f32 %v849, %v947
        %v980 = vadd.f32 %v850, %v948
        %v981 = vadd.f32 %v851, %v949
        %v982 = vadd.f32 %v852, %v950
        %v983 = vadd.f32 %v853, %v951
        %v984 = vadd.f32 %v854, %v952
        %v985 = vadd.f32 %v855, %v953
        %v986 = vadd.f32 %v856, %v954
        %v987 = vadd.f32 %v857, %v955
        %v988 = vadd.f32 %v858, %v956
        %v989 = vadd.f32 %v859, %v957
        %v990 = vadd.f32 %v860, %v958
        %v991 = vadd.f32 %v861, %v959
        %v992 = vadd.f32 %v862, %v960
        %v993 = vadd.f32 %v863, %v961
        %v994 = vadd.f32 %v864, %v962
        %v995 = vadd.f32 %v865, %v963
        %v996 = vadd.f32 %v866, %v964
        %v997 = vadd.f32 %v867, %v965
        %v998 = vadd.f32 %v868, %v966
        %v999 = vadd.f32 %v869, %v967
        %v1000 = vadd.f32 %v870, %v968
        %v1001 = vadd.f32 %v871, %v969
        %v1002 = vadd.f32 %v872, %v970
        %v1003 = vadd.f32 %v873, %v971
        %v1004 = vadd.f32 %v874, %v972
        %v1005 = vadd.f32 %v875, %v973
        %v1006 = vadd.f32 %v876, %v974
        %v1007 = vadd.f32 %v877, %v975
        %v1008 = vadd.f32 %v878, %v976
        %v1009 = vadd.f32 %v879, %v977
        %v1010 = vperm.slane %v662, 0
        %v1011 = vmul.f32 %v760, %v1010
        %v1012 = vmul.f32 %v738, %v1010
        %v1013 = vmul.f32 %v761, %v1010
        %v1014 = vmul.f32 %v739, %v1010
        %v1015 = vmul.f32 %v762, %v1010
        %v1016 = vmul.f32 %v740, %v1010
        %v1017 = vmul.f32 %v763, %v1010
        %v1018 = vmul.f32 %v741, %v1010
        %v1019 = vmul.f32 %v764, %v1010
        %v1020 = vmul.f32 %v742, %v1010
        %v1021 = vmul.f32 %v765, %v1010
        %v1022 = vmul.f32 %v743, %v1010
        %v1023 = vmul.f32 %v766, %v1010
        %v1024 = vmul.f32 %v744, %v1010
        %v1025 = vmul.f32 %v767, %v1010
        %v1026 = vmul.f32 %v745, %v1010
        %v1027 = vmul.f32 %v768, %v1010
        %v1028 = vmul.f32 %v746, %v1010
        %v1029 = vmul.f32 %v769, %v1010
        %v1030 = vmul.f32 %v747, %v1010
        %v1031 = vmul.f32 %v770, %v1010
        %v1032 = vmul.f32 %v748, %v1010
        %v1033 = vmul.f32 %v771, %v1010
        %v1034 = vmul.f32 %v749, %v1010
        %v1035 = vmul.f32 %v772, %v1010
        %v1036 = vmul.f32 %v750, %v1010
        %v1037 = vmul.f32 %v773, %v1010
        %v1038 = vmul.f32 %v751, %v1010
        %v1039 = vmul.f32 %v774, %v1010
        %v1040 = vmul.f32 %v752, %v1010
        %v1041 = vmul.f32 %v775, %v1010
        %v1042 = vmul.f32 %v753, %v1010
        %v1043 = vadd.f32 %v913, %v1011
        %v1044 = vadd.f32 %v914, %v1012
        %v1045 = vadd.f32 %v915, %v1013
        %v1046 = vadd.f32 %v916, %v1014
        %v1047 = vadd.f32 %v917, %v1015
        %v1048 = vadd.f32 %v918, %v1016
        %v1049 = vadd.f32 %v919, %v1017
        %v1050 = vadd.f32 %v920, %v1018
        %v1051 = vadd.f32 %v921, %v1019
        %v1052 = vadd.f32 %v922, %v1020
        %v1053 = vadd.f32 %v923, %v1021
        %v1054 = vadd.f32 %v924, %v1022
        %v1055 = vadd.f32 %v925, %v1023
        %v1056 = vadd.f32 %v926, %v1024
        %v1057 = vadd.f32 %v927, %v1025
        %v1058 = vadd.f32 %v928, %v1026
        %v1059 = vadd.f32 %v929, %v1027
        %v1060 = vadd.f32 %v930, %v1028
        %v1061 = vadd.f32 %v931, %v1029
        %v1062 = vadd.f32 %v932, %v1030
        %v1063 = vadd.f32 %v933, %v1031
        %v1064 = vadd.f32 %v934, %v1032
        %v1065 = vadd.f32 %v935, %v1033
        %v1066 = vadd.f32 %v936, %v1034
        %v1067 = vadd.f32 %v937, %v1035
        %v1068 = vadd.f32 %v938, %v1036
        %v1069 = vadd.f32 %v939, %v1037
        %v1070 = vadd.f32 %v940, %v1038
        %v1071 = vadd.f32 %v941, %v1039
        %v1072 = vadd.f32 %v942, %v1040
        %v1073 = vadd.f32 %v943, %v1041
        %v1074 = vadd.f32 %v944, %v1042
        %v1075 = vperm.slane %v663, 0
        %v1076 = vmul.f32 %v761, %v1075
        %v1077 = vmul.f32 %v739, %v1075
        %v1078 = vmul.f32 %v762, %v1075
        %v1079 = vmul.f32 %v740, %v1075
        %v1080 = vmul.f32 %v763, %v1075
        %v1081 = vmul.f32 %v741, %v1075
        %v1082 = vmul.f32 %v764, %v1075
        %v1083 = vmul.f32 %v742, %v1075
        %v1084 = vmul.f32 %v765, %v1075
        %v1085 = vmul.f32 %v743, %v1075
        %v1086 = vmul.f32 %v766, %v1075
        %v1087 = vmul.f32 %v744, %v1075
        %v1088 = vmul.f32 %v767, %v1075
        %v1089 = vmul.f32 %v745, %v1075
        %v1090 = vmul.f32 %v768, %v1075
        %v1091 = vmul.f32 %v746, %v1075
        %v1092 = vmul.f32 %v769, %v1075
        %v1093 = vmul.f32 %v747, %v1075
        %v1094 = vmul.f32 %v770, %v1075
        %v1095 = vmul.f32 %v748, %v1075
        %v1096 = vmul.f32 %v771, %v1075
        %v1097 = vmul.f32 %v749, %v1075
        %v1098 = vmul.f32 %v772, %v1075
        %v1099 = vmul.f32 %v750, %v1075
        %v1100 = vmul.f32 %v773, %v1075
        %v1101 = vmul.f32 %v751, %v1075
        %v1102 = vmul.f32 %v774, %v1075
        %v1103 = vmul.f32 %v752, %v1075
        %v1104 = vmul.f32 %v775, %v1075
        %v1105 = vmul.f32 %v753, %v1075
        %v1106 = vmul.f32 %v776, %v1075
        %v1107 = vmul.f32 %v754, %v1075
        %v1108 = vadd.f32 %v978, %v1076
        %v1109 = vadd.f32 %v979, %v1077
        %v1110 = vadd.f32 %v980, %v1078
        %v1111 = vadd.f32 %v981, %v1079
        %v1112 = vadd.f32 %v982, %v1080
        %v1113 = vadd.f32 %v983, %v1081
        %v1114 = vadd.f32 %v984, %v1082
        %v1115 = vadd.f32 %v985, %v1083
        %v1116 = vadd.f32 %v986, %v1084
        %v1117 = vadd.f32 %v987, %v1085
        %v1118 = vadd.f32 %v988, %v1086
        %v1119 = vadd.f32 %v989, %v1087
        %v1120 = vadd.f32 %v990, %v1088
        %v1121 = vadd.f32 %v991, %v1089
        %v1122 = vadd.f32 %v992, %v1090
        %v1123 = vadd.f32 %v993, %v1091
        %v1124 = vadd.f32 %v994, %v1092
        %v1125 = vadd.f32 %v995, %v1093
        %v1126 = vadd.f32 %v996, %v1094
        %v1127 = vadd.f32 %v997, %v1095
        %v1128 = vadd.f32 %v998, %v1096
        %v1129 = vadd.f32 %v999, %v1097
        %v1130 = vadd.f32 %v1000, %v1098
        %v1131 = vadd.f32 %v1001, %v1099
        %v1132 = vadd.f32 %v1002, %v1100
        %v1133 = vadd.f32 %v1003, %v1101
        %v1134 = vadd.f32 %v1004, %v1102
        %v1135 = vadd.f32 %v1005, %v1103
        %v1136 = vadd.f32 %v1006, %v1104
        %v1137 = vadd.f32 %v1007, %v1105
        %v1138 = vadd.f32 %v1008, %v1106
        %v1139 = vadd.f32 %v1009, %v1107
        %v1140 = vperm.slane %v664, 0
        %v1141 = vmul.f32 %v762, %v1140
        %v1142 = vmul.f32 %v740, %v1140
        %v1143 = vmul.f32 %v763, %v1140
        %v1144 = vmul.f32 %v741, %v1140
        %v1145 = vmul.f32 %v764, %v1140
        %v1146 = vmul.f32 %v742, %v1140
        %v1147 = vmul.f32 %v765, %v1140
        %v1148 = vmul.f32 %v743, %v1140
        %v1149 = vmul.f32 %v766, %v1140
        %v1150 = vmul.f32 %v744, %v1140
        %v1151 = vmul.f32 %v767, %v1140
        %v1152 = vmul.f32 %v745, %v1140
        %v1153 = vmul.f32 %v768, %v1140
        %v1154 = vmul.f32 %v746, %v1140
        %v1155 = vmul.f32 %v769, %v1140
        %v1156 = vmul.f32 %v747, %v1140
        %v1157 = vmul.f32 %v770, %v1140
        %v1158 = vmul.f32 %v748, %v1140
        %v1159 = vmul.f32 %v771, %v1140
        %v1160 = vmul.f32 %v749, %v1140
        %v1161 = vmul.f32 %v772, %v1140
        %v1162 = vmul.f32 %v750, %v1140
        %v1163 = vmul.f32 %v773, %v1140
        %v1164 = vmul.f32 %v751, %v1140
        %v1165 = vmul.f32 %v774, %v1140
        %v1166 = vmul.f32 %v752, %v1140
        %v1167 = vmul.f32 %v775, %v1140
        %v1168 = vmul.f32 %v753, %v1140
        %v1169 = vmul.f32 %v776, %v1140
        %v1170 = vmul.f32 %v754, %v1140
        %v1171 = vmul.f32 %v777, %v1140
        %v1172 = vmul.f32 %v755, %v1140
        %v1173 = vadd.f32 %v1043, %v1141
        %v1174 = vadd.f32 %v1044, %v1142
        %v1175 = vadd.f32 %v1045, %v1143
        %v1176 = vadd.f32 %v1046, %v1144
        %v1177 = vadd.f32 %v1047, %v1145
        %v1178 = vadd.f32 %v1048, %v1146
        %v1179 = vadd.f32 %v1049, %v1147
        %v1180 = vadd.f32 %v1050, %v1148
        %v1181 = vadd.f32 %v1051, %v1149
        %v1182 = vadd.f32 %v1052, %v1150
        %v1183 = vadd.f32 %v1053, %v1151
        %v1184 = vadd.f32 %v1054, %v1152
        %v1185 = vadd.f32 %v1055, %v1153
        %v1186 = vadd.f32 %v1056, %v1154
        %v1187 = vadd.f32 %v1057, %v1155
        %v1188 = vadd.f32 %v1058, %v1156
        %v1189 = vadd.f32 %v1059, %v1157
        %v1190 = vadd.f32 %v1060, %v1158
        %v1191 = vadd.f32 %v1061, %v1159
        %v1192 = vadd.f32 %v1062, %v1160
        %v1193 = vadd.f32 %v1063, %v1161
        %v1194 = vadd.f32 %v1064, %v1162
        %v1195 = vadd.f32 %v1065, %v1163
        %v1196 = vadd.f32 %v1066, %v1164
        %v1197 = vadd.f32 %v1067, %v1165
        %v1198 = vadd.f32 %v1068, %v1166
        %v1199 = vadd.f32 %v1069, %v1167
        %v1200 = vadd.f32 %v1070, %v1168
        %v1201 = vadd.f32 %v1071, %v1169
        %v1202 = vadd.f32 %v1072, %v1170
        %v1203 = vadd.f32 %v1073, %v1171
        %v1204 = vadd.f32 %v1074, %v1172
        %v1205 = vrot.slane %v570, 6
        %v1206 = vrot.slane %v574, 6
        %v1207 = vrot.slane %v578, 6
        %v1208 = vrot.slane %v582, 6
        %v1209 = vrot.slane %v586, 6
        %v1210 = vrot.slane %v590, 6
        %v1211 = vrot.slane %v594, 6
        %v1212 = vrot.slane %v598, 6
        %v1213 = vrot.slane %v602, 6
        %v1214 = vrot.slane %v606, 6
        %v1215 = vrot.slane %v610, 6
        %v1216 = vrot.slane %v614, 6
        %v1217 = vrot.slane %v618, 6
        %v1218 = vrot.slane %v622, 6
        %v1219 = vrot.slane %v626, 6
        %v1220 = vrot.slane %v630, 6
        %v1221 = vrot.slane %v634, 6
        %v1222 = vrot.slane %v638, 6
        %v1223 = vrot.slane %v642, 6
        %v1224 = vrot.slane %v646, 6
        %v1225 = vrot.slane %v650, 6
        %v1226 = vrot.slane %v654, 6
        %v1227 = vrot.slane %v571, 6
        %v1228 = vrot.slane %v575, 6
        %v1229 = vrot.slane %v579, 6
        %v1230 = vrot.slane %v583, 6
        %v1231 = vrot.slane %v587, 6
        %v1232 = vrot.slane %v591, 6
        %v1233 = vrot.slane %v595, 6
        %v1234 = vrot.slane %v599, 6
        %v1235 = vrot.slane %v603, 6
        %v1236 = vrot.slane %v607, 6
        %v1237 = vrot.slane %v611, 6
        %v1238 = vrot.slane %v615, 6
        %v1239 = vrot.slane %v619, 6
        %v1240 = vrot.slane %v623, 6
        %v1241 = vrot.slane %v627, 6
        %v1242 = vrot.slane %v631, 6
        %v1243 = vrot.slane %v635, 6
        %v1244 = vrot.slane %v639, 6
        %v1245 = vrot.slane %v643, 6
        %v1246 = vrot.slane %v647, 6
        %v1247 = vrot.slane %v651, 6
        %v1248 = vrot.slane %v655, 6
        %v1249 = vrot.slane %v572, 6
        %v1250 = vrot.slane %v576, 6
        %v1251 = vrot.slane %v580, 6
        %v1252 = vrot.slane %v584, 6
        %v1253 = vrot.slane %v588, 6
        %v1254 = vrot.slane %v592, 6
        %v1255 = vrot.slane %v596, 6
        %v1256 = vrot.slane %v600, 6
        %v1257 = vrot.slane %v604, 6
        %v1258 = vrot.slane %v608, 6
        %v1259 = vrot.slane %v612, 6
        %v1260 = vrot.slane %v616, 6
        %v1261 = vrot.slane %v620, 6
        %v1262 = vrot.slane %v624, 6
        %v1263 = vrot.slane %v628, 6
        %v1264 = vrot.slane %v632, 6
        %v1265 = vrot.slane %v636, 6
        %v1266 = vrot.slane %v640, 6
        %v1267 = vrot.slane %v644, 6
        %v1268 = vrot.slane %v648, 6
        %v1269 = vrot.slane %v652, 6
        %v1270 = vrot.slane %v656, 6
        %vm1271 = vcmp.lt.s32.totalorder %v732, 2
        %v1272 = vsel %vm1271, %v1227, %v1249
        %v1273 = vsel %vm1271, %v1228, %v1250
        %v1274 = vsel %vm1271, %v1229, %v1251
        %v1275 = vsel %vm1271, %v1230, %v1252
        %v1276 = vsel %vm1271, %v1231, %v1253
        %v1277 = vsel %vm1271, %v1232, %v1254
        %v1278 = vsel %vm1271, %v1233, %v1255
        %v1279 = vsel %vm1271, %v1234, %v1256
        %v1280 = vsel %vm1271, %v1235, %v1257
        %v1281 = vsel %vm1271, %v1236, %v1258
        %v1282 = vsel %vm1271, %v1237, %v1259
        %v1283 = vsel %vm1271, %v1238, %v1260
        %v1284 = vsel %vm1271, %v1239, %v1261
        %v1285 = vsel %vm1271, %v1240, %v1262
        %v1286 = vsel %vm1271, %v1241, %v1263
        %v1287 = vsel %vm1271, %v1242, %v1264
        %v1288 = vsel %vm1271, %v1243, %v1265
        %v1289 = vsel %vm1271, %v1244, %v1266
        %v1290 = vsel %vm1271, %v1245, %v1267
        %v1291 = vsel %vm1271, %v1246, %v1268
        %v1292 = vsel %vm1271, %v1247, %v1269
        %v1293 = vsel %vm1271, %v1248, %v1270
        %v1294 = vsel %vm1271, %v1205, %v1227
        %v1295 = vsel %vm1271, %v1206, %v1228
        %v1296 = vsel %vm1271, %v1207, %v1229
        %v1297 = vsel %vm1271, %v1208, %v1230
        %v1298 = vsel %vm1271, %v1209, %v1231
        %v1299 = vsel %vm1271, %v1210, %v1232
        %v1300 = vsel %vm1271, %v1211, %v1233
        %v1301 = vsel %vm1271, %v1212, %v1234
        %v1302 = vsel %vm1271, %v1213, %v1235
        %v1303 = vsel %vm1271, %v1214, %v1236
        %v1304 = vsel %vm1271, %v1215, %v1237
        %v1305 = vsel %vm1271, %v1216, %v1238
        %v1306 = vsel %vm1271, %v1217, %v1239
        %v1307 = vsel %vm1271, %v1218, %v1240
        %v1308 = vsel %vm1271, %v1219, %v1241
        %v1309 = vsel %vm1271, %v1220, %v1242
        %v1310 = vsel %vm1271, %v1221, %v1243
        %v1311 = vsel %vm1271, %v1222, %v1244
        %v1312 = vsel %vm1271, %v1223, %v1245
        %v1313 = vsel %vm1271, %v1224, %v1246
        %v1314 = vsel %vm1271, %v1225, %v1247
        %v1315 = vsel %vm1271, %v1226, %v1248
        %v1316 = vperm.slane %v658, 1
        %v1317 = vmul.f32 %v1294, %v1316
        %v1318 = vmul.f32 %v1272, %v1316
        %v1319 = vmul.f32 %v1295, %v1316
        %v1320 = vmul.f32 %v1273, %v1316
        %v1321 = vmul.f32 %v1296, %v1316
        %v1322 = vmul.f32 %v1274, %v1316
        %v1323 = vmul.f32 %v1297, %v1316
        %v1324 = vmul.f32 %v1275, %v1316
        %v1325 = vmul.f32 %v1298, %v1316
        %v1326 = vmul.f32 %v1276, %v1316
        %v1327 = vmul.f32 %v1299, %v1316
        %v1328 = vmul.f32 %v1277, %v1316
        %v1329 = vmul.f32 %v1300, %v1316
        %v1330 = vmul.f32 %v1278, %v1316
        %v1331 = vmul.f32 %v1301, %v1316
        %v1332 = vmul.f32 %v1279, %v1316
        %v1333 = vmul.f32 %v1302, %v1316
        %v1334 = vmul.f32 %v1280, %v1316
        %v1335 = vmul.f32 %v1303, %v1316
        %v1336 = vmul.f32 %v1281, %v1316
        %v1337 = vmul.f32 %v1304, %v1316
        %v1338 = vmul.f32 %v1282, %v1316
        %v1339 = vmul.f32 %v1305, %v1316
        %v1340 = vmul.f32 %v1283, %v1316
        %v1341 = vmul.f32 %v1306, %v1316
        %v1342 = vmul.f32 %v1284, %v1316
        %v1343 = vmul.f32 %v1307, %v1316
        %v1344 = vmul.f32 %v1285, %v1316
        %v1345 = vmul.f32 %v1308, %v1316
        %v1346 = vmul.f32 %v1286, %v1316
        %v1347 = vmul.f32 %v1309, %v1316
        %v1348 = vmul.f32 %v1287, %v1316
        %v1349 = vadd.f32 %v1108, %v1317
        %v1350 = vadd.f32 %v1109, %v1318
        %v1351 = vadd.f32 %v1110, %v1319
        %v1352 = vadd.f32 %v1111, %v1320
        %v1353 = vadd.f32 %v1112, %v1321
        %v1354 = vadd.f32 %v1113, %v1322
        %v1355 = vadd.f32 %v1114, %v1323
        %v1356 = vadd.f32 %v1115, %v1324
        %v1357 = vadd.f32 %v1116, %v1325
        %v1358 = vadd.f32 %v1117, %v1326
        %v1359 = vadd.f32 %v1118, %v1327
        %v1360 = vadd.f32 %v1119, %v1328
        %v1361 = vadd.f32 %v1120, %v1329
        %v1362 = vadd.f32 %v1121, %v1330
        %v1363 = vadd.f32 %v1122, %v1331
        %v1364 = vadd.f32 %v1123, %v1332
        %v1365 = vadd.f32 %v1124, %v1333
        %v1366 = vadd.f32 %v1125, %v1334
        %v1367 = vadd.f32 %v1126, %v1335
        %v1368 = vadd.f32 %v1127, %v1336
        %v1369 = vadd.f32 %v1128, %v1337
        %v1370 = vadd.f32 %v1129, %v1338
        %v1371 = vadd.f32 %v1130, %v1339
        %v1372 = vadd.f32 %v1131, %v1340
        %v1373 = vadd.f32 %v1132, %v1341
        %v1374 = vadd.f32 %v1133, %v1342
        %v1375 = vadd.f32 %v1134, %v1343
        %v1376 = vadd.f32 %v1135, %v1344
        %v1377 = vadd.f32 %v1136, %v1345
        %v1378 = vadd.f32 %v1137, %v1346
        %v1379 = vadd.f32 %v1138, %v1347
        %v1380 = vadd.f32 %v1139, %v1348
        %v1381 = vperm.slane %v659, 1
        %v1382 = vmul.f32 %v1295, %v1381
        %v1383 = vmul.f32 %v1273, %v1381
        %v1384 = vmul.f32 %v1296, %v1381
        %v1385 = vmul.f32 %v1274, %v1381
        %v1386 = vmul.f32 %v1297, %v1381
        %v1387 = vmul.f32 %v1275, %v1381
        %v1388 = vmul.f32 %v1298, %v1381
        %v1389 = vmul.f32 %v1276, %v1381
        %v1390 = vmul.f32 %v1299, %v1381
        %v1391 = vmul.f32 %v1277, %v1381
        %v1392 = vmul.f32 %v1300, %v1381
        %v1393 = vmul.f32 %v1278, %v1381
        %v1394 = vmul.f32 %v1301, %v1381
        %v1395 = vmul.f32 %v1279, %v1381
        %v1396 = vmul.f32 %v1302, %v1381
        %v1397 = vmul.f32 %v1280, %v1381
        %v1398 = vmul.f32 %v1303, %v1381
        %v1399 = vmul.f32 %v1281, %v1381
        %v1400 = vmul.f32 %v1304, %v1381
        %v1401 = vmul.f32 %v1282, %v1381
        %v1402 = vmul.f32 %v1305, %v1381
        %v1403 = vmul.f32 %v1283, %v1381
        %v1404 = vmul.f32 %v1306, %v1381
        %v1405 = vmul.f32 %v1284, %v1381
        %v1406 = vmul.f32 %v1307, %v1381
        %v1407 = vmul.f32 %v1285, %v1381
        %v1408 = vmul.f32 %v1308, %v1381
        %v1409 = vmul.f32 %v1286, %v1381
        %v1410 = vmul.f32 %v1309, %v1381
        %v1411 = vmul.f32 %v1287, %v1381
        %v1412 = vmul.f32 %v1310, %v1381
        %v1413 = vmul.f32 %v1288, %v1381
        %v1414 = vadd.f32 %v1173, %v1382
        %v1415 = vadd.f32 %v1174, %v1383
        %v1416 = vadd.f32 %v1175, %v1384
        %v1417 = vadd.f32 %v1176, %v1385
        %v1418 = vadd.f32 %v1177, %v1386
        %v1419 = vadd.f32 %v1178, %v1387
        %v1420 = vadd.f32 %v1179, %v1388
        %v1421 = vadd.f32 %v1180, %v1389
        %v1422 = vadd.f32 %v1181, %v1390
        %v1423 = vadd.f32 %v1182, %v1391
        %v1424 = vadd.f32 %v1183, %v1392
        %v1425 = vadd.f32 %v1184, %v1393
        %v1426 = vadd.f32 %v1185, %v1394
        %v1427 = vadd.f32 %v1186, %v1395
        %v1428 = vadd.f32 %v1187, %v1396
        %v1429 = vadd.f32 %v1188, %v1397
        %v1430 = vadd.f32 %v1189, %v1398
        %v1431 = vadd.f32 %v1190, %v1399
        %v1432 = vadd.f32 %v1191, %v1400
        %v1433 = vadd.f32 %v1192, %v1401
        %v1434 = vadd.f32 %v1193, %v1402
        %v1435 = vadd.f32 %v1194, %v1403
        %v1436 = vadd.f32 %v1195, %v1404
        %v1437 = vadd.f32 %v1196, %v1405
        %v1438 = vadd.f32 %v1197, %v1406
        %v1439 = vadd.f32 %v1198, %v1407
        %v1440 = vadd.f32 %v1199, %v1408
        %v1441 = vadd.f32 %v1200, %v1409
        %v1442 = vadd.f32 %v1201, %v1410
        %v1443 = vadd.f32 %v1202, %v1411
        %v1444 = vadd.f32 %v1203, %v1412
        %v1445 = vadd.f32 %v1204, %v1413
        %v1446 = vperm.slane %v660, 1
        %v1447 = vmul.f32 %v1296, %v1446
        %v1448 = vmul.f32 %v1274, %v1446
        %v1449 = vmul.f32 %v1297, %v1446
        %v1450 = vmul.f32 %v1275, %v1446
        %v1451 = vmul.f32 %v1298, %v1446
        %v1452 = vmul.f32 %v1276, %v1446
        %v1453 = vmul.f32 %v1299, %v1446
        %v1454 = vmul.f32 %v1277, %v1446
        %v1455 = vmul.f32 %v1300, %v1446
        %v1456 = vmul.f32 %v1278, %v1446
        %v1457 = vmul.f32 %v1301, %v1446
        %v1458 = vmul.f32 %v1279, %v1446
        %v1459 = vmul.f32 %v1302, %v1446
        %v1460 = vmul.f32 %v1280, %v1446
        %v1461 = vmul.f32 %v1303, %v1446
        %v1462 = vmul.f32 %v1281, %v1446
        %v1463 = vmul.f32 %v1304, %v1446
        %v1464 = vmul.f32 %v1282, %v1446
        %v1465 = vmul.f32 %v1305, %v1446
        %v1466 = vmul.f32 %v1283, %v1446
        %v1467 = vmul.f32 %v1306, %v1446
        %v1468 = vmul.f32 %v1284, %v1446
        %v1469 = vmul.f32 %v1307, %v1446
        %v1470 = vmul.f32 %v1285, %v1446
        %v1471 = vmul.f32 %v1308, %v1446
        %v1472 = vmul.f32 %v1286, %v1446
        %v1473 = vmul.f32 %v1309, %v1446
        %v1474 = vmul.f32 %v1287, %v1446
        %v1475 = vmul.f32 %v1310, %v1446
        %v1476 = vmul.f32 %v1288, %v1446
        %v1477 = vmul.f32 %v1311, %v1446
        %v1478 = vmul.f32 %v1289, %v1446
        %v1479 = vadd.f32 %v1349, %v1447
        %v1480 = vadd.f32 %v1350, %v1448
        %v1481 = vadd.f32 %v1351, %v1449
        %v1482 = vadd.f32 %v1352, %v1450
        %v1483 = vadd.f32 %v1353, %v1451
        %v1484 = vadd.f32 %v1354, %v1452
        %v1485 = vadd.f32 %v1355, %v1453
        %v1486 = vadd.f32 %v1356, %v1454
        %v1487 = vadd.f32 %v1357, %v1455
        %v1488 = vadd.f32 %v1358, %v1456
        %v1489 = vadd.f32 %v1359, %v1457
        %v1490 = vadd.f32 %v1360, %v1458
        %v1491 = vadd.f32 %v1361, %v1459
        %v1492 = vadd.f32 %v1362, %v1460
        %v1493 = vadd.f32 %v1363, %v1461
        %v1494 = vadd.f32 %v1364, %v1462
        %v1495 = vadd.f32 %v1365, %v1463
        %v1496 = vadd.f32 %v1366, %v1464
        %v1497 = vadd.f32 %v1367, %v1465
        %v1498 = vadd.f32 %v1368, %v1466
        %v1499 = vadd.f32 %v1369, %v1467
        %v1500 = vadd.f32 %v1370, %v1468
        %v1501 = vadd.f32 %v1371, %v1469
        %v1502 = vadd.f32 %v1372, %v1470
        %v1503 = vadd.f32 %v1373, %v1471
        %v1504 = vadd.f32 %v1374, %v1472
        %v1505 = vadd.f32 %v1375, %v1473
        %v1506 = vadd.f32 %v1376, %v1474
        %v1507 = vadd.f32 %v1377, %v1475
        %v1508 = vadd.f32 %v1378, %v1476
        %v1509 = vadd.f32 %v1379, %v1477
        %v1510 = vadd.f32 %v1380, %v1478
        %v1511 = vperm.slane %v661, 1
        %v1512 = vmul.f32 %v1297, %v1511
        %v1513 = vmul.f32 %v1275, %v1511
        %v1514 = vmul.f32 %v1298, %v1511
        %v1515 = vmul.f32 %v1276, %v1511
        %v1516 = vmul.f32 %v1299, %v1511
        %v1517 = vmul.f32 %v1277, %v1511
        %v1518 = vmul.f32 %v1300, %v1511
        %v1519 = vmul.f32 %v1278, %v1511
        %v1520 = vmul.f32 %v1301, %v1511
        %v1521 = vmul.f32 %v1279, %v1511
        %v1522 = vmul.f32 %v1302, %v1511
        %v1523 = vmul.f32 %v1280, %v1511
        %v1524 = vmul.f32 %v1303, %v1511
        %v1525 = vmul.f32 %v1281, %v1511
        %v1526 = vmul.f32 %v1304, %v1511
        %v1527 = vmul.f32 %v1282, %v1511
        %v1528 = vmul.f32 %v1305, %v1511
        %v1529 = vmul.f32 %v1283, %v1511
        %v1530 = vmul.f32 %v1306, %v1511
        %v1531 = vmul.f32 %v1284, %v1511
        %v1532 = vmul.f32 %v1307, %v1511
        %v1533 = vmul.f32 %v1285, %v1511
        %v1534 = vmul.f32 %v1308, %v1511
        %v1535 = vmul.f32 %v1286, %v1511
        %v1536 = vmul.f32 %v1309, %v1511
        %v1537 = vmul.f32 %v1287, %v1511
        %v1538 = vmul.f32 %v1310, %v1511
        %v1539 = vmul.f32 %v1288, %v1511
        %v1540 = vmul.f32 %v1311, %v1511
        %v1541 = vmul.f32 %v1289, %v1511
        %v1542 = vmul.f32 %v1312, %v1511
        %v1543 = vmul.f32 %v1290, %v1511
        %v1544 = vadd.f32 %v1414, %v1512
        %v1545 = vadd.f32 %v1415, %v1513
        %v1546 = vadd.f32 %v1416, %v1514
        %v1547 = vadd.f32 %v1417, %v1515
        %v1548 = vadd.f32 %v1418, %v1516
        %v1549 = vadd.f32 %v1419, %v1517
        %v1550 = vadd.f32 %v1420, %v1518
        %v1551 = vadd.f32 %v1421, %v1519
        %v1552 = vadd.f32 %v1422, %v1520
        %v1553 = vadd.f32 %v1423, %v1521
        %v1554 = vadd.f32 %v1424, %v1522
        %v1555 = vadd.f32 %v1425, %v1523
        %v1556 = vadd.f32 %v1426, %v1524
        %v1557 = vadd.f32 %v1427, %v1525
        %v1558 = vadd.f32 %v1428, %v1526
        %v1559 = vadd.f32 %v1429, %v1527
        %v1560 = vadd.f32 %v1430, %v1528
        %v1561 = vadd.f32 %v1431, %v1529
        %v1562 = vadd.f32 %v1432, %v1530
        %v1563 = vadd.f32 %v1433, %v1531
        %v1564 = vadd.f32 %v1434, %v1532
        %v1565 = vadd.f32 %v1435, %v1533
        %v1566 = vadd.f32 %v1436, %v1534
        %v1567 = vadd.f32 %v1437, %v1535
        %v1568 = vadd.f32 %v1438, %v1536
        %v1569 = vadd.f32 %v1439, %v1537
        %v1570 = vadd.f32 %v1440, %v1538
        %v1571 = vadd.f32 %v1441, %v1539
        %v1572 = vadd.f32 %v1442, %v1540
        %v1573 = vadd.f32 %v1443, %v1541
        %v1574 = vadd.f32 %v1444, %v1542
        %v1575 = vadd.f32 %v1445, %v1543
        %v1576 = vperm.slane %v662, 1
        %v1577 = vmul.f32 %v1298, %v1576
        %v1578 = vmul.f32 %v1276, %v1576
        %v1579 = vmul.f32 %v1299, %v1576
        %v1580 = vmul.f32 %v1277, %v1576
        %v1581 = vmul.f32 %v1300, %v1576
        %v1582 = vmul.f32 %v1278, %v1576
        %v1583 = vmul.f32 %v1301, %v1576
        %v1584 = vmul.f32 %v1279, %v1576
        %v1585 = vmul.f32 %v1302, %v1576
        %v1586 = vmul.f32 %v1280, %v1576
        %v1587 = vmul.f32 %v1303, %v1576
        %v1588 = vmul.f32 %v1281, %v1576
        %v1589 = vmul.f32 %v1304, %v1576
        %v1590 = vmul.f32 %v1282, %v1576
        %v1591 = vmul.f32 %v1305, %v1576
        %v1592 = vmul.f32 %v1283, %v1576
        %v1593 = vmul.f32 %v1306, %v1576
        %v1594 = vmul.f32 %v1284, %v1576
        %v1595 = vmul.f32 %v1307, %v1576
        %v1596 = vmul.f32 %v1285, %v1576
        %v1597 = vmul.f32 %v1308, %v1576
        %v1598 = vmul.f32 %v1286, %v1576
        %v1599 = vmul.f32 %v1309, %v1576
        %v1600 = vmul.f32 %v1287, %v1576
        %v1601 = vmul.f32 %v1310, %v1576
        %v1602 = vmul.f32 %v1288, %v1576
        %v1603 = vmul.f32 %v1311, %v1576
        %v1604 = vmul.f32 %v1289, %v1576
        %v1605 = vmul.f32 %v1312, %v1576
        %v1606 = vmul.f32 %v1290, %v1576
        %v1607 = vmul.f32 %v1313, %v1576
        %v1608 = vmul.f32 %v1291, %v1576
        %v1609 = vadd.f32 %v1479, %v1577
        %v1610 = vadd.f32 %v1480, %v1578
        %v1611 = vadd.f32 %v1481, %v1579
        %v1612 = vadd.f32 %v1482, %v1580
        %v1613 = vadd.f32 %v1483, %v1581
        %v1614 = vadd.f32 %v1484, %v1582
        %v1615 = vadd.f32 %v1485, %v1583
        %v1616 = vadd.f32 %v1486, %v1584
        %v1617 = vadd.f32 %v1487, %v1585
        %v1618 = vadd.f32 %v1488, %v1586
        %v1619 = vadd.f32 %v1489, %v1587
        %v1620 = vadd.f32 %v1490, %v1588
        %v1621 = vadd.f32 %v1491, %v1589
        %v1622 = vadd.f32 %v1492, %v1590
        %v1623 = vadd.f32 %v1493, %v1591
        %v1624 = vadd.f32 %v1494, %v1592
        %v1625 = vadd.f32 %v1495, %v1593
        %v1626 = vadd.f32 %v1496, %v1594
        %v1627 = vadd.f32 %v1497, %v1595
        %v1628 = vadd.f32 %v1498, %v1596
        %v1629 = vadd.f32 %v1499, %v1597
        %v1630 = vadd.f32 %v1500, %v1598
        %v1631 = vadd.f32 %v1501, %v1599
        %v1632 = vadd.f32 %v1502, %v1600
        %v1633 = vadd.f32 %v1503, %v1601
        %v1634 = vadd.f32 %v1504, %v1602
        %v1635 = vadd.f32 %v1505, %v1603
        %v1636 = vadd.f32 %v1506, %v1604
        %v1637 = vadd.f32 %v1507, %v1605
        %v1638 = vadd.f32 %v1508, %v1606
        %v1639 = vadd.f32 %v1509, %v1607
        %v1640 = vadd.f32 %v1510, %v1608
        %v1641 = vperm.slane %v663, 1
        %v1642 = vmul.f32 %v1299, %v1641
        %v1643 = vmul.f32 %v1277, %v1641
        %v1644 = vmul.f32 %v1300, %v1641
        %v1645 = vmul.f32 %v1278, %v1641
        %v1646 = vmul.f32 %v1301, %v1641
        %v1647 = vmul.f32 %v1279, %v1641
        %v1648 = vmul.f32 %v1302, %v1641
        %v1649 = vmul.f32 %v1280, %v1641
        %v1650 = vmul.f32 %v1303, %v1641
        %v1651 = vmul.f32 %v1281, %v1641
        %v1652 = vmul.f32 %v1304, %v1641
        %v1653 = vmul.f32 %v1282, %v1641
        %v1654 = vmul.f32 %v1305, %v1641
        %v1655 = vmul.f32 %v1283, %v1641
        %v1656 = vmul.f32 %v1306, %v1641
        %v1657 = vmul.f32 %v1284, %v1641
        %v1658 = vmul.f32 %v1307, %v1641
        %v1659 = vmul.f32 %v1285, %v1641
        %v1660 = vmul.f32 %v1308, %v1641
        %v1661 = vmul.f32 %v1286, %v1641
        %v1662 = vmul.f32 %v1309, %v1641
        %v1663 = vmul.f32 %v1287, %v1641
        %v1664 = vmul.f32 %v1310, %v1641
        %v1665 = vmul.f32 %v1288, %v1641
        %v1666 = vmul.f32 %v1311, %v1641
        %v1667 = vmul.f32 %v1289, %v1641
        %v1668 = vmul.f32 %v1312, %v1641
        %v1669 = vmul.f32 %v1290, %v1641
        %v1670 = vmul.f32 %v1313, %v1641
        %v1671 = vmul.f32 %v1291, %v1641
        %v1672 = vmul.f32 %v1314, %v1641
        %v1673 = vmul.f32 %v1292, %v1641
        %v1674 = vadd.f32 %v1544, %v1642
        %v1675 = vadd.f32 %v1545, %v1643
        %v1676 = vadd.f32 %v1546, %v1644
        %v1677 = vadd.f32 %v1547, %v1645
        %v1678 = vadd.f32 %v1548, %v1646
        %v1679 = vadd.f32 %v1549, %v1647
        %v1680 = vadd.f32 %v1550, %v1648
        %v1681 = vadd.f32 %v1551, %v1649
        %v1682 = vadd.f32 %v1552, %v1650
        %v1683 = vadd.f32 %v1553, %v1651
        %v1684 = vadd.f32 %v1554, %v1652
        %v1685 = vadd.f32 %v1555, %v1653
        %v1686 = vadd.f32 %v1556, %v1654
        %v1687 = vadd.f32 %v1557, %v1655
        %v1688 = vadd.f32 %v1558, %v1656
        %v1689 = vadd.f32 %v1559, %v1657
        %v1690 = vadd.f32 %v1560, %v1658
        %v1691 = vadd.f32 %v1561, %v1659
        %v1692 = vadd.f32 %v1562, %v1660
        %v1693 = vadd.f32 %v1563, %v1661
        %v1694 = vadd.f32 %v1564, %v1662
        %v1695 = vadd.f32 %v1565, %v1663
        %v1696 = vadd.f32 %v1566, %v1664
        %v1697 = vadd.f32 %v1567, %v1665
        %v1698 = vadd.f32 %v1568, %v1666
        %v1699 = vadd.f32 %v1569, %v1667
        %v1700 = vadd.f32 %v1570, %v1668
        %v1701 = vadd.f32 %v1571, %v1669
        %v1702 = vadd.f32 %v1572, %v1670
        %v1703 = vadd.f32 %v1573, %v1671
        %v1704 = vadd.f32 %v1574, %v1672
        %v1705 = vadd.f32 %v1575, %v1673
        %v1706 = vperm.slane %v664, 1
        %v1707 = vmul.f32 %v1300, %v1706
        %v1708 = vmul.f32 %v1278, %v1706
        %v1709 = vmul.f32 %v1301, %v1706
        %v1710 = vmul.f32 %v1279, %v1706
        %v1711 = vmul.f32 %v1302, %v1706
        %v1712 = vmul.f32 %v1280, %v1706
        %v1713 = vmul.f32 %v1303, %v1706
        %v1714 = vmul.f32 %v1281, %v1706
        %v1715 = vmul.f32 %v1304, %v1706
        %v1716 = vmul.f32 %v1282, %v1706
        %v1717 = vmul.f32 %v1305, %v1706
        %v1718 = vmul.f32 %v1283, %v1706
        %v1719 = vmul.f32 %v1306, %v1706
        %v1720 = vmul.f32 %v1284, %v1706
        %v1721 = vmul.f32 %v1307, %v1706
        %v1722 = vmul.f32 %v1285, %v1706
        %v1723 = vmul.f32 %v1308, %v1706
        %v1724 = vmul.f32 %v1286, %v1706
        %v1725 = vmul.f32 %v1309, %v1706
        %v1726 = vmul.f32 %v1287, %v1706
        %v1727 = vmul.f32 %v1310, %v1706
        %v1728 = vmul.f32 %v1288, %v1706
        %v1729 = vmul.f32 %v1311, %v1706
        %v1730 = vmul.f32 %v1289, %v1706
        %v1731 = vmul.f32 %v1312, %v1706
        %v1732 = vmul.f32 %v1290, %v1706
        %v1733 = vmul.f32 %v1313, %v1706
        %v1734 = vmul.f32 %v1291, %v1706
        %v1735 = vmul.f32 %v1314, %v1706
        %v1736 = vmul.f32 %v1292, %v1706
        %v1737 = vmul.f32 %v1315, %v1706
        %v1738 = vmul.f32 %v1293, %v1706
        %v1739 = vadd.f32 %v1609, %v1707
        %v1740 = vadd.f32 %v1610, %v1708
        %v1741 = vadd.f32 %v1611, %v1709
        %v1742 = vadd.f32 %v1612, %v1710
        %v1743 = vadd.f32 %v1613, %v1711
        %v1744 = vadd.f32 %v1614, %v1712
        %v1745 = vadd.f32 %v1615, %v1713
        %v1746 = vadd.f32 %v1616, %v1714
        %v1747 = vadd.f32 %v1617, %v1715
        %v1748 = vadd.f32 %v1618, %v1716
        %v1749 = vadd.f32 %v1619, %v1717
        %v1750 = vadd.f32 %v1620, %v1718
        %v1751 = vadd.f32 %v1621, %v1719
        %v1752 = vadd.f32 %v1622, %v1720
        %v1753 = vadd.f32 %v1623, %v1721
        %v1754 = vadd.f32 %v1624, %v1722
        %v1755 = vadd.f32 %v1625, %v1723
        %v1756 = vadd.f32 %v1626, %v1724
        %v1757 = vadd.f32 %v1627, %v1725
        %v1758 = vadd.f32 %v1628, %v1726
        %v1759 = vadd.f32 %v1629, %v1727
        %v1760 = vadd.f32 %v1630, %v1728
        %v1761 = vadd.f32 %v1631, %v1729
        %v1762 = vadd.f32 %v1632, %v1730
        %v1763 = vadd.f32 %v1633, %v1731
        %v1764 = vadd.f32 %v1634, %v1732
        %v1765 = vadd.f32 %v1635, %v1733
        %v1766 = vadd.f32 %v1636, %v1734
        %v1767 = vadd.f32 %v1637, %v1735
        %v1768 = vadd.f32 %v1638, %v1736
        %v1769 = vadd.f32 %v1639, %v1737
        %v1770 = vadd.f32 %v1640, %v1738
        %v1771 = vrot.slane %v570, 7
        %v1772 = vrot.slane %v574, 7
        %v1773 = vrot.slane %v578, 7
        %v1774 = vrot.slane %v582, 7
        %v1775 = vrot.slane %v586, 7
        %v1776 = vrot.slane %v590, 7
        %v1777 = vrot.slane %v594, 7
        %v1778 = vrot.slane %v598, 7
        %v1779 = vrot.slane %v602, 7
        %v1780 = vrot.slane %v606, 7
        %v1781 = vrot.slane %v610, 7
        %v1782 = vrot.slane %v614, 7
        %v1783 = vrot.slane %v618, 7
        %v1784 = vrot.slane %v622, 7
        %v1785 = vrot.slane %v626, 7
        %v1786 = vrot.slane %v630, 7
        %v1787 = vrot.slane %v634, 7
        %v1788 = vrot.slane %v638, 7
        %v1789 = vrot.slane %v642, 7
        %v1790 = vrot.slane %v646, 7
        %v1791 = vrot.slane %v650, 7
        %v1792 = vrot.slane %v654, 7
        %v1793 = vrot.slane %v571, 7
        %v1794 = vrot.slane %v575, 7
        %v1795 = vrot.slane %v579, 7
        %v1796 = vrot.slane %v583, 7
        %v1797 = vrot.slane %v587, 7
        %v1798 = vrot.slane %v591, 7
        %v1799 = vrot.slane %v595, 7
        %v1800 = vrot.slane %v599, 7
        %v1801 = vrot.slane %v603, 7
        %v1802 = vrot.slane %v607, 7
        %v1803 = vrot.slane %v611, 7
        %v1804 = vrot.slane %v615, 7
        %v1805 = vrot.slane %v619, 7
        %v1806 = vrot.slane %v623, 7
        %v1807 = vrot.slane %v627, 7
        %v1808 = vrot.slane %v631, 7
        %v1809 = vrot.slane %v635, 7
        %v1810 = vrot.slane %v639, 7
        %v1811 = vrot.slane %v643, 7
        %v1812 = vrot.slane %v647, 7
        %v1813 = vrot.slane %v651, 7
        %v1814 = vrot.slane %v655, 7
        %v1815 = vrot.slane %v572, 7
        %v1816 = vrot.slane %v576, 7
        %v1817 = vrot.slane %v580, 7
        %v1818 = vrot.slane %v584, 7
        %v1819 = vrot.slane %v588, 7
        %v1820 = vrot.slane %v592, 7
        %v1821 = vrot.slane %v596, 7
        %v1822 = vrot.slane %v600, 7
        %v1823 = vrot.slane %v604, 7
        %v1824 = vrot.slane %v608, 7
        %v1825 = vrot.slane %v612, 7
        %v1826 = vrot.slane %v616, 7
        %v1827 = vrot.slane %v620, 7
        %v1828 = vrot.slane %v624, 7
        %v1829 = vrot.slane %v628, 7
        %v1830 = vrot.slane %v632, 7
        %v1831 = vrot.slane %v636, 7
        %v1832 = vrot.slane %v640, 7
        %v1833 = vrot.slane %v644, 7
        %v1834 = vrot.slane %v648, 7
        %v1835 = vrot.slane %v652, 7
        %v1836 = vrot.slane %v656, 7
        %vm1837 = vcmp.lt.s32.totalorder %v732, 1
        %v1838 = vsel %vm1837, %v1793, %v1815
        %v1839 = vsel %vm1837, %v1794, %v1816
        %v1840 = vsel %vm1837, %v1795, %v1817
        %v1841 = vsel %vm1837, %v1796, %v1818
        %v1842 = vsel %vm1837, %v1797, %v1819
        %v1843 = vsel %vm1837, %v1798, %v1820
        %v1844 = vsel %vm1837, %v1799, %v1821
        %v1845 = vsel %vm1837, %v1800, %v1822
        %v1846 = vsel %vm1837, %v1801, %v1823
        %v1847 = vsel %vm1837, %v1802, %v1824
        %v1848 = vsel %vm1837, %v1803, %v1825
        %v1849 = vsel %vm1837, %v1804, %v1826
        %v1850 = vsel %vm1837, %v1805, %v1827
        %v1851 = vsel %vm1837, %v1806, %v1828
        %v1852 = vsel %vm1837, %v1807, %v1829
        %v1853 = vsel %vm1837, %v1808, %v1830
        %v1854 = vsel %vm1837, %v1809, %v1831
        %v1855 = vsel %vm1837, %v1810, %v1832
        %v1856 = vsel %vm1837, %v1811, %v1833
        %v1857 = vsel %vm1837, %v1812, %v1834
        %v1858 = vsel %vm1837, %v1813, %v1835
        %v1859 = vsel %vm1837, %v1814, %v1836
        %v1860 = vsel %vm1837, %v1771, %v1793
        %v1861 = vsel %vm1837, %v1772, %v1794
        %v1862 = vsel %vm1837, %v1773, %v1795
        %v1863 = vsel %vm1837, %v1774, %v1796
        %v1864 = vsel %vm1837, %v1775, %v1797
        %v1865 = vsel %vm1837, %v1776, %v1798
        %v1866 = vsel %vm1837, %v1777, %v1799
        %v1867 = vsel %vm1837, %v1778, %v1800
        %v1868 = vsel %vm1837, %v1779, %v1801
        %v1869 = vsel %vm1837, %v1780, %v1802
        %v1870 = vsel %vm1837, %v1781, %v1803
        %v1871 = vsel %vm1837, %v1782, %v1804
        %v1872 = vsel %vm1837, %v1783, %v1805
        %v1873 = vsel %vm1837, %v1784, %v1806
        %v1874 = vsel %vm1837, %v1785, %v1807
        %v1875 = vsel %vm1837, %v1786, %v1808
        %v1876 = vsel %vm1837, %v1787, %v1809
        %v1877 = vsel %vm1837, %v1788, %v1810
        %v1878 = vsel %vm1837, %v1789, %v1811
        %v1879 = vsel %vm1837, %v1790, %v1812
        %v1880 = vsel %vm1837, %v1791, %v1813
        %v1881 = vsel %vm1837, %v1792, %v1814
        %v1882 = vperm.slane %v658, 2
        %v1883 = vmul.f32 %v1860, %v1882
        %v1884 = vmul.f32 %v1838, %v1882
        %v1885 = vmul.f32 %v1861, %v1882
        %v1886 = vmul.f32 %v1839, %v1882
        %v1887 = vmul.f32 %v1862, %v1882
        %v1888 = vmul.f32 %v1840, %v1882
        %v1889 = vmul.f32 %v1863, %v1882
        %v1890 = vmul.f32 %v1841, %v1882
        %v1891 = vmul.f32 %v1864, %v1882
        %v1892 = vmul.f32 %v1842, %v1882
        %v1893 = vmul.f32 %v1865, %v1882
        %v1894 = vmul.f32 %v1843, %v1882
        %v1895 = vmul.f32 %v1866, %v1882
        %v1896 = vmul.f32 %v1844, %v1882
        %v1897 = vmul.f32 %v1867, %v1882
        %v1898 = vmul.f32 %v1845, %v1882
        %v1899 = vmul.f32 %v1868, %v1882
        %v1900 = vmul.f32 %v1846, %v1882
        %v1901 = vmul.f32 %v1869, %v1882
        %v1902 = vmul.f32 %v1847, %v1882
        %v1903 = vmul.f32 %v1870, %v1882
        %v1904 = vmul.f32 %v1848, %v1882
        %v1905 = vmul.f32 %v1871, %v1882
        %v1906 = vmul.f32 %v1849, %v1882
        %v1907 = vmul.f32 %v1872, %v1882
        %v1908 = vmul.f32 %v1850, %v1882
        %v1909 = vmul.f32 %v1873, %v1882
        %v1910 = vmul.f32 %v1851, %v1882
        %v1911 = vmul.f32 %v1874, %v1882
        %v1912 = vmul.f32 %v1852, %v1882
        %v1913 = vmul.f32 %v1875, %v1882
        %v1914 = vmul.f32 %v1853, %v1882
        %v1915 = vadd.f32 %v1674, %v1883
        %v1916 = vadd.f32 %v1675, %v1884
        %v1917 = vadd.f32 %v1676, %v1885
        %v1918 = vadd.f32 %v1677, %v1886
        %v1919 = vadd.f32 %v1678, %v1887
        %v1920 = vadd.f32 %v1679, %v1888
        %v1921 = vadd.f32 %v1680, %v1889
        %v1922 = vadd.f32 %v1681, %v1890
        %v1923 = vadd.f32 %v1682, %v1891
        %v1924 = vadd.f32 %v1683, %v1892
        %v1925 = vadd.f32 %v1684, %v1893
        %v1926 = vadd.f32 %v1685, %v1894
        %v1927 = vadd.f32 %v1686, %v1895
        %v1928 = vadd.f32 %v1687, %v1896
        %v1929 = vadd.f32 %v1688, %v1897
        %v1930 = vadd.f32 %v1689, %v1898
        %v1931 = vadd.f32 %v1690, %v1899
        %v1932 = vadd.f32 %v1691, %v1900
        %v1933 = vadd.f32 %v1692, %v1901
        %v1934 = vadd.f32 %v1693, %v1902
        %v1935 = vadd.f32 %v1694, %v1903
        %v1936 = vadd.f32 %v1695, %v1904
        %v1937 = vadd.f32 %v1696, %v1905
        %v1938 = vadd.f32 %v1697, %v1906
        %v1939 = vadd.f32 %v1698, %v1907
        %v1940 = vadd.f32 %v1699, %v1908
        %v1941 = vadd.f32 %v1700, %v1909
        %v1942 = vadd.f32 %v1701, %v1910
        %v1943 = vadd.f32 %v1702, %v1911
        %v1944 = vadd.f32 %v1703, %v1912
        %v1945 = vadd.f32 %v1704, %v1913
        %v1946 = vadd.f32 %v1705, %v1914
        %v1947 = vperm.slane %v659, 2
        %v1948 = vmul.f32 %v1861, %v1947
        %v1949 = vmul.f32 %v1839, %v1947
        %v1950 = vmul.f32 %v1862, %v1947
        %v1951 = vmul.f32 %v1840, %v1947
        %v1952 = vmul.f32 %v1863, %v1947
        %v1953 = vmul.f32 %v1841, %v1947
        %v1954 = vmul.f32 %v1864, %v1947
        %v1955 = vmul.f32 %v1842, %v1947
        %v1956 = vmul.f32 %v1865, %v1947
        %v1957 = vmul.f32 %v1843, %v1947
        %v1958 = vmul.f32 %v1866, %v1947
        %v1959 = vmul.f32 %v1844, %v1947
        %v1960 = vmul.f32 %v1867, %v1947
        %v1961 = vmul.f32 %v1845, %v1947
        %v1962 = vmul.f32 %v1868, %v1947
        %v1963 = vmul.f32 %v1846, %v1947
        %v1964 = vmul.f32 %v1869, %v1947
        %v1965 = vmul.f32 %v1847, %v1947
        %v1966 = vmul.f32 %v1870, %v1947
        %v1967 = vmul.f32 %v1848, %v1947
        %v1968 = vmul.f32 %v1871, %v1947
        %v1969 = vmul.f32 %v1849, %v1947
        %v1970 = vmul.f32 %v1872, %v1947
        %v1971 = vmul.f32 %v1850, %v1947
        %v1972 = vmul.f32 %v1873, %v1947
        %v1973 = vmul.f32 %v1851, %v1947
        %v1974 = vmul.f32 %v1874, %v1947
        %v1975 = vmul.f32 %v1852, %v1947
        %v1976 = vmul.f32 %v1875, %v1947
        %v1977 = vmul.f32 %v1853, %v1947
        %v1978 = vmul.f32 %v1876, %v1947
        %v1979 = vmul.f32 %v1854, %v1947
        %v1980 = vadd.f32 %v1739, %v1948
        %v1981 = vadd.f32 %v1740, %v1949
        %v1982 = vadd.f32 %v1741, %v1950
        %v1983 = vadd.f32 %v1742, %v1951
        %v1984 = vadd.f32 %v1743, %v1952
        %v1985 = vadd.f32 %v1744, %v1953
        %v1986 = vadd.f32 %v1745, %v1954
        %v1987 = vadd.f32 %v1746, %v1955
        %v1988 = vadd.f32 %v1747, %v1956
        %v1989 = vadd.f32 %v1748, %v1957
        %v1990 = vadd.f32 %v1749, %v1958
        %v1991 = vadd.f32 %v1750, %v1959
        %v1992 = vadd.f32 %v1751, %v1960
        %v1993 = vadd.f32 %v1752, %v1961
        %v1994 = vadd.f32 %v1753, %v1962
        %v1995 = vadd.f32 %v1754, %v1963
        %v1996 = vadd.f32 %v1755, %v1964
        %v1997 = vadd.f32 %v1756, %v1965
        %v1998 = vadd.f32 %v1757, %v1966
        %v1999 = vadd.f32 %v1758, %v1967
        %v2000 = vadd.f32 %v1759, %v1968
        %v2001 = vadd.f32 %v1760, %v1969
        %v2002 = vadd.f32 %v1761, %v1970
        %v2003 = vadd.f32 %v1762, %v1971
        %v2004 = vadd.f32 %v1763, %v1972
        %v2005 = vadd.f32 %v1764, %v1973
        %v2006 = vadd.f32 %v1765, %v1974
        %v2007 = vadd.f32 %v1766, %v1975
        %v2008 = vadd.f32 %v1767, %v1976
        %v2009 = vadd.f32 %v1768, %v1977
        %v2010 = vadd.f32 %v1769, %v1978
        %v2011 = vadd.f32 %v1770, %v1979
        %v2012 = vperm.slane %v660, 2
        %v2013 = vmul.f32 %v1862, %v2012
        %v2014 = vmul.f32 %v1840, %v2012
        %v2015 = vmul.f32 %v1863, %v2012
        %v2016 = vmul.f32 %v1841, %v2012
        %v2017 = vmul.f32 %v1864, %v2012
        %v2018 = vmul.f32 %v1842, %v2012
        %v2019 = vmul.f32 %v1865, %v2012
        %v2020 = vmul.f32 %v1843, %v2012
        %v2021 = vmul.f32 %v1866, %v2012
        %v2022 = vmul.f32 %v1844, %v2012
        %v2023 = vmul.f32 %v1867, %v2012
        %v2024 = vmul.f32 %v1845, %v2012
        %v2025 = vmul.f32 %v1868, %v2012
        %v2026 = vmul.f32 %v1846, %v2012
        %v2027 = vmul.f32 %v1869, %v2012
        %v2028 = vmul.f32 %v1847, %v2012
        %v2029 = vmul.f32 %v1870, %v2012
        %v2030 = vmul.f32 %v1848, %v2012
        %v2031 = vmul.f32 %v1871, %v2012
        %v2032 = vmul.f32 %v1849, %v2012
        %v2033 = vmul.f32 %v1872, %v2012
        %v2034 = vmul.f32 %v1850, %v2012
        %v2035 = vmul.f32 %v1873, %v2012
        %v2036 = vmul.f32 %v1851, %v2012
        %v2037 = vmul.f32 %v1874, %v2012
        %v2038 = vmul.f32 %v1852, %v2012
        %v2039 = vmul.f32 %v1875, %v2012
        %v2040 = vmul.f32 %v1853, %v2012
        %v2041 = vmul.f32 %v1876, %v2012
        %v2042 = vmul.f32 %v1854, %v2012
        %v2043 = vmul.f32 %v1877, %v2012
        %v2044 = vmul.f32 %v1855, %v2012
        %v2045 = vadd.f32 %v1915, %v2013
        %v2046 = vadd.f32 %v1916, %v2014
        %v2047 = vadd.f32 %v1917, %v2015
        %v2048 = vadd.f32 %v1918, %v2016
        %v2049 = vadd.f32 %v1919, %v2017
        %v2050 = vadd.f32 %v1920, %v2018
        %v2051 = vadd.f32 %v1921, %v2019
        %v2052 = vadd.f32 %v1922, %v2020
        %v2053 = vadd.f32 %v1923, %v2021
        %v2054 = vadd.f32 %v1924, %v2022
        %v2055 = vadd.f32 %v1925, %v2023
        %v2056 = vadd.f32 %v1926, %v2024
        %v2057 = vadd.f32 %v1927, %v2025
        %v2058 = vadd.f32 %v1928, %v2026
        %v2059 = vadd.f32 %v1929, %v2027
        %v2060 = vadd.f32 %v1930, %v2028
        %v2061 = vadd.f32 %v1931, %v2029
        %v2062 = vadd.f32 %v1932, %v2030
        %v2063 = vadd.f32 %v1933, %v2031
        %v2064 = vadd.f32 %v1934, %v2032
        %v2065 = vadd.f32 %v1935, %v2033
        %v2066 = vadd.f32 %v1936, %v2034
        %v2067 = vadd.f32 %v1937, %v2035
        %v2068 = vadd.f32 %v1938, %v2036
        %v2069 = vadd.f32 %v1939, %v2037
        %v2070 = vadd.f32 %v1940, %v2038
        %v2071 = vadd.f32 %v1941, %v2039
        %v2072 = vadd.f32 %v1942, %v2040
        %v2073 = vadd.f32 %v1943, %v2041
        %v2074 = vadd.f32 %v1944, %v2042
        %v2075 = vadd.f32 %v1945, %v2043
        %v2076 = vadd.f32 %v1946, %v2044
        %v2077 = vperm.slane %v661, 2
        %v2078 = vmul.f32 %v1863, %v2077
        %v2079 = vmul.f32 %v1841, %v2077
        %v2080 = vmul.f32 %v1864, %v2077
        %v2081 = vmul.f32 %v1842, %v2077
        %v2082 = vmul.f32 %v1865, %v2077
        %v2083 = vmul.f32 %v1843, %v2077
        %v2084 = vmul.f32 %v1866, %v2077
        %v2085 = vmul.f32 %v1844, %v2077
        %v2086 = vmul.f32 %v1867, %v2077
        %v2087 = vmul.f32 %v1845, %v2077
        %v2088 = vmul.f32 %v1868, %v2077
        %v2089 = vmul.f32 %v1846, %v2077
        %v2090 = vmul.f32 %v1869, %v2077
        %v2091 = vmul.f32 %v1847, %v2077
        %v2092 = vmul.f32 %v1870, %v2077
        %v2093 = vmul.f32 %v1848, %v2077
        %v2094 = vmul.f32 %v1871, %v2077
        %v2095 = vmul.f32 %v1849, %v2077
        %v2096 = vmul.f32 %v1872, %v2077
        %v2097 = vmul.f32 %v1850, %v2077
        %v2098 = vmul.f32 %v1873, %v2077
        %v2099 = vmul.f32 %v1851, %v2077
        %v2100 = vmul.f32 %v1874, %v2077
        %v2101 = vmul.f32 %v1852, %v2077
        %v2102 = vmul.f32 %v1875, %v2077
        %v2103 = vmul.f32 %v1853, %v2077
        %v2104 = vmul.f32 %v1876, %v2077
        %v2105 = vmul.f32 %v1854, %v2077
        %v2106 = vmul.f32 %v1877, %v2077
        %v2107 = vmul.f32 %v1855, %v2077
        %v2108 = vmul.f32 %v1878, %v2077
        %v2109 = vmul.f32 %v1856, %v2077
        %v2110 = vadd.f32 %v1980, %v2078
        %v2111 = vadd.f32 %v1981, %v2079
        %v2112 = vadd.f32 %v1982, %v2080
        %v2113 = vadd.f32 %v1983, %v2081
        %v2114 = vadd.f32 %v1984, %v2082
        %v2115 = vadd.f32 %v1985, %v2083
        %v2116 = vadd.f32 %v1986, %v2084
        %v2117 = vadd.f32 %v1987, %v2085
        %v2118 = vadd.f32 %v1988, %v2086
        %v2119 = vadd.f32 %v1989, %v2087
        %v2120 = vadd.f32 %v1990, %v2088
        %v2121 = vadd.f32 %v1991, %v2089
        %v2122 = vadd.f32 %v1992, %v2090
        %v2123 = vadd.f32 %v1993, %v2091
        %v2124 = vadd.f32 %v1994, %v2092
        %v2125 = vadd.f32 %v1995, %v2093
        %v2126 = vadd.f32 %v1996, %v2094
        %v2127 = vadd.f32 %v1997, %v2095
        %v2128 = vadd.f32 %v1998, %v2096
        %v2129 = vadd.f32 %v1999, %v2097
        %v2130 = vadd.f32 %v2000, %v2098
        %v2131 = vadd.f32 %v2001, %v2099
        %v2132 = vadd.f32 %v2002, %v2100
        %v2133 = vadd.f32 %v2003, %v2101
        %v2134 = vadd.f32 %v2004, %v2102
        %v2135 = vadd.f32 %v2005, %v2103
        %v2136 = vadd.f32 %v2006, %v2104
        %v2137 = vadd.f32 %v2007, %v2105
        %v2138 = vadd.f32 %v2008, %v2106
        %v2139 = vadd.f32 %v2009, %v2107
        %v2140 = vadd.f32 %v2010, %v2108
        %v2141 = vadd.f32 %v2011, %v2109
        %v2142 = vperm.slane %v662, 2
        %v2143 = vmul.f32 %v1864, %v2142
        %v2144 = vmul.f32 %v1842, %v2142
        %v2145 = vmul.f32 %v1865, %v2142
        %v2146 = vmul.f32 %v1843, %v2142
        %v2147 = vmul.f32 %v1866, %v2142
        %v2148 = vmul.f32 %v1844, %v2142
        %v2149 = vmul.f32 %v1867, %v2142
        %v2150 = vmul.f32 %v1845, %v2142
        %v2151 = vmul.f32 %v1868, %v2142
        %v2152 = vmul.f32 %v1846, %v2142
        %v2153 = vmul.f32 %v1869, %v2142
        %v2154 = vmul.f32 %v1847, %v2142
        %v2155 = vmul.f32 %v1870, %v2142
        %v2156 = vmul.f32 %v1848, %v2142
        %v2157 = vmul.f32 %v1871, %v2142
        %v2158 = vmul.f32 %v1849, %v2142
        %v2159 = vmul.f32 %v1872, %v2142
        %v2160 = vmul.f32 %v1850, %v2142
        %v2161 = vmul.f32 %v1873, %v2142
        %v2162 = vmul.f32 %v1851, %v2142
        %v2163 = vmul.f32 %v1874, %v2142
        %v2164 = vmul.f32 %v1852, %v2142
        %v2165 = vmul.f32 %v1875, %v2142
        %v2166 = vmul.f32 %v1853, %v2142
        %v2167 = vmul.f32 %v1876, %v2142
        %v2168 = vmul.f32 %v1854, %v2142
        %v2169 = vmul.f32 %v1877, %v2142
        %v2170 = vmul.f32 %v1855, %v2142
        %v2171 = vmul.f32 %v1878, %v2142
        %v2172 = vmul.f32 %v1856, %v2142
        %v2173 = vmul.f32 %v1879, %v2142
        %v2174 = vmul.f32 %v1857, %v2142
        %v2175 = vadd.f32 %v2045, %v2143
        %v2176 = vadd.f32 %v2046, %v2144
        %v2177 = vadd.f32 %v2047, %v2145
        %v2178 = vadd.f32 %v2048, %v2146
        %v2179 = vadd.f32 %v2049, %v2147
        %v2180 = vadd.f32 %v2050, %v2148
        %v2181 = vadd.f32 %v2051, %v2149
        %v2182 = vadd.f32 %v2052, %v2150
        %v2183 = vadd.f32 %v2053, %v2151
        %v2184 = vadd.f32 %v2054, %v2152
        %v2185 = vadd.f32 %v2055, %v2153
        %v2186 = vadd.f32 %v2056, %v2154
        %v2187 = vadd.f32 %v2057, %v2155
        %v2188 = vadd.f32 %v2058, %v2156
        %v2189 = vadd.f32 %v2059, %v2157
        %v2190 = vadd.f32 %v2060, %v2158
        %v2191 = vadd.f32 %v2061, %v2159
        %v2192 = vadd.f32 %v2062, %v2160
        %v2193 = vadd.f32 %v2063, %v2161
        %v2194 = vadd.f32 %v2064, %v2162
        %v2195 = vadd.f32 %v2065, %v2163
        %v2196 = vadd.f32 %v2066, %v2164
        %v2197 = vadd.f32 %v2067, %v2165
        %v2198 = vadd.f32 %v2068, %v2166
        %v2199 = vadd.f32 %v2069, %v2167
        %v2200 = vadd.f32 %v2070, %v2168
        %v2201 = vadd.f32 %v2071, %v2169
        %v2202 = vadd.f32 %v2072, %v2170
        %v2203 = vadd.f32 %v2073, %v2171
        %v2204 = vadd.f32 %v2074, %v2172
        %v2205 = vadd.f32 %v2075, %v2173
        %v2206 = vadd.f32 %v2076, %v2174
        %v2207 = vperm.slane %v663, 2
        %v2208 = vmul.f32 %v1865, %v2207
        %v2209 = vmul.f32 %v1843, %v2207
        %v2210 = vmul.f32 %v1866, %v2207
        %v2211 = vmul.f32 %v1844, %v2207
        %v2212 = vmul.f32 %v1867, %v2207
        %v2213 = vmul.f32 %v1845, %v2207
        %v2214 = vmul.f32 %v1868, %v2207
        %v2215 = vmul.f32 %v1846, %v2207
        %v2216 = vmul.f32 %v1869, %v2207
        %v2217 = vmul.f32 %v1847, %v2207
        %v2218 = vmul.f32 %v1870, %v2207
        %v2219 = vmul.f32 %v1848, %v2207
        %v2220 = vmul.f32 %v1871, %v2207
        %v2221 = vmul.f32 %v1849, %v2207
        %v2222 = vmul.f32 %v1872, %v2207
        %v2223 = vmul.f32 %v1850, %v2207
        %v2224 = vmul.f32 %v1873, %v2207
        %v2225 = vmul.f32 %v1851, %v2207
        %v2226 = vmul.f32 %v1874, %v2207
        %v2227 = vmul.f32 %v1852, %v2207
        %v2228 = vmul.f32 %v1875, %v2207
        %v2229 = vmul.f32 %v1853, %v2207
        %v2230 = vmul.f32 %v1876, %v2207
        %v2231 = vmul.f32 %v1854, %v2207
        %v2232 = vmul.f32 %v1877, %v2207
        %v2233 = vmul.f32 %v1855, %v2207
        %v2234 = vmul.f32 %v1878, %v2207
        %v2235 = vmul.f32 %v1856, %v2207
        %v2236 = vmul.f32 %v1879, %v2207
        %v2237 = vmul.f32 %v1857, %v2207
        %v2238 = vmul.f32 %v1880, %v2207
        %v2239 = vmul.f32 %v1858, %v2207
        %v2240 = vadd.f32 %v2110, %v2208
        %v2241 = vadd.f32 %v2111, %v2209
        %v2242 = vadd.f32 %v2112, %v2210
        %v2243 = vadd.f32 %v2113, %v2211
        %v2244 = vadd.f32 %v2114, %v2212
        %v2245 = vadd.f32 %v2115, %v2213
        %v2246 = vadd.f32 %v2116, %v2214
        %v2247 = vadd.f32 %v2117, %v2215
        %v2248 = vadd.f32 %v2118, %v2216
        %v2249 = vadd.f32 %v2119, %v2217
        %v2250 = vadd.f32 %v2120, %v2218
        %v2251 = vadd.f32 %v2121, %v2219
        %v2252 = vadd.f32 %v2122, %v2220
        %v2253 = vadd.f32 %v2123, %v2221
        %v2254 = vadd.f32 %v2124, %v2222
        %v2255 = vadd.f32 %v2125, %v2223
        %v2256 = vadd.f32 %v2126, %v2224
        %v2257 = vadd.f32 %v2127, %v2225
        %v2258 = vadd.f32 %v2128, %v2226
        %v2259 = vadd.f32 %v2129, %v2227
        %v2260 = vadd.f32 %v2130, %v2228
        %v2261 = vadd.f32 %v2131, %v2229
        %v2262 = vadd.f32 %v2132, %v2230
        %v2263 = vadd.f32 %v2133, %v2231
        %v2264 = vadd.f32 %v2134, %v2232
        %v2265 = vadd.f32 %v2135, %v2233
        %v2266 = vadd.f32 %v2136, %v2234
        %v2267 = vadd.f32 %v2137, %v2235
        %v2268 = vadd.f32 %v2138, %v2236
        %v2269 = vadd.f32 %v2139, %v2237
        %v2270 = vadd.f32 %v2140, %v2238
        %v2271 = vadd.f32 %v2141, %v2239
        %v2272 = vperm.slane %v664, 2
        %v2273 = vmul.f32 %v1866, %v2272
        %v2274 = vmul.f32 %v1844, %v2272
        %v2275 = vmul.f32 %v1867, %v2272
        %v2276 = vmul.f32 %v1845, %v2272
        %v2277 = vmul.f32 %v1868, %v2272
        %v2278 = vmul.f32 %v1846, %v2272
        %v2279 = vmul.f32 %v1869, %v2272
        %v2280 = vmul.f32 %v1847, %v2272
        %v2281 = vmul.f32 %v1870, %v2272
        %v2282 = vmul.f32 %v1848, %v2272
        %v2283 = vmul.f32 %v1871, %v2272
        %v2284 = vmul.f32 %v1849, %v2272
        %v2285 = vmul.f32 %v1872, %v2272
        %v2286 = vmul.f32 %v1850, %v2272
        %v2287 = vmul.f32 %v1873, %v2272
        %v2288 = vmul.f32 %v1851, %v2272
        %v2289 = vmul.f32 %v1874, %v2272
        %v2290 = vmul.f32 %v1852, %v2272
        %v2291 = vmul.f32 %v1875, %v2272
        %v2292 = vmul.f32 %v1853, %v2272
        %v2293 = vmul.f32 %v1876, %v2272
        %v2294 = vmul.f32 %v1854, %v2272
        %v2295 = vmul.f32 %v1877, %v2272
        %v2296 = vmul.f32 %v1855, %v2272
        %v2297 = vmul.f32 %v1878, %v2272
        %v2298 = vmul.f32 %v1856, %v2272
        %v2299 = vmul.f32 %v1879, %v2272
        %v2300 = vmul.f32 %v1857, %v2272
        %v2301 = vmul.f32 %v1880, %v2272
        %v2302 = vmul.f32 %v1858, %v2272
        %v2303 = vmul.f32 %v1881, %v2272
        %v2304 = vmul.f32 %v1859, %v2272
        %v2305 = vadd.f32 %v2175, %v2273
        %v2306 = vadd.f32 %v2176, %v2274
        %v2307 = vadd.f32 %v2177, %v2275
        %v2308 = vadd.f32 %v2178, %v2276
        %v2309 = vadd.f32 %v2179, %v2277
        %v2310 = vadd.f32 %v2180, %v2278
        %v2311 = vadd.f32 %v2181, %v2279
        %v2312 = vadd.f32 %v2182, %v2280
        %v2313 = vadd.f32 %v2183, %v2281
        %v2314 = vadd.f32 %v2184, %v2282
        %v2315 = vadd.f32 %v2185, %v2283
        %v2316 = vadd.f32 %v2186, %v2284
        %v2317 = vadd.f32 %v2187, %v2285
        %v2318 = vadd.f32 %v2188, %v2286
        %v2319 = vadd.f32 %v2189, %v2287
        %v2320 = vadd.f32 %v2190, %v2288
        %v2321 = vadd.f32 %v2191, %v2289
        %v2322 = vadd.f32 %v2192, %v2290
        %v2323 = vadd.f32 %v2193, %v2291
        %v2324 = vadd.f32 %v2194, %v2292
        %v2325 = vadd.f32 %v2195, %v2293
        %v2326 = vadd.f32 %v2196, %v2294
        %v2327 = vadd.f32 %v2197, %v2295
        %v2328 = vadd.f32 %v2198, %v2296
        %v2329 = vadd.f32 %v2199, %v2297
        %v2330 = vadd.f32 %v2200, %v2298
        %v2331 = vadd.f32 %v2201, %v2299
        %v2332 = vadd.f32 %v2202, %v2300
        %v2333 = vadd.f32 %v2203, %v2301
        %v2334 = vadd.f32 %v2204, %v2302
        %v2335 = vadd.f32 %v2205, %v2303
        %v2336 = vadd.f32 %v2206, %v2304
        %v2337 = vperm.slane %v658, 3
        %v2338 = vmul.f32 %v571, %v2337
        %v2339 = vmul.f32 %v572, %v2337
        %v2340 = vmul.f32 %v575, %v2337
        %v2341 = vmul.f32 %v576, %v2337
        %v2342 = vmul.f32 %v579, %v2337
        %v2343 = vmul.f32 %v580, %v2337
        %v2344 = vmul.f32 %v583, %v2337
        %v2345 = vmul.f32 %v584, %v2337
        %v2346 = vmul.f32 %v587, %v2337
        %v2347 = vmul.f32 %v588, %v2337
        %v2348 = vmul.f32 %v591, %v2337
        %v2349 = vmul.f32 %v592, %v2337
        %v2350 = vmul.f32 %v595, %v2337
        %v2351 = vmul.f32 %v596, %v2337
        %v2352 = vmul.f32 %v599, %v2337
        %v2353 = vmul.f32 %v600, %v2337
        %v2354 = vmul.f32 %v603, %v2337
        %v2355 = vmul.f32 %v604, %v2337
        %v2356 = vmul.f32 %v607, %v2337
        %v2357 = vmul.f32 %v608, %v2337
        %v2358 = vmul.f32 %v611, %v2337
        %v2359 = vmul.f32 %v612, %v2337
        %v2360 = vmul.f32 %v615, %v2337
        %v2361 = vmul.f32 %v616, %v2337
        %v2362 = vmul.f32 %v619, %v2337
        %v2363 = vmul.f32 %v620, %v2337
        %v2364 = vmul.f32 %v623, %v2337
        %v2365 = vmul.f32 %v624, %v2337
        %v2366 = vmul.f32 %v627, %v2337
        %v2367 = vmul.f32 %v628, %v2337
        %v2368 = vmul.f32 %v631, %v2337
        %v2369 = vmul.f32 %v632, %v2337
        %v2370 = vadd.f32 %v2240, %v2338
        %v2371 = vadd.f32 %v2241, %v2339
        %v2372 = vadd.f32 %v2242, %v2340
        %v2373 = vadd.f32 %v2243, %v2341
        %v2374 = vadd.f32 %v2244, %v2342
        %v2375 = vadd.f32 %v2245, %v2343
        %v2376 = vadd.f32 %v2246, %v2344
        %v2377 = vadd.f32 %v2247, %v2345
        %v2378 = vadd.f32 %v2248, %v2346
        %v2379 = vadd.f32 %v2249, %v2347
        %v2380 = vadd.f32 %v2250, %v2348
        %v2381 = vadd.f32 %v2251, %v2349
        %v2382 = vadd.f32 %v2252, %v2350
        %v2383 = vadd.f32 %v2253, %v2351
        %v2384 = vadd.f32 %v2254, %v2352
        %v2385 = vadd.f32 %v2255, %v2353
        %v2386 = vadd.f32 %v2256, %v2354
        %v2387 = vadd.f32 %v2257, %v2355
        %v2388 = vadd.f32 %v2258, %v2356
        %v2389 = vadd.f32 %v2259, %v2357
        %v2390 = vadd.f32 %v2260, %v2358
        %v2391 = vadd.f32 %v2261, %v2359
        %v2392 = vadd.f32 %v2262, %v2360
        %v2393 = vadd.f32 %v2263, %v2361
        %v2394 = vadd.f32 %v2264, %v2362
        %v2395 = vadd.f32 %v2265, %v2363
        %v2396 = vadd.f32 %v2266, %v2364
        %v2397 = vadd.f32 %v2267, %v2365
        %v2398 = vadd.f32 %v2268, %v2366
        %v2399 = vadd.f32 %v2269, %v2367
        %v2400 = vadd.f32 %v2270, %v2368
        %v2401 = vadd.f32 %v2271, %v2369
        %v2402 = vperm.slane %v659, 3
        %v2403 = vmul.f32 %v575, %v2402
        %v2404 = vmul.f32 %v576, %v2402
        %v2405 = vmul.f32 %v579, %v2402
        %v2406 = vmul.f32 %v580, %v2402
        %v2407 = vmul.f32 %v583, %v2402
        %v2408 = vmul.f32 %v584, %v2402
        %v2409 = vmul.f32 %v587, %v2402
        %v2410 = vmul.f32 %v588, %v2402
        %v2411 = vmul.f32 %v591, %v2402
        %v2412 = vmul.f32 %v592, %v2402
        %v2413 = vmul.f32 %v595, %v2402
        %v2414 = vmul.f32 %v596, %v2402
        %v2415 = vmul.f32 %v599, %v2402
        %v2416 = vmul.f32 %v600, %v2402
        %v2417 = vmul.f32 %v603, %v2402
        %v2418 = vmul.f32 %v604, %v2402
        %v2419 = vmul.f32 %v607, %v2402
        %v2420 = vmul.f32 %v608, %v2402
        %v2421 = vmul.f32 %v611, %v2402
        %v2422 = vmul.f32 %v612, %v2402
        %v2423 = vmul.f32 %v615, %v2402
        %v2424 = vmul.f32 %v616, %v2402
        %v2425 = vmul.f32 %v619, %v2402
        %v2426 = vmul.f32 %v620, %v2402
        %v2427 = vmul.f32 %v623, %v2402
        %v2428 = vmul.f32 %v624, %v2402
        %v2429 = vmul.f32 %v627, %v2402
        %v2430 = vmul.f32 %v628, %v2402
        %v2431 = vmul.f32 %v631, %v2402
        %v2432 = vmul.f32 %v632, %v2402
        %v2433 = vmul.f32 %v635, %v2402
        %v2434 = vmul.f32 %v636, %v2402
        %v2435 = vadd.f32 %v2305, %v2403
        %v2436 = vadd.f32 %v2306, %v2404
        %v2437 = vadd.f32 %v2307, %v2405
        %v2438 = vadd.f32 %v2308, %v2406
        %v2439 = vadd.f32 %v2309, %v2407
        %v2440 = vadd.f32 %v2310, %v2408
        %v2441 = vadd.f32 %v2311, %v2409
        %v2442 = vadd.f32 %v2312, %v2410
        %v2443 = vadd.f32 %v2313, %v2411
        %v2444 = vadd.f32 %v2314, %v2412
        %v2445 = vadd.f32 %v2315, %v2413
        %v2446 = vadd.f32 %v2316, %v2414
        %v2447 = vadd.f32 %v2317, %v2415
        %v2448 = vadd.f32 %v2318, %v2416
        %v2449 = vadd.f32 %v2319, %v2417
        %v2450 = vadd.f32 %v2320, %v2418
        %v2451 = vadd.f32 %v2321, %v2419
        %v2452 = vadd.f32 %v2322, %v2420
        %v2453 = vadd.f32 %v2323, %v2421
        %v2454 = vadd.f32 %v2324, %v2422
        %v2455 = vadd.f32 %v2325, %v2423
        %v2456 = vadd.f32 %v2326, %v2424
        %v2457 = vadd.f32 %v2327, %v2425
        %v2458 = vadd.f32 %v2328, %v2426
        %v2459 = vadd.f32 %v2329, %v2427
        %v2460 = vadd.f32 %v2330, %v2428
        %v2461 = vadd.f32 %v2331, %v2429
        %v2462 = vadd.f32 %v2332, %v2430
        %v2463 = vadd.f32 %v2333, %v2431
        %v2464 = vadd.f32 %v2334, %v2432
        %v2465 = vadd.f32 %v2335, %v2433
        %v2466 = vadd.f32 %v2336, %v2434
        %v2467 = vperm.slane %v660, 3
        %v2468 = vmul.f32 %v579, %v2467
        %v2469 = vmul.f32 %v580, %v2467
        %v2470 = vmul.f32 %v583, %v2467
        %v2471 = vmul.f32 %v584, %v2467
        %v2472 = vmul.f32 %v587, %v2467
        %v2473 = vmul.f32 %v588, %v2467
        %v2474 = vmul.f32 %v591, %v2467
        %v2475 = vmul.f32 %v592, %v2467
        %v2476 = vmul.f32 %v595, %v2467
        %v2477 = vmul.f32 %v596, %v2467
        %v2478 = vmul.f32 %v599, %v2467
        %v2479 = vmul.f32 %v600, %v2467
        %v2480 = vmul.f32 %v603, %v2467
        %v2481 = vmul.f32 %v604, %v2467
        %v2482 = vmul.f32 %v607, %v2467
        %v2483 = vmul.f32 %v608, %v2467
        %v2484 = vmul.f32 %v611, %v2467
        %v2485 = vmul.f32 %v612, %v2467
        %v2486 = vmul.f32 %v615, %v2467
        %v2487 = vmul.f32 %v616, %v2467
        %v2488 = vmul.f32 %v619, %v2467
        %v2489 = vmul.f32 %v620, %v2467
        %v2490 = vmul.f32 %v623, %v2467
        %v2491 = vmul.f32 %v624, %v2467
        %v2492 = vmul.f32 %v627, %v2467
        %v2493 = vmul.f32 %v628, %v2467
        %v2494 = vmul.f32 %v631, %v2467
        %v2495 = vmul.f32 %v632, %v2467
        %v2496 = vmul.f32 %v635, %v2467
        %v2497 = vmul.f32 %v636, %v2467
        %v2498 = vmul.f32 %v639, %v2467
        %v2499 = vmul.f32 %v640, %v2467
        %v2500 = vadd.f32 %v2370, %v2468
        %v2501 = vadd.f32 %v2371, %v2469
        %v2502 = vadd.f32 %v2372, %v2470
        %v2503 = vadd.f32 %v2373, %v2471
        %v2504 = vadd.f32 %v2374, %v2472
        %v2505 = vadd.f32 %v2375, %v2473
        %v2506 = vadd.f32 %v2376, %v2474
        %v2507 = vadd.f32 %v2377, %v2475
        %v2508 = vadd.f32 %v2378, %v2476
        %v2509 = vadd.f32 %v2379, %v2477
        %v2510 = vadd.f32 %v2380, %v2478
        %v2511 = vadd.f32 %v2381, %v2479
        %v2512 = vadd.f32 %v2382, %v2480
        %v2513 = vadd.f32 %v2383, %v2481
        %v2514 = vadd.f32 %v2384, %v2482
        %v2515 = vadd.f32 %v2385, %v2483
        %v2516 = vadd.f32 %v2386, %v2484
        %v2517 = vadd.f32 %v2387, %v2485
        %v2518 = vadd.f32 %v2388, %v2486
        %v2519 = vadd.f32 %v2389, %v2487
        %v2520 = vadd.f32 %v2390, %v2488
        %v2521 = vadd.f32 %v2391, %v2489
        %v2522 = vadd.f32 %v2392, %v2490
        %v2523 = vadd.f32 %v2393, %v2491
        %v2524 = vadd.f32 %v2394, %v2492
        %v2525 = vadd.f32 %v2395, %v2493
        %v2526 = vadd.f32 %v2396, %v2494
        %v2527 = vadd.f32 %v2397, %v2495
        %v2528 = vadd.f32 %v2398, %v2496
        %v2529 = vadd.f32 %v2399, %v2497
        %v2530 = vadd.f32 %v2400, %v2498
        %v2531 = vadd.f32 %v2401, %v2499
        %v2532 = vperm.slane %v661, 3
        %v2533 = vmul.f32 %v583, %v2532
        %v2534 = vmul.f32 %v584, %v2532
        %v2535 = vmul.f32 %v587, %v2532
        %v2536 = vmul.f32 %v588, %v2532
        %v2537 = vmul.f32 %v591, %v2532
        %v2538 = vmul.f32 %v592, %v2532
        %v2539 = vmul.f32 %v595, %v2532
        %v2540 = vmul.f32 %v596, %v2532
        %v2541 = vmul.f32 %v599, %v2532
        %v2542 = vmul.f32 %v600, %v2532
        %v2543 = vmul.f32 %v603, %v2532
        %v2544 = vmul.f32 %v604, %v2532
        %v2545 = vmul.f32 %v607, %v2532
        %v2546 = vmul.f32 %v608, %v2532
        %v2547 = vmul.f32 %v611, %v2532
        %v2548 = vmul.f32 %v612, %v2532
        %v2549 = vmul.f32 %v615, %v2532
        %v2550 = vmul.f32 %v616, %v2532
        %v2551 = vmul.f32 %v619, %v2532
        %v2552 = vmul.f32 %v620, %v2532
        %v2553 = vmul.f32 %v623, %v2532
        %v2554 = vmul.f32 %v624, %v2532
        %v2555 = vmul.f32 %v627, %v2532
        %v2556 = vmul.f32 %v628, %v2532
        %v2557 = vmul.f32 %v631, %v2532
        %v2558 = vmul.f32 %v632, %v2532
        %v2559 = vmul.f32 %v635, %v2532
        %v2560 = vmul.f32 %v636, %v2532
        %v2561 = vmul.f32 %v639, %v2532
        %v2562 = vmul.f32 %v640, %v2532
        %v2563 = vmul.f32 %v643, %v2532
        %v2564 = vmul.f32 %v644, %v2532
        %v2565 = vadd.f32 %v2435, %v2533
        %v2566 = vadd.f32 %v2436, %v2534
        %v2567 = vadd.f32 %v2437, %v2535
        %v2568 = vadd.f32 %v2438, %v2536
        %v2569 = vadd.f32 %v2439, %v2537
        %v2570 = vadd.f32 %v2440, %v2538
        %v2571 = vadd.f32 %v2441, %v2539
        %v2572 = vadd.f32 %v2442, %v2540
        %v2573 = vadd.f32 %v2443, %v2541
        %v2574 = vadd.f32 %v2444, %v2542
        %v2575 = vadd.f32 %v2445, %v2543
        %v2576 = vadd.f32 %v2446, %v2544
        %v2577 = vadd.f32 %v2447, %v2545
        %v2578 = vadd.f32 %v2448, %v2546
        %v2579 = vadd.f32 %v2449, %v2547
        %v2580 = vadd.f32 %v2450, %v2548
        %v2581 = vadd.f32 %v2451, %v2549
        %v2582 = vadd.f32 %v2452, %v2550
        %v2583 = vadd.f32 %v2453, %v2551
        %v2584 = vadd.f32 %v2454, %v2552
        %v2585 = vadd.f32 %v2455, %v2553
        %v2586 = vadd.f32 %v2456, %v2554
        %v2587 = vadd.f32 %v2457, %v2555
        %v2588 = vadd.f32 %v2458, %v2556
        %v2589 = vadd.f32 %v2459, %v2557
        %v2590 = vadd.f32 %v2460, %v2558
        %v2591 = vadd.f32 %v2461, %v2559
        %v2592 = vadd.f32 %v2462, %v2560
        %v2593 = vadd.f32 %v2463, %v2561
        %v2594 = vadd.f32 %v2464, %v2562
        %v2595 = vadd.f32 %v2465, %v2563
        %v2596 = vadd.f32 %v2466, %v2564
        %v2597 = vperm.slane %v662, 3
        %v2598 = vmul.f32 %v587, %v2597
        %v2599 = vmul.f32 %v588, %v2597
        %v2600 = vmul.f32 %v591, %v2597
        %v2601 = vmul.f32 %v592, %v2597
        %v2602 = vmul.f32 %v595, %v2597
        %v2603 = vmul.f32 %v596, %v2597
        %v2604 = vmul.f32 %v599, %v2597
        %v2605 = vmul.f32 %v600, %v2597
        %v2606 = vmul.f32 %v603, %v2597
        %v2607 = vmul.f32 %v604, %v2597
        %v2608 = vmul.f32 %v607, %v2597
        %v2609 = vmul.f32 %v608, %v2597
        %v2610 = vmul.f32 %v611, %v2597
        %v2611 = vmul.f32 %v612, %v2597
        %v2612 = vmul.f32 %v615, %v2597
        %v2613 = vmul.f32 %v616, %v2597
        %v2614 = vmul.f32 %v619, %v2597
        %v2615 = vmul.f32 %v620, %v2597
        %v2616 = vmul.f32 %v623, %v2597
        %v2617 = vmul.f32 %v624, %v2597
        %v2618 = vmul.f32 %v627, %v2597
        %v2619 = vmul.f32 %v628, %v2597
        %v2620 = vmul.f32 %v631, %v2597
        %v2621 = vmul.f32 %v632, %v2597
        %v2622 = vmul.f32 %v635, %v2597
        %v2623 = vmul.f32 %v636, %v2597
        %v2624 = vmul.f32 %v639, %v2597
        %v2625 = vmul.f32 %v640, %v2597
        %v2626 = vmul.f32 %v643, %v2597
        %v2627 = vmul.f32 %v644, %v2597
        %v2628 = vmul.f32 %v647, %v2597
        %v2629 = vmul.f32 %v648, %v2597
        %v2630 = vadd.f32 %v2500, %v2598
        %v2631 = vadd.f32 %v2501, %v2599
        %v2632 = vadd.f32 %v2502, %v2600
        %v2633 = vadd.f32 %v2503, %v2601
        %v2634 = vadd.f32 %v2504, %v2602
        %v2635 = vadd.f32 %v2505, %v2603
        %v2636 = vadd.f32 %v2506, %v2604
        %v2637 = vadd.f32 %v2507, %v2605
        %v2638 = vadd.f32 %v2508, %v2606
        %v2639 = vadd.f32 %v2509, %v2607
        %v2640 = vadd.f32 %v2510, %v2608
        %v2641 = vadd.f32 %v2511, %v2609
        %v2642 = vadd.f32 %v2512, %v2610
        %v2643 = vadd.f32 %v2513, %v2611
        %v2644 = vadd.f32 %v2514, %v2612
        %v2645 = vadd.f32 %v2515, %v2613
        %v2646 = vadd.f32 %v2516, %v2614
        %v2647 = vadd.f32 %v2517, %v2615
        %v2648 = vadd.f32 %v2518, %v2616
        %v2649 = vadd.f32 %v2519, %v2617
        %v2650 = vadd.f32 %v2520, %v2618
        %v2651 = vadd.f32 %v2521, %v2619
        %v2652 = vadd.f32 %v2522, %v2620
        %v2653 = vadd.f32 %v2523, %v2621
        %v2654 = vadd.f32 %v2524, %v2622
        %v2655 = vadd.f32 %v2525, %v2623
        %v2656 = vadd.f32 %v2526, %v2624
        %v2657 = vadd.f32 %v2527, %v2625
        %v2658 = vadd.f32 %v2528, %v2626
        %v2659 = vadd.f32 %v2529, %v2627
        %v2660 = vadd.f32 %v2530, %v2628
        %v2661 = vadd.f32 %v2531, %v2629
        %v2662 = vperm.slane %v663, 3
        %v2663 = vmul.f32 %v591, %v2662
        %v2664 = vmul.f32 %v592, %v2662
        %v2665 = vmul.f32 %v595, %v2662
        %v2666 = vmul.f32 %v596, %v2662
        %v2667 = vmul.f32 %v599, %v2662
        %v2668 = vmul.f32 %v600, %v2662
        %v2669 = vmul.f32 %v603, %v2662
        %v2670 = vmul.f32 %v604, %v2662
        %v2671 = vmul.f32 %v607, %v2662
        %v2672 = vmul.f32 %v608, %v2662
        %v2673 = vmul.f32 %v611, %v2662
        %v2674 = vmul.f32 %v612, %v2662
        %v2675 = vmul.f32 %v615, %v2662
        %v2676 = vmul.f32 %v616, %v2662
        %v2677 = vmul.f32 %v619, %v2662
        %v2678 = vmul.f32 %v620, %v2662
        %v2679 = vmul.f32 %v623, %v2662
        %v2680 = vmul.f32 %v624, %v2662
        %v2681 = vmul.f32 %v627, %v2662
        %v2682 = vmul.f32 %v628, %v2662
        %v2683 = vmul.f32 %v631, %v2662
        %v2684 = vmul.f32 %v632, %v2662
        %v2685 = vmul.f32 %v635, %v2662
        %v2686 = vmul.f32 %v636, %v2662
        %v2687 = vmul.f32 %v639, %v2662
        %v2688 = vmul.f32 %v640, %v2662
        %v2689 = vmul.f32 %v643, %v2662
        %v2690 = vmul.f32 %v644, %v2662
        %v2691 = vmul.f32 %v647, %v2662
        %v2692 = vmul.f32 %v648, %v2662
        %v2693 = vmul.f32 %v651, %v2662
        %v2694 = vmul.f32 %v652, %v2662
        %v2695 = vadd.f32 %v2565, %v2663
        %v2696 = vadd.f32 %v2566, %v2664
        %v2697 = vadd.f32 %v2567, %v2665
        %v2698 = vadd.f32 %v2568, %v2666
        %v2699 = vadd.f32 %v2569, %v2667
        %v2700 = vadd.f32 %v2570, %v2668
        %v2701 = vadd.f32 %v2571, %v2669
        %v2702 = vadd.f32 %v2572, %v2670
        %v2703 = vadd.f32 %v2573, %v2671
        %v2704 = vadd.f32 %v2574, %v2672
        %v2705 = vadd.f32 %v2575, %v2673
        %v2706 = vadd.f32 %v2576, %v2674
        %v2707 = vadd.f32 %v2577, %v2675
        %v2708 = vadd.f32 %v2578, %v2676
        %v2709 = vadd.f32 %v2579, %v2677
        %v2710 = vadd.f32 %v2580, %v2678
        %v2711 = vadd.f32 %v2581, %v2679
        %v2712 = vadd.f32 %v2582, %v2680
        %v2713 = vadd.f32 %v2583, %v2681
        %v2714 = vadd.f32 %v2584, %v2682
        %v2715 = vadd.f32 %v2585, %v2683
        %v2716 = vadd.f32 %v2586, %v2684
        %v2717 = vadd.f32 %v2587, %v2685
        %v2718 = vadd.f32 %v2588, %v2686
        %v2719 = vadd.f32 %v2589, %v2687
        %v2720 = vadd.f32 %v2590, %v2688
        %v2721 = vadd.f32 %v2591, %v2689
        %v2722 = vadd.f32 %v2592, %v2690
        %v2723 = vadd.f32 %v2593, %v2691
        %v2724 = vadd.f32 %v2594, %v2692
        %v2725 = vadd.f32 %v2595, %v2693
        %v2726 = vadd.f32 %v2596, %v2694
        %v2727 = vperm.slane %v664, 3
        %v2728 = vmul.f32 %v595, %v2727
        %v2729 = vmul.f32 %v596, %v2727
        %v2730 = vmul.f32 %v599, %v2727
        %v2731 = vmul.f32 %v600, %v2727
        %v2732 = vmul.f32 %v603, %v2727
        %v2733 = vmul.f32 %v604, %v2727
        %v2734 = vmul.f32 %v607, %v2727
        %v2735 = vmul.f32 %v608, %v2727
        %v2736 = vmul.f32 %v611, %v2727
        %v2737 = vmul.f32 %v612, %v2727
        %v2738 = vmul.f32 %v615, %v2727
        %v2739 = vmul.f32 %v616, %v2727
        %v2740 = vmul.f32 %v619, %v2727
        %v2741 = vmul.f32 %v620, %v2727
        %v2742 = vmul.f32 %v623, %v2727
        %v2743 = vmul.f32 %v624, %v2727
        %v2744 = vmul.f32 %v627, %v2727
        %v2745 = vmul.f32 %v628, %v2727
        %v2746 = vmul.f32 %v631, %v2727
        %v2747 = vmul.f32 %v632, %v2727
        %v2748 = vmul.f32 %v635, %v2727
        %v2749 = vmul.f32 %v636, %v2727
        %v2750 = vmul.f32 %v639, %v2727
        %v2751 = vmul.f32 %v640, %v2727
        %v2752 = vmul.f32 %v643, %v2727
        %v2753 = vmul.f32 %v644, %v2727
        %v2754 = vmul.f32 %v647, %v2727
        %v2755 = vmul.f32 %v648, %v2727
        %v2756 = vmul.f32 %v651, %v2727
        %v2757 = vmul.f32 %v652, %v2727
        %v2758 = vmul.f32 %v655, %v2727
        %v2759 = vmul.f32 %v656, %v2727
        %v2760 = vadd.f32 %v2630, %v2728
        %v2761 = vadd.f32 %v2631, %v2729
        %v2762 = vadd.f32 %v2632, %v2730
        %v2763 = vadd.f32 %v2633, %v2731
        %v2764 = vadd.f32 %v2634, %v2732
        %v2765 = vadd.f32 %v2635, %v2733
        %v2766 = vadd.f32 %v2636, %v2734
        %v2767 = vadd.f32 %v2637, %v2735
        %v2768 = vadd.f32 %v2638, %v2736
        %v2769 = vadd.f32 %v2639, %v2737
        %v2770 = vadd.f32 %v2640, %v2738
        %v2771 = vadd.f32 %v2641, %v2739
        %v2772 = vadd.f32 %v2642, %v2740
        %v2773 = vadd.f32 %v2643, %v2741
        %v2774 = vadd.f32 %v2644, %v2742
        %v2775 = vadd.f32 %v2645, %v2743
        %v2776 = vadd.f32 %v2646, %v2744
        %v2777 = vadd.f32 %v2647, %v2745
        %v2778 = vadd.f32 %v2648, %v2746
        %v2779 = vadd.f32 %v2649, %v2747
        %v2780 = vadd.f32 %v2650, %v2748
        %v2781 = vadd.f32 %v2651, %v2749
        %v2782 = vadd.f32 %v2652, %v2750
        %v2783 = vadd.f32 %v2653, %v2751
        %v2784 = vadd.f32 %v2654, %v2752
        %v2785 = vadd.f32 %v2655, %v2753
        %v2786 = vadd.f32 %v2656, %v2754
        %v2787 = vadd.f32 %v2657, %v2755
        %v2788 = vadd.f32 %v2658, %v2756
        %v2789 = vadd.f32 %v2659, %v2757
        %v2790 = vadd.f32 %v2660, %v2758
        %v2791 = vadd.f32 %v2661, %v2759
        %v2792 = vrot.slane %v571, 1
        %v2793 = vrot.slane %v575, 1
        %v2794 = vrot.slane %v579, 1
        %v2795 = vrot.slane %v583, 1
        %v2796 = vrot.slane %v587, 1
        %v2797 = vrot.slane %v591, 1
        %v2798 = vrot.slane %v595, 1
        %v2799 = vrot.slane %v599, 1
        %v2800 = vrot.slane %v603, 1
        %v2801 = vrot.slane %v607, 1
        %v2802 = vrot.slane %v611, 1
        %v2803 = vrot.slane %v615, 1
        %v2804 = vrot.slane %v619, 1
        %v2805 = vrot.slane %v623, 1
        %v2806 = vrot.slane %v627, 1
        %v2807 = vrot.slane %v631, 1
        %v2808 = vrot.slane %v635, 1
        %v2809 = vrot.slane %v639, 1
        %v2810 = vrot.slane %v643, 1
        %v2811 = vrot.slane %v647, 1
        %v2812 = vrot.slane %v651, 1
        %v2813 = vrot.slane %v655, 1
        %v2814 = vrot.slane %v572, 1
        %v2815 = vrot.slane %v576, 1
        %v2816 = vrot.slane %v580, 1
        %v2817 = vrot.slane %v584, 1
        %v2818 = vrot.slane %v588, 1
        %v2819 = vrot.slane %v592, 1
        %v2820 = vrot.slane %v596, 1
        %v2821 = vrot.slane %v600, 1
        %v2822 = vrot.slane %v604, 1
        %v2823 = vrot.slane %v608, 1
        %v2824 = vrot.slane %v612, 1
        %v2825 = vrot.slane %v616, 1
        %v2826 = vrot.slane %v620, 1
        %v2827 = vrot.slane %v624, 1
        %v2828 = vrot.slane %v628, 1
        %v2829 = vrot.slane %v632, 1
        %v2830 = vrot.slane %v636, 1
        %v2831 = vrot.slane %v640, 1
        %v2832 = vrot.slane %v644, 1
        %v2833 = vrot.slane %v648, 1
        %v2834 = vrot.slane %v652, 1
        %v2835 = vrot.slane %v656, 1
        %v2836 = vrot.slane %v573, 1
        %v2837 = vrot.slane %v577, 1
        %v2838 = vrot.slane %v581, 1
        %v2839 = vrot.slane %v585, 1
        %v2840 = vrot.slane %v589, 1
        %v2841 = vrot.slane %v593, 1
        %v2842 = vrot.slane %v597, 1
        %v2843 = vrot.slane %v601, 1
        %v2844 = vrot.slane %v605, 1
        %v2845 = vrot.slane %v609, 1
        %v2846 = vrot.slane %v613, 1
        %v2847 = vrot.slane %v617, 1
        %v2848 = vrot.slane %v621, 1
        %v2849 = vrot.slane %v625, 1
        %v2850 = vrot.slane %v629, 1
        %v2851 = vrot.slane %v633, 1
        %v2852 = vrot.slane %v637, 1
        %v2853 = vrot.slane %v641, 1
        %v2854 = vrot.slane %v645, 1
        %v2855 = vrot.slane %v649, 1
        %v2856 = vrot.slane %v653, 1
        %v2857 = vrot.slane %v657, 1
        %vm2858 = vcmp.lt.s32.totalorder %v732, 7
        %v2859 = vsel %vm2858, %v2814, %v2836
        %v2860 = vsel %vm2858, %v2815, %v2837
        %v2861 = vsel %vm2858, %v2816, %v2838
        %v2862 = vsel %vm2858, %v2817, %v2839
        %v2863 = vsel %vm2858, %v2818, %v2840
        %v2864 = vsel %vm2858, %v2819, %v2841
        %v2865 = vsel %vm2858, %v2820, %v2842
        %v2866 = vsel %vm2858, %v2821, %v2843
        %v2867 = vsel %vm2858, %v2822, %v2844
        %v2868 = vsel %vm2858, %v2823, %v2845
        %v2869 = vsel %vm2858, %v2824, %v2846
        %v2870 = vsel %vm2858, %v2825, %v2847
        %v2871 = vsel %vm2858, %v2826, %v2848
        %v2872 = vsel %vm2858, %v2827, %v2849
        %v2873 = vsel %vm2858, %v2828, %v2850
        %v2874 = vsel %vm2858, %v2829, %v2851
        %v2875 = vsel %vm2858, %v2830, %v2852
        %v2876 = vsel %vm2858, %v2831, %v2853
        %v2877 = vsel %vm2858, %v2832, %v2854
        %v2878 = vsel %vm2858, %v2833, %v2855
        %v2879 = vsel %vm2858, %v2834, %v2856
        %v2880 = vsel %vm2858, %v2835, %v2857
        %v2881 = vsel %vm2858, %v2792, %v2814
        %v2882 = vsel %vm2858, %v2793, %v2815
        %v2883 = vsel %vm2858, %v2794, %v2816
        %v2884 = vsel %vm2858, %v2795, %v2817
        %v2885 = vsel %vm2858, %v2796, %v2818
        %v2886 = vsel %vm2858, %v2797, %v2819
        %v2887 = vsel %vm2858, %v2798, %v2820
        %v2888 = vsel %vm2858, %v2799, %v2821
        %v2889 = vsel %vm2858, %v2800, %v2822
        %v2890 = vsel %vm2858, %v2801, %v2823
        %v2891 = vsel %vm2858, %v2802, %v2824
        %v2892 = vsel %vm2858, %v2803, %v2825
        %v2893 = vsel %vm2858, %v2804, %v2826
        %v2894 = vsel %vm2858, %v2805, %v2827
        %v2895 = vsel %vm2858, %v2806, %v2828
        %v2896 = vsel %vm2858, %v2807, %v2829
        %v2897 = vsel %vm2858, %v2808, %v2830
        %v2898 = vsel %vm2858, %v2809, %v2831
        %v2899 = vsel %vm2858, %v2810, %v2832
        %v2900 = vsel %vm2858, %v2811, %v2833
        %v2901 = vsel %vm2858, %v2812, %v2834
        %v2902 = vsel %vm2858, %v2813, %v2835
        %v2903 = vperm.slane %v658, 4
        %v2904 = vmul.f32 %v2881, %v2903
        %v2905 = vmul.f32 %v2859, %v2903
        %v2906 = vmul.f32 %v2882, %v2903
        %v2907 = vmul.f32 %v2860, %v2903
        %v2908 = vmul.f32 %v2883, %v2903
        %v2909 = vmul.f32 %v2861, %v2903
        %v2910 = vmul.f32 %v2884, %v2903
        %v2911 = vmul.f32 %v2862, %v2903
        %v2912 = vmul.f32 %v2885, %v2903
        %v2913 = vmul.f32 %v2863, %v2903
        %v2914 = vmul.f32 %v2886, %v2903
        %v2915 = vmul.f32 %v2864, %v2903
        %v2916 = vmul.f32 %v2887, %v2903
        %v2917 = vmul.f32 %v2865, %v2903
        %v2918 = vmul.f32 %v2888, %v2903
        %v2919 = vmul.f32 %v2866, %v2903
        %v2920 = vmul.f32 %v2889, %v2903
        %v2921 = vmul.f32 %v2867, %v2903
        %v2922 = vmul.f32 %v2890, %v2903
        %v2923 = vmul.f32 %v2868, %v2903
        %v2924 = vmul.f32 %v2891, %v2903
        %v2925 = vmul.f32 %v2869, %v2903
        %v2926 = vmul.f32 %v2892, %v2903
        %v2927 = vmul.f32 %v2870, %v2903
        %v2928 = vmul.f32 %v2893, %v2903
        %v2929 = vmul.f32 %v2871, %v2903
        %v2930 = vmul.f32 %v2894, %v2903
        %v2931 = vmul.f32 %v2872, %v2903
        %v2932 = vmul.f32 %v2895, %v2903
        %v2933 = vmul.f32 %v2873, %v2903
        %v2934 = vmul.f32 %v2896, %v2903
        %v2935 = vmul.f32 %v2874, %v2903
        %v2936 = vadd.f32 %v2695, %v2904
        %v2937 = vadd.f32 %v2696, %v2905
        %v2938 = vadd.f32 %v2697, %v2906
        %v2939 = vadd.f32 %v2698, %v2907
        %v2940 = vadd.f32 %v2699, %v2908
        %v2941 = vadd.f32 %v2700, %v2909
        %v2942 = vadd.f32 %v2701, %v2910
        %v2943 = vadd.f32 %v2702, %v2911
        %v2944 = vadd.f32 %v2703, %v2912
        %v2945 = vadd.f32 %v2704, %v2913
        %v2946 = vadd.f32 %v2705, %v2914
        %v2947 = vadd.f32 %v2706, %v2915
        %v2948 = vadd.f32 %v2707, %v2916
        %v2949 = vadd.f32 %v2708, %v2917
        %v2950 = vadd.f32 %v2709, %v2918
        %v2951 = vadd.f32 %v2710, %v2919
        %v2952 = vadd.f32 %v2711, %v2920
        %v2953 = vadd.f32 %v2712, %v2921
        %v2954 = vadd.f32 %v2713, %v2922
        %v2955 = vadd.f32 %v2714, %v2923
        %v2956 = vadd.f32 %v2715, %v2924
        %v2957 = vadd.f32 %v2716, %v2925
        %v2958 = vadd.f32 %v2717, %v2926
        %v2959 = vadd.f32 %v2718, %v2927
        %v2960 = vadd.f32 %v2719, %v2928
        %v2961 = vadd.f32 %v2720, %v2929
        %v2962 = vadd.f32 %v2721, %v2930
        %v2963 = vadd.f32 %v2722, %v2931
        %v2964 = vadd.f32 %v2723, %v2932
        %v2965 = vadd.f32 %v2724, %v2933
        %v2966 = vadd.f32 %v2725, %v2934
        %v2967 = vadd.f32 %v2726, %v2935
        %v2968 = vperm.slane %v659, 4
        %v2969 = vmul.f32 %v2882, %v2968
        %v2970 = vmul.f32 %v2860, %v2968
        %v2971 = vmul.f32 %v2883, %v2968
        %v2972 = vmul.f32 %v2861, %v2968
        %v2973 = vmul.f32 %v2884, %v2968
        %v2974 = vmul.f32 %v2862, %v2968
        %v2975 = vmul.f32 %v2885, %v2968
        %v2976 = vmul.f32 %v2863, %v2968
        %v2977 = vmul.f32 %v2886, %v2968
        %v2978 = vmul.f32 %v2864, %v2968
        %v2979 = vmul.f32 %v2887, %v2968
        %v2980 = vmul.f32 %v2865, %v2968
        %v2981 = vmul.f32 %v2888, %v2968
        %v2982 = vmul.f32 %v2866, %v2968
        %v2983 = vmul.f32 %v2889, %v2968
        %v2984 = vmul.f32 %v2867, %v2968
        %v2985 = vmul.f32 %v2890, %v2968
        %v2986 = vmul.f32 %v2868, %v2968
        %v2987 = vmul.f32 %v2891, %v2968
        %v2988 = vmul.f32 %v2869, %v2968
        %v2989 = vmul.f32 %v2892, %v2968
        %v2990 = vmul.f32 %v2870, %v2968
        %v2991 = vmul.f32 %v2893, %v2968
        %v2992 = vmul.f32 %v2871, %v2968
        %v2993 = vmul.f32 %v2894, %v2968
        %v2994 = vmul.f32 %v2872, %v2968
        %v2995 = vmul.f32 %v2895, %v2968
        %v2996 = vmul.f32 %v2873, %v2968
        %v2997 = vmul.f32 %v2896, %v2968
        %v2998 = vmul.f32 %v2874, %v2968
        %v2999 = vmul.f32 %v2897, %v2968
        %v3000 = vmul.f32 %v2875, %v2968
        %v3001 = vadd.f32 %v2760, %v2969
        %v3002 = vadd.f32 %v2761, %v2970
        %v3003 = vadd.f32 %v2762, %v2971
        %v3004 = vadd.f32 %v2763, %v2972
        %v3005 = vadd.f32 %v2764, %v2973
        %v3006 = vadd.f32 %v2765, %v2974
        %v3007 = vadd.f32 %v2766, %v2975
        %v3008 = vadd.f32 %v2767, %v2976
        %v3009 = vadd.f32 %v2768, %v2977
        %v3010 = vadd.f32 %v2769, %v2978
        %v3011 = vadd.f32 %v2770, %v2979
        %v3012 = vadd.f32 %v2771, %v2980
        %v3013 = vadd.f32 %v2772, %v2981
        %v3014 = vadd.f32 %v2773, %v2982
        %v3015 = vadd.f32 %v2774, %v2983
        %v3016 = vadd.f32 %v2775, %v2984
        %v3017 = vadd.f32 %v2776, %v2985
        %v3018 = vadd.f32 %v2777, %v2986
        %v3019 = vadd.f32 %v2778, %v2987
        %v3020 = vadd.f32 %v2779, %v2988
        %v3021 = vadd.f32 %v2780, %v2989
        %v3022 = vadd.f32 %v2781, %v2990
        %v3023 = vadd.f32 %v2782, %v2991
        %v3024 = vadd.f32 %v2783, %v2992
        %v3025 = vadd.f32 %v2784, %v2993
        %v3026 = vadd.f32 %v2785, %v2994
        %v3027 = vadd.f32 %v2786, %v2995
        %v3028 = vadd.f32 %v2787, %v2996
        %v3029 = vadd.f32 %v2788, %v2997
        %v3030 = vadd.f32 %v2789, %v2998
        %v3031 = vadd.f32 %v2790, %v2999
        %v3032 = vadd.f32 %v2791, %v3000
        %v3033 = vperm.slane %v660, 4
        %v3034 = vmul.f32 %v2883, %v3033
        %v3035 = vmul.f32 %v2861, %v3033
        %v3036 = vmul.f32 %v2884, %v3033
        %v3037 = vmul.f32 %v2862, %v3033
        %v3038 = vmul.f32 %v2885, %v3033
        %v3039 = vmul.f32 %v2863, %v3033
        %v3040 = vmul.f32 %v2886, %v3033
        %v3041 = vmul.f32 %v2864, %v3033
        %v3042 = vmul.f32 %v2887, %v3033
        %v3043 = vmul.f32 %v2865, %v3033
        %v3044 = vmul.f32 %v2888, %v3033
        %v3045 = vmul.f32 %v2866, %v3033
        %v3046 = vmul.f32 %v2889, %v3033
        %v3047 = vmul.f32 %v2867, %v3033
        %v3048 = vmul.f32 %v2890, %v3033
        %v3049 = vmul.f32 %v2868, %v3033
        %v3050 = vmul.f32 %v2891, %v3033
        %v3051 = vmul.f32 %v2869, %v3033
        %v3052 = vmul.f32 %v2892, %v3033
        %v3053 = vmul.f32 %v2870, %v3033
        %v3054 = vmul.f32 %v2893, %v3033
        %v3055 = vmul.f32 %v2871, %v3033
        %v3056 = vmul.f32 %v2894, %v3033
        %v3057 = vmul.f32 %v2872, %v3033
        %v3058 = vmul.f32 %v2895, %v3033
        %v3059 = vmul.f32 %v2873, %v3033
        %v3060 = vmul.f32 %v2896, %v3033
        %v3061 = vmul.f32 %v2874, %v3033
        %v3062 = vmul.f32 %v2897, %v3033
        %v3063 = vmul.f32 %v2875, %v3033
        %v3064 = vmul.f32 %v2898, %v3033
        %v3065 = vmul.f32 %v2876, %v3033
        %v3066 = vadd.f32 %v2936, %v3034
        %v3067 = vadd.f32 %v2937, %v3035
        %v3068 = vadd.f32 %v2938, %v3036
        %v3069 = vadd.f32 %v2939, %v3037
        %v3070 = vadd.f32 %v2940, %v3038
        %v3071 = vadd.f32 %v2941, %v3039
        %v3072 = vadd.f32 %v2942, %v3040
        %v3073 = vadd.f32 %v2943, %v3041
        %v3074 = vadd.f32 %v2944, %v3042
        %v3075 = vadd.f32 %v2945, %v3043
        %v3076 = vadd.f32 %v2946, %v3044
        %v3077 = vadd.f32 %v2947, %v3045
        %v3078 = vadd.f32 %v2948, %v3046
        %v3079 = vadd.f32 %v2949, %v3047
        %v3080 = vadd.f32 %v2950, %v3048
        %v3081 = vadd.f32 %v2951, %v3049
        %v3082 = vadd.f32 %v2952, %v3050
        %v3083 = vadd.f32 %v2953, %v3051
        %v3084 = vadd.f32 %v2954, %v3052
        %v3085 = vadd.f32 %v2955, %v3053
        %v3086 = vadd.f32 %v2956, %v3054
        %v3087 = vadd.f32 %v2957, %v3055
        %v3088 = vadd.f32 %v2958, %v3056
        %v3089 = vadd.f32 %v2959, %v3057
        %v3090 = vadd.f32 %v2960, %v3058
        %v3091 = vadd.f32 %v2961, %v3059
        %v3092 = vadd.f32 %v2962, %v3060
        %v3093 = vadd.f32 %v2963, %v3061
        %v3094 = vadd.f32 %v2964, %v3062
        %v3095 = vadd.f32 %v2965, %v3063
        %v3096 = vadd.f32 %v2966, %v3064
        %v3097 = vadd.f32 %v2967, %v3065
        %v3098 = vperm.slane %v661, 4
        %v3099 = vmul.f32 %v2884, %v3098
        %v3100 = vmul.f32 %v2862, %v3098
        %v3101 = vmul.f32 %v2885, %v3098
        %v3102 = vmul.f32 %v2863, %v3098
        %v3103 = vmul.f32 %v2886, %v3098
        %v3104 = vmul.f32 %v2864, %v3098
        %v3105 = vmul.f32 %v2887, %v3098
        %v3106 = vmul.f32 %v2865, %v3098
        %v3107 = vmul.f32 %v2888, %v3098
        %v3108 = vmul.f32 %v2866, %v3098
        %v3109 = vmul.f32 %v2889, %v3098
        %v3110 = vmul.f32 %v2867, %v3098
        %v3111 = vmul.f32 %v2890, %v3098
        %v3112 = vmul.f32 %v2868, %v3098
        %v3113 = vmul.f32 %v2891, %v3098
        %v3114 = vmul.f32 %v2869, %v3098
        %v3115 = vmul.f32 %v2892, %v3098
        %v3116 = vmul.f32 %v2870, %v3098
        %v3117 = vmul.f32 %v2893, %v3098
        %v3118 = vmul.f32 %v2871, %v3098
        %v3119 = vmul.f32 %v2894, %v3098
        %v3120 = vmul.f32 %v2872, %v3098
        %v3121 = vmul.f32 %v2895, %v3098
        %v3122 = vmul.f32 %v2873, %v3098
        %v3123 = vmul.f32 %v2896, %v3098
        %v3124 = vmul.f32 %v2874, %v3098
        %v3125 = vmul.f32 %v2897, %v3098
        %v3126 = vmul.f32 %v2875, %v3098
        %v3127 = vmul.f32 %v2898, %v3098
        %v3128 = vmul.f32 %v2876, %v3098
        %v3129 = vmul.f32 %v2899, %v3098
        %v3130 = vmul.f32 %v2877, %v3098
        %v3131 = vadd.f32 %v3001, %v3099
        %v3132 = vadd.f32 %v3002, %v3100
        %v3133 = vadd.f32 %v3003, %v3101
        %v3134 = vadd.f32 %v3004, %v3102
        %v3135 = vadd.f32 %v3005, %v3103
        %v3136 = vadd.f32 %v3006, %v3104
        %v3137 = vadd.f32 %v3007, %v3105
        %v3138 = vadd.f32 %v3008, %v3106
        %v3139 = vadd.f32 %v3009, %v3107
        %v3140 = vadd.f32 %v3010, %v3108
        %v3141 = vadd.f32 %v3011, %v3109
        %v3142 = vadd.f32 %v3012, %v3110
        %v3143 = vadd.f32 %v3013, %v3111
        %v3144 = vadd.f32 %v3014, %v3112
        %v3145 = vadd.f32 %v3015, %v3113
        %v3146 = vadd.f32 %v3016, %v3114
        %v3147 = vadd.f32 %v3017, %v3115
        %v3148 = vadd.f32 %v3018, %v3116
        %v3149 = vadd.f32 %v3019, %v3117
        %v3150 = vadd.f32 %v3020, %v3118
        %v3151 = vadd.f32 %v3021, %v3119
        %v3152 = vadd.f32 %v3022, %v3120
        %v3153 = vadd.f32 %v3023, %v3121
        %v3154 = vadd.f32 %v3024, %v3122
        %v3155 = vadd.f32 %v3025, %v3123
        %v3156 = vadd.f32 %v3026, %v3124
        %v3157 = vadd.f32 %v3027, %v3125
        %v3158 = vadd.f32 %v3028, %v3126
        %v3159 = vadd.f32 %v3029, %v3127
        %v3160 = vadd.f32 %v3030, %v3128
        %v3161 = vadd.f32 %v3031, %v3129
        %v3162 = vadd.f32 %v3032, %v3130
        %v3163 = vperm.slane %v662, 4
        %v3164 = vmul.f32 %v2885, %v3163
        %v3165 = vmul.f32 %v2863, %v3163
        %v3166 = vmul.f32 %v2886, %v3163
        %v3167 = vmul.f32 %v2864, %v3163
        %v3168 = vmul.f32 %v2887, %v3163
        %v3169 = vmul.f32 %v2865, %v3163
        %v3170 = vmul.f32 %v2888, %v3163
        %v3171 = vmul.f32 %v2866, %v3163
        %v3172 = vmul.f32 %v2889, %v3163
        %v3173 = vmul.f32 %v2867, %v3163
        %v3174 = vmul.f32 %v2890, %v3163
        %v3175 = vmul.f32 %v2868, %v3163
        %v3176 = vmul.f32 %v2891, %v3163
        %v3177 = vmul.f32 %v2869, %v3163
        %v3178 = vmul.f32 %v2892, %v3163
        %v3179 = vmul.f32 %v2870, %v3163
        %v3180 = vmul.f32 %v2893, %v3163
        %v3181 = vmul.f32 %v2871, %v3163
        %v3182 = vmul.f32 %v2894, %v3163
        %v3183 = vmul.f32 %v2872, %v3163
        %v3184 = vmul.f32 %v2895, %v3163
        %v3185 = vmul.f32 %v2873, %v3163
        %v3186 = vmul.f32 %v2896, %v3163
        %v3187 = vmul.f32 %v2874, %v3163
        %v3188 = vmul.f32 %v2897, %v3163
        %v3189 = vmul.f32 %v2875, %v3163
        %v3190 = vmul.f32 %v2898, %v3163
        %v3191 = vmul.f32 %v2876, %v3163
        %v3192 = vmul.f32 %v2899, %v3163
        %v3193 = vmul.f32 %v2877, %v3163
        %v3194 = vmul.f32 %v2900, %v3163
        %v3195 = vmul.f32 %v2878, %v3163
        %v3196 = vadd.f32 %v3066, %v3164
        %v3197 = vadd.f32 %v3067, %v3165
        %v3198 = vadd.f32 %v3068, %v3166
        %v3199 = vadd.f32 %v3069, %v3167
        %v3200 = vadd.f32 %v3070, %v3168
        %v3201 = vadd.f32 %v3071, %v3169
        %v3202 = vadd.f32 %v3072, %v3170
        %v3203 = vadd.f32 %v3073, %v3171
        %v3204 = vadd.f32 %v3074, %v3172
        %v3205 = vadd.f32 %v3075, %v3173
        %v3206 = vadd.f32 %v3076, %v3174
        %v3207 = vadd.f32 %v3077, %v3175
        %v3208 = vadd.f32 %v3078, %v3176
        %v3209 = vadd.f32 %v3079, %v3177
        %v3210 = vadd.f32 %v3080, %v3178
        %v3211 = vadd.f32 %v3081, %v3179
        %v3212 = vadd.f32 %v3082, %v3180
        %v3213 = vadd.f32 %v3083, %v3181
        %v3214 = vadd.f32 %v3084, %v3182
        %v3215 = vadd.f32 %v3085, %v3183
        %v3216 = vadd.f32 %v3086, %v3184
        %v3217 = vadd.f32 %v3087, %v3185
        %v3218 = vadd.f32 %v3088, %v3186
        %v3219 = vadd.f32 %v3089, %v3187
        %v3220 = vadd.f32 %v3090, %v3188
        %v3221 = vadd.f32 %v3091, %v3189
        %v3222 = vadd.f32 %v3092, %v3190
        %v3223 = vadd.f32 %v3093, %v3191
        %v3224 = vadd.f32 %v3094, %v3192
        %v3225 = vadd.f32 %v3095, %v3193
        %v3226 = vadd.f32 %v3096, %v3194
        %v3227 = vadd.f32 %v3097, %v3195
        %v3228 = vperm.slane %v663, 4
        %v3229 = vmul.f32 %v2886, %v3228
        %v3230 = vmul.f32 %v2864, %v3228
        %v3231 = vmul.f32 %v2887, %v3228
        %v3232 = vmul.f32 %v2865, %v3228
        %v3233 = vmul.f32 %v2888, %v3228
        %v3234 = vmul.f32 %v2866, %v3228
        %v3235 = vmul.f32 %v2889, %v3228
        %v3236 = vmul.f32 %v2867, %v3228
        %v3237 = vmul.f32 %v2890, %v3228
        %v3238 = vmul.f32 %v2868, %v3228
        %v3239 = vmul.f32 %v2891, %v3228
        %v3240 = vmul.f32 %v2869, %v3228
        %v3241 = vmul.f32 %v2892, %v3228
        %v3242 = vmul.f32 %v2870, %v3228
        %v3243 = vmul.f32 %v2893, %v3228
        %v3244 = vmul.f32 %v2871, %v3228
        %v3245 = vmul.f32 %v2894, %v3228
        %v3246 = vmul.f32 %v2872, %v3228
        %v3247 = vmul.f32 %v2895, %v3228
        %v3248 = vmul.f32 %v2873, %v3228
        %v3249 = vmul.f32 %v2896, %v3228
        %v3250 = vmul.f32 %v2874, %v3228
        %v3251 = vmul.f32 %v2897, %v3228
        %v3252 = vmul.f32 %v2875, %v3228
        %v3253 = vmul.f32 %v2898, %v3228
        %v3254 = vmul.f32 %v2876, %v3228
        %v3255 = vmul.f32 %v2899, %v3228
        %v3256 = vmul.f32 %v2877, %v3228
        %v3257 = vmul.f32 %v2900, %v3228
        %v3258 = vmul.f32 %v2878, %v3228
        %v3259 = vmul.f32 %v2901, %v3228
        %v3260 = vmul.f32 %v2879, %v3228
        %v3261 = vadd.f32 %v3131, %v3229
        %v3262 = vadd.f32 %v3132, %v3230
        %v3263 = vadd.f32 %v3133, %v3231
        %v3264 = vadd.f32 %v3134, %v3232
        %v3265 = vadd.f32 %v3135, %v3233
        %v3266 = vadd.f32 %v3136, %v3234
        %v3267 = vadd.f32 %v3137, %v3235
        %v3268 = vadd.f32 %v3138, %v3236
        %v3269 = vadd.f32 %v3139, %v3237
        %v3270 = vadd.f32 %v3140, %v3238
        %v3271 = vadd.f32 %v3141, %v3239
        %v3272 = vadd.f32 %v3142, %v3240
        %v3273 = vadd.f32 %v3143, %v3241
        %v3274 = vadd.f32 %v3144, %v3242
        %v3275 = vadd.f32 %v3145, %v3243
        %v3276 = vadd.f32 %v3146, %v3244
        %v3277 = vadd.f32 %v3147, %v3245
        %v3278 = vadd.f32 %v3148, %v3246
        %v3279 = vadd.f32 %v3149, %v3247
        %v3280 = vadd.f32 %v3150, %v3248
        %v3281 = vadd.f32 %v3151, %v3249
        %v3282 = vadd.f32 %v3152, %v3250
        %v3283 = vadd.f32 %v3153, %v3251
        %v3284 = vadd.f32 %v3154, %v3252
        %v3285 = vadd.f32 %v3155, %v3253
        %v3286 = vadd.f32 %v3156, %v3254
        %v3287 = vadd.f32 %v3157, %v3255
        %v3288 = vadd.f32 %v3158, %v3256
        %v3289 = vadd.f32 %v3159, %v3257
        %v3290 = vadd.f32 %v3160, %v3258
        %v3291 = vadd.f32 %v3161, %v3259
        %v3292 = vadd.f32 %v3162, %v3260
        %v3293 = vperm.slane %v664, 4
        %v3294 = vmul.f32 %v2887, %v3293
        %v3295 = vmul.f32 %v2865, %v3293
        %v3296 = vmul.f32 %v2888, %v3293
        %v3297 = vmul.f32 %v2866, %v3293
        %v3298 = vmul.f32 %v2889, %v3293
        %v3299 = vmul.f32 %v2867, %v3293
        %v3300 = vmul.f32 %v2890, %v3293
        %v3301 = vmul.f32 %v2868, %v3293
        %v3302 = vmul.f32 %v2891, %v3293
        %v3303 = vmul.f32 %v2869, %v3293
        %v3304 = vmul.f32 %v2892, %v3293
        %v3305 = vmul.f32 %v2870, %v3293
        %v3306 = vmul.f32 %v2893, %v3293
        %v3307 = vmul.f32 %v2871, %v3293
        %v3308 = vmul.f32 %v2894, %v3293
        %v3309 = vmul.f32 %v2872, %v3293
        %v3310 = vmul.f32 %v2895, %v3293
        %v3311 = vmul.f32 %v2873, %v3293
        %v3312 = vmul.f32 %v2896, %v3293
        %v3313 = vmul.f32 %v2874, %v3293
        %v3314 = vmul.f32 %v2897, %v3293
        %v3315 = vmul.f32 %v2875, %v3293
        %v3316 = vmul.f32 %v2898, %v3293
        %v3317 = vmul.f32 %v2876, %v3293
        %v3318 = vmul.f32 %v2899, %v3293
        %v3319 = vmul.f32 %v2877, %v3293
        %v3320 = vmul.f32 %v2900, %v3293
        %v3321 = vmul.f32 %v2878, %v3293
        %v3322 = vmul.f32 %v2901, %v3293
        %v3323 = vmul.f32 %v2879, %v3293
        %v3324 = vmul.f32 %v2902, %v3293
        %v3325 = vmul.f32 %v2880, %v3293
        %v3326 = vadd.f32 %v3196, %v3294
        %v3327 = vadd.f32 %v3197, %v3295
        %v3328 = vadd.f32 %v3198, %v3296
        %v3329 = vadd.f32 %v3199, %v3297
        %v3330 = vadd.f32 %v3200, %v3298
        %v3331 = vadd.f32 %v3201, %v3299
        %v3332 = vadd.f32 %v3202, %v3300
        %v3333 = vadd.f32 %v3203, %v3301
        %v3334 = vadd.f32 %v3204, %v3302
        %v3335 = vadd.f32 %v3205, %v3303
        %v3336 = vadd.f32 %v3206, %v3304
        %v3337 = vadd.f32 %v3207, %v3305
        %v3338 = vadd.f32 %v3208, %v3306
        %v3339 = vadd.f32 %v3209, %v3307
        %v3340 = vadd.f32 %v3210, %v3308
        %v3341 = vadd.f32 %v3211, %v3309
        %v3342 = vadd.f32 %v3212, %v3310
        %v3343 = vadd.f32 %v3213, %v3311
        %v3344 = vadd.f32 %v3214, %v3312
        %v3345 = vadd.f32 %v3215, %v3313
        %v3346 = vadd.f32 %v3216, %v3314
        %v3347 = vadd.f32 %v3217, %v3315
        %v3348 = vadd.f32 %v3218, %v3316
        %v3349 = vadd.f32 %v3219, %v3317
        %v3350 = vadd.f32 %v3220, %v3318
        %v3351 = vadd.f32 %v3221, %v3319
        %v3352 = vadd.f32 %v3222, %v3320
        %v3353 = vadd.f32 %v3223, %v3321
        %v3354 = vadd.f32 %v3224, %v3322
        %v3355 = vadd.f32 %v3225, %v3323
        %v3356 = vadd.f32 %v3226, %v3324
        %v3357 = vadd.f32 %v3227, %v3325
        %v3358 = vrot.slane %v571, 2
        %v3359 = vrot.slane %v575, 2
        %v3360 = vrot.slane %v579, 2
        %v3361 = vrot.slane %v583, 2
        %v3362 = vrot.slane %v587, 2
        %v3363 = vrot.slane %v591, 2
        %v3364 = vrot.slane %v595, 2
        %v3365 = vrot.slane %v599, 2
        %v3366 = vrot.slane %v603, 2
        %v3367 = vrot.slane %v607, 2
        %v3368 = vrot.slane %v611, 2
        %v3369 = vrot.slane %v615, 2
        %v3370 = vrot.slane %v619, 2
        %v3371 = vrot.slane %v623, 2
        %v3372 = vrot.slane %v627, 2
        %v3373 = vrot.slane %v631, 2
        %v3374 = vrot.slane %v635, 2
        %v3375 = vrot.slane %v639, 2
        %v3376 = vrot.slane %v643, 2
        %v3377 = vrot.slane %v647, 2
        %v3378 = vrot.slane %v651, 2
        %v3379 = vrot.slane %v655, 2
        %v3380 = vrot.slane %v572, 2
        %v3381 = vrot.slane %v576, 2
        %v3382 = vrot.slane %v580, 2
        %v3383 = vrot.slane %v584, 2
        %v3384 = vrot.slane %v588, 2
        %v3385 = vrot.slane %v592, 2
        %v3386 = vrot.slane %v596, 2
        %v3387 = vrot.slane %v600, 2
        %v3388 = vrot.slane %v604, 2
        %v3389 = vrot.slane %v608, 2
        %v3390 = vrot.slane %v612, 2
        %v3391 = vrot.slane %v616, 2
        %v3392 = vrot.slane %v620, 2
        %v3393 = vrot.slane %v624, 2
        %v3394 = vrot.slane %v628, 2
        %v3395 = vrot.slane %v632, 2
        %v3396 = vrot.slane %v636, 2
        %v3397 = vrot.slane %v640, 2
        %v3398 = vrot.slane %v644, 2
        %v3399 = vrot.slane %v648, 2
        %v3400 = vrot.slane %v652, 2
        %v3401 = vrot.slane %v656, 2
        %v3402 = vrot.slane %v573, 2
        %v3403 = vrot.slane %v577, 2
        %v3404 = vrot.slane %v581, 2
        %v3405 = vrot.slane %v585, 2
        %v3406 = vrot.slane %v589, 2
        %v3407 = vrot.slane %v593, 2
        %v3408 = vrot.slane %v597, 2
        %v3409 = vrot.slane %v601, 2
        %v3410 = vrot.slane %v605, 2
        %v3411 = vrot.slane %v609, 2
        %v3412 = vrot.slane %v613, 2
        %v3413 = vrot.slane %v617, 2
        %v3414 = vrot.slane %v621, 2
        %v3415 = vrot.slane %v625, 2
        %v3416 = vrot.slane %v629, 2
        %v3417 = vrot.slane %v633, 2
        %v3418 = vrot.slane %v637, 2
        %v3419 = vrot.slane %v641, 2
        %v3420 = vrot.slane %v645, 2
        %v3421 = vrot.slane %v649, 2
        %v3422 = vrot.slane %v653, 2
        %v3423 = vrot.slane %v657, 2
        %vm3424 = vcmp.lt.s32.totalorder %v732, 6
        %v3425 = vsel %vm3424, %v3380, %v3402
        %v3426 = vsel %vm3424, %v3381, %v3403
        %v3427 = vsel %vm3424, %v3382, %v3404
        %v3428 = vsel %vm3424, %v3383, %v3405
        %v3429 = vsel %vm3424, %v3384, %v3406
        %v3430 = vsel %vm3424, %v3385, %v3407
        %v3431 = vsel %vm3424, %v3386, %v3408
        %v3432 = vsel %vm3424, %v3387, %v3409
        %v3433 = vsel %vm3424, %v3388, %v3410
        %v3434 = vsel %vm3424, %v3389, %v3411
        %v3435 = vsel %vm3424, %v3390, %v3412
        %v3436 = vsel %vm3424, %v3391, %v3413
        %v3437 = vsel %vm3424, %v3392, %v3414
        %v3438 = vsel %vm3424, %v3393, %v3415
        %v3439 = vsel %vm3424, %v3394, %v3416
        %v3440 = vsel %vm3424, %v3395, %v3417
        %v3441 = vsel %vm3424, %v3396, %v3418
        %v3442 = vsel %vm3424, %v3397, %v3419
        %v3443 = vsel %vm3424, %v3398, %v3420
        %v3444 = vsel %vm3424, %v3399, %v3421
        %v3445 = vsel %vm3424, %v3400, %v3422
        %v3446 = vsel %vm3424, %v3401, %v3423
        %v3447 = vsel %vm3424, %v3358, %v3380
        %v3448 = vsel %vm3424, %v3359, %v3381
        %v3449 = vsel %vm3424, %v3360, %v3382
        %v3450 = vsel %vm3424, %v3361, %v3383
        %v3451 = vsel %vm3424, %v3362, %v3384
        %v3452 = vsel %vm3424, %v3363, %v3385
        %v3453 = vsel %vm3424, %v3364, %v3386
        %v3454 = vsel %vm3424, %v3365, %v3387
        %v3455 = vsel %vm3424, %v3366, %v3388
        %v3456 = vsel %vm3424, %v3367, %v3389
        %v3457 = vsel %vm3424, %v3368, %v3390
        %v3458 = vsel %vm3424, %v3369, %v3391
        %v3459 = vsel %vm3424, %v3370, %v3392
        %v3460 = vsel %vm3424, %v3371, %v3393
        %v3461 = vsel %vm3424, %v3372, %v3394
        %v3462 = vsel %vm3424, %v3373, %v3395
        %v3463 = vsel %vm3424, %v3374, %v3396
        %v3464 = vsel %vm3424, %v3375, %v3397
        %v3465 = vsel %vm3424, %v3376, %v3398
        %v3466 = vsel %vm3424, %v3377, %v3399
        %v3467 = vsel %vm3424, %v3378, %v3400
        %v3468 = vsel %vm3424, %v3379, %v3401
        %v3469 = vperm.slane %v658, 5
        %v3470 = vmul.f32 %v3447, %v3469
        %v3471 = vmul.f32 %v3425, %v3469
        %v3472 = vmul.f32 %v3448, %v3469
        %v3473 = vmul.f32 %v3426, %v3469
        %v3474 = vmul.f32 %v3449, %v3469
        %v3475 = vmul.f32 %v3427, %v3469
        %v3476 = vmul.f32 %v3450, %v3469
        %v3477 = vmul.f32 %v3428, %v3469
        %v3478 = vmul.f32 %v3451, %v3469
        %v3479 = vmul.f32 %v3429, %v3469
        %v3480 = vmul.f32 %v3452, %v3469
        %v3481 = vmul.f32 %v3430, %v3469
        %v3482 = vmul.f32 %v3453, %v3469
        %v3483 = vmul.f32 %v3431, %v3469
        %v3484 = vmul.f32 %v3454, %v3469
        %v3485 = vmul.f32 %v3432, %v3469
        %v3486 = vmul.f32 %v3455, %v3469
        %v3487 = vmul.f32 %v3433, %v3469
        %v3488 = vmul.f32 %v3456, %v3469
        %v3489 = vmul.f32 %v3434, %v3469
        %v3490 = vmul.f32 %v3457, %v3469
        %v3491 = vmul.f32 %v3435, %v3469
        %v3492 = vmul.f32 %v3458, %v3469
        %v3493 = vmul.f32 %v3436, %v3469
        %v3494 = vmul.f32 %v3459, %v3469
        %v3495 = vmul.f32 %v3437, %v3469
        %v3496 = vmul.f32 %v3460, %v3469
        %v3497 = vmul.f32 %v3438, %v3469
        %v3498 = vmul.f32 %v3461, %v3469
        %v3499 = vmul.f32 %v3439, %v3469
        %v3500 = vmul.f32 %v3462, %v3469
        %v3501 = vmul.f32 %v3440, %v3469
        %v3502 = vadd.f32 %v3261, %v3470
        %v3503 = vadd.f32 %v3262, %v3471
        %v3504 = vadd.f32 %v3263, %v3472
        %v3505 = vadd.f32 %v3264, %v3473
        %v3506 = vadd.f32 %v3265, %v3474
        %v3507 = vadd.f32 %v3266, %v3475
        %v3508 = vadd.f32 %v3267, %v3476
        %v3509 = vadd.f32 %v3268, %v3477
        %v3510 = vadd.f32 %v3269, %v3478
        %v3511 = vadd.f32 %v3270, %v3479
        %v3512 = vadd.f32 %v3271, %v3480
        %v3513 = vadd.f32 %v3272, %v3481
        %v3514 = vadd.f32 %v3273, %v3482
        %v3515 = vadd.f32 %v3274, %v3483
        %v3516 = vadd.f32 %v3275, %v3484
        %v3517 = vadd.f32 %v3276, %v3485
        %v3518 = vadd.f32 %v3277, %v3486
        %v3519 = vadd.f32 %v3278, %v3487
        %v3520 = vadd.f32 %v3279, %v3488
        %v3521 = vadd.f32 %v3280, %v3489
        %v3522 = vadd.f32 %v3281, %v3490
        %v3523 = vadd.f32 %v3282, %v3491
        %v3524 = vadd.f32 %v3283, %v3492
        %v3525 = vadd.f32 %v3284, %v3493
        %v3526 = vadd.f32 %v3285, %v3494
        %v3527 = vadd.f32 %v3286, %v3495
        %v3528 = vadd.f32 %v3287, %v3496
        %v3529 = vadd.f32 %v3288, %v3497
        %v3530 = vadd.f32 %v3289, %v3498
        %v3531 = vadd.f32 %v3290, %v3499
        %v3532 = vadd.f32 %v3291, %v3500
        %v3533 = vadd.f32 %v3292, %v3501
        %v3534 = vperm.slane %v659, 5
        %v3535 = vmul.f32 %v3448, %v3534
        %v3536 = vmul.f32 %v3426, %v3534
        %v3537 = vmul.f32 %v3449, %v3534
        %v3538 = vmul.f32 %v3427, %v3534
        %v3539 = vmul.f32 %v3450, %v3534
        %v3540 = vmul.f32 %v3428, %v3534
        %v3541 = vmul.f32 %v3451, %v3534
        %v3542 = vmul.f32 %v3429, %v3534
        %v3543 = vmul.f32 %v3452, %v3534
        %v3544 = vmul.f32 %v3430, %v3534
        %v3545 = vmul.f32 %v3453, %v3534
        %v3546 = vmul.f32 %v3431, %v3534
        %v3547 = vmul.f32 %v3454, %v3534
        %v3548 = vmul.f32 %v3432, %v3534
        %v3549 = vmul.f32 %v3455, %v3534
        %v3550 = vmul.f32 %v3433, %v3534
        %v3551 = vmul.f32 %v3456, %v3534
        %v3552 = vmul.f32 %v3434, %v3534
        %v3553 = vmul.f32 %v3457, %v3534
        %v3554 = vmul.f32 %v3435, %v3534
        %v3555 = vmul.f32 %v3458, %v3534
        %v3556 = vmul.f32 %v3436, %v3534
        %v3557 = vmul.f32 %v3459, %v3534
        %v3558 = vmul.f32 %v3437, %v3534
        %v3559 = vmul.f32 %v3460, %v3534
        %v3560 = vmul.f32 %v3438, %v3534
        %v3561 = vmul.f32 %v3461, %v3534
        %v3562 = vmul.f32 %v3439, %v3534
        %v3563 = vmul.f32 %v3462, %v3534
        %v3564 = vmul.f32 %v3440, %v3534
        %v3565 = vmul.f32 %v3463, %v3534
        %v3566 = vmul.f32 %v3441, %v3534
        %v3567 = vadd.f32 %v3326, %v3535
        %v3568 = vadd.f32 %v3327, %v3536
        %v3569 = vadd.f32 %v3328, %v3537
        %v3570 = vadd.f32 %v3329, %v3538
        %v3571 = vadd.f32 %v3330, %v3539
        %v3572 = vadd.f32 %v3331, %v3540
        %v3573 = vadd.f32 %v3332, %v3541
        %v3574 = vadd.f32 %v3333, %v3542
        %v3575 = vadd.f32 %v3334, %v3543
        %v3576 = vadd.f32 %v3335, %v3544
        %v3577 = vadd.f32 %v3336, %v3545
        %v3578 = vadd.f32 %v3337, %v3546
        %v3579 = vadd.f32 %v3338, %v3547
        %v3580 = vadd.f32 %v3339, %v3548
        %v3581 = vadd.f32 %v3340, %v3549
        %v3582 = vadd.f32 %v3341, %v3550
        %v3583 = vadd.f32 %v3342, %v3551
        %v3584 = vadd.f32 %v3343, %v3552
        %v3585 = vadd.f32 %v3344, %v3553
        %v3586 = vadd.f32 %v3345, %v3554
        %v3587 = vadd.f32 %v3346, %v3555
        %v3588 = vadd.f32 %v3347, %v3556
        %v3589 = vadd.f32 %v3348, %v3557
        %v3590 = vadd.f32 %v3349, %v3558
        %v3591 = vadd.f32 %v3350, %v3559
        %v3592 = vadd.f32 %v3351, %v3560
        %v3593 = vadd.f32 %v3352, %v3561
        %v3594 = vadd.f32 %v3353, %v3562
        %v3595 = vadd.f32 %v3354, %v3563
        %v3596 = vadd.f32 %v3355, %v3564
        %v3597 = vadd.f32 %v3356, %v3565
        %v3598 = vadd.f32 %v3357, %v3566
        %v3599 = vperm.slane %v660, 5
        %v3600 = vmul.f32 %v3449, %v3599
        %v3601 = vmul.f32 %v3427, %v3599
        %v3602 = vmul.f32 %v3450, %v3599
        %v3603 = vmul.f32 %v3428, %v3599
        %v3604 = vmul.f32 %v3451, %v3599
        %v3605 = vmul.f32 %v3429, %v3599
        %v3606 = vmul.f32 %v3452, %v3599
        %v3607 = vmul.f32 %v3430, %v3599
        %v3608 = vmul.f32 %v3453, %v3599
        %v3609 = vmul.f32 %v3431, %v3599
        %v3610 = vmul.f32 %v3454, %v3599
        %v3611 = vmul.f32 %v3432, %v3599
        %v3612 = vmul.f32 %v3455, %v3599
        %v3613 = vmul.f32 %v3433, %v3599
        %v3614 = vmul.f32 %v3456, %v3599
        %v3615 = vmul.f32 %v3434, %v3599
        %v3616 = vmul.f32 %v3457, %v3599
        %v3617 = vmul.f32 %v3435, %v3599
        %v3618 = vmul.f32 %v3458, %v3599
        %v3619 = vmul.f32 %v3436, %v3599
        %v3620 = vmul.f32 %v3459, %v3599
        %v3621 = vmul.f32 %v3437, %v3599
        %v3622 = vmul.f32 %v3460, %v3599
        %v3623 = vmul.f32 %v3438, %v3599
        %v3624 = vmul.f32 %v3461, %v3599
        %v3625 = vmul.f32 %v3439, %v3599
        %v3626 = vmul.f32 %v3462, %v3599
        %v3627 = vmul.f32 %v3440, %v3599
        %v3628 = vmul.f32 %v3463, %v3599
        %v3629 = vmul.f32 %v3441, %v3599
        %v3630 = vmul.f32 %v3464, %v3599
        %v3631 = vmul.f32 %v3442, %v3599
        %v3632 = vadd.f32 %v3502, %v3600
        %v3633 = vadd.f32 %v3503, %v3601
        %v3634 = vadd.f32 %v3504, %v3602
        %v3635 = vadd.f32 %v3505, %v3603
        %v3636 = vadd.f32 %v3506, %v3604
        %v3637 = vadd.f32 %v3507, %v3605
        %v3638 = vadd.f32 %v3508, %v3606
        %v3639 = vadd.f32 %v3509, %v3607
        %v3640 = vadd.f32 %v3510, %v3608
        %v3641 = vadd.f32 %v3511, %v3609
        %v3642 = vadd.f32 %v3512, %v3610
        %v3643 = vadd.f32 %v3513, %v3611
        %v3644 = vadd.f32 %v3514, %v3612
        %v3645 = vadd.f32 %v3515, %v3613
        %v3646 = vadd.f32 %v3516, %v3614
        %v3647 = vadd.f32 %v3517, %v3615
        %v3648 = vadd.f32 %v3518, %v3616
        %v3649 = vadd.f32 %v3519, %v3617
        %v3650 = vadd.f32 %v3520, %v3618
        %v3651 = vadd.f32 %v3521, %v3619
        %v3652 = vadd.f32 %v3522, %v3620
        %v3653 = vadd.f32 %v3523, %v3621
        %v3654 = vadd.f32 %v3524, %v3622
        %v3655 = vadd.f32 %v3525, %v3623
        %v3656 = vadd.f32 %v3526, %v3624
        %v3657 = vadd.f32 %v3527, %v3625
        %v3658 = vadd.f32 %v3528, %v3626
        %v3659 = vadd.f32 %v3529, %v3627
        %v3660 = vadd.f32 %v3530, %v3628
        %v3661 = vadd.f32 %v3531, %v3629
        %v3662 = vadd.f32 %v3532, %v3630
        %v3663 = vadd.f32 %v3533, %v3631
        %v3664 = vperm.slane %v661, 5
        %v3665 = vmul.f32 %v3450, %v3664
        %v3666 = vmul.f32 %v3428, %v3664
        %v3667 = vmul.f32 %v3451, %v3664
        %v3668 = vmul.f32 %v3429, %v3664
        %v3669 = vmul.f32 %v3452, %v3664
        %v3670 = vmul.f32 %v3430, %v3664
        %v3671 = vmul.f32 %v3453, %v3664
        %v3672 = vmul.f32 %v3431, %v3664
        %v3673 = vmul.f32 %v3454, %v3664
        %v3674 = vmul.f32 %v3432, %v3664
        %v3675 = vmul.f32 %v3455, %v3664
        %v3676 = vmul.f32 %v3433, %v3664
        %v3677 = vmul.f32 %v3456, %v3664
        %v3678 = vmul.f32 %v3434, %v3664
        %v3679 = vmul.f32 %v3457, %v3664
        %v3680 = vmul.f32 %v3435, %v3664
        %v3681 = vmul.f32 %v3458, %v3664
        %v3682 = vmul.f32 %v3436, %v3664
        %v3683 = vmul.f32 %v3459, %v3664
        %v3684 = vmul.f32 %v3437, %v3664
        %v3685 = vmul.f32 %v3460, %v3664
        %v3686 = vmul.f32 %v3438, %v3664
        %v3687 = vmul.f32 %v3461, %v3664
        %v3688 = vmul.f32 %v3439, %v3664
        %v3689 = vmul.f32 %v3462, %v3664
        %v3690 = vmul.f32 %v3440, %v3664
        %v3691 = vmul.f32 %v3463, %v3664
        %v3692 = vmul.f32 %v3441, %v3664
        %v3693 = vmul.f32 %v3464, %v3664
        %v3694 = vmul.f32 %v3442, %v3664
        %v3695 = vmul.f32 %v3465, %v3664
        %v3696 = vmul.f32 %v3443, %v3664
        %v3697 = vadd.f32 %v3567, %v3665
        %v3698 = vadd.f32 %v3568, %v3666
        %v3699 = vadd.f32 %v3569, %v3667
        %v3700 = vadd.f32 %v3570, %v3668
        %v3701 = vadd.f32 %v3571, %v3669
        %v3702 = vadd.f32 %v3572, %v3670
        %v3703 = vadd.f32 %v3573, %v3671
        %v3704 = vadd.f32 %v3574, %v3672
        %v3705 = vadd.f32 %v3575, %v3673
        %v3706 = vadd.f32 %v3576, %v3674
        %v3707 = vadd.f32 %v3577, %v3675
        %v3708 = vadd.f32 %v3578, %v3676
        %v3709 = vadd.f32 %v3579, %v3677
        %v3710 = vadd.f32 %v3580, %v3678
        %v3711 = vadd.f32 %v3581, %v3679
        %v3712 = vadd.f32 %v3582, %v3680
        %v3713 = vadd.f32 %v3583, %v3681
        %v3714 = vadd.f32 %v3584, %v3682
        %v3715 = vadd.f32 %v3585, %v3683
        %v3716 = vadd.f32 %v3586, %v3684
        %v3717 = vadd.f32 %v3587, %v3685
        %v3718 = vadd.f32 %v3588, %v3686
        %v3719 = vadd.f32 %v3589, %v3687
        %v3720 = vadd.f32 %v3590, %v3688
        %v3721 = vadd.f32 %v3591, %v3689
        %v3722 = vadd.f32 %v3592, %v3690
        %v3723 = vadd.f32 %v3593, %v3691
        %v3724 = vadd.f32 %v3594, %v3692
        %v3725 = vadd.f32 %v3595, %v3693
        %v3726 = vadd.f32 %v3596, %v3694
        %v3727 = vadd.f32 %v3597, %v3695
        %v3728 = vadd.f32 %v3598, %v3696
        %v3729 = vperm.slane %v662, 5
        %v3730 = vmul.f32 %v3451, %v3729
        %v3731 = vmul.f32 %v3429, %v3729
        %v3732 = vmul.f32 %v3452, %v3729
        %v3733 = vmul.f32 %v3430, %v3729
        %v3734 = vmul.f32 %v3453, %v3729
        %v3735 = vmul.f32 %v3431, %v3729
        %v3736 = vmul.f32 %v3454, %v3729
        %v3737 = vmul.f32 %v3432, %v3729
        %v3738 = vmul.f32 %v3455, %v3729
        %v3739 = vmul.f32 %v3433, %v3729
        %v3740 = vmul.f32 %v3456, %v3729
        %v3741 = vmul.f32 %v3434, %v3729
        %v3742 = vmul.f32 %v3457, %v3729
        %v3743 = vmul.f32 %v3435, %v3729
        %v3744 = vmul.f32 %v3458, %v3729
        %v3745 = vmul.f32 %v3436, %v3729
        %v3746 = vmul.f32 %v3459, %v3729
        %v3747 = vmul.f32 %v3437, %v3729
        %v3748 = vmul.f32 %v3460, %v3729
        %v3749 = vmul.f32 %v3438, %v3729
        %v3750 = vmul.f32 %v3461, %v3729
        %v3751 = vmul.f32 %v3439, %v3729
        %v3752 = vmul.f32 %v3462, %v3729
        %v3753 = vmul.f32 %v3440, %v3729
        %v3754 = vmul.f32 %v3463, %v3729
        %v3755 = vmul.f32 %v3441, %v3729
        %v3756 = vmul.f32 %v3464, %v3729
        %v3757 = vmul.f32 %v3442, %v3729
        %v3758 = vmul.f32 %v3465, %v3729
        %v3759 = vmul.f32 %v3443, %v3729
        %v3760 = vmul.f32 %v3466, %v3729
        %v3761 = vmul.f32 %v3444, %v3729
        %v3762 = vadd.f32 %v3632, %v3730
        %v3763 = vadd.f32 %v3633, %v3731
        %v3764 = vadd.f32 %v3634, %v3732
        %v3765 = vadd.f32 %v3635, %v3733
        %v3766 = vadd.f32 %v3636, %v3734
        %v3767 = vadd.f32 %v3637, %v3735
        %v3768 = vadd.f32 %v3638, %v3736
        %v3769 = vadd.f32 %v3639, %v3737
        %v3770 = vadd.f32 %v3640, %v3738
        %v3771 = vadd.f32 %v3641, %v3739
        %v3772 = vadd.f32 %v3642, %v3740
        %v3773 = vadd.f32 %v3643, %v3741
        %v3774 = vadd.f32 %v3644, %v3742
        %v3775 = vadd.f32 %v3645, %v3743
        %v3776 = vadd.f32 %v3646, %v3744
        %v3777 = vadd.f32 %v3647, %v3745
        %v3778 = vadd.f32 %v3648, %v3746
        %v3779 = vadd.f32 %v3649, %v3747
        %v3780 = vadd.f32 %v3650, %v3748
        %v3781 = vadd.f32 %v3651, %v3749
        %v3782 = vadd.f32 %v3652, %v3750
        %v3783 = vadd.f32 %v3653, %v3751
        %v3784 = vadd.f32 %v3654, %v3752
        %v3785 = vadd.f32 %v3655, %v3753
        %v3786 = vadd.f32 %v3656, %v3754
        %v3787 = vadd.f32 %v3657, %v3755
        %v3788 = vadd.f32 %v3658, %v3756
        %v3789 = vadd.f32 %v3659, %v3757
        %v3790 = vadd.f32 %v3660, %v3758
        %v3791 = vadd.f32 %v3661, %v3759
        %v3792 = vadd.f32 %v3662, %v3760
        %v3793 = vadd.f32 %v3663, %v3761
        %v3794 = vperm.slane %v663, 5
        %v3795 = vmul.f32 %v3452, %v3794
        %v3796 = vmul.f32 %v3430, %v3794
        %v3797 = vmul.f32 %v3453, %v3794
        %v3798 = vmul.f32 %v3431, %v3794
        %v3799 = vmul.f32 %v3454, %v3794
        %v3800 = vmul.f32 %v3432, %v3794
        %v3801 = vmul.f32 %v3455, %v3794
        %v3802 = vmul.f32 %v3433, %v3794
        %v3803 = vmul.f32 %v3456, %v3794
        %v3804 = vmul.f32 %v3434, %v3794
        %v3805 = vmul.f32 %v3457, %v3794
        %v3806 = vmul.f32 %v3435, %v3794
        %v3807 = vmul.f32 %v3458, %v3794
        %v3808 = vmul.f32 %v3436, %v3794
        %v3809 = vmul.f32 %v3459, %v3794
        %v3810 = vmul.f32 %v3437, %v3794
        %v3811 = vmul.f32 %v3460, %v3794
        %v3812 = vmul.f32 %v3438, %v3794
        %v3813 = vmul.f32 %v3461, %v3794
        %v3814 = vmul.f32 %v3439, %v3794
        %v3815 = vmul.f32 %v3462, %v3794
        %v3816 = vmul.f32 %v3440, %v3794
        %v3817 = vmul.f32 %v3463, %v3794
        %v3818 = vmul.f32 %v3441, %v3794
        %v3819 = vmul.f32 %v3464, %v3794
        %v3820 = vmul.f32 %v3442, %v3794
        %v3821 = vmul.f32 %v3465, %v3794
        %v3822 = vmul.f32 %v3443, %v3794
        %v3823 = vmul.f32 %v3466, %v3794
        %v3824 = vmul.f32 %v3444, %v3794
        %v3825 = vmul.f32 %v3467, %v3794
        %v3826 = vmul.f32 %v3445, %v3794
        %v3827 = vadd.f32 %v3697, %v3795
        %v3828 = vadd.f32 %v3698, %v3796
        %v3829 = vadd.f32 %v3699, %v3797
        %v3830 = vadd.f32 %v3700, %v3798
        %v3831 = vadd.f32 %v3701, %v3799
        %v3832 = vadd.f32 %v3702, %v3800
        %v3833 = vadd.f32 %v3703, %v3801
        %v3834 = vadd.f32 %v3704, %v3802
        %v3835 = vadd.f32 %v3705, %v3803
        %v3836 = vadd.f32 %v3706, %v3804
        %v3837 = vadd.f32 %v3707, %v3805
        %v3838 = vadd.f32 %v3708, %v3806
        %v3839 = vadd.f32 %v3709, %v3807
        %v3840 = vadd.f32 %v3710, %v3808
        %v3841 = vadd.f32 %v3711, %v3809
        %v3842 = vadd.f32 %v3712, %v3810
        %v3843 = vadd.f32 %v3713, %v3811
        %v3844 = vadd.f32 %v3714, %v3812
        %v3845 = vadd.f32 %v3715, %v3813
        %v3846 = vadd.f32 %v3716, %v3814
        %v3847 = vadd.f32 %v3717, %v3815
        %v3848 = vadd.f32 %v3718, %v3816
        %v3849 = vadd.f32 %v3719, %v3817
        %v3850 = vadd.f32 %v3720, %v3818
        %v3851 = vadd.f32 %v3721, %v3819
        %v3852 = vadd.f32 %v3722, %v3820
        %v3853 = vadd.f32 %v3723, %v3821
        %v3854 = vadd.f32 %v3724, %v3822
        %v3855 = vadd.f32 %v3725, %v3823
        %v3856 = vadd.f32 %v3726, %v3824
        %v3857 = vadd.f32 %v3727, %v3825
        %v3858 = vadd.f32 %v3728, %v3826
        %v3859 = vperm.slane %v664, 5
        %v3860 = vmul.f32 %v3453, %v3859
        %v3861 = vmul.f32 %v3431, %v3859
        %v3862 = vmul.f32 %v3454, %v3859
        %v3863 = vmul.f32 %v3432, %v3859
        %v3864 = vmul.f32 %v3455, %v3859
        %v3865 = vmul.f32 %v3433, %v3859
        %v3866 = vmul.f32 %v3456, %v3859
        %v3867 = vmul.f32 %v3434, %v3859
        %v3868 = vmul.f32 %v3457, %v3859
        %v3869 = vmul.f32 %v3435, %v3859
        %v3870 = vmul.f32 %v3458, %v3859
        %v3871 = vmul.f32 %v3436, %v3859
        %v3872 = vmul.f32 %v3459, %v3859
        %v3873 = vmul.f32 %v3437, %v3859
        %v3874 = vmul.f32 %v3460, %v3859
        %v3875 = vmul.f32 %v3438, %v3859
        %v3876 = vmul.f32 %v3461, %v3859
        %v3877 = vmul.f32 %v3439, %v3859
        %v3878 = vmul.f32 %v3462, %v3859
        %v3879 = vmul.f32 %v3440, %v3859
        %v3880 = vmul.f32 %v3463, %v3859
        %v3881 = vmul.f32 %v3441, %v3859
        %v3882 = vmul.f32 %v3464, %v3859
        %v3883 = vmul.f32 %v3442, %v3859
        %v3884 = vmul.f32 %v3465, %v3859
        %v3885 = vmul.f32 %v3443, %v3859
        %v3886 = vmul.f32 %v3466, %v3859
        %v3887 = vmul.f32 %v3444, %v3859
        %v3888 = vmul.f32 %v3467, %v3859
        %v3889 = vmul.f32 %v3445, %v3859
        %v3890 = vmul.f32 %v3468, %v3859
        %v3891 = vmul.f32 %v3446, %v3859
        %v3892 = vadd.f32 %v3762, %v3860
        %v3893 = vadd.f32 %v3763, %v3861
        %v3894 = vadd.f32 %v3764, %v3862
        %v3895 = vadd.f32 %v3765, %v3863
        %v3896 = vadd.f32 %v3766, %v3864
        %v3897 = vadd.f32 %v3767, %v3865
        %v3898 = vadd.f32 %v3768, %v3866
        %v3899 = vadd.f32 %v3769, %v3867
        %v3900 = vadd.f32 %v3770, %v3868
        %v3901 = vadd.f32 %v3771, %v3869
        %v3902 = vadd.f32 %v3772, %v3870
        %v3903 = vadd.f32 %v3773, %v3871
        %v3904 = vadd.f32 %v3774, %v3872
        %v3905 = vadd.f32 %v3775, %v3873
        %v3906 = vadd.f32 %v3776, %v3874
        %v3907 = vadd.f32 %v3777, %v3875
        %v3908 = vadd.f32 %v3778, %v3876
        %v3909 = vadd.f32 %v3779, %v3877
        %v3910 = vadd.f32 %v3780, %v3878
        %v3911 = vadd.f32 %v3781, %v3879
        %v3912 = vadd.f32 %v3782, %v3880
        %v3913 = vadd.f32 %v3783, %v3881
        %v3914 = vadd.f32 %v3784, %v3882
        %v3915 = vadd.f32 %v3785, %v3883
        %v3916 = vadd.f32 %v3786, %v3884
        %v3917 = vadd.f32 %v3787, %v3885
        %v3918 = vadd.f32 %v3788, %v3886
        %v3919 = vadd.f32 %v3789, %v3887
        %v3920 = vadd.f32 %v3790, %v3888
        %v3921 = vadd.f32 %v3791, %v3889
        %v3922 = vadd.f32 %v3792, %v3890
        %v3923 = vadd.f32 %v3793, %v3891
        %v3924 = vrot.slane %v571, 3
        %v3925 = vrot.slane %v575, 3
        %v3926 = vrot.slane %v579, 3
        %v3927 = vrot.slane %v583, 3
        %v3928 = vrot.slane %v587, 3
        %v3929 = vrot.slane %v591, 3
        %v3930 = vrot.slane %v595, 3
        %v3931 = vrot.slane %v599, 3
        %v3932 = vrot.slane %v603, 3
        %v3933 = vrot.slane %v607, 3
        %v3934 = vrot.slane %v611, 3
        %v3935 = vrot.slane %v615, 3
        %v3936 = vrot.slane %v619, 3
        %v3937 = vrot.slane %v623, 3
        %v3938 = vrot.slane %v627, 3
        %v3939 = vrot.slane %v631, 3
        %v3940 = vrot.slane %v635, 3
        %v3941 = vrot.slane %v639, 3
        %v3942 = vrot.slane %v643, 3
        %v3943 = vrot.slane %v647, 3
        %v3944 = vrot.slane %v651, 3
        %v3945 = vrot.slane %v655, 3
        %v3946 = vrot.slane %v572, 3
        %v3947 = vrot.slane %v576, 3
        %v3948 = vrot.slane %v580, 3
        %v3949 = vrot.slane %v584, 3
        %v3950 = vrot.slane %v588, 3
        %v3951 = vrot.slane %v592, 3
        %v3952 = vrot.slane %v596, 3
        %v3953 = vrot.slane %v600, 3
        %v3954 = vrot.slane %v604, 3
        %v3955 = vrot.slane %v608, 3
        %v3956 = vrot.slane %v612, 3
        %v3957 = vrot.slane %v616, 3
        %v3958 = vrot.slane %v620, 3
        %v3959 = vrot.slane %v624, 3
        %v3960 = vrot.slane %v628, 3
        %v3961 = vrot.slane %v632, 3
        %v3962 = vrot.slane %v636, 3
        %v3963 = vrot.slane %v640, 3
        %v3964 = vrot.slane %v644, 3
        %v3965 = vrot.slane %v648, 3
        %v3966 = vrot.slane %v652, 3
        %v3967 = vrot.slane %v656, 3
        %v3968 = vrot.slane %v573, 3
        %v3969 = vrot.slane %v577, 3
        %v3970 = vrot.slane %v581, 3
        %v3971 = vrot.slane %v585, 3
        %v3972 = vrot.slane %v589, 3
        %v3973 = vrot.slane %v593, 3
        %v3974 = vrot.slane %v597, 3
        %v3975 = vrot.slane %v601, 3
        %v3976 = vrot.slane %v605, 3
        %v3977 = vrot.slane %v609, 3
        %v3978 = vrot.slane %v613, 3
        %v3979 = vrot.slane %v617, 3
        %v3980 = vrot.slane %v621, 3
        %v3981 = vrot.slane %v625, 3
        %v3982 = vrot.slane %v629, 3
        %v3983 = vrot.slane %v633, 3
        %v3984 = vrot.slane %v637, 3
        %v3985 = vrot.slane %v641, 3
        %v3986 = vrot.slane %v645, 3
        %v3987 = vrot.slane %v649, 3
        %v3988 = vrot.slane %v653, 3
        %v3989 = vrot.slane %v657, 3
        %vm3990 = vcmp.lt.s32.totalorder %v732, 5
        %v3991 = vsel %vm3990, %v3946, %v3968
        %v3992 = vsel %vm3990, %v3947, %v3969
        %v3993 = vsel %vm3990, %v3948, %v3970
        %v3994 = vsel %vm3990, %v3949, %v3971
        %v3995 = vsel %vm3990, %v3950, %v3972
        %v3996 = vsel %vm3990, %v3951, %v3973
        %v3997 = vsel %vm3990, %v3952, %v3974
        %v3998 = vsel %vm3990, %v3953, %v3975
        %v3999 = vsel %vm3990, %v3954, %v3976
        %v4000 = vsel %vm3990, %v3955, %v3977
        %v4001 = vsel %vm3990, %v3956, %v3978
        %v4002 = vsel %vm3990, %v3957, %v3979
        %v4003 = vsel %vm3990, %v3958, %v3980
        %v4004 = vsel %vm3990, %v3959, %v3981
        %v4005 = vsel %vm3990, %v3960, %v3982
        %v4006 = vsel %vm3990, %v3961, %v3983
        %v4007 = vsel %vm3990, %v3962, %v3984
        %v4008 = vsel %vm3990, %v3963, %v3985
        %v4009 = vsel %vm3990, %v3964, %v3986
        %v4010 = vsel %vm3990, %v3965, %v3987
        %v4011 = vsel %vm3990, %v3966, %v3988
        %v4012 = vsel %vm3990, %v3967, %v3989
        %v4013 = vsel %vm3990, %v3924, %v3946
        %v4014 = vsel %vm3990, %v3925, %v3947
        %v4015 = vsel %vm3990, %v3926, %v3948
        %v4016 = vsel %vm3990, %v3927, %v3949
        %v4017 = vsel %vm3990, %v3928, %v3950
        %v4018 = vsel %vm3990, %v3929, %v3951
        %v4019 = vsel %vm3990, %v3930, %v3952
        %v4020 = vsel %vm3990, %v3931, %v3953
        %v4021 = vsel %vm3990, %v3932, %v3954
        %v4022 = vsel %vm3990, %v3933, %v3955
        %v4023 = vsel %vm3990, %v3934, %v3956
        %v4024 = vsel %vm3990, %v3935, %v3957
        %v4025 = vsel %vm3990, %v3936, %v3958
        %v4026 = vsel %vm3990, %v3937, %v3959
        %v4027 = vsel %vm3990, %v3938, %v3960
        %v4028 = vsel %vm3990, %v3939, %v3961
        %v4029 = vsel %vm3990, %v3940, %v3962
        %v4030 = vsel %vm3990, %v3941, %v3963
        %v4031 = vsel %vm3990, %v3942, %v3964
        %v4032 = vsel %vm3990, %v3943, %v3965
        %v4033 = vsel %vm3990, %v3944, %v3966
        %v4034 = vsel %vm3990, %v3945, %v3967
        %v4035 = vperm.slane %v658, 6
        %v4036 = vmul.f32 %v4013, %v4035
        %v4037 = vmul.f32 %v3991, %v4035
        %v4038 = vmul.f32 %v4014, %v4035
        %v4039 = vmul.f32 %v3992, %v4035
        %v4040 = vmul.f32 %v4015, %v4035
        %v4041 = vmul.f32 %v3993, %v4035
        %v4042 = vmul.f32 %v4016, %v4035
        %v4043 = vmul.f32 %v3994, %v4035
        %v4044 = vmul.f32 %v4017, %v4035
        %v4045 = vmul.f32 %v3995, %v4035
        %v4046 = vmul.f32 %v4018, %v4035
        %v4047 = vmul.f32 %v3996, %v4035
        %v4048 = vmul.f32 %v4019, %v4035
        %v4049 = vmul.f32 %v3997, %v4035
        %v4050 = vmul.f32 %v4020, %v4035
        %v4051 = vmul.f32 %v3998, %v4035
        %v4052 = vmul.f32 %v4021, %v4035
        %v4053 = vmul.f32 %v3999, %v4035
        %v4054 = vmul.f32 %v4022, %v4035
        %v4055 = vmul.f32 %v4000, %v4035
        %v4056 = vmul.f32 %v4023, %v4035
        %v4057 = vmul.f32 %v4001, %v4035
        %v4058 = vmul.f32 %v4024, %v4035
        %v4059 = vmul.f32 %v4002, %v4035
        %v4060 = vmul.f32 %v4025, %v4035
        %v4061 = vmul.f32 %v4003, %v4035
        %v4062 = vmul.f32 %v4026, %v4035
        %v4063 = vmul.f32 %v4004, %v4035
        %v4064 = vmul.f32 %v4027, %v4035
        %v4065 = vmul.f32 %v4005, %v4035
        %v4066 = vmul.f32 %v4028, %v4035
        %v4067 = vmul.f32 %v4006, %v4035
        %v4068 = vadd.f32 %v3827, %v4036
        %v4069 = vadd.f32 %v3828, %v4037
        %v4070 = vadd.f32 %v3829, %v4038
        %v4071 = vadd.f32 %v3830, %v4039
        %v4072 = vadd.f32 %v3831, %v4040
        %v4073 = vadd.f32 %v3832, %v4041
        %v4074 = vadd.f32 %v3833, %v4042
        %v4075 = vadd.f32 %v3834, %v4043
        %v4076 = vadd.f32 %v3835, %v4044
        %v4077 = vadd.f32 %v3836, %v4045
        %v4078 = vadd.f32 %v3837, %v4046
        %v4079 = vadd.f32 %v3838, %v4047
        %v4080 = vadd.f32 %v3839, %v4048
        %v4081 = vadd.f32 %v3840, %v4049
        %v4082 = vadd.f32 %v3841, %v4050
        %v4083 = vadd.f32 %v3842, %v4051
        %v4084 = vadd.f32 %v3843, %v4052
        %v4085 = vadd.f32 %v3844, %v4053
        %v4086 = vadd.f32 %v3845, %v4054
        %v4087 = vadd.f32 %v3846, %v4055
        %v4088 = vadd.f32 %v3847, %v4056
        %v4089 = vadd.f32 %v3848, %v4057
        %v4090 = vadd.f32 %v3849, %v4058
        %v4091 = vadd.f32 %v3850, %v4059
        %v4092 = vadd.f32 %v3851, %v4060
        %v4093 = vadd.f32 %v3852, %v4061
        %v4094 = vadd.f32 %v3853, %v4062
        %v4095 = vadd.f32 %v3854, %v4063
        %v4096 = vadd.f32 %v3855, %v4064
        %v4097 = vadd.f32 %v3856, %v4065
        %v4098 = vadd.f32 %v3857, %v4066
        %v4099 = vadd.f32 %v3858, %v4067
        %v4100 = vperm.slane %v659, 6
        %v4101 = vmul.f32 %v4014, %v4100
        %v4102 = vmul.f32 %v3992, %v4100
        %v4103 = vmul.f32 %v4015, %v4100
        %v4104 = vmul.f32 %v3993, %v4100
        %v4105 = vmul.f32 %v4016, %v4100
        %v4106 = vmul.f32 %v3994, %v4100
        %v4107 = vmul.f32 %v4017, %v4100
        %v4108 = vmul.f32 %v3995, %v4100
        %v4109 = vmul.f32 %v4018, %v4100
        %v4110 = vmul.f32 %v3996, %v4100
        %v4111 = vmul.f32 %v4019, %v4100
        %v4112 = vmul.f32 %v3997, %v4100
        %v4113 = vmul.f32 %v4020, %v4100
        %v4114 = vmul.f32 %v3998, %v4100
        %v4115 = vmul.f32 %v4021, %v4100
        %v4116 = vmul.f32 %v3999, %v4100
        %v4117 = vmul.f32 %v4022, %v4100
        %v4118 = vmul.f32 %v4000, %v4100
        %v4119 = vmul.f32 %v4023, %v4100
        %v4120 = vmul.f32 %v4001, %v4100
        %v4121 = vmul.f32 %v4024, %v4100
        %v4122 = vmul.f32 %v4002, %v4100
        %v4123 = vmul.f32 %v4025, %v4100
        %v4124 = vmul.f32 %v4003, %v4100
        %v4125 = vmul.f32 %v4026, %v4100
        %v4126 = vmul.f32 %v4004, %v4100
        %v4127 = vmul.f32 %v4027, %v4100
        %v4128 = vmul.f32 %v4005, %v4100
        %v4129 = vmul.f32 %v4028, %v4100
        %v4130 = vmul.f32 %v4006, %v4100
        %v4131 = vmul.f32 %v4029, %v4100
        %v4132 = vmul.f32 %v4007, %v4100
        %v4133 = vadd.f32 %v3892, %v4101
        %v4134 = vadd.f32 %v3893, %v4102
        %v4135 = vadd.f32 %v3894, %v4103
        %v4136 = vadd.f32 %v3895, %v4104
        %v4137 = vadd.f32 %v3896, %v4105
        %v4138 = vadd.f32 %v3897, %v4106
        %v4139 = vadd.f32 %v3898, %v4107
        %v4140 = vadd.f32 %v3899, %v4108
        %v4141 = vadd.f32 %v3900, %v4109
        %v4142 = vadd.f32 %v3901, %v4110
        %v4143 = vadd.f32 %v3902, %v4111
        %v4144 = vadd.f32 %v3903, %v4112
        %v4145 = vadd.f32 %v3904, %v4113
        %v4146 = vadd.f32 %v3905, %v4114
        %v4147 = vadd.f32 %v3906, %v4115
        %v4148 = vadd.f32 %v3907, %v4116
        %v4149 = vadd.f32 %v3908, %v4117
        %v4150 = vadd.f32 %v3909, %v4118
        %v4151 = vadd.f32 %v3910, %v4119
        %v4152 = vadd.f32 %v3911, %v4120
        %v4153 = vadd.f32 %v3912, %v4121
        %v4154 = vadd.f32 %v3913, %v4122
        %v4155 = vadd.f32 %v3914, %v4123
        %v4156 = vadd.f32 %v3915, %v4124
        %v4157 = vadd.f32 %v3916, %v4125
        %v4158 = vadd.f32 %v3917, %v4126
        %v4159 = vadd.f32 %v3918, %v4127
        %v4160 = vadd.f32 %v3919, %v4128
        %v4161 = vadd.f32 %v3920, %v4129
        %v4162 = vadd.f32 %v3921, %v4130
        %v4163 = vadd.f32 %v3922, %v4131
        %v4164 = vadd.f32 %v3923, %v4132
        %v4165 = vperm.slane %v660, 6
        %v4166 = vmul.f32 %v4015, %v4165
        %v4167 = vmul.f32 %v3993, %v4165
        %v4168 = vmul.f32 %v4016, %v4165
        %v4169 = vmul.f32 %v3994, %v4165
        %v4170 = vmul.f32 %v4017, %v4165
        %v4171 = vmul.f32 %v3995, %v4165
        %v4172 = vmul.f32 %v4018, %v4165
        %v4173 = vmul.f32 %v3996, %v4165
        %v4174 = vmul.f32 %v4019, %v4165
        %v4175 = vmul.f32 %v3997, %v4165
        %v4176 = vmul.f32 %v4020, %v4165
        %v4177 = vmul.f32 %v3998, %v4165
        %v4178 = vmul.f32 %v4021, %v4165
        %v4179 = vmul.f32 %v3999, %v4165
        %v4180 = vmul.f32 %v4022, %v4165
        %v4181 = vmul.f32 %v4000, %v4165
        %v4182 = vmul.f32 %v4023, %v4165
        %v4183 = vmul.f32 %v4001, %v4165
        %v4184 = vmul.f32 %v4024, %v4165
        %v4185 = vmul.f32 %v4002, %v4165
        %v4186 = vmul.f32 %v4025, %v4165
        %v4187 = vmul.f32 %v4003, %v4165
        %v4188 = vmul.f32 %v4026, %v4165
        %v4189 = vmul.f32 %v4004, %v4165
        %v4190 = vmul.f32 %v4027, %v4165
        %v4191 = vmul.f32 %v4005, %v4165
        %v4192 = vmul.f32 %v4028, %v4165
        %v4193 = vmul.f32 %v4006, %v4165
        %v4194 = vmul.f32 %v4029, %v4165
        %v4195 = vmul.f32 %v4007, %v4165
        %v4196 = vmul.f32 %v4030, %v4165
        %v4197 = vmul.f32 %v4008, %v4165
        %v4198 = vadd.f32 %v4068, %v4166
        %v4199 = vadd.f32 %v4069, %v4167
        %v4200 = vadd.f32 %v4070, %v4168
        %v4201 = vadd.f32 %v4071, %v4169
        %v4202 = vadd.f32 %v4072, %v4170
        %v4203 = vadd.f32 %v4073, %v4171
        %v4204 = vadd.f32 %v4074, %v4172
        %v4205 = vadd.f32 %v4075, %v4173
        %v4206 = vadd.f32 %v4076, %v4174
        %v4207 = vadd.f32 %v4077, %v4175
        %v4208 = vadd.f32 %v4078, %v4176
        %v4209 = vadd.f32 %v4079, %v4177
        %v4210 = vadd.f32 %v4080, %v4178
        %v4211 = vadd.f32 %v4081, %v4179
        %v4212 = vadd.f32 %v4082, %v4180
        %v4213 = vadd.f32 %v4083, %v4181
        %v4214 = vadd.f32 %v4084, %v4182
        %v4215 = vadd.f32 %v4085, %v4183
        %v4216 = vadd.f32 %v4086, %v4184
        %v4217 = vadd.f32 %v4087, %v4185
        %v4218 = vadd.f32 %v4088, %v4186
        %v4219 = vadd.f32 %v4089, %v4187
        %v4220 = vadd.f32 %v4090, %v4188
        %v4221 = vadd.f32 %v4091, %v4189
        %v4222 = vadd.f32 %v4092, %v4190
        %v4223 = vadd.f32 %v4093, %v4191
        %v4224 = vadd.f32 %v4094, %v4192
        %v4225 = vadd.f32 %v4095, %v4193
        %v4226 = vadd.f32 %v4096, %v4194
        %v4227 = vadd.f32 %v4097, %v4195
        %v4228 = vadd.f32 %v4098, %v4196
        %v4229 = vadd.f32 %v4099, %v4197
        %v4230 = vperm.slane %v661, 6
        %v4231 = vmul.f32 %v4016, %v4230
        %v4232 = vmul.f32 %v3994, %v4230
        %v4233 = vmul.f32 %v4017, %v4230
        %v4234 = vmul.f32 %v3995, %v4230
        %v4235 = vmul.f32 %v4018, %v4230
        %v4236 = vmul.f32 %v3996, %v4230
        %v4237 = vmul.f32 %v4019, %v4230
        %v4238 = vmul.f32 %v3997, %v4230
        %v4239 = vmul.f32 %v4020, %v4230
        %v4240 = vmul.f32 %v3998, %v4230
        %v4241 = vmul.f32 %v4021, %v4230
        %v4242 = vmul.f32 %v3999, %v4230
        %v4243 = vmul.f32 %v4022, %v4230
        %v4244 = vmul.f32 %v4000, %v4230
        %v4245 = vmul.f32 %v4023, %v4230
        %v4246 = vmul.f32 %v4001, %v4230
        %v4247 = vmul.f32 %v4024, %v4230
        %v4248 = vmul.f32 %v4002, %v4230
        %v4249 = vmul.f32 %v4025, %v4230
        %v4250 = vmul.f32 %v4003, %v4230
        %v4251 = vmul.f32 %v4026, %v4230
        %v4252 = vmul.f32 %v4004, %v4230
        %v4253 = vmul.f32 %v4027, %v4230
        %v4254 = vmul.f32 %v4005, %v4230
        %v4255 = vmul.f32 %v4028, %v4230
        %v4256 = vmul.f32 %v4006, %v4230
        %v4257 = vmul.f32 %v4029, %v4230
        %v4258 = vmul.f32 %v4007, %v4230
        %v4259 = vmul.f32 %v4030, %v4230
        %v4260 = vmul.f32 %v4008, %v4230
        %v4261 = vmul.f32 %v4031, %v4230
        %v4262 = vmul.f32 %v4009, %v4230
        %v4263 = vadd.f32 %v4133, %v4231
        %v4264 = vadd.f32 %v4134, %v4232
        %v4265 = vadd.f32 %v4135, %v4233
        %v4266 = vadd.f32 %v4136, %v4234
        %v4267 = vadd.f32 %v4137, %v4235
        %v4268 = vadd.f32 %v4138, %v4236
        %v4269 = vadd.f32 %v4139, %v4237
        %v4270 = vadd.f32 %v4140, %v4238
        %v4271 = vadd.f32 %v4141, %v4239
        %v4272 = vadd.f32 %v4142, %v4240
        %v4273 = vadd.f32 %v4143, %v4241
        %v4274 = vadd.f32 %v4144, %v4242
        %v4275 = vadd.f32 %v4145, %v4243
        %v4276 = vadd.f32 %v4146, %v4244
        %v4277 = vadd.f32 %v4147, %v4245
        %v4278 = vadd.f32 %v4148, %v4246
        %v4279 = vadd.f32 %v4149, %v4247
        %v4280 = vadd.f32 %v4150, %v4248
        %v4281 = vadd.f32 %v4151, %v4249
        %v4282 = vadd.f32 %v4152, %v4250
        %v4283 = vadd.f32 %v4153, %v4251
        %v4284 = vadd.f32 %v4154, %v4252
        %v4285 = vadd.f32 %v4155, %v4253
        %v4286 = vadd.f32 %v4156, %v4254
        %v4287 = vadd.f32 %v4157, %v4255
        %v4288 = vadd.f32 %v4158, %v4256
        %v4289 = vadd.f32 %v4159, %v4257
        %v4290 = vadd.f32 %v4160, %v4258
        %v4291 = vadd.f32 %v4161, %v4259
        %v4292 = vadd.f32 %v4162, %v4260
        %v4293 = vadd.f32 %v4163, %v4261
        %v4294 = vadd.f32 %v4164, %v4262
        %v4295 = vperm.slane %v662, 6
        %v4296 = vmul.f32 %v4017, %v4295
        %v4297 = vmul.f32 %v3995, %v4295
        %v4298 = vmul.f32 %v4018, %v4295
        %v4299 = vmul.f32 %v3996, %v4295
        %v4300 = vmul.f32 %v4019, %v4295
        %v4301 = vmul.f32 %v3997, %v4295
        %v4302 = vmul.f32 %v4020, %v4295
        %v4303 = vmul.f32 %v3998, %v4295
        %v4304 = vmul.f32 %v4021, %v4295
        %v4305 = vmul.f32 %v3999, %v4295
        %v4306 = vmul.f32 %v4022, %v4295
        %v4307 = vmul.f32 %v4000, %v4295
        %v4308 = vmul.f32 %v4023, %v4295
        %v4309 = vmul.f32 %v4001, %v4295
        %v4310 = vmul.f32 %v4024, %v4295
        %v4311 = vmul.f32 %v4002, %v4295
        %v4312 = vmul.f32 %v4025, %v4295
        %v4313 = vmul.f32 %v4003, %v4295
        %v4314 = vmul.f32 %v4026, %v4295
        %v4315 = vmul.f32 %v4004, %v4295
        %v4316 = vmul.f32 %v4027, %v4295
        %v4317 = vmul.f32 %v4005, %v4295
        %v4318 = vmul.f32 %v4028, %v4295
        %v4319 = vmul.f32 %v4006, %v4295
        %v4320 = vmul.f32 %v4029, %v4295
        %v4321 = vmul.f32 %v4007, %v4295
        %v4322 = vmul.f32 %v4030, %v4295
        %v4323 = vmul.f32 %v4008, %v4295
        %v4324 = vmul.f32 %v4031, %v4295
        %v4325 = vmul.f32 %v4009, %v4295
        %v4326 = vmul.f32 %v4032, %v4295
        %v4327 = vmul.f32 %v4010, %v4295
        %v4328 = vadd.f32 %v4198, %v4296
        %v4329 = vadd.f32 %v4199, %v4297
        %v4330 = vadd.f32 %v4200, %v4298
        %v4331 = vadd.f32 %v4201, %v4299
        %v4332 = vadd.f32 %v4202, %v4300
        %v4333 = vadd.f32 %v4203, %v4301
        %v4334 = vadd.f32 %v4204, %v4302
        %v4335 = vadd.f32 %v4205, %v4303
        %v4336 = vadd.f32 %v4206, %v4304
        %v4337 = vadd.f32 %v4207, %v4305
        %v4338 = vadd.f32 %v4208, %v4306
        %v4339 = vadd.f32 %v4209, %v4307
        %v4340 = vadd.f32 %v4210, %v4308
        %v4341 = vadd.f32 %v4211, %v4309
        %v4342 = vadd.f32 %v4212, %v4310
        %v4343 = vadd.f32 %v4213, %v4311
        %v4344 = vadd.f32 %v4214, %v4312
        %v4345 = vadd.f32 %v4215, %v4313
        %v4346 = vadd.f32 %v4216, %v4314
        %v4347 = vadd.f32 %v4217, %v4315
        %v4348 = vadd.f32 %v4218, %v4316
        %v4349 = vadd.f32 %v4219, %v4317
        %v4350 = vadd.f32 %v4220, %v4318
        %v4351 = vadd.f32 %v4221, %v4319
        %v4352 = vadd.f32 %v4222, %v4320
        %v4353 = vadd.f32 %v4223, %v4321
        %v4354 = vadd.f32 %v4224, %v4322
        %v4355 = vadd.f32 %v4225, %v4323
        %v4356 = vadd.f32 %v4226, %v4324
        %v4357 = vadd.f32 %v4227, %v4325
        %v4358 = vadd.f32 %v4228, %v4326
        %v4359 = vadd.f32 %v4229, %v4327
        %v4360 = vperm.slane %v663, 6
        %v4361 = vmul.f32 %v4018, %v4360
        %v4362 = vmul.f32 %v3996, %v4360
        %v4363 = vmul.f32 %v4019, %v4360
        %v4364 = vmul.f32 %v3997, %v4360
        %v4365 = vmul.f32 %v4020, %v4360
        %v4366 = vmul.f32 %v3998, %v4360
        %v4367 = vmul.f32 %v4021, %v4360
        %v4368 = vmul.f32 %v3999, %v4360
        %v4369 = vmul.f32 %v4022, %v4360
        %v4370 = vmul.f32 %v4000, %v4360
        %v4371 = vmul.f32 %v4023, %v4360
        %v4372 = vmul.f32 %v4001, %v4360
        %v4373 = vmul.f32 %v4024, %v4360
        %v4374 = vmul.f32 %v4002, %v4360
        %v4375 = vmul.f32 %v4025, %v4360
        %v4376 = vmul.f32 %v4003, %v4360
        %v4377 = vmul.f32 %v4026, %v4360
        %v4378 = vmul.f32 %v4004, %v4360
        %v4379 = vmul.f32 %v4027, %v4360
        %v4380 = vmul.f32 %v4005, %v4360
        %v4381 = vmul.f32 %v4028, %v4360
        %v4382 = vmul.f32 %v4006, %v4360
        %v4383 = vmul.f32 %v4029, %v4360
        %v4384 = vmul.f32 %v4007, %v4360
        %v4385 = vmul.f32 %v4030, %v4360
        %v4386 = vmul.f32 %v4008, %v4360
        %v4387 = vmul.f32 %v4031, %v4360
        %v4388 = vmul.f32 %v4009, %v4360
        %v4389 = vmul.f32 %v4032, %v4360
        %v4390 = vmul.f32 %v4010, %v4360
        %v4391 = vmul.f32 %v4033, %v4360
        %v4392 = vmul.f32 %v4011, %v4360
        %v4393 = vadd.f32 %v4263, %v4361
        %v4394 = vadd.f32 %v4264, %v4362
        %v4395 = vadd.f32 %v4265, %v4363
        %v4396 = vadd.f32 %v4266, %v4364
        %v4397 = vadd.f32 %v4267, %v4365
        %v4398 = vadd.f32 %v4268, %v4366
        %v4399 = vadd.f32 %v4269, %v4367
        %v4400 = vadd.f32 %v4270, %v4368
        %v4401 = vadd.f32 %v4271, %v4369
        %v4402 = vadd.f32 %v4272, %v4370
        %v4403 = vadd.f32 %v4273, %v4371
        %v4404 = vadd.f32 %v4274, %v4372
        %v4405 = vadd.f32 %v4275, %v4373
        %v4406 = vadd.f32 %v4276, %v4374
        %v4407 = vadd.f32 %v4277, %v4375
        %v4408 = vadd.f32 %v4278, %v4376
        %v4409 = vadd.f32 %v4279, %v4377
        %v4410 = vadd.f32 %v4280, %v4378
        %v4411 = vadd.f32 %v4281, %v4379
        %v4412 = vadd.f32 %v4282, %v4380
        %v4413 = vadd.f32 %v4283, %v4381
        %v4414 = vadd.f32 %v4284, %v4382
        %v4415 = vadd.f32 %v4285, %v4383
        %v4416 = vadd.f32 %v4286, %v4384
        %v4417 = vadd.f32 %v4287, %v4385
        %v4418 = vadd.f32 %v4288, %v4386
        %v4419 = vadd.f32 %v4289, %v4387
        %v4420 = vadd.f32 %v4290, %v4388
        %v4421 = vadd.f32 %v4291, %v4389
        %v4422 = vadd.f32 %v4292, %v4390
        %v4423 = vadd.f32 %v4293, %v4391
        %v4424 = vadd.f32 %v4294, %v4392
        %v4425 = vperm.slane %v664, 6
        %v4426 = vmul.f32 %v4019, %v4425
        %v4427 = vmul.f32 %v3997, %v4425
        %v4428 = vmul.f32 %v4020, %v4425
        %v4429 = vmul.f32 %v3998, %v4425
        %v4430 = vmul.f32 %v4021, %v4425
        %v4431 = vmul.f32 %v3999, %v4425
        %v4432 = vmul.f32 %v4022, %v4425
        %v4433 = vmul.f32 %v4000, %v4425
        %v4434 = vmul.f32 %v4023, %v4425
        %v4435 = vmul.f32 %v4001, %v4425
        %v4436 = vmul.f32 %v4024, %v4425
        %v4437 = vmul.f32 %v4002, %v4425
        %v4438 = vmul.f32 %v4025, %v4425
        %v4439 = vmul.f32 %v4003, %v4425
        %v4440 = vmul.f32 %v4026, %v4425
        %v4441 = vmul.f32 %v4004, %v4425
        %v4442 = vmul.f32 %v4027, %v4425
        %v4443 = vmul.f32 %v4005, %v4425
        %v4444 = vmul.f32 %v4028, %v4425
        %v4445 = vmul.f32 %v4006, %v4425
        %v4446 = vmul.f32 %v4029, %v4425
        %v4447 = vmul.f32 %v4007, %v4425
        %v4448 = vmul.f32 %v4030, %v4425
        %v4449 = vmul.f32 %v4008, %v4425
        %v4450 = vmul.f32 %v4031, %v4425
        %v4451 = vmul.f32 %v4009, %v4425
        %v4452 = vmul.f32 %v4032, %v4425
        %v4453 = vmul.f32 %v4010, %v4425
        %v4454 = vmul.f32 %v4033, %v4425
        %v4455 = vmul.f32 %v4011, %v4425
        %v4456 = vmul.f32 %v4034, %v4425
        %v4457 = vmul.f32 %v4012, %v4425
        %v4458 = vadd.f32 %v4328, %v4426
        %v4459 = vadd.f32 %v4329, %v4427
        %v4460 = vadd.f32 %v4330, %v4428
        %v4461 = vadd.f32 %v4331, %v4429
        %v4462 = vadd.f32 %v4332, %v4430
        %v4463 = vadd.f32 %v4333, %v4431
        %v4464 = vadd.f32 %v4334, %v4432
        %v4465 = vadd.f32 %v4335, %v4433
        %v4466 = vadd.f32 %v4336, %v4434
        %v4467 = vadd.f32 %v4337, %v4435
        %v4468 = vadd.f32 %v4338, %v4436
        %v4469 = vadd.f32 %v4339, %v4437
        %v4470 = vadd.f32 %v4340, %v4438
        %v4471 = vadd.f32 %v4341, %v4439
        %v4472 = vadd.f32 %v4342, %v4440
        %v4473 = vadd.f32 %v4343, %v4441
        %v4474 = vadd.f32 %v4344, %v4442
        %v4475 = vadd.f32 %v4345, %v4443
        %v4476 = vadd.f32 %v4346, %v4444
        %v4477 = vadd.f32 %v4347, %v4445
        %v4478 = vadd.f32 %v4348, %v4446
        %v4479 = vadd.f32 %v4349, %v4447
        %v4480 = vadd.f32 %v4350, %v4448
        %v4481 = vadd.f32 %v4351, %v4449
        %v4482 = vadd.f32 %v4352, %v4450
        %v4483 = vadd.f32 %v4353, %v4451
        %v4484 = vadd.f32 %v4354, %v4452
        %v4485 = vadd.f32 %v4355, %v4453
        %v4486 = vadd.f32 %v4356, %v4454
        %v4487 = vadd.f32 %v4357, %v4455
        %v4488 = vadd.f32 %v4358, %v4456
        %v4489 = vadd.f32 %v4359, %v4457
        %v4490 = vadd.f32 %v4458, %v4393
        %v4491 = vadd.f32 %v4459, %v4394
        %v4492 = vadd.f32 %v4460, %v4395
        %v4493 = vadd.f32 %v4461, %v4396
        %v4494 = vadd.f32 %v4462, %v4397
        %v4495 = vadd.f32 %v4463, %v4398
        %v4496 = vadd.f32 %v4464, %v4399
        %v4497 = vadd.f32 %v4465, %v4400
        %v4498 = vadd.f32 %v4466, %v4401
        %v4499 = vadd.f32 %v4467, %v4402
        %v4500 = vadd.f32 %v4468, %v4403
        %v4501 = vadd.f32 %v4469, %v4404
        %v4502 = vadd.f32 %v4470, %v4405
        %v4503 = vadd.f32 %v4471, %v4406
        %v4504 = vadd.f32 %v4472, %v4407
        %v4505 = vadd.f32 %v4473, %v4408
        %v4506 = vadd.f32 %v4474, %v4409
        %v4507 = vadd.f32 %v4475, %v4410
        %v4508 = vadd.f32 %v4476, %v4411
        %v4509 = vadd.f32 %v4477, %v4412
        %v4510 = vadd.f32 %v4478, %v4413
        %v4511 = vadd.f32 %v4479, %v4414
        %v4512 = vadd.f32 %v4480, %v4415
        %v4513 = vadd.f32 %v4481, %v4416
        %v4514 = vadd.f32 %v4482, %v4417
        %v4515 = vadd.f32 %v4483, %v4418
        %v4516 = vadd.f32 %v4484, %v4419
        %v4517 = vadd.f32 %v4485, %v4420
        %v4518 = vadd.f32 %v4486, %v4421
        %v4519 = vadd.f32 %v4487, %v4422
        %v4520 = vadd.f32 %v4488, %v4423
        %v4521 = vadd.f32 %v4489, %v4424
        %4522 = vadd.xlane.f32.xlu0 %v4490
        %v4523 = vpop.xlane.xlu0 %4522
        %4524 = vadd.xlane.f32.xlu0 %v4491
        %v4525 = vpop.xlane.xlu0 %4524
        %4526 = vadd.xlane.f32.xlu0 %v4492
        %v4527 = vpop.xlane.xlu0 %4526
        %4528 = vadd.xlane.f32.xlu0 %v4493
        %v4529 = vpop.xlane.xlu0 %4528
        %4530 = vadd.xlane.f32.xlu0 %v4494
        %v4531 = vpop.xlane.xlu0 %4530
        %4532 = vadd.xlane.f32.xlu0 %v4495
        %v4533 = vpop.xlane.xlu0 %4532
        %4534 = vadd.xlane.f32.xlu0 %v4496
        %v4535 = vpop.xlane.xlu0 %4534
        %4536 = vadd.xlane.f32.xlu0 %v4497
        %v4537 = vpop.xlane.xlu0 %4536
        %4538 = vadd.xlane.f32.xlu0 %v4498
        %v4539 = vpop.xlane.xlu0 %4538
        %4540 = vadd.xlane.f32.xlu0 %v4499
        %v4541 = vpop.xlane.xlu0 %4540
        %4542 = vadd.xlane.f32.xlu0 %v4500
        %v4543 = vpop.xlane.xlu0 %4542
        %4544 = vadd.xlane.f32.xlu0 %v4501
        %v4545 = vpop.xlane.xlu0 %4544
        %4546 = vadd.xlane.f32.xlu0 %v4502
        %v4547 = vpop.xlane.xlu0 %4546
        %4548 = vadd.xlane.f32.xlu0 %v4503
        %v4549 = vpop.xlane.xlu0 %4548
        %4550 = vadd.xlane.f32.xlu0 %v4504
        %v4551 = vpop.xlane.xlu0 %4550
        %4552 = vadd.xlane.f32.xlu0 %v4505
        %v4553 = vpop.xlane.xlu0 %4552
        %4554 = vadd.xlane.f32.xlu0 %v4506
        %v4555 = vpop.xlane.xlu0 %4554
        %4556 = vadd.xlane.f32.xlu0 %v4507
        %v4557 = vpop.xlane.xlu0 %4556
        %4558 = vadd.xlane.f32.xlu0 %v4508
        %v4559 = vpop.xlane.xlu0 %4558
        %4560 = vadd.xlane.f32.xlu0 %v4509
        %v4561 = vpop.xlane.xlu0 %4560
        %4562 = vadd.xlane.f32.xlu0 %v4510
        %v4563 = vpop.xlane.xlu0 %4562
        %4564 = vadd.xlane.f32.xlu0 %v4511
        %v4565 = vpop.xlane.xlu0 %4564
        %4566 = vadd.xlane.f32.xlu0 %v4512
        %v4567 = vpop.xlane.xlu0 %4566
        %4568 = vadd.xlane.f32.xlu0 %v4513
        %v4569 = vpop.xlane.xlu0 %4568
        %4570 = vadd.xlane.f32.xlu0 %v4514
        %v4571 = vpop.xlane.xlu0 %4570
        %4572 = vadd.xlane.f32.xlu0 %v4515
        %v4573 = vpop.xlane.xlu0 %4572
        %4574 = vadd.xlane.f32.xlu0 %v4516
        %v4575 = vpop.xlane.xlu0 %4574
        %4576 = vadd.xlane.f32.xlu0 %v4517
        %v4577 = vpop.xlane.xlu0 %4576
        %4578 = vadd.xlane.f32.xlu0 %v4518
        %v4579 = vpop.xlane.xlu0 %4578
        %4580 = vadd.xlane.f32.xlu0 %v4519
        %v4581 = vpop.xlane.xlu0 %4580
        %4582 = vadd.xlane.f32.xlu0 %v4520
        %v4583 = vpop.xlane.xlu0 %4582
        %4584 = vadd.xlane.f32.xlu0 %v4521
        %v4585 = vpop.xlane.xlu0 %4584
        %v4586 = vmul.f32 %v4523, 0.125
        %v4587 = vmul.f32 %v4525, 0.125
        %v4588 = vmul.f32 %v4527, 0.125
        %v4589 = vmul.f32 %v4529, 0.125
        %v4590 = vmul.f32 %v4531, 0.125
        %v4591 = vmul.f32 %v4533, 0.125
        %v4592 = vmul.f32 %v4535, 0.125
        %v4593 = vmul.f32 %v4537, 0.125
        %v4594 = vmul.f32 %v4539, 0.125
        %v4595 = vmul.f32 %v4541, 0.125
        %v4596 = vmul.f32 %v4543, 0.125
        %v4597 = vmul.f32 %v4545, 0.125
        %v4598 = vmul.f32 %v4547, 0.125
        %v4599 = vmul.f32 %v4549, 0.125
        %v4600 = vmul.f32 %v4551, 0.125
        %v4601 = vmul.f32 %v4553, 0.125
        %v4602 = vmul.f32 %v4555, 0.125
        %v4603 = vmul.f32 %v4557, 0.125
        %v4604 = vmul.f32 %v4559, 0.125
        %v4605 = vmul.f32 %v4561, 0.125
        %v4606 = vmul.f32 %v4563, 0.125
        %v4607 = vmul.f32 %v4565, 0.125
        %v4608 = vmul.f32 %v4567, 0.125
        %v4609 = vmul.f32 %v4569, 0.125
        %v4610 = vmul.f32 %v4571, 0.125
        %v4611 = vmul.f32 %v4573, 0.125
        %v4612 = vmul.f32 %v4575, 0.125
        %v4613 = vmul.f32 %v4577, 0.125
        %v4614 = vmul.f32 %v4579, 0.125
        %v4615 = vmul.f32 %v4581, 0.125
        %v4616 = vmul.f32 %v4583, 0.125
        %v4617 = vmul.f32 %v4585, 0.125
        %v4618 = vsub.f32 %v4490, %v4586
        %v4619 = vsub.f32 %v4491, %v4587
        %v4620 = vsub.f32 %v4492, %v4588
        %v4621 = vsub.f32 %v4493, %v4589
        %v4622 = vsub.f32 %v4494, %v4590
        %v4623 = vsub.f32 %v4495, %v4591
        %v4624 = vsub.f32 %v4496, %v4592
        %v4625 = vsub.f32 %v4497, %v4593
        %v4626 = vsub.f32 %v4498, %v4594
        %v4627 = vsub.f32 %v4499, %v4595
        %v4628 = vsub.f32 %v4500, %v4596
        %v4629 = vsub.f32 %v4501, %v4597
        %v4630 = vsub.f32 %v4502, %v4598
        %v4631 = vsub.f32 %v4503, %v4599
        %v4632 = vsub.f32 %v4504, %v4600
        %v4633 = vsub.f32 %v4505, %v4601
        %v4634 = vsub.f32 %v4506, %v4602
        %v4635 = vsub.f32 %v4507, %v4603
        %v4636 = vsub.f32 %v4508, %v4604
        %v4637 = vsub.f32 %v4509, %v4605
        %v4638 = vsub.f32 %v4510, %v4606
        %v4639 = vsub.f32 %v4511, %v4607
        %v4640 = vsub.f32 %v4512, %v4608
        %v4641 = vsub.f32 %v4513, %v4609
        %v4642 = vsub.f32 %v4514, %v4610
        %v4643 = vsub.f32 %v4515, %v4611
        %v4644 = vsub.f32 %v4516, %v4612
        %v4645 = vsub.f32 %v4517, %v4613
        %v4646 = vsub.f32 %v4518, %v4614
        %v4647 = vsub.f32 %v4519, %v4615
        %v4648 = vsub.f32 %v4520, %v4616
        %v4649 = vsub.f32 %v4521, %v4617
        %v4650 = vmul.f32 %v4618, %v4618
        %v4651 = vmul.f32 %v4619, %v4619
        %v4652 = vmul.f32 %v4620, %v4620
        %v4653 = vmul.f32 %v4621, %v4621
        %v4654 = vmul.f32 %v4622, %v4622
        %v4655 = vmul.f32 %v4623, %v4623
        %v4656 = vmul.f32 %v4624, %v4624
        %v4657 = vmul.f32 %v4625, %v4625
        %v4658 = vmul.f32 %v4626, %v4626
        %v4659 = vmul.f32 %v4627, %v4627
        %v4660 = vmul.f32 %v4628, %v4628
        %v4661 = vmul.f32 %v4629, %v4629
        %v4662 = vmul.f32 %v4630, %v4630
        %v4663 = vmul.f32 %v4631, %v4631
        %v4664 = vmul.f32 %v4632, %v4632
        %v4665 = vmul.f32 %v4633, %v4633
        %v4666 = vmul.f32 %v4634, %v4634
        %v4667 = vmul.f32 %v4635, %v4635
        %v4668 = vmul.f32 %v4636, %v4636
        %v4669 = vmul.f32 %v4637, %v4637
        %v4670 = vmul.f32 %v4638, %v4638
        %v4671 = vmul.f32 %v4639, %v4639
        %v4672 = vmul.f32 %v4640, %v4640
        %v4673 = vmul.f32 %v4641, %v4641
        %v4674 = vmul.f32 %v4642, %v4642
        %v4675 = vmul.f32 %v4643, %v4643
        %v4676 = vmul.f32 %v4644, %v4644
        %v4677 = vmul.f32 %v4645, %v4645
        %v4678 = vmul.f32 %v4646, %v4646
        %v4679 = vmul.f32 %v4647, %v4647
        %v4680 = vmul.f32 %v4648, %v4648
        %v4681 = vmul.f32 %v4649, %v4649
        %4682 = vadd.xlane.f32.xlu0 %v4650
        %v4683 = vpop.xlane.xlu0 %4682
        %4684 = vadd.xlane.f32.xlu0 %v4651
        %v4685 = vpop.xlane.xlu0 %4684
        %4686 = vadd.xlane.f32.xlu0 %v4652
        %v4687 = vpop.xlane.xlu0 %4686
        %4688 = vadd.xlane.f32.xlu0 %v4653
        %v4689 = vpop.xlane.xlu0 %4688
        %4690 = vadd.xlane.f32.xlu0 %v4654
        %v4691 = vpop.xlane.xlu0 %4690
        %4692 = vadd.xlane.f32.xlu0 %v4655
        %v4693 = vpop.xlane.xlu0 %4692
        %4694 = vadd.xlane.f32.xlu0 %v4656
        %v4695 = vpop.xlane.xlu0 %4694
        %4696 = vadd.xlane.f32.xlu0 %v4657
        %v4697 = vpop.xlane.xlu0 %4696
        %4698 = vadd.xlane.f32.xlu0 %v4658
        %v4699 = vpop.xlane.xlu0 %4698
        %4700 = vadd.xlane.f32.xlu0 %v4659
        %v4701 = vpop.xlane.xlu0 %4700
        %4702 = vadd.xlane.f32.xlu0 %v4660
        %v4703 = vpop.xlane.xlu0 %4702
        %4704 = vadd.xlane.f32.xlu0 %v4661
        %v4705 = vpop.xlane.xlu0 %4704
        %4706 = vadd.xlane.f32.xlu0 %v4662
        %v4707 = vpop.xlane.xlu0 %4706
        %4708 = vadd.xlane.f32.xlu0 %v4663
        %v4709 = vpop.xlane.xlu0 %4708
        %4710 = vadd.xlane.f32.xlu0 %v4664
        %v4711 = vpop.xlane.xlu0 %4710
        %4712 = vadd.xlane.f32.xlu0 %v4665
        %v4713 = vpop.xlane.xlu0 %4712
        %4714 = vadd.xlane.f32.xlu0 %v4666
        %v4715 = vpop.xlane.xlu0 %4714
        %4716 = vadd.xlane.f32.xlu0 %v4667
        %v4717 = vpop.xlane.xlu0 %4716
        %4718 = vadd.xlane.f32.xlu0 %v4668
        %v4719 = vpop.xlane.xlu0 %4718
        %4720 = vadd.xlane.f32.xlu0 %v4669
        %v4721 = vpop.xlane.xlu0 %4720
        %4722 = vadd.xlane.f32.xlu0 %v4670
        %v4723 = vpop.xlane.xlu0 %4722
        %4724 = vadd.xlane.f32.xlu0 %v4671
        %v4725 = vpop.xlane.xlu0 %4724
        %4726 = vadd.xlane.f32.xlu0 %v4672
        %v4727 = vpop.xlane.xlu0 %4726
        %4728 = vadd.xlane.f32.xlu0 %v4673
        %v4729 = vpop.xlane.xlu0 %4728
        %4730 = vadd.xlane.f32.xlu0 %v4674
        %v4731 = vpop.xlane.xlu0 %4730
        %4732 = vadd.xlane.f32.xlu0 %v4675
        %v4733 = vpop.xlane.xlu0 %4732
        %4734 = vadd.xlane.f32.xlu0 %v4676
        %v4735 = vpop.xlane.xlu0 %4734
        %4736 = vadd.xlane.f32.xlu0 %v4677
        %v4737 = vpop.xlane.xlu0 %4736
        %4738 = vadd.xlane.f32.xlu0 %v4678
        %v4739 = vpop.xlane.xlu0 %4738
        %4740 = vadd.xlane.f32.xlu0 %v4679
        %v4741 = vpop.xlane.xlu0 %4740
        %4742 = vadd.xlane.f32.xlu0 %v4680
        %v4743 = vpop.xlane.xlu0 %4742
        %4744 = vadd.xlane.f32.xlu0 %v4681
        %v4745 = vpop.xlane.xlu0 %4744
        %v4746 = vmul.f32 %v4586, %v4586
        %v4747 = vmul.f32 %v4587, %v4587
        %v4748 = vmul.f32 %v4588, %v4588
        %v4749 = vmul.f32 %v4589, %v4589
        %v4750 = vmul.f32 %v4590, %v4590
        %v4751 = vmul.f32 %v4591, %v4591
        %v4752 = vmul.f32 %v4592, %v4592
        %v4753 = vmul.f32 %v4593, %v4593
        %v4754 = vmul.f32 %v4594, %v4594
        %v4755 = vmul.f32 %v4595, %v4595
        %v4756 = vmul.f32 %v4596, %v4596
        %v4757 = vmul.f32 %v4597, %v4597
        %v4758 = vmul.f32 %v4598, %v4598
        %v4759 = vmul.f32 %v4599, %v4599
        %v4760 = vmul.f32 %v4600, %v4600
        %v4761 = vmul.f32 %v4601, %v4601
        %v4762 = vmul.f32 %v4602, %v4602
        %v4763 = vmul.f32 %v4603, %v4603
        %v4764 = vmul.f32 %v4604, %v4604
        %v4765 = vmul.f32 %v4605, %v4605
        %v4766 = vmul.f32 %v4606, %v4606
        %v4767 = vmul.f32 %v4607, %v4607
        %v4768 = vmul.f32 %v4608, %v4608
        %v4769 = vmul.f32 %v4609, %v4609
        %v4770 = vmul.f32 %v4610, %v4610
        %v4771 = vmul.f32 %v4611, %v4611
        %v4772 = vmul.f32 %v4612, %v4612
        %v4773 = vmul.f32 %v4613, %v4613
        %v4774 = vmul.f32 %v4614, %v4614
        %v4775 = vmul.f32 %v4615, %v4615
        %v4776 = vmul.f32 %v4616, %v4616
        %v4777 = vmul.f32 %v4617, %v4617
        %v4778 = vmul.f32 %v4746, 120.0
        %v4779 = vmul.f32 %v4747, 120.0
        %v4780 = vmul.f32 %v4748, 120.0
        %v4781 = vmul.f32 %v4749, 120.0
        %v4782 = vmul.f32 %v4750, 120.0
        %v4783 = vmul.f32 %v4751, 120.0
        %v4784 = vmul.f32 %v4752, 120.0
        %v4785 = vmul.f32 %v4753, 120.0
        %v4786 = vmul.f32 %v4754, 120.0
        %v4787 = vmul.f32 %v4755, 120.0
        %v4788 = vmul.f32 %v4756, 120.0
        %v4789 = vmul.f32 %v4757, 120.0
        %v4790 = vmul.f32 %v4758, 120.0
        %v4791 = vmul.f32 %v4759, 120.0
        %v4792 = vmul.f32 %v4760, 120.0
        %v4793 = vmul.f32 %v4761, 120.0
        %v4794 = vmul.f32 %v4762, 120.0
        %v4795 = vmul.f32 %v4763, 120.0
        %v4796 = vmul.f32 %v4764, 120.0
        %v4797 = vmul.f32 %v4765, 120.0
        %v4798 = vmul.f32 %v4766, 120.0
        %v4799 = vmul.f32 %v4767, 120.0
        %v4800 = vmul.f32 %v4768, 120.0
        %v4801 = vmul.f32 %v4769, 120.0
        %v4802 = vmul.f32 %v4770, 120.0
        %v4803 = vmul.f32 %v4771, 120.0
        %v4804 = vmul.f32 %v4772, 120.0
        %v4805 = vmul.f32 %v4773, 120.0
        %v4806 = vmul.f32 %v4774, 120.0
        %v4807 = vmul.f32 %v4775, 120.0
        %v4808 = vmul.f32 %v4776, 120.0
        %v4809 = vmul.f32 %v4777, 120.0
        %v4810 = vsub.f32 %v4683, %v4778
        %v4811 = vsub.f32 %v4685, %v4779
        %v4812 = vsub.f32 %v4687, %v4780
        %v4813 = vsub.f32 %v4689, %v4781
        %v4814 = vsub.f32 %v4691, %v4782
        %v4815 = vsub.f32 %v4693, %v4783
        %v4816 = vsub.f32 %v4695, %v4784
        %v4817 = vsub.f32 %v4697, %v4785
        %v4818 = vsub.f32 %v4699, %v4786
        %v4819 = vsub.f32 %v4701, %v4787
        %v4820 = vsub.f32 %v4703, %v4788
        %v4821 = vsub.f32 %v4705, %v4789
        %v4822 = vsub.f32 %v4707, %v4790
        %v4823 = vsub.f32 %v4709, %v4791
        %v4824 = vsub.f32 %v4711, %v4792
        %v4825 = vsub.f32 %v4713, %v4793
        %v4826 = vsub.f32 %v4715, %v4794
        %v4827 = vsub.f32 %v4717, %v4795
        %v4828 = vsub.f32 %v4719, %v4796
        %v4829 = vsub.f32 %v4721, %v4797
        %v4830 = vsub.f32 %v4723, %v4798
        %v4831 = vsub.f32 %v4725, %v4799
        %v4832 = vsub.f32 %v4727, %v4800
        %v4833 = vsub.f32 %v4729, %v4801
        %v4834 = vsub.f32 %v4731, %v4802
        %v4835 = vsub.f32 %v4733, %v4803
        %v4836 = vsub.f32 %v4735, %v4804
        %v4837 = vsub.f32 %v4737, %v4805
        %v4838 = vsub.f32 %v4739, %v4806
        %v4839 = vsub.f32 %v4741, %v4807
        %v4840 = vsub.f32 %v4743, %v4808
        %v4841 = vsub.f32 %v4745, %v4809
        %v4842 = vmul.f32 %v4810, 0.125
        %v4843 = vmul.f32 %v4811, 0.125
        %v4844 = vmul.f32 %v4812, 0.125
        %v4845 = vmul.f32 %v4813, 0.125
        %v4846 = vmul.f32 %v4814, 0.125
        %v4847 = vmul.f32 %v4815, 0.125
        %v4848 = vmul.f32 %v4816, 0.125
        %v4849 = vmul.f32 %v4817, 0.125
        %v4850 = vmul.f32 %v4818, 0.125
        %v4851 = vmul.f32 %v4819, 0.125
        %v4852 = vmul.f32 %v4820, 0.125
        %v4853 = vmul.f32 %v4821, 0.125
        %v4854 = vmul.f32 %v4822, 0.125
        %v4855 = vmul.f32 %v4823, 0.125
        %v4856 = vmul.f32 %v4824, 0.125
        %v4857 = vmul.f32 %v4825, 0.125
        %v4858 = vmul.f32 %v4826, 0.125
        %v4859 = vmul.f32 %v4827, 0.125
        %v4860 = vmul.f32 %v4828, 0.125
        %v4861 = vmul.f32 %v4829, 0.125
        %v4862 = vmul.f32 %v4830, 0.125
        %v4863 = vmul.f32 %v4831, 0.125
        %v4864 = vmul.f32 %v4832, 0.125
        %v4865 = vmul.f32 %v4833, 0.125
        %v4866 = vmul.f32 %v4834, 0.125
        %v4867 = vmul.f32 %v4835, 0.125
        %v4868 = vmul.f32 %v4836, 0.125
        %v4869 = vmul.f32 %v4837, 0.125
        %v4870 = vmul.f32 %v4838, 0.125
        %v4871 = vmul.f32 %v4839, 0.125
        %v4872 = vmul.f32 %v4840, 0.125
        %v4873 = vmul.f32 %v4841, 0.125
        %v4874 = vadd.f32 %v4842, 1e-06
        %v4875 = vadd.f32 %v4843, 1e-06
        %v4876 = vadd.f32 %v4844, 1e-06
        %v4877 = vadd.f32 %v4845, 1e-06
        %v4878 = vadd.f32 %v4846, 1e-06
        %v4879 = vadd.f32 %v4847, 1e-06
        %v4880 = vadd.f32 %v4848, 1e-06
        %v4881 = vadd.f32 %v4849, 1e-06
        %v4882 = vadd.f32 %v4850, 1e-06
        %v4883 = vadd.f32 %v4851, 1e-06
        %v4884 = vadd.f32 %v4852, 1e-06
        %v4885 = vadd.f32 %v4853, 1e-06
        %v4886 = vadd.f32 %v4854, 1e-06
        %v4887 = vadd.f32 %v4855, 1e-06
        %v4888 = vadd.f32 %v4856, 1e-06
        %v4889 = vadd.f32 %v4857, 1e-06
        %v4890 = vadd.f32 %v4858, 1e-06
        %v4891 = vadd.f32 %v4859, 1e-06
        %v4892 = vadd.f32 %v4860, 1e-06
        %v4893 = vadd.f32 %v4861, 1e-06
        %v4894 = vadd.f32 %v4862, 1e-06
        %v4895 = vadd.f32 %v4863, 1e-06
        %v4896 = vadd.f32 %v4864, 1e-06
        %v4897 = vadd.f32 %v4865, 1e-06
        %v4898 = vadd.f32 %v4866, 1e-06
        %v4899 = vadd.f32 %v4867, 1e-06
        %v4900 = vadd.f32 %v4868, 1e-06
        %v4901 = vadd.f32 %v4869, 1e-06
        %v4902 = vadd.f32 %v4870, 1e-06
        %v4903 = vadd.f32 %v4871, 1e-06
        %v4904 = vadd.f32 %v4872, 1e-06
        %v4905 = vadd.f32 %v4873, 1e-06
        %v4906 = vrsqrt.pop %v4874
        %v4907 = vmul.f32 %v4906, %v4874
        %v4908 = vmul.f32 %v4907, %v4906
        %v4909 = vmul.f32 0.5, %v4908
        %v4910 = vsub.f32 1.5, %v4909
        %v4911 = vmul.f32 %v4906, %v4910
        %vm4912 = vweird.f32 %v4874
        %vm4913 = vweird.f32 %v4906
        %vm4914 = vmor %vm4912, %vm4913
        %v4915 = vsel %vm4914, %v4906, %v4911
        %v4916 = vrsqrt.pop %v4875
        %v4917 = vmul.f32 %v4916, %v4875
        %v4918 = vmul.f32 %v4917, %v4916
        %v4919 = vmul.f32 0.5, %v4918
        %v4920 = vsub.f32 1.5, %v4919
        %v4921 = vmul.f32 %v4916, %v4920
        %vm4922 = vweird.f32 %v4875
        %vm4923 = vweird.f32 %v4916
        %vm4924 = vmor %vm4922, %vm4923
        %v4925 = vsel %vm4924, %v4916, %v4921
        %v4926 = vrsqrt.pop %v4876
        %v4927 = vmul.f32 %v4926, %v4876
        %v4928 = vmul.f32 %v4927, %v4926
        %v4929 = vmul.f32 0.5, %v4928
        %v4930 = vsub.f32 1.5, %v4929
        %v4931 = vmul.f32 %v4926, %v4930
        %vm4932 = vweird.f32 %v4876
        %vm4933 = vweird.f32 %v4926
        %vm4934 = vmor %vm4932, %vm4933
        %v4935 = vsel %vm4934, %v4926, %v4931
        %v4936 = vrsqrt.pop %v4877
        %v4937 = vmul.f32 %v4936, %v4877
        %v4938 = vmul.f32 %v4937, %v4936
        %v4939 = vmul.f32 0.5, %v4938
        %v4940 = vsub.f32 1.5, %v4939
        %v4941 = vmul.f32 %v4936, %v4940
        %vm4942 = vweird.f32 %v4877
        %vm4943 = vweird.f32 %v4936
        %vm4944 = vmor %vm4942, %vm4943
        %v4945 = vsel %vm4944, %v4936, %v4941
        %v4946 = vrsqrt.pop %v4878
        %v4947 = vmul.f32 %v4946, %v4878
        %v4948 = vmul.f32 %v4947, %v4946
        %v4949 = vmul.f32 0.5, %v4948
        %v4950 = vsub.f32 1.5, %v4949
        %v4951 = vmul.f32 %v4946, %v4950
        %vm4952 = vweird.f32 %v4878
        %vm4953 = vweird.f32 %v4946
        %vm4954 = vmor %vm4952, %vm4953
        %v4955 = vsel %vm4954, %v4946, %v4951
        %v4956 = vrsqrt.pop %v4879
        %v4957 = vmul.f32 %v4956, %v4879
        %v4958 = vmul.f32 %v4957, %v4956
        %v4959 = vmul.f32 0.5, %v4958
        %v4960 = vsub.f32 1.5, %v4959
        %v4961 = vmul.f32 %v4956, %v4960
        %vm4962 = vweird.f32 %v4879
        %vm4963 = vweird.f32 %v4956
        %vm4964 = vmor %vm4962, %vm4963
        %v4965 = vsel %vm4964, %v4956, %v4961
        %v4966 = vrsqrt.pop %v4880
        %v4967 = vmul.f32 %v4966, %v4880
        %v4968 = vmul.f32 %v4967, %v4966
        %v4969 = vmul.f32 0.5, %v4968
        %v4970 = vsub.f32 1.5, %v4969
        %v4971 = vmul.f32 %v4966, %v4970
        %vm4972 = vweird.f32 %v4880
        %vm4973 = vweird.f32 %v4966
        %vm4974 = vmor %vm4972, %vm4973
        %v4975 = vsel %vm4974, %v4966, %v4971
        %v4976 = vrsqrt.pop %v4881
        %v4977 = vmul.f32 %v4976, %v4881
        %v4978 = vmul.f32 %v4977, %v4976
        %v4979 = vmul.f32 0.5, %v4978
        %v4980 = vsub.f32 1.5, %v4979
        %v4981 = vmul.f32 %v4976, %v4980
        %vm4982 = vweird.f32 %v4881
        %vm4983 = vweird.f32 %v4976
        %vm4984 = vmor %vm4982, %vm4983
        %v4985 = vsel %vm4984, %v4976, %v4981
        %v4986 = vrsqrt.pop %v4882
        %v4987 = vmul.f32 %v4986, %v4882
        %v4988 = vmul.f32 %v4987, %v4986
        %v4989 = vmul.f32 0.5, %v4988
        %v4990 = vsub.f32 1.5, %v4989
        %v4991 = vmul.f32 %v4986, %v4990
        %vm4992 = vweird.f32 %v4882
        %vm4993 = vweird.f32 %v4986
        %vm4994 = vmor %vm4992, %vm4993
        %v4995 = vsel %vm4994, %v4986, %v4991
        %v4996 = vrsqrt.pop %v4883
        %v4997 = vmul.f32 %v4996, %v4883
        %v4998 = vmul.f32 %v4997, %v4996
        %v4999 = vmul.f32 0.5, %v4998
        %v5000 = vsub.f32 1.5, %v4999
        %v5001 = vmul.f32 %v4996, %v5000
        %vm5002 = vweird.f32 %v4883
        %vm5003 = vweird.f32 %v4996
        %vm5004 = vmor %vm5002, %vm5003
        %v5005 = vsel %vm5004, %v4996, %v5001
        %v5006 = vrsqrt.pop %v4884
        %v5007 = vmul.f32 %v5006, %v4884
        %v5008 = vmul.f32 %v5007, %v5006
        %v5009 = vmul.f32 0.5, %v5008
        %v5010 = vsub.f32 1.5, %v5009
        %v5011 = vmul.f32 %v5006, %v5010
        %vm5012 = vweird.f32 %v4884
        %vm5013 = vweird.f32 %v5006
        %vm5014 = vmor %vm5012, %vm5013
        %v5015 = vsel %vm5014, %v5006, %v5011
        %v5016 = vrsqrt.pop %v4885
        %v5017 = vmul.f32 %v5016, %v4885
        %v5018 = vmul.f32 %v5017, %v5016
        %v5019 = vmul.f32 0.5, %v5018
        %v5020 = vsub.f32 1.5, %v5019
        %v5021 = vmul.f32 %v5016, %v5020
        %vm5022 = vweird.f32 %v4885
        %vm5023 = vweird.f32 %v5016
        %vm5024 = vmor %vm5022, %vm5023
        %v5025 = vsel %vm5024, %v5016, %v5021
        %v5026 = vrsqrt.pop %v4886
        %v5027 = vmul.f32 %v5026, %v4886
        %v5028 = vmul.f32 %v5027, %v5026
        %v5029 = vmul.f32 0.5, %v5028
        %v5030 = vsub.f32 1.5, %v5029
        %v5031 = vmul.f32 %v5026, %v5030
        %vm5032 = vweird.f32 %v4886
        %vm5033 = vweird.f32 %v5026
        %vm5034 = vmor %vm5032, %vm5033
        %v5035 = vsel %vm5034, %v5026, %v5031
        %v5036 = vrsqrt.pop %v4887
        %v5037 = vmul.f32 %v5036, %v4887
        %v5038 = vmul.f32 %v5037, %v5036
        %v5039 = vmul.f32 0.5, %v5038
        %v5040 = vsub.f32 1.5, %v5039
        %v5041 = vmul.f32 %v5036, %v5040
        %vm5042 = vweird.f32 %v4887
        %vm5043 = vweird.f32 %v5036
        %vm5044 = vmor %vm5042, %vm5043
        %v5045 = vsel %vm5044, %v5036, %v5041
        %v5046 = vrsqrt.pop %v4888
        %v5047 = vmul.f32 %v5046, %v4888
        %v5048 = vmul.f32 %v5047, %v5046
        %v5049 = vmul.f32 0.5, %v5048
        %v5050 = vsub.f32 1.5, %v5049
        %v5051 = vmul.f32 %v5046, %v5050
        %vm5052 = vweird.f32 %v4888
        %vm5053 = vweird.f32 %v5046
        %vm5054 = vmor %vm5052, %vm5053
        %v5055 = vsel %vm5054, %v5046, %v5051
        %v5056 = vrsqrt.pop %v4889
        %v5057 = vmul.f32 %v5056, %v4889
        %v5058 = vmul.f32 %v5057, %v5056
        %v5059 = vmul.f32 0.5, %v5058
        %v5060 = vsub.f32 1.5, %v5059
        %v5061 = vmul.f32 %v5056, %v5060
        %vm5062 = vweird.f32 %v4889
        %vm5063 = vweird.f32 %v5056
        %vm5064 = vmor %vm5062, %vm5063
        %v5065 = vsel %vm5064, %v5056, %v5061
        %v5066 = vrsqrt.pop %v4890
        %v5067 = vmul.f32 %v5066, %v4890
        %v5068 = vmul.f32 %v5067, %v5066
        %v5069 = vmul.f32 0.5, %v5068
        %v5070 = vsub.f32 1.5, %v5069
        %v5071 = vmul.f32 %v5066, %v5070
        %vm5072 = vweird.f32 %v4890
        %vm5073 = vweird.f32 %v5066
        %vm5074 = vmor %vm5072, %vm5073
        %v5075 = vsel %vm5074, %v5066, %v5071
        %v5076 = vrsqrt.pop %v4891
        %v5077 = vmul.f32 %v5076, %v4891
        %v5078 = vmul.f32 %v5077, %v5076
        %v5079 = vmul.f32 0.5, %v5078
        %v5080 = vsub.f32 1.5, %v5079
        %v5081 = vmul.f32 %v5076, %v5080
        %vm5082 = vweird.f32 %v4891
        %vm5083 = vweird.f32 %v5076
        %vm5084 = vmor %vm5082, %vm5083
        %v5085 = vsel %vm5084, %v5076, %v5081
        %v5086 = vrsqrt.pop %v4892
        %v5087 = vmul.f32 %v5086, %v4892
        %v5088 = vmul.f32 %v5087, %v5086
        %v5089 = vmul.f32 0.5, %v5088
        %v5090 = vsub.f32 1.5, %v5089
        %v5091 = vmul.f32 %v5086, %v5090
        %vm5092 = vweird.f32 %v4892
        %vm5093 = vweird.f32 %v5086
        %vm5094 = vmor %vm5092, %vm5093
        %v5095 = vsel %vm5094, %v5086, %v5091
        %v5096 = vrsqrt.pop %v4893
        %v5097 = vmul.f32 %v5096, %v4893
        %v5098 = vmul.f32 %v5097, %v5096
        %v5099 = vmul.f32 0.5, %v5098
        %v5100 = vsub.f32 1.5, %v5099
        %v5101 = vmul.f32 %v5096, %v5100
        %vm5102 = vweird.f32 %v4893
        %vm5103 = vweird.f32 %v5096
        %vm5104 = vmor %vm5102, %vm5103
        %v5105 = vsel %vm5104, %v5096, %v5101
        %v5106 = vrsqrt.pop %v4894
        %v5107 = vmul.f32 %v5106, %v4894
        %v5108 = vmul.f32 %v5107, %v5106
        %v5109 = vmul.f32 0.5, %v5108
        %v5110 = vsub.f32 1.5, %v5109
        %v5111 = vmul.f32 %v5106, %v5110
        %vm5112 = vweird.f32 %v4894
        %vm5113 = vweird.f32 %v5106
        %vm5114 = vmor %vm5112, %vm5113
        %v5115 = vsel %vm5114, %v5106, %v5111
        %v5116 = vrsqrt.pop %v4895
        %v5117 = vmul.f32 %v5116, %v4895
        %v5118 = vmul.f32 %v5117, %v5116
        %v5119 = vmul.f32 0.5, %v5118
        %v5120 = vsub.f32 1.5, %v5119
        %v5121 = vmul.f32 %v5116, %v5120
        %vm5122 = vweird.f32 %v4895
        %vm5123 = vweird.f32 %v5116
        %vm5124 = vmor %vm5122, %vm5123
        %v5125 = vsel %vm5124, %v5116, %v5121
        %v5126 = vrsqrt.pop %v4896
        %v5127 = vmul.f32 %v5126, %v4896
        %v5128 = vmul.f32 %v5127, %v5126
        %v5129 = vmul.f32 0.5, %v5128
        %v5130 = vsub.f32 1.5, %v5129
        %v5131 = vmul.f32 %v5126, %v5130
        %vm5132 = vweird.f32 %v4896
        %vm5133 = vweird.f32 %v5126
        %vm5134 = vmor %vm5132, %vm5133
        %v5135 = vsel %vm5134, %v5126, %v5131
        %v5136 = vrsqrt.pop %v4897
        %v5137 = vmul.f32 %v5136, %v4897
        %v5138 = vmul.f32 %v5137, %v5136
        %v5139 = vmul.f32 0.5, %v5138
        %v5140 = vsub.f32 1.5, %v5139
        %v5141 = vmul.f32 %v5136, %v5140
        %vm5142 = vweird.f32 %v4897
        %vm5143 = vweird.f32 %v5136
        %vm5144 = vmor %vm5142, %vm5143
        %v5145 = vsel %vm5144, %v5136, %v5141
        %v5146 = vrsqrt.pop %v4898
        %v5147 = vmul.f32 %v5146, %v4898
        %v5148 = vmul.f32 %v5147, %v5146
        %v5149 = vmul.f32 0.5, %v5148
        %v5150 = vsub.f32 1.5, %v5149
        %v5151 = vmul.f32 %v5146, %v5150
        %vm5152 = vweird.f32 %v4898
        %vm5153 = vweird.f32 %v5146
        %vm5154 = vmor %vm5152, %vm5153
        %v5155 = vsel %vm5154, %v5146, %v5151
        %v5156 = vrsqrt.pop %v4899
        %v5157 = vmul.f32 %v5156, %v4899
        %v5158 = vmul.f32 %v5157, %v5156
        %v5159 = vmul.f32 0.5, %v5158
        %v5160 = vsub.f32 1.5, %v5159
        %v5161 = vmul.f32 %v5156, %v5160
        %vm5162 = vweird.f32 %v4899
        %vm5163 = vweird.f32 %v5156
        %vm5164 = vmor %vm5162, %vm5163
        %v5165 = vsel %vm5164, %v5156, %v5161
        %v5166 = vrsqrt.pop %v4900
        %v5167 = vmul.f32 %v5166, %v4900
        %v5168 = vmul.f32 %v5167, %v5166
        %v5169 = vmul.f32 0.5, %v5168
        %v5170 = vsub.f32 1.5, %v5169
        %v5171 = vmul.f32 %v5166, %v5170
        %vm5172 = vweird.f32 %v4900
        %vm5173 = vweird.f32 %v5166
        %vm5174 = vmor %vm5172, %vm5173
        %v5175 = vsel %vm5174, %v5166, %v5171
        %v5176 = vrsqrt.pop %v4901
        %v5177 = vmul.f32 %v5176, %v4901
        %v5178 = vmul.f32 %v5177, %v5176
        %v5179 = vmul.f32 0.5, %v5178
        %v5180 = vsub.f32 1.5, %v5179
        %v5181 = vmul.f32 %v5176, %v5180
        %vm5182 = vweird.f32 %v4901
        %vm5183 = vweird.f32 %v5176
        %vm5184 = vmor %vm5182, %vm5183
        %v5185 = vsel %vm5184, %v5176, %v5181
        %v5186 = vrsqrt.pop %v4902
        %v5187 = vmul.f32 %v5186, %v4902
        %v5188 = vmul.f32 %v5187, %v5186
        %v5189 = vmul.f32 0.5, %v5188
        %v5190 = vsub.f32 1.5, %v5189
        %v5191 = vmul.f32 %v5186, %v5190
        %vm5192 = vweird.f32 %v4902
        %vm5193 = vweird.f32 %v5186
        %vm5194 = vmor %vm5192, %vm5193
        %v5195 = vsel %vm5194, %v5186, %v5191
        %v5196 = vrsqrt.pop %v4903
        %v5197 = vmul.f32 %v5196, %v4903
        %v5198 = vmul.f32 %v5197, %v5196
        %v5199 = vmul.f32 0.5, %v5198
        %v5200 = vsub.f32 1.5, %v5199
        %v5201 = vmul.f32 %v5196, %v5200
        %vm5202 = vweird.f32 %v4903
        %vm5203 = vweird.f32 %v5196
        %vm5204 = vmor %vm5202, %vm5203
        %v5205 = vsel %vm5204, %v5196, %v5201
        %v5206 = vrsqrt.pop %v4904
        %v5207 = vmul.f32 %v5206, %v4904
        %v5208 = vmul.f32 %v5207, %v5206
        %v5209 = vmul.f32 0.5, %v5208
        %v5210 = vsub.f32 1.5, %v5209
        %v5211 = vmul.f32 %v5206, %v5210
        %vm5212 = vweird.f32 %v4904
        %vm5213 = vweird.f32 %v5206
        %vm5214 = vmor %vm5212, %vm5213
        %v5215 = vsel %vm5214, %v5206, %v5211
        %v5216 = vrsqrt.pop %v4905
        %v5217 = vmul.f32 %v5216, %v4905
        %v5218 = vmul.f32 %v5217, %v5216
        %v5219 = vmul.f32 0.5, %v5218
        %v5220 = vsub.f32 1.5, %v5219
        %v5221 = vmul.f32 %v5216, %v5220
        %vm5222 = vweird.f32 %v4905
        %vm5223 = vweird.f32 %v5216
        %vm5224 = vmor %vm5222, %vm5223
        %v5225 = vsel %vm5224, %v5216, %v5221
        %v5226 = vmul.f32 %v4618, %v4915
        %v5227 = vmul.f32 %v4619, %v4925
        %v5228 = vmul.f32 %v4620, %v4935
        %v5229 = vmul.f32 %v4621, %v4945
        %v5230 = vmul.f32 %v4622, %v4955
        %v5231 = vmul.f32 %v4623, %v4965
        %v5232 = vmul.f32 %v4624, %v4975
        %v5233 = vmul.f32 %v4625, %v4985
        %v5234 = vmul.f32 %v4626, %v4995
        %v5235 = vmul.f32 %v4627, %v5005
        %v5236 = vmul.f32 %v4628, %v5015
        %v5237 = vmul.f32 %v4629, %v5025
        %v5238 = vmul.f32 %v4630, %v5035
        %v5239 = vmul.f32 %v4631, %v5045
        %v5240 = vmul.f32 %v4632, %v5055
        %v5241 = vmul.f32 %v4633, %v5065
        %v5242 = vmul.f32 %v4634, %v5075
        %v5243 = vmul.f32 %v4635, %v5085
        %v5244 = vmul.f32 %v4636, %v5095
        %v5245 = vmul.f32 %v4637, %v5105
        %v5246 = vmul.f32 %v4638, %v5115
        %v5247 = vmul.f32 %v4639, %v5125
        %v5248 = vmul.f32 %v4640, %v5135
        %v5249 = vmul.f32 %v4641, %v5145
        %v5250 = vmul.f32 %v4642, %v5155
        %v5251 = vmul.f32 %v4643, %v5165
        %v5252 = vmul.f32 %v4644, %v5175
        %v5253 = vmul.f32 %v4645, %v5185
        %v5254 = vmul.f32 %v4646, %v5195
        %v5255 = vmul.f32 %v4647, %v5205
        %v5256 = vmul.f32 %v4648, %v5215
        %v5257 = vmul.f32 %v4649, %v5225
        %v5258 = vld [vmem:[%s3] sm:$0x1]
        %v5260 = vperm.slane %v5258, 0
        %v5262 = vmul.f32 %v5226, %v5260
        %v5263 = vmul.f32 %v5227, %v5260
        %v5264 = vmul.f32 %v5228, %v5260
        %v5265 = vmul.f32 %v5229, %v5260
        %v5266 = vmul.f32 %v5230, %v5260
        %v5267 = vmul.f32 %v5231, %v5260
        %v5268 = vmul.f32 %v5232, %v5260
        %v5269 = vmul.f32 %v5233, %v5260
        %v5270 = vmul.f32 %v5234, %v5260
        %v5271 = vmul.f32 %v5235, %v5260
        %v5272 = vmul.f32 %v5236, %v5260
        %v5273 = vmul.f32 %v5237, %v5260
        %v5274 = vmul.f32 %v5238, %v5260
        %v5275 = vmul.f32 %v5239, %v5260
        %v5276 = vmul.f32 %v5240, %v5260
        %v5277 = vmul.f32 %v5241, %v5260
        %v5278 = vmul.f32 %v5242, %v5260
        %v5279 = vmul.f32 %v5243, %v5260
        %v5280 = vmul.f32 %v5244, %v5260
        %v5281 = vmul.f32 %v5245, %v5260
        %v5282 = vmul.f32 %v5246, %v5260
        %v5283 = vmul.f32 %v5247, %v5260
        %v5284 = vmul.f32 %v5248, %v5260
        %v5285 = vmul.f32 %v5249, %v5260
        %v5286 = vmul.f32 %v5250, %v5260
        %v5287 = vmul.f32 %v5251, %v5260
        %v5288 = vmul.f32 %v5252, %v5260
        %v5289 = vmul.f32 %v5253, %v5260
        %v5290 = vmul.f32 %v5254, %v5260
        %v5291 = vmul.f32 %v5255, %v5260
        %v5292 = vmul.f32 %v5256, %v5260
        %v5293 = vmul.f32 %v5257, %v5260
        %v5294 = vld [vmem:[%s4] sm:$0x1]
        %v5296 = vperm.slane %v5294, 0
        %v5298 = vadd.f32 %v5262, %v5296
        %v5299 = vadd.f32 %v5263, %v5296
        %v5300 = vadd.f32 %v5264, %v5296
        %v5301 = vadd.f32 %v5265, %v5296
        %v5302 = vadd.f32 %v5266, %v5296
        %v5303 = vadd.f32 %v5267, %v5296
        %v5304 = vadd.f32 %v5268, %v5296
        %v5305 = vadd.f32 %v5269, %v5296
        %v5306 = vadd.f32 %v5270, %v5296
        %v5307 = vadd.f32 %v5271, %v5296
        %v5308 = vadd.f32 %v5272, %v5296
        %v5309 = vadd.f32 %v5273, %v5296
        %v5310 = vadd.f32 %v5274, %v5296
        %v5311 = vadd.f32 %v5275, %v5296
        %v5312 = vadd.f32 %v5276, %v5296
        %v5313 = vadd.f32 %v5277, %v5296
        %v5314 = vadd.f32 %v5278, %v5296
        %v5315 = vadd.f32 %v5279, %v5296
        %v5316 = vadd.f32 %v5280, %v5296
        %v5317 = vadd.f32 %v5281, %v5296
        %v5318 = vadd.f32 %v5282, %v5296
        %v5319 = vadd.f32 %v5283, %v5296
        %v5320 = vadd.f32 %v5284, %v5296
        %v5321 = vadd.f32 %v5285, %v5296
        %v5322 = vadd.f32 %v5286, %v5296
        %v5323 = vadd.f32 %v5287, %v5296
        %v5324 = vadd.f32 %v5288, %v5296
        %v5325 = vadd.f32 %v5289, %v5296
        %v5326 = vadd.f32 %v5290, %v5296
        %v5327 = vadd.f32 %v5291, %v5296
        %v5328 = vadd.f32 %v5292, %v5296
        %v5329 = vadd.f32 %v5293, %v5296
        %v5330 = vpack.c.bf16 %v5298, %v5298
        %v5331 = vpack.c.bf16 %v5299, %v5299
        %v5332 = vpack.c.bf16 %v5300, %v5300
        %v5333 = vpack.c.bf16 %v5301, %v5301
        %v5334 = vpack.c.bf16 %v5302, %v5302
        %v5335 = vpack.c.bf16 %v5303, %v5303
        %v5336 = vpack.c.bf16 %v5304, %v5304
        %v5337 = vpack.c.bf16 %v5305, %v5305
        %v5338 = vpack.c.bf16 %v5306, %v5306
        %v5339 = vpack.c.bf16 %v5307, %v5307
        %v5340 = vpack.c.bf16 %v5308, %v5308
        %v5341 = vpack.c.bf16 %v5309, %v5309
        %v5342 = vpack.c.bf16 %v5310, %v5310
        %v5343 = vpack.c.bf16 %v5311, %v5311
        %v5344 = vpack.c.bf16 %v5312, %v5312
        %v5345 = vpack.c.bf16 %v5313, %v5313
        %v5346 = vpack.c.bf16 %v5314, %v5314
        %v5347 = vpack.c.bf16 %v5315, %v5315
        %v5348 = vpack.c.bf16 %v5316, %v5316
        %v5349 = vpack.c.bf16 %v5317, %v5317
        %v5350 = vpack.c.bf16 %v5318, %v5318
        %v5351 = vpack.c.bf16 %v5319, %v5319
        %v5352 = vpack.c.bf16 %v5320, %v5320
        %v5353 = vpack.c.bf16 %v5321, %v5321
        %v5354 = vpack.c.bf16 %v5322, %v5322
        %v5355 = vpack.c.bf16 %v5323, %v5323
        %v5356 = vpack.c.bf16 %v5324, %v5324
        %v5357 = vpack.c.bf16 %v5325, %v5325
        %v5358 = vpack.c.bf16 %v5326, %v5326
        %v5359 = vpack.c.bf16 %v5327, %v5327
        %v5360 = vpack.c.bf16 %v5328, %v5328
        %v5361 = vpack.c.bf16 %v5329, %v5329
        %5362 = vst [vmem:[#allocation3] sm:$0xf] %v5330
        %5363 = vst [vmem:[#allocation3 + $0x4] sm:$0xf] %v5331
        %5364 = vst [vmem:[#allocation3 + $0x8] sm:$0xf] %v5332
        %5365 = vst [vmem:[#allocation3 + $0xc] sm:$0xf] %v5333
        %5366 = vst [vmem:[#allocation3 + $0x10] sm:$0xf] %v5334
        %5367 = vst [vmem:[#allocation3 + $0x14] sm:$0xf] %v5335
        %5368 = vst [vmem:[#allocation3 + $0x18] sm:$0xf] %v5336
        %5369 = vst [vmem:[#allocation3 + $0x1c] sm:$0xf] %v5337
        %5370 = vst [vmem:[#allocation3 + $0x20] sm:$0xf] %v5338
        %5371 = vst [vmem:[#allocation3 + $0x24] sm:$0xf] %v5339
        %5372 = vst [vmem:[#allocation3 + $0x28] sm:$0xf] %v5340
        %5373 = vst [vmem:[#allocation3 + $0x2c] sm:$0xf] %v5341
        %5374 = vst [vmem:[#allocation3 + $0x30] sm:$0xf] %v5342
        %5375 = vst [vmem:[#allocation3 + $0x34] sm:$0xf] %v5343
        %5376 = vst [vmem:[#allocation3 + $0x38] sm:$0xf] %v5344
        %5377 = vst [vmem:[#allocation3 + $0x3c] sm:$0xf] %v5345
        %5378 = vst [vmem:[#allocation3 + $0x40] sm:$0xf] %v5346
        %5379 = vst [vmem:[#allocation3 + $0x44] sm:$0xf] %v5347
        %5380 = vst [vmem:[#allocation3 + $0x48] sm:$0xf] %v5348
        %5381 = vst [vmem:[#allocation3 + $0x4c] sm:$0xf] %v5349
        %5382 = vst [vmem:[#allocation3 + $0x50] sm:$0xf] %v5350
        %5383 = vst [vmem:[#allocation3 + $0x54] sm:$0xf] %v5351
        %5384 = vst [vmem:[#allocation3 + $0x58] sm:$0xf] %v5352
        %5385 = vst [vmem:[#allocation3 + $0x5c] sm:$0xf] %v5353
        %5386 = vst [vmem:[#allocation3 + $0x60] sm:$0xf] %v5354
        %5387 = vst [vmem:[#allocation3 + $0x64] sm:$0xf] %v5355
        %5388 = vst [vmem:[#allocation3 + $0x68] sm:$0xf] %v5356
        %5389 = vst [vmem:[#allocation3 + $0x6c] sm:$0xf] %v5357
        %5390 = vst [vmem:[#allocation3 + $0x70] sm:$0xf] %v5358
        %5391 = vst [vmem:[#allocation3 + $0x74] sm:$0xf] %v5359
        %5392 = vst [vmem:[#allocation3 + $0x78] sm:$0xf] %v5360
        %5393 = vst [vmem:[#allocation3 + $0x7c] sm:$0xf] %v5361
        %v5394 = vld [vmem:[%s5] sm:$0xf]
        %v5395 = vld [vmem:[%s5 + $0x4] sm:$0xf]
        %v5396 = vld [vmem:[%s5 + $0x8] sm:$0xf]
        %v5397 = vld [vmem:[%s5 + $0xc] sm:$0xf]
        %v5398 = vld [vmem:[%s5 + $0x10] sm:$0xf]
        %v5399 = vld [vmem:[%s5 + $0x14] sm:$0xf]
        %v5400 = vld [vmem:[%s5 + $0x18] sm:$0xf]
        %v5401 = vld [vmem:[%s5 + $0x1c] sm:$0xf]
        %v5402 = vld [vmem:[%s5 + $0x20] sm:$0xf]
        %v5403 = vld [vmem:[%s5 + $0x24] sm:$0xf]
        %v5404 = vld [vmem:[%s5 + $0x28] sm:$0xf]
        %v5405 = vld [vmem:[%s5 + $0x2c] sm:$0xf]
        %v5406 = vld [vmem:[%s5 + $0x30] sm:$0xf]
        %v5407 = vld [vmem:[%s5 + $0x34] sm:$0xf]
        %v5408 = vld [vmem:[%s5 + $0x38] sm:$0xf]
        %v5409 = vld [vmem:[%s5 + $0x3c] sm:$0xf]
        %v5410 = vld [vmem:[%s6] sm:$0x1]
        loop: start=0, step=1, limit=2
        $region73: #{tpu_custom_call.1} parent=67 // loop_pre_header
          _
        $region74: #{tpu_custom_call.1} parent=67 // loop_header
          %s5412 = sphi 0, %s5416
          %p5413 = scmp.ge.s32.totalorder %s5412, 2
          %v5417 = vphi 0.0, %v5802
        $region75: #{tpu_custom_call.1} parent=67 // loop_header_branch
          %5415 = sbr.rel (%p5413) target = $region79
        $region76: #{tpu_custom_call.1} parent=67 // loop_body
          %s5418 = smul.u32 %s5412, 128
          %s5419 = sshra.s32 %s5418, 3
          %s5420 = sand.u32 %s5418, 7
          %s5421 = smul.addr %s5419, 4
          %s5422 = scalar_lea.vmem [#allocation3], %s5421
          %v5423 = vld [vmem:[%s5422] sm:$0xf]
          %v5424 = vld [vmem:[%s5422 + $0x4] sm:$0xf]
          %v5425 = vld [vmem:[%s5422 + $0x8] sm:$0xf]
          %v5426 = vld [vmem:[%s5422 + $0xc] sm:$0xf]
          %v5427 = vld [vmem:[%s5422 + $0x10] sm:$0xf]
          %v5428 = vld [vmem:[%s5422 + $0x14] sm:$0xf]
          %v5429 = vld [vmem:[%s5422 + $0x18] sm:$0xf]
          %v5430 = vld [vmem:[%s5422 + $0x1c] sm:$0xf]
          %v5431 = vld [vmem:[%s5422 + $0x20] sm:$0xf]
          %v5432 = vld [vmem:[%s5422 + $0x24] sm:$0xf]
          %v5433 = vld [vmem:[%s5422 + $0x28] sm:$0xf]
          %v5434 = vld [vmem:[%s5422 + $0x2c] sm:$0xf]
          %v5435 = vld [vmem:[%s5422 + $0x30] sm:$0xf]
          %v5436 = vld [vmem:[%s5422 + $0x34] sm:$0xf]
          %v5437 = vld [vmem:[%s5422 + $0x38] sm:$0xf]
          %v5438 = vld [vmem:[%s5422 + $0x3c] sm:$0xf]
          %v5440 = vperm.slane %v5410, 0
          %v5458 = vunpack.c.l.b16 %v5423
          %v5459 = vunpack.c.l.b16 %v5424
          %v5460 = vunpack.c.l.b16 %v5425
          %v5461 = vunpack.c.l.b16 %v5426
          %v5462 = vunpack.c.l.b16 %v5427
          %v5463 = vunpack.c.l.b16 %v5428
          %v5464 = vunpack.c.l.b16 %v5429
          %v5465 = vunpack.c.l.b16 %v5430
          %v5466 = vunpack.c.l.b16 %v5431
          %v5467 = vunpack.c.l.b16 %v5432
          %v5468 = vunpack.c.l.b16 %v5433
          %v5469 = vunpack.c.l.b16 %v5434
          %v5470 = vunpack.c.l.b16 %v5435
          %v5471 = vunpack.c.l.b16 %v5436
          %v5472 = vunpack.c.l.b16 %v5437
          %v5473 = vunpack.c.l.b16 %v5438
          %v5474 = vpack.c.b16 %v5459, %v5458
          %v5475 = vpack.c.b16 %v5461, %v5460
          %v5476 = vpack.c.b16 %v5463, %v5462
          %v5477 = vpack.c.b16 %v5465, %v5464
          %v5478 = vpack.c.b16 %v5467, %v5466
          %v5479 = vpack.c.b16 %v5469, %v5468
          %v5480 = vpack.c.b16 %v5471, %v5470
          %v5481 = vpack.c.b16 %v5473, %v5472
          %v5506 = vunpack.c.l.b16 %v5394
          %v5507 = vunpack.c.l.b16 %v5395
          %v5508 = vunpack.c.l.b16 %v5396
          %v5509 = vunpack.c.l.b16 %v5397
          %v5510 = vunpack.c.l.b16 %v5398
          %v5511 = vunpack.c.l.b16 %v5399
          %v5512 = vunpack.c.l.b16 %v5400
          %v5513 = vunpack.c.l.b16 %v5401
          %v5514 = vunpack.c.l.b16 %v5402
          %v5515 = vunpack.c.l.b16 %v5403
          %v5516 = vunpack.c.l.b16 %v5404
          %v5517 = vunpack.c.l.b16 %v5405
          %v5518 = vunpack.c.l.b16 %v5406
          %v5519 = vunpack.c.l.b16 %v5407
          %v5520 = vunpack.c.l.b16 %v5408
          %v5521 = vunpack.c.l.b16 %v5409
          %v5522 = vpack.c.b16 %v5507, %v5506
          %v5523 = vpack.c.b16 %v5509, %v5508
          %v5524 = vpack.c.b16 %v5511, %v5510
          %v5525 = vpack.c.b16 %v5513, %v5512
          %v5526 = vpack.c.b16 %v5515, %v5514
          %v5527 = vpack.c.b16 %v5517, %v5516
          %v5528 = vpack.c.b16 %v5519, %v5518
          %v5529 = vpack.c.b16 %v5521, %v5520
          %5538 = vmatpush.bf16.msra.mxu0 %v5529
          %5539 = vmatpush.bf16.msra.mxu0 %v5528
          %5540 = vmatpush.bf16.msra.mxu0 %v5527
          %5541 = vmatpush.bf16.msra.mxu0 %v5526
          %5542 = vmatpush.bf16.msra.mxu0 %v5525
          %5543 = vmatpush.bf16.msra.mxu0 %v5524
          %5544 = vmatpush.bf16.msra.mxu0 %v5523
          %5545 = vmatpush.bf16.msra.mxu0 %v5522
          %5546 = vmatmul.bf16.gmra.mxu0 %v5474
          %v5547 = vpop.f32.mrf.mxu0
          %v5548 = vadd.f32 %v5440, %v5547
          %v5549 = vpop.f32.mrf.mxu0
          %v5550 = vadd.f32 %v5440, %v5549
          %5551 = vmatmul.bf16.gmra.mxu0 %v5475
          %v5552 = vpop.f32.mrf.mxu0
          %v5553 = vadd.f32 %v5440, %v5552
          %v5554 = vpop.f32.mrf.mxu0
          %v5555 = vadd.f32 %v5440, %v5554
          %5556 = vmatmul.bf16.gmra.mxu0 %v5476
          %v5557 = vpop.f32.mrf.mxu0
          %v5558 = vadd.f32 %v5440, %v5557
          %v5559 = vpop.f32.mrf.mxu0
          %v5560 = vadd.f32 %v5440, %v5559
          %5561 = vmatmul.bf16.gmra.mxu0 %v5477
          %v5562 = vpop.f32.mrf.mxu0
          %v5563 = vadd.f32 %v5440, %v5562
          %v5564 = vpop.f32.mrf.mxu0
          %v5565 = vadd.f32 %v5440, %v5564
          %5566 = vmatmul.bf16.gmra.mxu0 %v5478
          %v5567 = vpop.f32.mrf.mxu0
          %v5568 = vadd.f32 %v5440, %v5567
          %v5569 = vpop.f32.mrf.mxu0
          %v5570 = vadd.f32 %v5440, %v5569
          %5571 = vmatmul.bf16.gmra.mxu0 %v5479
          %v5572 = vpop.f32.mrf.mxu0
          %v5573 = vadd.f32 %v5440, %v5572
          %v5574 = vpop.f32.mrf.mxu0
          %v5575 = vadd.f32 %v5440, %v5574
          %5576 = vmatmul.bf16.gmra.mxu0 %v5480
          %v5577 = vpop.f32.mrf.mxu0
          %v5578 = vadd.f32 %v5440, %v5577
          %v5579 = vpop.f32.mrf.mxu0
          %v5580 = vadd.f32 %v5440, %v5579
          %5581 = vmatmul.bf16.gmra.mxu0 %v5481
          %v5582 = vpop.f32.mrf.mxu0
          %v5583 = vadd.f32 %v5440, %v5582
          %v5584 = vpop.f32.mrf.mxu0
          %v5585 = vadd.f32 %v5440, %v5584
          %5586 = vdwg.mxu0
          %v5587 = vmul.f32 %v5548, 0.5
          %v5588 = vmul.f32 %v5550, 0.5
          %v5589 = vmul.f32 %v5553, 0.5
          %v5590 = vmul.f32 %v5555, 0.5
          %v5591 = vmul.f32 %v5558, 0.5
          %v5592 = vmul.f32 %v5560, 0.5
          %v5593 = vmul.f32 %v5563, 0.5
          %v5594 = vmul.f32 %v5565, 0.5
          %v5595 = vmul.f32 %v5568, 0.5
          %v5596 = vmul.f32 %v5570, 0.5
          %v5597 = vmul.f32 %v5573, 0.5
          %v5598 = vmul.f32 %v5575, 0.5
          %v5599 = vmul.f32 %v5578, 0.5
          %v5600 = vmul.f32 %v5580, 0.5
          %v5601 = vmul.f32 %v5583, 0.5
          %v5602 = vmul.f32 %v5585, 0.5
          %v5603 = vmul.f32 %v5548, %v5548
          %v5604 = vmul.f32 %v5550, %v5550
          %v5605 = vmul.f32 %v5553, %v5553
          %v5606 = vmul.f32 %v5555, %v5555
          %v5607 = vmul.f32 %v5558, %v5558
          %v5608 = vmul.f32 %v5560, %v5560
          %v5609 = vmul.f32 %v5563, %v5563
          %v5610 = vmul.f32 %v5565, %v5565
          %v5611 = vmul.f32 %v5568, %v5568
          %v5612 = vmul.f32 %v5570, %v5570
          %v5613 = vmul.f32 %v5573, %v5573
          %v5614 = vmul.f32 %v5575, %v5575
          %v5615 = vmul.f32 %v5578, %v5578
          %v5616 = vmul.f32 %v5580, %v5580
          %v5617 = vmul.f32 %v5583, %v5583
          %v5618 = vmul.f32 %v5585, %v5585
          %v5619 = vmul.f32 %v5603, %v5548
          %v5620 = vmul.f32 %v5604, %v5550
          %v5621 = vmul.f32 %v5605, %v5553
          %v5622 = vmul.f32 %v5606, %v5555
          %v5623 = vmul.f32 %v5607, %v5558
          %v5624 = vmul.f32 %v5608, %v5560
          %v5625 = vmul.f32 %v5609, %v5563
          %v5626 = vmul.f32 %v5610, %v5565
          %v5627 = vmul.f32 %v5611, %v5568
          %v5628 = vmul.f32 %v5612, %v5570
          %v5629 = vmul.f32 %v5613, %v5573
          %v5630 = vmul.f32 %v5614, %v5575
          %v5631 = vmul.f32 %v5615, %v5578
          %v5632 = vmul.f32 %v5616, %v5580
          %v5633 = vmul.f32 %v5617, %v5583
          %v5634 = vmul.f32 %v5618, %v5585
          %v5635 = vmul.f32 %v5619, 0.044715
          %v5636 = vmul.f32 %v5620, 0.044715
          %v5637 = vmul.f32 %v5621, 0.044715
          %v5638 = vmul.f32 %v5622, 0.044715
          %v5639 = vmul.f32 %v5623, 0.044715
          %v5640 = vmul.f32 %v5624, 0.044715
          %v5641 = vmul.f32 %v5625, 0.044715
          %v5642 = vmul.f32 %v5626, 0.044715
          %v5643 = vmul.f32 %v5627, 0.044715
          %v5644 = vmul.f32 %v5628, 0.044715
          %v5645 = vmul.f32 %v5629, 0.044715
          %v5646 = vmul.f32 %v5630, 0.044715
          %v5647 = vmul.f32 %v5631, 0.044715
          %v5648 = vmul.f32 %v5632, 0.044715
          %v5649 = vmul.f32 %v5633, 0.044715
          %v5650 = vmul.f32 %v5634, 0.044715
          %v5651 = vadd.f32 %v5548, %v5635
          %v5652 = vadd.f32 %v5550, %v5636
          %v5653 = vadd.f32 %v5553, %v5637
          %v5654 = vadd.f32 %v5555, %v5638
          %v5655 = vadd.f32 %v5558, %v5639
          %v5656 = vadd.f32 %v5560, %v5640
          %v5657 = vadd.f32 %v5563, %v5641
          %v5658 = vadd.f32 %v5565, %v5642
          %v5659 = vadd.f32 %v5568, %v5643
          %v5660 = vadd.f32 %v5570, %v5644
          %v5661 = vadd.f32 %v5573, %v5645
          %v5662 = vadd.f32 %v5575, %v5646
          %v5663 = vadd.f32 %v5578, %v5647
          %v5664 = vadd.f32 %v5580, %v5648
          %v5665 = vadd.f32 %v5583, %v5649
          %v5666 = vadd.f32 %v5585, %v5650
          %v5667 = vmul.f32 %v5651, 0.7978846
          %v5668 = vmul.f32 %v5652, 0.7978846
          %v5669 = vmul.f32 %v5653, 0.7978846
          %v5670 = vmul.f32 %v5654, 0.7978846
          %v5671 = vmul.f32 %v5655, 0.7978846
          %v5672 = vmul.f32 %v5656, 0.7978846
          %v5673 = vmul.f32 %v5657, 0.7978846
          %v5674 = vmul.f32 %v5658, 0.7978846
          %v5675 = vmul.f32 %v5659, 0.7978846
          %v5676 = vmul.f32 %v5660, 0.7978846
          %v5677 = vmul.f32 %v5661, 0.7978846
          %v5678 = vmul.f32 %v5662, 0.7978846
          %v5679 = vmul.f32 %v5663, 0.7978846
          %v5680 = vmul.f32 %v5664, 0.7978846
          %v5681 = vmul.f32 %v5665, 0.7978846
          %v5682 = vmul.f32 %v5666, 0.7978846
          %v5683 = vtanh.pop %v5667
          %v5684 = vtanh.pop %v5668
          %v5685 = vtanh.pop %v5669
          %v5686 = vtanh.pop %v5670
          %v5687 = vtanh.pop %v5671
          %v5688 = vtanh.pop %v5672
          %v5689 = vtanh.pop %v5673
          %v5690 = vtanh.pop %v5674
          %v5691 = vtanh.pop %v5675
          %v5692 = vtanh.pop %v5676
          %v5693 = vtanh.pop %v5677
          %v5694 = vtanh.pop %v5678
          %v5695 = vtanh.pop %v5679
          %v5696 = vtanh.pop %v5680
          %v5697 = vtanh.pop %v5681
          %v5698 = vtanh.pop %v5682
          %v5699 = vadd.f32 %v5683, 1.0
          %v5700 = vadd.f32 %v5684, 1.0
          %v5701 = vadd.f32 %v5685, 1.0
          %v5702 = vadd.f32 %v5686, 1.0
          %v5703 = vadd.f32 %v5687, 1.0
          %v5704 = vadd.f32 %v5688, 1.0
          %v5705 = vadd.f32 %v5689, 1.0
          %v5706 = vadd.f32 %v5690, 1.0
          %v5707 = vadd.f32 %v5691, 1.0
          %v5708 = vadd.f32 %v5692, 1.0
          %v5709 = vadd.f32 %v5693, 1.0
          %v5710 = vadd.f32 %v5694, 1.0
          %v5711 = vadd.f32 %v5695, 1.0
          %v5712 = vadd.f32 %v5696, 1.0
          %v5713 = vadd.f32 %v5697, 1.0
          %v5714 = vadd.f32 %v5698, 1.0
          %v5715 = vmul.f32 %v5587, %v5699
          %v5716 = vmul.f32 %v5588, %v5700
          %v5717 = vmul.f32 %v5589, %v5701
          %v5718 = vmul.f32 %v5590, %v5702
          %v5719 = vmul.f32 %v5591, %v5703
          %v5720 = vmul.f32 %v5592, %v5704
          %v5721 = vmul.f32 %v5593, %v5705
          %v5722 = vmul.f32 %v5594, %v5706
          %v5723 = vmul.f32 %v5595, %v5707
          %v5724 = vmul.f32 %v5596, %v5708
          %v5725 = vmul.f32 %v5597, %v5709
          %v5726 = vmul.f32 %v5598, %v5710
          %v5727 = vmul.f32 %v5599, %v5711
          %v5728 = vmul.f32 %v5600, %v5712
          %v5729 = vmul.f32 %v5601, %v5713
          %v5730 = vmul.f32 %v5602, %v5714
          %v5731 = vpack.c.bf16 %v5715, %v5715
          %v5732 = vpack.c.bf16 %v5716, %v5716
          %v5733 = vpack.c.bf16 %v5717, %v5717
          %v5734 = vpack.c.bf16 %v5718, %v5718
          %v5735 = vpack.c.bf16 %v5719, %v5719
          %v5736 = vpack.c.bf16 %v5720, %v5720
          %v5737 = vpack.c.bf16 %v5721, %v5721
          %v5738 = vpack.c.bf16 %v5722, %v5722
          %v5739 = vpack.c.bf16 %v5723, %v5723
          %v5740 = vpack.c.bf16 %v5724, %v5724
          %v5741 = vpack.c.bf16 %v5725, %v5725
          %v5742 = vpack.c.bf16 %v5726, %v5726
          %v5743 = vpack.c.bf16 %v5727, %v5727
          %v5744 = vpack.c.bf16 %v5728, %v5728
          %v5745 = vpack.c.bf16 %v5729, %v5729
          %v5746 = vpack.c.bf16 %v5730, %v5730
          %s5747 = smul.addr %s5419, 4
          %s5748 = scalar_lea.vmem [#allocation4], %s5747
          %5749 = vst [vmem:[%s5748] sm:$0xf] %v5731
          %5750 = vst [vmem:[%s5748 + $0x4] sm:$0xf] %v5732
          %5751 = vst [vmem:[%s5748 + $0x8] sm:$0xf] %v5733
          %5752 = vst [vmem:[%s5748 + $0xc] sm:$0xf] %v5734
          %5753 = vst [vmem:[%s5748 + $0x10] sm:$0xf] %v5735
          %5754 = vst [vmem:[%s5748 + $0x14] sm:$0xf] %v5736
          %5755 = vst [vmem:[%s5748 + $0x18] sm:$0xf] %v5737
          %5756 = vst [vmem:[%s5748 + $0x1c] sm:$0xf] %v5738
          %5757 = vst [vmem:[%s5748 + $0x20] sm:$0xf] %v5739
          %5758 = vst [vmem:[%s5748 + $0x24] sm:$0xf] %v5740
          %5759 = vst [vmem:[%s5748 + $0x28] sm:$0xf] %v5741
          %5760 = vst [vmem:[%s5748 + $0x2c] sm:$0xf] %v5742
          %5761 = vst [vmem:[%s5748 + $0x30] sm:$0xf] %v5743
          %5762 = vst [vmem:[%s5748 + $0x34] sm:$0xf] %v5744
          %5763 = vst [vmem:[%s5748 + $0x38] sm:$0xf] %v5745
          %5764 = vst [vmem:[%s5748 + $0x3c] sm:$0xf] %v5746
          %v5765 = vmul.f32 %v5715, %v5715
          %v5766 = vmul.f32 %v5716, %v5716
          %v5767 = vmul.f32 %v5717, %v5717
          %v5768 = vmul.f32 %v5718, %v5718
          %v5769 = vmul.f32 %v5719, %v5719
          %v5770 = vmul.f32 %v5720, %v5720
          %v5771 = vmul.f32 %v5721, %v5721
          %v5772 = vmul.f32 %v5722, %v5722
          %v5773 = vmul.f32 %v5723, %v5723
          %v5774 = vmul.f32 %v5724, %v5724
          %v5775 = vmul.f32 %v5725, %v5725
          %v5776 = vmul.f32 %v5726, %v5726
          %v5777 = vmul.f32 %v5727, %v5727
          %v5778 = vmul.f32 %v5728, %v5728
          %v5779 = vmul.f32 %v5729, %v5729
          %v5780 = vmul.f32 %v5730, %v5730
          %v5781 = vadd.f32 %v5765, %v5766
          %v5782 = vadd.f32 %v5781, %v5767
          %v5783 = vadd.f32 %v5782, %v5768
          %v5784 = vadd.f32 %v5783, %v5769
          %v5785 = vadd.f32 %v5784, %v5770
          %v5786 = vadd.f32 %v5785, %v5771
          %v5787 = vadd.f32 %v5786, %v5772
          %v5788 = vadd.f32 %v5787, %v5773
          %v5789 = vadd.f32 %v5788, %v5774
          %v5790 = vadd.f32 %v5789, %v5775
          %v5791 = vadd.f32 %v5790, %v5776
          %v5792 = vadd.f32 %v5791, %v5777
          %v5793 = vadd.f32 %v5792, %v5778
          %v5794 = vadd.f32 %v5793, %v5779
          %v5795 = vadd.f32 %v5794, %v5780
          %v5796 = vrot.slane %v5795, 4
          %v5797 = vadd.f32 %v5795, %v5796
          %v5798 = vrot.slane %v5797, 2
          %v5799 = vadd.f32 %v5797, %v5798
          %v5800 = vrot.slane %v5799, 1
          %v5801 = vadd.f32 %v5799, %v5800
          %v5802 = vadd.f32 %v5417, %v5801
        $region77: #{tpu_custom_call.1} parent=67 // loop_footer
          %s5416 = sadd.s32 1, %s5412
        $region78: #{tpu_custom_call.1} parent=67 // loop_footer_branch
          %5411 = sbr.rel target = $region74
        $region79: #{tpu_custom_call.1} parent=67 // loop_exit
          _
        %v5803 = vrsqrt.pop %v5417
        %v5804 = vmul.f32 %v5803, %v5417
        %v5805 = vmul.f32 %v5804, %v5803
        %v5806 = vmul.f32 0.5, %v5805
        %v5807 = vsub.f32 1.5, %v5806
        %v5808 = vmul.f32 %v5803, %v5807
        %v5809 = vmul.f32 %v5417, %v5808
        %vm5810 = vcmp.eq.f32.partialorder %v5417, inf
        %v5811 = vsel %vm5810, %v5417, %v5809
        %vm5812 = vcmp.eq.f32.partialorder %v5417, 0.0
        %v5813 = vand.u32 %v5417, 2147483648
        %v5814 = vsel %vm5812, %v5813, %v5811
        %5815 = vadd.xlane.f32.xlu0 %v5814
        %v5816 = vpop.xlane.xlu0 %5815
        %v5817 = vmul.f32 %v5816, 0.03125
        %v5818 = vadd.f32 %v5817, 1e-06
        %v5819 = vrcp.pop %v5818
        %v5820 = vmul.f32 %v5818, %v5819
        %v5821 = vsub.f32 1.0, %v5820
        %v5822 = vmul.f32 %v5819, %v5821
        %v5823 = vadd.f32 %v5819, %v5822
        %vm5824 = vweird.f32 %v5818
        %vm5825 = vweird.f32 %v5819
        %vm5826 = vmor %vm5824, %vm5825
        %v5827 = vsel %vm5826, %v5819, %v5823
        %v5828 = vand.u32 2147483647, %v5818
        %vm5829 = vcmp.eq.f32.partialorder %v5828, 8.507059e+37
        %v5830 = vand.u32 %v5818, 2147483648
        %v5831 = vor.u32 1.1754944e-38, %v5830
        %v5832 = vsel %vm5829, %v5831, %v5827
        %v5833 = vmul.f32 %v5814, %v5832
        %v5834 = vld [vmem:[%s9] sm:$0xf]
        %v5835 = vld [vmem:[%s9 + $0x4] sm:$0xf]
        %v5836 = vld [vmem:[%s9 + $0x8] sm:$0xf]
        %v5837 = vld [vmem:[%s9 + $0xc] sm:$0xf]
        %v5838 = vld [vmem:[%s9 + $0x10] sm:$0xf]
        %v5839 = vld [vmem:[%s9 + $0x14] sm:$0xf]
        %v5840 = vld [vmem:[%s9 + $0x18] sm:$0xf]
        %v5841 = vld [vmem:[%s9 + $0x1c] sm:$0xf]
        %v5842 = vld [vmem:[%s9 + $0x20] sm:$0xf]
        %v5843 = vld [vmem:[%s9 + $0x24] sm:$0xf]
        %v5844 = vld [vmem:[%s9 + $0x28] sm:$0xf]
        %v5845 = vld [vmem:[%s9 + $0x2c] sm:$0xf]
        %v5846 = vld [vmem:[%s9 + $0x30] sm:$0xf]
        %v5847 = vld [vmem:[%s9 + $0x34] sm:$0xf]
        %v5848 = vld [vmem:[%s9 + $0x38] sm:$0xf]
        %v5849 = vld [vmem:[%s9 + $0x3c] sm:$0xf]
        %v5850 = vld [vmem:[%s10] sm:$0x1]
        %v5851 = vld [vmem:[%s11] sm:$0x1]
        %v5852 = vld [vmem:[%s7] sm:$0x1]
        %v5853 = vld [vmem:[%s8] sm:$0x1]
        loop: start=0, step=1, limit=2
        $region80: #{tpu_custom_call.1} parent=67 // loop_pre_header
          _
        $region81: #{tpu_custom_call.1} parent=67 // loop_header
          %s5855 = sphi 0, %s5859
          %p5856 = scmp.ge.s32.totalorder %s5855, 2
        $region82: #{tpu_custom_call.1} parent=67 // loop_header_branch
          %5858 = sbr.rel (%p5856) target = $region86
        $region83: #{tpu_custom_call.1} parent=67 // loop_body
          %s5860 = smul.u32 %s5855, 128
          %s5861 = sshra.s32 %s5860, 3
          %s5862 = sand.u32 %s5860, 7
          %s5863 = smul.addr %s5861, 4
          %s5864 = scalar_lea.vmem [#allocation4], %s5863
          %v5865 = vld [vmem:[%s5864] sm:$0xf]
          %v5866 = vld [vmem:[%s5864 + $0x4] sm:$0xf]
          %v5867 = vld [vmem:[%s5864 + $0x8] sm:$0xf]
          %v5868 = vld [vmem:[%s5864 + $0xc] sm:$0xf]
          %v5869 = vld [vmem:[%s5864 + $0x10] sm:$0xf]
          %v5870 = vld [vmem:[%s5864 + $0x14] sm:$0xf]
          %v5871 = vld [vmem:[%s5864 + $0x18] sm:$0xf]
          %v5872 = vld [vmem:[%s5864 + $0x1c] sm:$0xf]
          %v5873 = vld [vmem:[%s5864 + $0x20] sm:$0xf]
          %v5874 = vld [vmem:[%s5864 + $0x24] sm:$0xf]
          %v5875 = vld [vmem:[%s5864 + $0x28] sm:$0xf]
          %v5876 = vld [vmem:[%s5864 + $0x2c] sm:$0xf]
          %v5877 = vld [vmem:[%s5864 + $0x30] sm:$0xf]
          %v5878 = vld [vmem:[%s5864 + $0x34] sm:$0xf]
          %v5879 = vld [vmem:[%s5864 + $0x38] sm:$0xf]
          %v5880 = vld [vmem:[%s5864 + $0x3c] sm:$0xf]
          %v5881 = vunpack.c.l.bf16 %v5865
          %v5882 = vunpack.c.l.bf16 %v5866
          %v5883 = vunpack.c.l.bf16 %v5867
          %v5884 = vunpack.c.l.bf16 %v5868
          %v5885 = vunpack.c.l.bf16 %v5869
          %v5886 = vunpack.c.l.bf16 %v5870
          %v5887 = vunpack.c.l.bf16 %v5871
          %v5888 = vunpack.c.l.bf16 %v5872
          %v5889 = vunpack.c.l.bf16 %v5873
          %v5890 = vunpack.c.l.bf16 %v5874
          %v5891 = vunpack.c.l.bf16 %v5875
          %v5892 = vunpack.c.l.bf16 %v5876
          %v5893 = vunpack.c.l.bf16 %v5877
          %v5894 = vunpack.c.l.bf16 %v5878
          %v5895 = vunpack.c.l.bf16 %v5879
          %v5896 = vunpack.c.l.bf16 %v5880
          %v5897 = vmul.f32 %v5881, %v5833
          %v5898 = vmul.f32 %v5882, %v5833
          %v5899 = vmul.f32 %v5883, %v5833
          %v5900 = vmul.f32 %v5884, %v5833
          %v5901 = vmul.f32 %v5885, %v5833
          %v5902 = vmul.f32 %v5886, %v5833
          %v5903 = vmul.f32 %v5887, %v5833
          %v5904 = vmul.f32 %v5888, %v5833
          %v5905 = vmul.f32 %v5889, %v5833
          %v5906 = vmul.f32 %v5890, %v5833
          %v5907 = vmul.f32 %v5891, %v5833
          %v5908 = vmul.f32 %v5892, %v5833
          %v5909 = vmul.f32 %v5893, %v5833
          %v5910 = vmul.f32 %v5894, %v5833
          %v5911 = vmul.f32 %v5895, %v5833
          %v5912 = vmul.f32 %v5896, %v5833
          %v5914 = vperm.slane %v5852, 0
          %v5916 = vmul.f32 %v5914, %v5897
          %v5917 = vmul.f32 %v5914, %v5898
          %v5918 = vmul.f32 %v5914, %v5899
          %v5919 = vmul.f32 %v5914, %v5900
          %v5920 = vmul.f32 %v5914, %v5901
          %v5921 = vmul.f32 %v5914, %v5902
          %v5922 = vmul.f32 %v5914, %v5903
          %v5923 = vmul.f32 %v5914, %v5904
          %v5924 = vmul.f32 %v5914, %v5905
          %v5925 = vmul.f32 %v5914, %v5906
          %v5926 = vmul.f32 %v5914, %v5907
          %v5927 = vmul.f32 %v5914, %v5908
          %v5928 = vmul.f32 %v5914, %v5909
          %v5929 = vmul.f32 %v5914, %v5910
          %v5930 = vmul.f32 %v5914, %v5911
          %v5931 = vmul.f32 %v5914, %v5912
          %v5933 = vperm.slane %v5853, 0
          %v5935 = vadd.f32 %v5916, %v5933
          %v5936 = vadd.f32 %v5917, %v5933
          %v5937 = vadd.f32 %v5918, %v5933
          %v5938 = vadd.f32 %v5919, %v5933
          %v5939 = vadd.f32 %v5920, %v5933
          %v5940 = vadd.f32 %v5921, %v5933
          %v5941 = vadd.f32 %v5922, %v5933
          %v5942 = vadd.f32 %v5923, %v5933
          %v5943 = vadd.f32 %v5924, %v5933
          %v5944 = vadd.f32 %v5925, %v5933
          %v5945 = vadd.f32 %v5926, %v5933
          %v5946 = vadd.f32 %v5927, %v5933
          %v5947 = vadd.f32 %v5928, %v5933
          %v5948 = vadd.f32 %v5929, %v5933
          %v5949 = vadd.f32 %v5930, %v5933
          %v5950 = vadd.f32 %v5931, %v5933
          %v5951 = vadd.f32 %v5935, %v5881
          %v5952 = vadd.f32 %v5936, %v5882
          %v5953 = vadd.f32 %v5937, %v5883
          %v5954 = vadd.f32 %v5938, %v5884
          %v5955 = vadd.f32 %v5939, %v5885
          %v5956 = vadd.f32 %v5940, %v5886
          %v5957 = vadd.f32 %v5941, %v5887
          %v5958 = vadd.f32 %v5942, %v5888
          %v5959 = vadd.f32 %v5943, %v5889
          %v5960 = vadd.f32 %v5944, %v5890
          %v5961 = vadd.f32 %v5945, %v5891
          %v5962 = vadd.f32 %v5946, %v5892
          %v5963 = vadd.f32 %v5947, %v5893
          %v5964 = vadd.f32 %v5948, %v5894
          %v5965 = vadd.f32 %v5949, %v5895
          %v5966 = vadd.f32 %v5950, %v5896
          %v5967 = vpack.c.bf16 %v5952, %v5951
          %v5968 = vpack.c.bf16 %v5954, %v5953
          %v5969 = vpack.c.bf16 %v5956, %v5955
          %v5970 = vpack.c.bf16 %v5958, %v5957
          %v5971 = vpack.c.bf16 %v5960, %v5959
          %v5972 = vpack.c.bf16 %v5962, %v5961
          %v5973 = vpack.c.bf16 %v5964, %v5963
          %v5974 = vpack.c.bf16 %v5966, %v5965
          %v5976 = vperm.slane %v5850, 0
          %v5994 = vunpack.c.l.b16 %v5834
          %v5995 = vunpack.c.l.b16 %v5835
          %v5996 = vunpack.c.l.b16 %v5836
          %v5997 = vunpack.c.l.b16 %v5837
          %v5998 = vunpack.c.l.b16 %v5838
          %v5999 = vunpack.c.l.b16 %v5839
          %v6000 = vunpack.c.l.b16 %v5840
          %v6001 = vunpack.c.l.b16 %v5841
          %v6002 = vunpack.c.l.b16 %v5842
          %v6003 = vunpack.c.l.b16 %v5843
          %v6004 = vunpack.c.l.b16 %v5844
          %v6005 = vunpack.c.l.b16 %v5845
          %v6006 = vunpack.c.l.b16 %v5846
          %v6007 = vunpack.c.l.b16 %v5847
          %v6008 = vunpack.c.l.b16 %v5848
          %v6009 = vunpack.c.l.b16 %v5849
          %v6010 = vpack.c.b16 %v5995, %v5994
          %v6011 = vpack.c.b16 %v5997, %v5996
          %v6012 = vpack.c.b16 %v5999, %v5998
          %v6013 = vpack.c.b16 %v6001, %v6000
          %v6014 = vpack.c.b16 %v6003, %v6002
          %v6015 = vpack.c.b16 %v6005, %v6004
          %v6016 = vpack.c.b16 %v6007, %v6006
          %v6017 = vpack.c.b16 %v6009, %v6008
          %6026 = vmatpush.bf16.msra.mxu0 %v6017
          %6027 = vmatpush.bf16.msra.mxu0 %v6016
          %6028 = vmatpush.bf16.msra.mxu0 %v6015
          %6029 = vmatpush.bf16.msra.mxu0 %v6014
          %6030 = vmatpush.bf16.msra.mxu0 %v6013
          %6031 = vmatpush.bf16.msra.mxu0 %v6012
          %6032 = vmatpush.bf16.msra.mxu0 %v6011
          %6033 = vmatpush.bf16.msra.mxu0 %v6010
          %6034 = vmatmul.bf16.gmra.mxu0 %v5967
          %v6035 = vpop.f32.mrf.mxu0
          %v6036 = vadd.f32 %v5976, %v6035
          %v6037 = vpop.f32.mrf.mxu0
          %v6038 = vadd.f32 %v5976, %v6037
          %6039 = vmatmul.bf16.gmra.mxu0 %v5968
          %v6040 = vpop.f32.mrf.mxu0
          %v6041 = vadd.f32 %v5976, %v6040
          %v6042 = vpop.f32.mrf.mxu0
          %v6043 = vadd.f32 %v5976, %v6042
          %6044 = vmatmul.bf16.gmra.mxu0 %v5969
          %v6045 = vpop.f32.mrf.mxu0
          %v6046 = vadd.f32 %v5976, %v6045
          %v6047 = vpop.f32.mrf.mxu0
          %v6048 = vadd.f32 %v5976, %v6047
          %6049 = vmatmul.bf16.gmra.mxu0 %v5970
          %v6050 = vpop.f32.mrf.mxu0
          %v6051 = vadd.f32 %v5976, %v6050
          %v6052 = vpop.f32.mrf.mxu0
          %v6053 = vadd.f32 %v5976, %v6052
          %6054 = vmatmul.bf16.gmra.mxu0 %v5971
          %v6055 = vpop.f32.mrf.mxu0
          %v6056 = vadd.f32 %v5976, %v6055
          %v6057 = vpop.f32.mrf.mxu0
          %v6058 = vadd.f32 %v5976, %v6057
          %6059 = vmatmul.bf16.gmra.mxu0 %v5972
          %v6060 = vpop.f32.mrf.mxu0
          %v6061 = vadd.f32 %v5976, %v6060
          %v6062 = vpop.f32.mrf.mxu0
          %v6063 = vadd.f32 %v5976, %v6062
          %6064 = vmatmul.bf16.gmra.mxu0 %v5973
          %v6065 = vpop.f32.mrf.mxu0
          %v6066 = vadd.f32 %v5976, %v6065
          %v6067 = vpop.f32.mrf.mxu0
          %v6068 = vadd.f32 %v5976, %v6067
          %6069 = vmatmul.bf16.gmra.mxu0 %v5974
          %v6070 = vpop.f32.mrf.mxu0
          %v6071 = vadd.f32 %v5976, %v6070
          %v6072 = vpop.f32.mrf.mxu0
          %v6073 = vadd.f32 %v5976, %v6072
          %6074 = vdwg.mxu0
          %s6075 = smul.u32 %s5855, 8
          %s6076 = sadd.s32 %s6075, 3
          %s6077 = smul.u32 %s6076, 32
          %s6078 = scalar_lea.vmem [#allocation2], %s6077
          %v6079 = vld [vmem:[%s6078 + $0x8] sm:$0xff]
          %v6080 = vld [vmem:[%s6078 + $0x10] sm:$0xff]
          %v6081 = vld [vmem:[%s6078 + $0x28] sm:$0xff]
          %v6082 = vld [vmem:[%s6078 + $0x30] sm:$0xff]
          %v6083 = vld [vmem:[%s6078 + $0x48] sm:$0xff]
          %v6084 = vld [vmem:[%s6078 + $0x50] sm:$0xff]
          %v6085 = vld [vmem:[%s6078 + $0x68] sm:$0xff]
          %v6086 = vld [vmem:[%s6078 + $0x70] sm:$0xff]
          %v6087 = vld [vmem:[%s6078 + $0x88] sm:$0xff]
          %v6088 = vld [vmem:[%s6078 + $0x90] sm:$0xff]
          %v6089 = vld [vmem:[%s6078 + $0xa8] sm:$0xff]
          %v6090 = vld [vmem:[%s6078 + $0xb0] sm:$0xff]
          %v6091 = vld [vmem:[%s6078 + $0xc8] sm:$0xff]
          %v6092 = vld [vmem:[%s6078 + $0xd0] sm:$0xff]
          %v6093 = vld [vmem:[%s6078 + $0xe8] sm:$0xff]
          %v6094 = vld [vmem:[%s6078 + $0xf0] sm:$0xff]
          %v6096 = vperm.slane %v5851, 0
          %v6098 = vmul.f32 %v6036, %v6096
          %v6099 = vmul.f32 %v6038, %v6096
          %v6100 = vmul.f32 %v6041, %v6096
          %v6101 = vmul.f32 %v6043, %v6096
          %v6102 = vmul.f32 %v6046, %v6096
          %v6103 = vmul.f32 %v6048, %v6096
          %v6104 = vmul.f32 %v6051, %v6096
          %v6105 = vmul.f32 %v6053, %v6096
          %v6106 = vmul.f32 %v6056, %v6096
          %v6107 = vmul.f32 %v6058, %v6096
          %v6108 = vmul.f32 %v6061, %v6096
          %v6109 = vmul.f32 %v6063, %v6096
          %v6110 = vmul.f32 %v6066, %v6096
          %v6111 = vmul.f32 %v6068, %v6096
          %v6112 = vmul.f32 %v6071, %v6096
          %v6113 = vmul.f32 %v6073, %v6096
          %v6114 = vadd.f32 %v6079, %v6098
          %v6115 = vadd.f32 %v6080, %v6099
          %v6116 = vadd.f32 %v6081, %v6100
          %v6117 = vadd.f32 %v6082, %v6101
          %v6118 = vadd.f32 %v6083, %v6102
          %v6119 = vadd.f32 %v6084, %v6103
          %v6120 = vadd.f32 %v6085, %v6104
          %v6121 = vadd.f32 %v6086, %v6105
          %v6122 = vadd.f32 %v6087, %v6106
          %v6123 = vadd.f32 %v6088, %v6107
          %v6124 = vadd.f32 %v6089, %v6108
          %v6125 = vadd.f32 %v6090, %v6109
          %v6126 = vadd.f32 %v6091, %v6110
          %v6127 = vadd.f32 %v6092, %v6111
          %v6128 = vadd.f32 %v6093, %v6112
          %v6129 = vadd.f32 %v6094, %v6113
          %s6130 = scalar_lea.vmem %s406, %s5860 [#allocation5]
          %6131 = vst [vmem:[%s6130] sm:$0xff] %v6114
          %6132 = vst [vmem:[%s6130 + $0x8] sm:$0xff] %v6115
          %6133 = vst [vmem:[%s6130 + $0x10] sm:$0xff] %v6116
          %6134 = vst [vmem:[%s6130 + $0x18] sm:$0xff] %v6117
          %6135 = vst [vmem:[%s6130 + $0x20] sm:$0xff] %v6118
          %6136 = vst [vmem:[%s6130 + $0x28] sm:$0xff] %v6119
          %6137 = vst [vmem:[%s6130 + $0x30] sm:$0xff] %v6120
          %6138 = vst [vmem:[%s6130 + $0x38] sm:$0xff] %v6121
          %6139 = vst [vmem:[%s6130 + $0x40] sm:$0xff] %v6122
          %6140 = vst [vmem:[%s6130 + $0x48] sm:$0xff] %v6123
          %6141 = vst [vmem:[%s6130 + $0x50] sm:$0xff] %v6124
          %6142 = vst [vmem:[%s6130 + $0x58] sm:$0xff] %v6125
          %6143 = vst [vmem:[%s6130 + $0x60] sm:$0xff] %v6126
          %6144 = vst [vmem:[%s6130 + $0x68] sm:$0xff] %v6127
          %6145 = vst [vmem:[%s6130 + $0x70] sm:$0xff] %v6128
          %6146 = vst [vmem:[%s6130 + $0x78] sm:$0xff] %v6129
        $region84: #{tpu_custom_call.1} parent=67 // loop_footer
          %s5859 = sadd.s32 1, %s5855
        $region85: #{tpu_custom_call.1} parent=67 // loop_footer_branch
          %5854 = sbr.rel target = $region81
        $region86: #{tpu_custom_call.1} parent=67 // loop_exit
          _
        %s6147 = sand.u32 %s291, 1
        %s6148 = scalar_lea.sflag [#allocation6], %s6147
        %s6149 = sand.u32 %s291, 1
        %s6150 = smul.addr %s6149, 256
        %s6151 = scalar_lea.vmem [#allocation5], %s6150
        // Predicated region
        $region87: #{tpu_custom_call.1} parent=67 // pred_check
          %p6152 = pneg %p301
        $region88: #{tpu_custom_call.1} parent=67 // pred_check_branch
          %6154 = sbr.rel (%p6152) target = $region90
        $region89: #{tpu_custom_call.1} parent=67 // pred_region
          %6156 = vsyncadd %s6148, 0
          %s6157 = smul.addr %s26, 32
          %s6158 = smul.addr %s6157, 8
          %s6159 = scalar_lea.hbm %s12, %s6158
          %s6160 = sshll.u32 %s6151, 4
          %s6161 = int_to_ptr.vmem [resolvable:$true] %s6160
          %s6162 = sshll.u32 %s6159, 4
          %s6163 = int_to_ptr.hbm [resolvable:$true] %s6162
          %6168 = dma.vmem_to_hbm [thread:$0]  %s6161, 4096, %s6163, %s6148, 128, 128, 8
        $region90: #{tpu_custom_call.1} parent=67 // pred_fallthru
          _
      $region68: #{tpu_custom_call.1} parent=5 // pred_fallthru
        _
      %p6169 = scmp.le.s32.totalorder 2, %s21
      // Predicated region
      $region91: #{tpu_custom_call.1} parent=5 // pred_check
        %p6170 = pneg %p6169
      $region92: #{tpu_custom_call.1} parent=5 // pred_check_branch
        %6172 = sbr.rel (%p6170) target = $region94
      $region93: #{tpu_custom_call.1} parent=5 // pred_region
        %s6173 = ssub.s32 %s21, 2
        // Predicated region
        $region95: #{tpu_custom_call.1} parent=93 // pred_check
          %p6174 = pneg %p307
        $region96: #{tpu_custom_call.1} parent=93 // pred_check_branch
          %6176 = sbr.rel (%p6174) target = $region98
        $region97: #{tpu_custom_call.1} parent=93 // pred_region
          %s6177 = sand.u32 %s292, 1
          %s6178 = scalar_lea.sflag [#allocation6], %s6177
          %s6179 = sand.u32 %s292, 1
          %s6180 = smul.addr %s6179, 256
          %s6181 = scalar_lea.vmem [#allocation5], %s6180
          %6183 = dma.done %s6178, 4096
        $region98: #{tpu_custom_call.1} parent=93 // pred_fallthru
          _
      $region94: #{tpu_custom_call.1} parent=5 // pred_fallthru
        _
    $region6: #{tpu_custom_call.1} parent=1 // loop_footer
      %s25 = sadd.s32 1, %s21
    $region7: #{tpu_custom_call.1} parent=1 // loop_footer_branch
      %20 = sbr.rel target = $region3
    $region8: #{tpu_custom_call.1} parent=1 // loop_exit
      _
    %6184 = vsyncpa [#allocation6], 1
    %s6185 = scalar_lea.sflag [#allocation6], 1
    %6186 = vsyncpa %s6185, 1

</llo_original>
